<compile_context>
chip_gen: v5e
topology: v5e:2x2
jax: 0.10.0
libtpu: 0.0.40
codegen_flags: <defaults>
</compile_context>

<pallas_src>
import math

import jax
import jax.numpy as jnp
from jax.experimental import pallas as pl
from jax.experimental.pallas import tpu as pltpu

BN_EPS = 1e-5        # torch.nn.BatchNorm1d default eps
L2_EPS = 1e-12       # torch.nn.functional.normalize default eps
COS_EPS = 1e-8       # torch.cosine_similarity default eps
SIM_THRESH = 0.88

# Row layout of the packed bias/gamma/beta slab (16 x max(E, Dp) f32).
_BD, _B1, _G1, _BE1, _B11, _G11, _BE11, _PB1 = range(8)
_B2, _G2, _BE2, _B22, _G22, _BE22, _PB2 = range(8, 15)
_VEC_ORDER = ("bd", "b1", "g1", "be1", "b11", "g11", "be11", "pb1",
              "b2", "g2", "be2", "b22", "g22", "be22", "pb2")
_W_ORDER = ("w1", "w11", "pw1", "w2", "w22", "pw2")   # packed weight slab, in this order


def _round_up(x, m):
    return ((x + m - 1) // m) * m


def _pad2(a, shape):
    return jnp.pad(a, [(0, t - s) for s, t in zip(a.shape, shape)])


def _pad1(v, n):
    return jnp.pad(v, (0, n - v.shape[0]))


def _make_kernel(n_orig, npad, e, dp):
    """Builds the gridless kernel closure over the static (padded) shapes."""

    def kernel(x_ref, adj_ref, m_ref, wd_ref, ws_ref, vs_ref,
               out_ref, sim1_ref, sim2_ref, a2_ref):
        m = m_ref[...]                                        # (npad, 1) f32 validity mask
        inv_cnt = 1.0 / jnp.maximum(jnp.sum(m), 1.0)          # hoisted BN 1/count

        # Rows >= n_orig do not exist in the original graph; zero them wherever a
        # broadcast bias would otherwise give them nonzero features.
        pad = (jax.lax.broadcasted_iota(jnp.int32, (npad, 1), 0)
               < n_orig).astype(jnp.float32)

        # Adjacency loaded once into the top half of the fused-aggregation slab (bf16).
        a2_ref[0:npad, :] = adj_ref[...]

        def vec(row, d):                                      # (1, d) f32 slice of the bias slab
            return vs_ref[row:row + 1, 0:d]

        def mxu(a_f32, w_bf16):                               # bf16 operands, f32 accumulation
            return jnp.dot(a_f32.astype(jnp.bfloat16), w_bf16,
                           preferred_element_type=jnp.float32)

        def gcn_post(y, w, b, g, be):
            # y = (agg + self) @ W + bias ; L2-normalize rows ; masked BatchNorm1d.
            y = mxu(y, w) + b
            ss = jnp.sum(y * y, axis=-1, keepdims=True)
            y = y * jax.lax.rsqrt(jnp.maximum(ss, L2_EPS * L2_EPS))
            # Training-mode batch stats over valid rows; single-pass variance is safe
            # because |y| <= 1 after the L2 normalize.  Invalid rows come out 0.
            mean = jnp.sum(y * m, axis=0, keepdims=True) * inv_cnt
            msq = jnp.sum((y * y) * m, axis=0, keepdims=True) * inv_cnt
            var = jnp.maximum(msq - mean * mean, 0.0)
            scale = g * jax.lax.rsqrt(var + BN_EPS)
            return (y * scale + (be - mean * scale)) * m
            # TODO(synk): BatchNorm running-stat tracking (eval mode) is not modelled;
            # training-mode batch statistics are used, as in a fresh PyTorch module.

        def cosine_graph(h):
            # torch.cosine_similarity over all node pairs, then the hard 0.88 threshold.
            # One EUP rsqrt per row; pairwise dot runs as a bf16 MXU matmul (f32 acc).
            ss = jnp.sum(h * h, axis=-1, keepdims=True)
            hn = (h * jax.lax.rsqrt(jnp.maximum(ss, COS_EPS * COS_EPS))
                  ).astype(jnp.bfloat16)
            cos = jnp.einsum('nd,md->nm', hn, hn,
                             preferred_element_type=jnp.float32)
            return jnp.where(cos > SIM_THRESH, 1.0, 0.0)

        def dual_gcn(h, sim, wa, ba, ga, bea, ws_, bs, gs, bes):
            # Fuse the adj- and sim-aggregations into a single (2*npad, npad) MXU dot;
            # h is pushed to the MXU once and cast to bf16 once per layer.
            a2_ref[npad:2 * npad, :] = sim.astype(jnp.bfloat16)
            agg = jnp.dot(a2_ref[...], h.astype(jnp.bfloat16),
                          preferred_element_type=jnp.float32)
            # Self-loop folded as "+ h" (kept in f32) instead of a materialized identity.
            return (gcn_post(agg[0:npad] + h, wa, ba, ga, bea) +
                    gcn_post(agg[npad:2 * npad] + h, ws_, bs, gs, bes))

        # X = mask * X ; X = down_dim(X)   (pad rows forced back to exactly zero)
        h = (mxu(m * x_ref[...], wd_ref[...]) + vec(_BD, e)) * pad

        sim1 = cosine_graph(h)
        sim1_ref[...] = sim1
        h = dual_gcn(h, sim1,
                     ws_ref[0:e, 0:e],     vec(_B1, e),  vec(_G1, e),  vec(_BE1, e),
                     ws_ref[e:2 * e, 0:e], vec(_B11, e), vec(_G11, e), vec(_BE11, e))
        h = (mxu(h, ws_ref[2 * e:3 * e, 0:e]) + vec(_PB1, e)) * pad          # pool1

        sim2 = cosine_graph(h)
        sim2_ref[...] = sim2
        h = dual_gcn(h, sim2,
                     ws_ref[3 * e:4 * e, 0:dp], vec(_B2, dp),  vec(_G2, dp),  vec(_BE2, dp),
                     ws_ref[4 * e:5 * e, 0:dp], vec(_B22, dp), vec(_G22, dp), vec(_BE22, dp))
        h = mxu(h, ws_ref[5 * e:5 * e + dp, 0:dp]) + vec(_PB2, dp)           # pool2

        out_ref[...] = jnp.maximum(h, 0.0)                                   # final relu

    return kernel


def gcn_multi_task_forward(node_feat, adj, mask, params):
    """node_feat (1,N,Din), adj (1,N,N), mask (1,N) -> (out (1,N,Dout), sim1, sim2)."""
    B, N, Din = node_feat.shape
    assert B == 1, "GCN_multi_task's sim_matrix computation (squeeze(0)) assumes batch 1"
    E = params["w1"].shape[0]              # embed_dim (256 in the module)
    Dout = params["pw2"].shape[0]

    # Lane-dense padded shapes.
    Np = _round_up(N, 128)
    Dip = _round_up(Din, 128)
    Dp = _round_up(Dout, 128)
    Wmax = max(E, Dp)

    # Flatten the unit batch and zero-pad the ragged axes.
    x2 = _pad2(node_feat.reshape(N, Din), (Np, Dip))
    adj_b = _pad2(adj.reshape(N, N), (Np, Np)).astype(jnp.bfloat16)
    m_col = _pad2(mask.reshape(N, 1), (Np, 1))

    # Pack parameters into three DMA slabs (weights pre-cast to bf16 for the MXU).
    wd = _pad2(params["wd"], (Dip, E)).astype(jnp.bfloat16)
    wslab = jnp.concatenate(
        [_pad2(params[k], (E if k != "pw2" else Dp, Wmax)) for k in _W_ORDER],
        axis=0).astype(jnp.bfloat16)                            # (5E + Dp, Wmax)
    vslab = jnp.stack([_pad1(params[k], Wmax) for k in _VEC_ORDER]
                      + [jnp.zeros((Wmax,), jnp.float32)], axis=0)   # (16, Wmax) f32

    args = (x2, adj_b, m_col, wd, wslab, vslab)
    out_shapes = (jax.ShapeDtypeStruct((Np, Dp), jnp.float32),
                  jax.ShapeDtypeStruct((Np, Np), jnp.float32),
                  jax.ShapeDtypeStruct((Np, Np), jnp.float32))
    scratch = [pltpu.VMEM((2 * Np, Np), jnp.bfloat16)]          # fused-aggregation slab

    # Shape-derived VMEM budget (inputs + outputs + scratch, x2 for live temporaries,
    # plus headroom for Mosaic internal scratch), clamped for v7x's 64 MiB physical VMEM.
    in_bytes = sum(a.size * a.dtype.itemsize for a in args)
    out_bytes = sum(math.prod(s.shape) * jnp.dtype(s.dtype).itemsize for s in out_shapes)
    scratch_bytes = 2 * Np * Np * 2
    footprint = in_bytes + out_bytes + scratch_bytes
    vmem_limit = int(max(min(2 * footprint + (8 << 20), 48 << 20), 16 << 20))

    vmem = pl.BlockSpec(memory_space=pltpu.MemorySpace.VMEM)
    out2, sim1, sim2 = pl.pallas_call(
        _make_kernel(N, Np, E, Dp),
        out_shape=out_shapes,
        in_specs=[vmem] * len(args),
        out_specs=(vmem, vmem, vmem),
        scratch_shapes=scratch,
        # Gridless by design (see header).
        compiler_params=pltpu.CompilerParams(vmem_limit_bytes=vmem_limit),
    )(*args)

    return (out2[:N, :Dout].reshape(B, N, Dout), sim1[:N, :N], sim2[:N, :N])


def _reference(node_feat, adj, mask, params, sims=None):
    """Pure-JAX mirror of the kernel math on the UNPADDED shapes (same bf16 choices).

    If `sims` is given, those thresholded similarity graphs are used downstream instead
    of re-deriving them, so a cosine value on the 0.88 decision boundary cannot cause a
    spurious kernel-vs-reference mismatch.  Returns (out, (sim1, sim2), (cos1, cos2)).
    """
    x = node_feat[0]
    m = mask[0][:, None]
    adjb = adj[0].astype(jnp.bfloat16)
    inv_cnt = 1.0 / jnp.maximum(jnp.sum(m), 1.0)

    def mxu(a, w):
        return jnp.dot(a.astype(jnp.bfloat16), w.astype(jnp.bfloat16),
                       preferred_element_type=jnp.float32)

    def post(y, w, b, g, be):
        y = mxu(y, w) + b[None, :]
        ss = jnp.sum(y * y, axis=-1, keepdims=True)
        y = y * jax.lax.rsqrt(jnp.maximum(ss, L2_EPS * L2_EPS))
        mean = jnp.sum(y * m, axis=0, keepdims=True) * inv_cnt
        msq = jnp.sum((y * y) * m, axis=0, keepdims=True) * inv_cnt
        var = jnp.maximum(msq - mean * mean, 0.0)
        scale = g[None, :] * jax.lax.rsqrt(var + BN_EPS)
        return (y * scale + (be[None, :] - mean * scale)) * m

    def cosine(h):
        ss = jnp.sum(h * h, axis=-1, keepdims=True)
        hn = (h * jax.lax.rsqrt(jnp.maximum(ss, COS_EPS * COS_EPS))).astype(jnp.bfloat16)
        return jnp.einsum('nd,md->nm', hn, hn, preferred_element_type=jnp.float32)

    def dual(h, s, pa, ps):
        hb = h.astype(jnp.bfloat16)
        agg_a = jnp.dot(adjb, hb, preferred_element_type=jnp.float32)
        agg_s = jnp.dot(s.astype(jnp.bfloat16), hb, preferred_element_type=jnp.float32)
        return post(agg_a + h, *pa) + post(agg_s + h, *ps)

    p = params
    h = mxu(m * x, p["wd"]) + p["bd"][None, :]
    cos1 = cosine(h)
    s1 = jnp.where(cos1 > SIM_THRESH, 1.0, 0.0) if sims is None else sims[0]
    h = dual(h, s1, (p["w1"], p["b1"], p["g1"], p["be1"]),
                    (p["w11"], p["b11"], p["g11"], p["be11"]))
    h = mxu(h, p["pw1"]) + p["pb1"][None, :]
    cos2 = cosine(h)
    s2 = jnp.where(cos2 > SIM_THRESH, 1.0, 0.0) if sims is None else sims[1]
    h = dual(h, s2, (p["w2"], p["b2"], p["g2"], p["be2"]),
                    (p["w22"], p["b22"], p["g22"], p["be22"]))
    h = mxu(h, p["pw2"]) + p["pb2"][None, :]
    out = jnp.maximum(h, 0.0)[None]
    return out, (s1, s2), (cos1, cos2)


def init_params(key, input_dim, embed_dim, output_dim):
    ks = jax.random.split(key, 10)

    def xavier(k, fan_in, fan_out):          # GCNBlock weight: xavier_normal_, stored (in,out)
        std = (2.0 / (fan_in + fan_out)) ** 0.5
        return std * jax.random.normal(k, (fan_in, fan_out), jnp.float32)

    def linear(kw, kb, fan_in, fan_out):     # nn.Linear default init, weight stored (in,out)
        lim = 1.0 / (fan_in ** 0.5)
        w = jax.random.uniform(kw, (fan_in, fan_out), jnp.float32, -lim, lim)
        b = jax.random.uniform(kb, (fan_out,), jnp.float32, -lim, lim)
        return w, b

    wd, bd = linear(ks[0], ks[1], input_dim, embed_dim)
    pw1, pb1 = linear(ks[2], ks[3], embed_dim, embed_dim)
    pw2, pb2 = linear(ks[4], ks[5], output_dim, output_dim)

    def bn(dim):                              # BatchNorm1d affine defaults
        return jnp.ones((dim,), jnp.float32), jnp.zeros((dim,), jnp.float32)

    g1, be1 = bn(embed_dim)
    g11, be11 = bn(embed_dim)
    g2, be2 = bn(output_dim)
    g22, be22 = bn(output_dim)

    return dict(
        wd=wd, bd=bd,
        w1=xavier(ks[6], embed_dim, embed_dim),
        b1=jnp.zeros((embed_dim,), jnp.float32), g1=g1, be1=be1,
        w11=xavier(ks[7], embed_dim, embed_dim),
        b11=jnp.zeros((embed_dim,), jnp.float32), g11=g11, be11=be11,
        pw1=pw1, pb1=pb1,
        w2=xavier(ks[8], embed_dim, output_dim),
        b2=jnp.zeros((output_dim,), jnp.float32), g2=g2, be2=be2,
        w22=xavier(ks[9], embed_dim, output_dim),
        b22=jnp.zeros((output_dim,), jnp.float32), g22=g22, be22=be22,
        pw2=pw2, pb2=pb2,
    )


if __name__ == "__main__":
    B, N = 1, 50                        # batch must be 1 (module squeezes batch for sim_matrix)
    input_dim, output_dim = 100, 120    # small ragged stand-ins for the real 1024 / 250
    embed_dim = 256                     # hardcoded in GCN_multi_task.__init__

    key = jax.random.PRNGKey(0)
    kx, ka, kp = jax.random.split(key, 3)
    node_feat = jax.random.normal(kx, (B, N, input_dim), jnp.float32)
    adj = jax.random.uniform(ka, (B, N, N), jnp.float32)
    n_valid = 37                        # contiguous valid-node prefix (as the BN gather assumes)
    mask = (jnp.arange(N)[None, :] < n_valid).astype(jnp.float32)

    params = init_params(kp, input_dim, embed_dim, output_dim)

    out, sim1, sim2 = gcn_multi_task_forward(node_feat, adj, mask, params)
    out = jax.block_until_ready(out)
    assert out.shape == (B, N, output_dim)

    # Reference check.  The kernel's thresholded similarity graphs are fed back into the
    # reference so a cosine value landing on the 0.88 boundary cannot create a spurious
    # mismatch; the thresholding itself is verified away from the decision boundary.
    ref_out, _, (cos1, cos2) = _reference(node_feat, adj, mask, params, sims=(sim1, sim2))
    assert bool(jnp.allclose(out, ref_out, atol=5e-3, rtol=5e-3)), "output mismatch vs reference"
    for sim_k, cos in ((sim1, cos1), (sim2, cos2)):
        away = jnp.abs(cos - SIM_THRESH) > 1e-2
        ok = jnp.where(away, sim_k == (cos > SIM_THRESH).astype(jnp.float32), True)
        assert bool(jnp.all(ok)), "similarity-graph threshold mismatch vs reference"

    print("KERNEL_OK")
</pallas_src>

<mosaic_0001>
module attributes {stable_mosaic.version = 11 : i64} {
  func.func @kernel(%arg0: memref<128x128xf32, #tpu.memory_space<vmem>>, %arg1: memref<128x128xbf16, #tpu.memory_space<vmem>>, %arg2: memref<128x1xf32, #tpu.memory_space<vmem>>, %arg3: memref<128x256xbf16, #tpu.memory_space<vmem>>, %arg4: memref<1408x256xbf16, #tpu.memory_space<vmem>>, %arg5: memref<16x256xf32, #tpu.memory_space<vmem>>, %arg6: memref<128x128xf32, #tpu.memory_space<vmem>>, %arg7: memref<128x128xf32, #tpu.memory_space<vmem>>, %arg8: memref<128x128xf32, #tpu.memory_space<vmem>>, %arg9: memref<256x128xbf16, #tpu.memory_space<vmem>>) attributes {dimension_semantics = [], scalar_prefetch = 0 : i64, scratch_operands = 1 : i64, tpu.core_type = #tpu.core_type<tc>} {
    %c0 = arith.constant 0 : index
    %c0_0 = arith.constant 0 : index
    %0 = vector.load %arg2[%c0, %c0_0] : memref<128x1xf32, #tpu.memory_space<vmem>>, vector<128x1xf32>
    %1 = vector.shape_cast %0 : vector<128x1xf32> to vector<1x128x1xf32>
    %cst = arith.constant dense<0.000000e+00> : vector<1xf32>
    %2 = vector.multi_reduction <add>, %1, %cst [1, 2] : vector<1x128x1xf32> to vector<1xf32>
    %3 = vector.shape_cast %2 : vector<1xf32> to vector<1x1x1xf32>
    %4 = vector.extract %3[0, 0, 0] : f32 from vector<1x1x1xf32>
    %cst_1 = arith.constant 1.000000e+00 : f32
    %5 = arith.maximumf %4, %cst_1 : f32
    %cst_2 = arith.constant 1.000000e+00 : f32
    %6 = arith.divf %cst_2, %5 : f32
    %7 = tpu.iota {dimensions = array<i32: 0>} : vector<128x1xi32>
    %c50_i32 = arith.constant 50 : i32
    %8 = vector.broadcast %c50_i32 : i32 to vector<128x1xi32>
    %9 = arith.cmpi slt, %7, %8 : vector<128x1xi32>
    %10 = arith.extui %9 : vector<128x1xi1> to vector<128x1xi32>
    %11 = arith.sitofp %10 : vector<128x1xi32> to vector<128x1xf32>
    %c0_3 = arith.constant 0 : index
    %c0_4 = arith.constant 0 : index
    %12 = vector.load %arg1[%c0_3, %c0_4] : memref<128x128xbf16, #tpu.memory_space<vmem>>, vector<128x128xbf16>
    %c0_5 = arith.constant 0 : index
    %c0_6 = arith.constant 0 : index
    %13 = vector.load %arg9[%c0_5, %c0_6] : memref<256x128xbf16, #tpu.memory_space<vmem>>, vector<128x128xbf16>
    tpu.vector_store %arg9[%c0_5, %c0_6], %12 {strides = array<i32>} : memref<256x128xbf16, #tpu.memory_space<vmem>>, vector<128x128xbf16>,
    %c0_7 = arith.constant 0 : index
    %c0_8 = arith.constant 0 : index
    %14 = vector.load %arg0[%c0_7, %c0_8] : memref<128x128xf32, #tpu.memory_space<vmem>>, vector<128x128xf32>
    %15 = vector.broadcast %0 : vector<128x1xf32> to vector<128x128xf32>
    %16 = arith.mulf %15, %14 : vector<128x128xf32>
    %c0_9 = arith.constant 0 : index
    %c0_10 = arith.constant 0 : index
    %17 = vector.load %arg3[%c0_9, %c0_10] : memref<128x256xbf16, #tpu.memory_space<vmem>>, vector<128x256xbf16>
    %18 = arith.truncf %16 : vector<128x128xf32> to vector<128x128xbf16>
    %cst_11 = arith.constant dense<0.000000e+00> : vector<128x256xf32>
    %19 = tpu.matmul %18, %17, %cst_11 {dimension_numbers = #tpu.dot_dimension_numbers<[1], [0], [0], [1], [0, 0, 1, 1], [], []>} : vector<128x128xbf16>, vector<128x256xbf16>, vector<128x256xf32> -> vector<128x256xf32>
    %c0_12 = arith.constant 0 : index
    %c0_13 = arith.constant 0 : index
    %20 = vector.load %arg5[%c0_12, %c0_13] : memref<16x256xf32, #tpu.memory_space<vmem>>, vector<1x256xf32>
    %21 = vector.broadcast %20 : vector<1x256xf32> to vector<128x256xf32>
    %22 = arith.addf %19, %21 : vector<128x256xf32>
    %23 = vector.broadcast %11 : vector<128x1xf32> to vector<128x256xf32>
    %24 = arith.mulf %22, %23 : vector<128x256xf32>
    %25 = arith.mulf %24, %24 : vector<128x256xf32>
    %cst_14 = arith.constant dense<0.000000e+00> : vector<128xf32>
    %26 = vector.multi_reduction <add>, %25, %cst_14 [1] : vector<128x256xf32> to vector<128xf32>
    %27 = vector.shape_cast %26 : vector<128xf32> to vector<128x1xf32>
    %cst_15 = arith.constant 1.000000e-16 : f32
    %28 = vector.broadcast %cst_15 : f32 to vector<128x1xf32>
    %29 = arith.maximumf %27, %28 : vector<128x1xf32>
    %30 = math.rsqrt %29 : vector<128x1xf32>
    %31 = vector.broadcast %30 : vector<128x1xf32> to vector<128x256xf32>
    %32 = arith.mulf %24, %31 : vector<128x256xf32>
    %33 = arith.truncf %32 : vector<128x256xf32> to vector<128x256xbf16>
    "tpu.trace_start"() <{level = 10 : i32, message = "nd,md->nm"}> : () -> ()
    %cst_16 = arith.constant dense<0.000000e+00> : vector<128x128xf32>
    %34 = tpu.matmul %33, %33, %cst_16 {dimension_numbers = #tpu.dot_dimension_numbers<[1], [1], [0], [0], [0, 0, 1, 0], [], []>} : vector<128x256xbf16>, vector<128x256xbf16>, vector<128x128xf32> -> vector<128x128xf32>
    %cst_17 = arith.constant 0.879999995 : f32
    "tpu.trace_stop"() : () -> ()
    %35 = vector.broadcast %cst_17 : f32 to vector<128x128xf32>
    %36 = arith.cmpf ogt, %34, %35 : vector<128x128xf32>
    %cst_18 = arith.constant 1.000000e+00 : f32
    %cst_19 = arith.constant 0.000000e+00 : f32
    %37 = vector.broadcast %cst_18 : f32 to vector<128x128xf32>
    %38 = vector.broadcast %cst_19 : f32 to vector<128x128xf32>
    %39 = arith.select %36, %37, %38 : vector<128x128xi1>, vector<128x128xf32>
    %c0_20 = arith.constant 0 : index
    %c0_21 = arith.constant 0 : index
    %40 = vector.load %arg7[%c0_20, %c0_21] : memref<128x128xf32, #tpu.memory_space<vmem>>, vector<128x128xf32>
    tpu.vector_store %arg7[%c0_20, %c0_21], %39 {strides = array<i32>} : memref<128x128xf32, #tpu.memory_space<vmem>>, vector<128x128xf32>,
    %c0_22 = arith.constant 0 : index
    %c0_23 = arith.constant 0 : index
    %41 = vector.load %arg4[%c0_22, %c0_23] : memref<1408x256xbf16, #tpu.memory_space<vmem>>, vector<256x256xbf16>
    %c1 = arith.constant 1 : index
    %c0_24 = arith.constant 0 : index
    %42 = vector.load %arg5[%c1, %c0_24] : memref<16x256xf32, #tpu.memory_space<vmem>>, vector<1x256xf32>
    %c2 = arith.constant 2 : index
    %c0_25 = arith.constant 0 : index
    %43 = vector.load %arg5[%c2, %c0_25] : memref<16x256xf32, #tpu.memory_space<vmem>>, vector<1x256xf32>
    %c3 = arith.constant 3 : index
    %c0_26 = arith.constant 0 : index
    %44 = vector.load %arg5[%c3, %c0_26] : memref<16x256xf32, #tpu.memory_space<vmem>>, vector<1x256xf32>
    %c256 = arith.constant 256 : index
    %c0_27 = arith.constant 0 : index
    %45 = vector.load %arg4[%c256, %c0_27] : memref<1408x256xbf16, #tpu.memory_space<vmem>>, vector<256x256xbf16>
    %c4 = arith.constant 4 : index
    %c0_28 = arith.constant 0 : index
    %46 = vector.load %arg5[%c4, %c0_28] : memref<16x256xf32, #tpu.memory_space<vmem>>, vector<1x256xf32>
    %c5 = arith.constant 5 : index
    %c0_29 = arith.constant 0 : index
    %47 = vector.load %arg5[%c5, %c0_29] : memref<16x256xf32, #tpu.memory_space<vmem>>, vector<1x256xf32>
    %c6 = arith.constant 6 : index
    %c0_30 = arith.constant 0 : index
    %48 = vector.load %arg5[%c6, %c0_30] : memref<16x256xf32, #tpu.memory_space<vmem>>, vector<1x256xf32>
    %49 = arith.truncf %39 : vector<128x128xf32> to vector<128x128xbf16>
    %c128 = arith.constant 128 : index
    %c0_31 = arith.constant 0 : index
    %50 = vector.load %arg9[%c128, %c0_31] : memref<256x128xbf16, #tpu.memory_space<vmem>>, vector<128x128xbf16>
    tpu.vector_store %arg9[%c128, %c0_31], %49 {strides = array<i32>} : memref<256x128xbf16, #tpu.memory_space<vmem>>, vector<128x128xbf16>,
    %c0_32 = arith.constant 0 : index
    %c0_33 = arith.constant 0 : index
    %51 = vector.load %arg9[%c0_32, %c0_33] : memref<256x128xbf16, #tpu.memory_space<vmem>>, vector<256x128xbf16>
    %52 = arith.truncf %24 : vector<128x256xf32> to vector<128x256xbf16>
    %cst_34 = arith.constant dense<0.000000e+00> : vector<256x256xf32>
    %53 = tpu.matmul %51, %52, %cst_34 {dimension_numbers = #tpu.dot_dimension_numbers<[1], [0], [0], [1], [0, 0, 1, 1], [], []>} : vector<256x128xbf16>, vector<128x256xbf16>, vector<256x256xf32> -> vector<256x256xf32>
    %54 = vector.extract_strided_slice %53 {offsets = [0, 0], sizes = [128, 256], strides = [1, 1]} : vector<256x256xf32> to vector<128x256xf32>
    %55 = arith.addf %54, %24 : vector<128x256xf32>
    %56 = arith.truncf %55 : vector<128x256xf32> to vector<128x256xbf16>
    %cst_35 = arith.constant dense<0.000000e+00> : vector<128x256xf32>
    %57 = tpu.matmul %56, %41, %cst_35 {dimension_numbers = #tpu.dot_dimension_numbers<[1], [0], [0], [1], [0, 0, 1, 1], [], []>} : vector<128x256xbf16>, vector<256x256xbf16>, vector<128x256xf32> -> vector<128x256xf32>
    %58 = vector.broadcast %42 : vector<1x256xf32> to vector<128x256xf32>
    %59 = arith.addf %57, %58 : vector<128x256xf32>
    %60 = arith.mulf %59, %59 : vector<128x256xf32>
    %cst_36 = arith.constant dense<0.000000e+00> : vector<128xf32>
    %61 = vector.multi_reduction <add>, %60, %cst_36 [1] : vector<128x256xf32> to vector<128xf32>
    %62 = vector.shape_cast %61 : vector<128xf32> to vector<128x1xf32>
    %cst_37 = arith.constant 1.000000e-24 : f32
    %63 = vector.broadcast %cst_37 : f32 to vector<128x1xf32>
    %64 = arith.maximumf %62, %63 : vector<128x1xf32>
    %65 = math.rsqrt %64 : vector<128x1xf32>
    %66 = vector.broadcast %65 : vector<128x1xf32> to vector<128x256xf32>
    %67 = arith.mulf %59, %66 : vector<128x256xf32>
    %68 = vector.broadcast %0 : vector<128x1xf32> to vector<128x256xf32>
    %69 = arith.mulf %67, %68 : vector<128x256xf32>
    %cst_38 = arith.constant dense<0.000000e+00> : vector<256xf32>
    %70 = vector.multi_reduction <add>, %69, %cst_38 [0] : vector<128x256xf32> to vector<256xf32>
    %71 = vector.shape_cast %70 : vector<256xf32> to vector<1x256xf32>
    %72 = vector.broadcast %6 : f32 to vector<1x256xf32>
    %73 = arith.mulf %71, %72 : vector<1x256xf32>
    %74 = arith.mulf %67, %67 : vector<128x256xf32>
    %75 = vector.broadcast %0 : vector<128x1xf32> to vector<128x256xf32>
    %76 = arith.mulf %74, %75 : vector<128x256xf32>
    %cst_39 = arith.constant dense<0.000000e+00> : vector<256xf32>
    %77 = vector.multi_reduction <add>, %76, %cst_39 [0] : vector<128x256xf32> to vector<256xf32>
    %78 = vector.shape_cast %77 : vector<256xf32> to vector<1x256xf32>
    %79 = vector.broadcast %6 : f32 to vector<1x256xf32>
    %80 = arith.mulf %78, %79 : vector<1x256xf32>
    %81 = arith.mulf %73, %73 : vector<1x256xf32>
    %82 = arith.subf %80, %81 : vector<1x256xf32>
    %cst_40 = arith.constant 0.000000e+00 : f32
    %83 = vector.broadcast %cst_40 : f32 to vector<1x256xf32>
    %84 = arith.maximumf %82, %83 : vector<1x256xf32>
    %cst_41 = arith.constant 9.99999974E-6 : f32
    %85 = vector.broadcast %cst_41 : f32 to vector<1x256xf32>
    %86 = arith.addf %84, %85 : vector<1x256xf32>
    %87 = math.rsqrt %86 : vector<1x256xf32>
    %88 = arith.mulf %43, %87 : vector<1x256xf32>
    %89 = vector.broadcast %88 : vector<1x256xf32> to vector<128x256xf32>
    %90 = arith.mulf %67, %89 : vector<128x256xf32>
    %91 = arith.mulf %73, %88 : vector<1x256xf32>
    %92 = arith.subf %44, %91 : vector<1x256xf32>
    %93 = vector.broadcast %92 : vector<1x256xf32> to vector<128x256xf32>
    %94 = arith.addf %90, %93 : vector<128x256xf32>
    %95 = vector.broadcast %0 : vector<128x1xf32> to vector<128x256xf32>
    %96 = arith.mulf %94, %95 : vector<128x256xf32>
    %97 = vector.extract_strided_slice %53 {offsets = [128, 0], sizes = [128, 256], strides = [1, 1]} : vector<256x256xf32> to vector<128x256xf32>
    %98 = arith.addf %97, %24 : vector<128x256xf32>
    %99 = arith.truncf %98 : vector<128x256xf32> to vector<128x256xbf16>
    %cst_42 = arith.constant dense<0.000000e+00> : vector<128x256xf32>
    %100 = tpu.matmul %99, %45, %cst_42 {dimension_numbers = #tpu.dot_dimension_numbers<[1], [0], [0], [1], [0, 0, 1, 1], [], []>} : vector<128x256xbf16>, vector<256x256xbf16>, vector<128x256xf32> -> vector<128x256xf32>
    %101 = vector.broadcast %46 : vector<1x256xf32> to vector<128x256xf32>
    %102 = arith.addf %100, %101 : vector<128x256xf32>
    %103 = arith.mulf %102, %102 : vector<128x256xf32>
    %cst_43 = arith.constant dense<0.000000e+00> : vector<128xf32>
    %104 = vector.multi_reduction <add>, %103, %cst_43 [1] : vector<128x256xf32> to vector<128xf32>
    %105 = vector.shape_cast %104 : vector<128xf32> to vector<128x1xf32>
    %cst_44 = arith.constant 1.000000e-24 : f32
    %106 = vector.broadcast %cst_44 : f32 to vector<128x1xf32>
    %107 = arith.maximumf %105, %106 : vector<128x1xf32>
    %108 = math.rsqrt %107 : vector<128x1xf32>
    %109 = vector.broadcast %108 : vector<128x1xf32> to vector<128x256xf32>
    %110 = arith.mulf %102, %109 : vector<128x256xf32>
    %111 = vector.broadcast %0 : vector<128x1xf32> to vector<128x256xf32>
    %112 = arith.mulf %110, %111 : vector<128x256xf32>
    %cst_45 = arith.constant dense<0.000000e+00> : vector<256xf32>
    %113 = vector.multi_reduction <add>, %112, %cst_45 [0] : vector<128x256xf32> to vector<256xf32>
    %114 = vector.shape_cast %113 : vector<256xf32> to vector<1x256xf32>
    %115 = vector.broadcast %6 : f32 to vector<1x256xf32>
    %116 = arith.mulf %114, %115 : vector<1x256xf32>
    %117 = arith.mulf %110, %110 : vector<128x256xf32>
    %118 = vector.broadcast %0 : vector<128x1xf32> to vector<128x256xf32>
    %119 = arith.mulf %117, %118 : vector<128x256xf32>
    %cst_46 = arith.constant dense<0.000000e+00> : vector<256xf32>
    %120 = vector.multi_reduction <add>, %119, %cst_46 [0] : vector<128x256xf32> to vector<256xf32>
    %121 = vector.shape_cast %120 : vector<256xf32> to vector<1x256xf32>
    %122 = vector.broadcast %6 : f32 to vector<1x256xf32>
    %123 = arith.mulf %121, %122 : vector<1x256xf32>
    %124 = arith.mulf %116, %116 : vector<1x256xf32>
    %125 = arith.subf %123, %124 : vector<1x256xf32>
    %cst_47 = arith.constant 0.000000e+00 : f32
    %126 = vector.broadcast %cst_47 : f32 to vector<1x256xf32>
    %127 = arith.maximumf %125, %126 : vector<1x256xf32>
    %cst_48 = arith.constant 9.99999974E-6 : f32
    %128 = vector.broadcast %cst_48 : f32 to vector<1x256xf32>
    %129 = arith.addf %127, %128 : vector<1x256xf32>
    %130 = math.rsqrt %129 : vector<1x256xf32>
    %131 = arith.mulf %47, %130 : vector<1x256xf32>
    %132 = vector.broadcast %131 : vector<1x256xf32> to vector<128x256xf32>
    %133 = arith.mulf %110, %132 : vector<128x256xf32>
    %134 = arith.mulf %116, %131 : vector<1x256xf32>
    %135 = arith.subf %48, %134 : vector<1x256xf32>
    %136 = vector.broadcast %135 : vector<1x256xf32> to vector<128x256xf32>
    %137 = arith.addf %133, %136 : vector<128x256xf32>
    %138 = vector.broadcast %0 : vector<128x1xf32> to vector<128x256xf32>
    %139 = arith.mulf %137, %138 : vector<128x256xf32>
    %140 = arith.addf %96, %139 : vector<128x256xf32>
    %c512 = arith.constant 512 : index
    %c0_49 = arith.constant 0 : index
    %141 = vector.load %arg4[%c512, %c0_49] : memref<1408x256xbf16, #tpu.memory_space<vmem>>, vector<256x256xbf16>
    %142 = arith.truncf %140 : vector<128x256xf32> to vector<128x256xbf16>
    %cst_50 = arith.constant dense<0.000000e+00> : vector<128x256xf32>
    %143 = tpu.matmul %142, %141, %cst_50 {dimension_numbers = #tpu.dot_dimension_numbers<[1], [0], [0], [1], [0, 0, 1, 1], [], []>} : vector<128x256xbf16>, vector<256x256xbf16>, vector<128x256xf32> -> vector<128x256xf32>
    %c7 = arith.constant 7 : index
    %c0_51 = arith.constant 0 : index
    %144 = vector.load %arg5[%c7, %c0_51] : memref<16x256xf32, #tpu.memory_space<vmem>>, vector<1x256xf32>
    %145 = vector.broadcast %144 : vector<1x256xf32> to vector<128x256xf32>
    %146 = arith.addf %143, %145 : vector<128x256xf32>
    %147 = vector.broadcast %11 : vector<128x1xf32> to vector<128x256xf32>
    %148 = arith.mulf %146, %147 : vector<128x256xf32>
    %149 = arith.mulf %148, %148 : vector<128x256xf32>
    %cst_52 = arith.constant dense<0.000000e+00> : vector<128xf32>
    %150 = vector.multi_reduction <add>, %149, %cst_52 [1] : vector<128x256xf32> to vector<128xf32>
    %151 = vector.shape_cast %150 : vector<128xf32> to vector<128x1xf32>
    %cst_53 = arith.constant 1.000000e-16 : f32
    %152 = vector.broadcast %cst_53 : f32 to vector<128x1xf32>
    %153 = arith.maximumf %151, %152 : vector<128x1xf32>
    %154 = math.rsqrt %153 : vector<128x1xf32>
    %155 = vector.broadcast %154 : vector<128x1xf32> to vector<128x256xf32>
    %156 = arith.mulf %148, %155 : vector<128x256xf32>
    %157 = arith.truncf %156 : vector<128x256xf32> to vector<128x256xbf16>
    "tpu.trace_start"() <{level = 10 : i32, message = "nd,md->nm"}> : () -> ()
    %cst_54 = arith.constant dense<0.000000e+00> : vector<128x128xf32>
    %158 = tpu.matmul %157, %157, %cst_54 {dimension_numbers = #tpu.dot_dimension_numbers<[1], [1], [0], [0], [0, 0, 1, 0], [], []>} : vector<128x256xbf16>, vector<128x256xbf16>, vector<128x128xf32> -> vector<128x128xf32>
    %cst_55 = arith.constant 0.879999995 : f32
    "tpu.trace_stop"() : () -> ()
    %159 = vector.broadcast %cst_55 : f32 to vector<128x128xf32>
    %160 = arith.cmpf ogt, %158, %159 : vector<128x128xf32>
    %cst_56 = arith.constant 1.000000e+00 : f32
    %cst_57 = arith.constant 0.000000e+00 : f32
    %161 = vector.broadcast %cst_56 : f32 to vector<128x128xf32>
    %162 = vector.broadcast %cst_57 : f32 to vector<128x128xf32>
    %163 = arith.select %160, %161, %162 : vector<128x128xi1>, vector<128x128xf32>
    %c0_58 = arith.constant 0 : index
    %c0_59 = arith.constant 0 : index
    %164 = vector.load %arg8[%c0_58, %c0_59] : memref<128x128xf32, #tpu.memory_space<vmem>>, vector<128x128xf32>
    tpu.vector_store %arg8[%c0_58, %c0_59], %163 {strides = array<i32>} : memref<128x128xf32, #tpu.memory_space<vmem>>, vector<128x128xf32>,
    %c768 = arith.constant 768 : index
    %c0_60 = arith.constant 0 : index
    %165 = vector.load %arg4[%c768, %c0_60] : memref<1408x256xbf16, #tpu.memory_space<vmem>>, vector<256x128xbf16>
    %c8 = arith.constant 8 : index
    %c0_61 = arith.constant 0 : index
    %166 = vector.load %arg5[%c8, %c0_61] : memref<16x256xf32, #tpu.memory_space<vmem>>, vector<1x128xf32>
    %c9 = arith.constant 9 : index
    %c0_62 = arith.constant 0 : index
    %167 = vector.load %arg5[%c9, %c0_62] : memref<16x256xf32, #tpu.memory_space<vmem>>, vector<1x128xf32>
    %c10 = arith.constant 10 : index
    %c0_63 = arith.constant 0 : index
    %168 = vector.load %arg5[%c10, %c0_63] : memref<16x256xf32, #tpu.memory_space<vmem>>, vector<1x128xf32>
    %c1024 = arith.constant 1024 : index
    %c0_64 = arith.constant 0 : index
    %169 = vector.load %arg4[%c1024, %c0_64] : memref<1408x256xbf16, #tpu.memory_space<vmem>>, vector<256x128xbf16>
    %c11 = arith.constant 11 : index
    %c0_65 = arith.constant 0 : index
    %170 = vector.load %arg5[%c11, %c0_65] : memref<16x256xf32, #tpu.memory_space<vmem>>, vector<1x128xf32>
    %c12 = arith.constant 12 : index
    %c0_66 = arith.constant 0 : index
    %171 = vector.load %arg5[%c12, %c0_66] : memref<16x256xf32, #tpu.memory_space<vmem>>, vector<1x128xf32>
    %c13 = arith.constant 13 : index
    %c0_67 = arith.constant 0 : index
    %172 = vector.load %arg5[%c13, %c0_67] : memref<16x256xf32, #tpu.memory_space<vmem>>, vector<1x128xf32>
    %173 = arith.truncf %163 : vector<128x128xf32> to vector<128x128xbf16>
    %c128_68 = arith.constant 128 : index
    %c0_69 = arith.constant 0 : index
    %174 = vector.load %arg9[%c128_68, %c0_69] : memref<256x128xbf16, #tpu.memory_space<vmem>>, vector<128x128xbf16>
    tpu.vector_store %arg9[%c128_68, %c0_69], %173 {strides = array<i32>} : memref<256x128xbf16, #tpu.memory_space<vmem>>, vector<128x128xbf16>,
    %c0_70 = arith.constant 0 : index
    %c0_71 = arith.constant 0 : index
    %175 = vector.load %arg9[%c0_70, %c0_71] : memref<256x128xbf16, #tpu.memory_space<vmem>>, vector<256x128xbf16>
    %176 = arith.truncf %148 : vector<128x256xf32> to vector<128x256xbf16>
    %cst_72 = arith.constant dense<0.000000e+00> : vector<256x256xf32>
    %177 = tpu.matmul %175, %176, %cst_72 {dimension_numbers = #tpu.dot_dimension_numbers<[1], [0], [0], [1], [0, 0, 1, 1], [], []>} : vector<256x128xbf16>, vector<128x256xbf16>, vector<256x256xf32> -> vector<256x256xf32>
    %178 = vector.extract_strided_slice %177 {offsets = [0, 0], sizes = [128, 256], strides = [1, 1]} : vector<256x256xf32> to vector<128x256xf32>
    %179 = arith.addf %178, %148 : vector<128x256xf32>
    %180 = arith.truncf %179 : vector<128x256xf32> to vector<128x256xbf16>
    %cst_73 = arith.constant dense<0.000000e+00> : vector<128x128xf32>
    %181 = tpu.matmul %180, %165, %cst_73 {dimension_numbers = #tpu.dot_dimension_numbers<[1], [0], [0], [1], [0, 0, 1, 1], [], []>} : vector<128x256xbf16>, vector<256x128xbf16>, vector<128x128xf32> -> vector<128x128xf32>
    %182 = vector.broadcast %166 : vector<1x128xf32> to vector<128x128xf32>
    %183 = arith.addf %181, %182 : vector<128x128xf32>
    %184 = arith.mulf %183, %183 : vector<128x128xf32>
    %cst_74 = arith.constant dense<0.000000e+00> : vector<128xf32>
    %185 = vector.multi_reduction <add>, %184, %cst_74 [1] : vector<128x128xf32> to vector<128xf32>
    %186 = vector.shape_cast %185 : vector<128xf32> to vector<128x1xf32>
    %cst_75 = arith.constant 1.000000e-24 : f32
    %187 = vector.broadcast %cst_75 : f32 to vector<128x1xf32>
    %188 = arith.maximumf %186, %187 : vector<128x1xf32>
    %189 = math.rsqrt %188 : vector<128x1xf32>
    %190 = vector.broadcast %189 : vector<128x1xf32> to vector<128x128xf32>
    %191 = arith.mulf %183, %190 : vector<128x128xf32>
    %192 = vector.broadcast %0 : vector<128x1xf32> to vector<128x128xf32>
    %193 = arith.mulf %191, %192 : vector<128x128xf32>
    %cst_76 = arith.constant dense<0.000000e+00> : vector<128xf32>
    %194 = vector.multi_reduction <add>, %193, %cst_76 [0] : vector<128x128xf32> to vector<128xf32>
    %195 = vector.shape_cast %194 : vector<128xf32> to vector<1x128xf32>
    %196 = vector.broadcast %6 : f32 to vector<1x128xf32>
    %197 = arith.mulf %195, %196 : vector<1x128xf32>
    %198 = arith.mulf %191, %191 : vector<128x128xf32>
    %199 = vector.broadcast %0 : vector<128x1xf32> to vector<128x128xf32>
    %200 = arith.mulf %198, %199 : vector<128x128xf32>
    %cst_77 = arith.constant dense<0.000000e+00> : vector<128xf32>
    %201 = vector.multi_reduction <add>, %200, %cst_77 [0] : vector<128x128xf32> to vector<128xf32>
    %202 = vector.shape_cast %201 : vector<128xf32> to vector<1x128xf32>
    %203 = vector.broadcast %6 : f32 to vector<1x128xf32>
    %204 = arith.mulf %202, %203 : vector<1x128xf32>
    %205 = arith.mulf %197, %197 : vector<1x128xf32>
    %206 = arith.subf %204, %205 : vector<1x128xf32>
    %cst_78 = arith.constant 0.000000e+00 : f32
    %207 = vector.broadcast %cst_78 : f32 to vector<1x128xf32>
    %208 = arith.maximumf %206, %207 : vector<1x128xf32>
    %cst_79 = arith.constant 9.99999974E-6 : f32
    %209 = vector.broadcast %cst_79 : f32 to vector<1x128xf32>
    %210 = arith.addf %208, %209 : vector<1x128xf32>
    %211 = math.rsqrt %210 : vector<1x128xf32>
    %212 = arith.mulf %167, %211 : vector<1x128xf32>
    %213 = vector.broadcast %212 : vector<1x128xf32> to vector<128x128xf32>
    %214 = arith.mulf %191, %213 : vector<128x128xf32>
    %215 = arith.mulf %197, %212 : vector<1x128xf32>
    %216 = arith.subf %168, %215 : vector<1x128xf32>
    %217 = vector.broadcast %216 : vector<1x128xf32> to vector<128x128xf32>
    %218 = arith.addf %214, %217 : vector<128x128xf32>
    %219 = vector.broadcast %0 : vector<128x1xf32> to vector<128x128xf32>
    %220 = arith.mulf %218, %219 : vector<128x128xf32>
    %221 = vector.extract_strided_slice %177 {offsets = [128, 0], sizes = [128, 256], strides = [1, 1]} : vector<256x256xf32> to vector<128x256xf32>
    %222 = arith.addf %221, %148 : vector<128x256xf32>
    %223 = arith.truncf %222 : vector<128x256xf32> to vector<128x256xbf16>
    %cst_80 = arith.constant dense<0.000000e+00> : vector<128x128xf32>
    %224 = tpu.matmul %223, %169, %cst_80 {dimension_numbers = #tpu.dot_dimension_numbers<[1], [0], [0], [1], [0, 0, 1, 1], [], []>} : vector<128x256xbf16>, vector<256x128xbf16>, vector<128x128xf32> -> vector<128x128xf32>
    %225 = vector.broadcast %170 : vector<1x128xf32> to vector<128x128xf32>
    %226 = arith.addf %224, %225 : vector<128x128xf32>
    %227 = arith.mulf %226, %226 : vector<128x128xf32>
    %cst_81 = arith.constant dense<0.000000e+00> : vector<128xf32>
    %228 = vector.multi_reduction <add>, %227, %cst_81 [1] : vector<128x128xf32> to vector<128xf32>
    %229 = vector.shape_cast %228 : vector<128xf32> to vector<128x1xf32>
    %cst_82 = arith.constant 1.000000e-24 : f32
    %230 = vector.broadcast %cst_82 : f32 to vector<128x1xf32>
    %231 = arith.maximumf %229, %230 : vector<128x1xf32>
    %232 = math.rsqrt %231 : vector<128x1xf32>
    %233 = vector.broadcast %232 : vector<128x1xf32> to vector<128x128xf32>
    %234 = arith.mulf %226, %233 : vector<128x128xf32>
    %235 = vector.broadcast %0 : vector<128x1xf32> to vector<128x128xf32>
    %236 = arith.mulf %234, %235 : vector<128x128xf32>
    %cst_83 = arith.constant dense<0.000000e+00> : vector<128xf32>
    %237 = vector.multi_reduction <add>, %236, %cst_83 [0] : vector<128x128xf32> to vector<128xf32>
    %238 = vector.shape_cast %237 : vector<128xf32> to vector<1x128xf32>
    %239 = vector.broadcast %6 : f32 to vector<1x128xf32>
    %240 = arith.mulf %238, %239 : vector<1x128xf32>
    %241 = arith.mulf %234, %234 : vector<128x128xf32>
    %242 = vector.broadcast %0 : vector<128x1xf32> to vector<128x128xf32>
    %243 = arith.mulf %241, %242 : vector<128x128xf32>
    %cst_84 = arith.constant dense<0.000000e+00> : vector<128xf32>
    %244 = vector.multi_reduction <add>, %243, %cst_84 [0] : vector<128x128xf32> to vector<128xf32>
    %245 = vector.shape_cast %244 : vector<128xf32> to vector<1x128xf32>
    %246 = vector.broadcast %6 : f32 to vector<1x128xf32>
    %247 = arith.mulf %245, %246 : vector<1x128xf32>
    %248 = arith.mulf %240, %240 : vector<1x128xf32>
    %249 = arith.subf %247, %248 : vector<1x128xf32>
    %cst_85 = arith.constant 0.000000e+00 : f32
    %250 = vector.broadcast %cst_85 : f32 to vector<1x128xf32>
    %251 = arith.maximumf %249, %250 : vector<1x128xf32>
    %cst_86 = arith.constant 9.99999974E-6 : f32
    %252 = vector.broadcast %cst_86 : f32 to vector<1x128xf32>
    %253 = arith.addf %251, %252 : vector<1x128xf32>
    %254 = math.rsqrt %253 : vector<1x128xf32>
    %255 = arith.mulf %171, %254 : vector<1x128xf32>
    %256 = vector.broadcast %255 : vector<1x128xf32> to vector<128x128xf32>
    %257 = arith.mulf %234, %256 : vector<128x128xf32>
    %258 = arith.mulf %240, %255 : vector<1x128xf32>
    %259 = arith.subf %172, %258 : vector<1x128xf32>
    %260 = vector.broadcast %259 : vector<1x128xf32> to vector<128x128xf32>
    %261 = arith.addf %257, %260 : vector<128x128xf32>
    %262 = vector.broadcast %0 : vector<128x1xf32> to vector<128x128xf32>
    %263 = arith.mulf %261, %262 : vector<128x128xf32>
    %264 = arith.addf %220, %263 : vector<128x128xf32>
    %c1280 = arith.constant 1280 : index
    %c0_87 = arith.constant 0 : index
    %265 = vector.load %arg4[%c1280, %c0_87] : memref<1408x256xbf16, #tpu.memory_space<vmem>>, vector<128x128xbf16>
    %266 = arith.truncf %264 : vector<128x128xf32> to vector<128x128xbf16>
    %cst_88 = arith.constant dense<0.000000e+00> : vector<128x128xf32>
    %267 = tpu.matmul %266, %265, %cst_88 {dimension_numbers = #tpu.dot_dimension_numbers<[1], [0], [0], [1], [0, 0, 1, 1], [], []>} : vector<128x128xbf16>, vector<128x128xbf16>, vector<128x128xf32> -> vector<128x128xf32>
    %c14 = arith.constant 14 : index
    %c0_89 = arith.constant 0 : index
    %268 = vector.load %arg5[%c14, %c0_89] : memref<16x256xf32, #tpu.memory_space<vmem>>, vector<1x128xf32>
    %269 = vector.broadcast %268 : vector<1x128xf32> to vector<128x128xf32>
    %270 = arith.addf %267, %269 : vector<128x128xf32>
    %cst_90 = arith.constant 0.000000e+00 : f32
    %271 = vector.broadcast %cst_90 : f32 to vector<128x128xf32>
    %272 = arith.maximumf %270, %271 : vector<128x128xf32>
    %c0_91 = arith.constant 0 : index
    %c0_92 = arith.constant 0 : index
    %273 = vector.load %arg6[%c0_91, %c0_92] : memref<128x128xf32, #tpu.memory_space<vmem>>, vector<128x128xf32>
    tpu.vector_store %arg6[%c0_91, %c0_92], %272 {strides = array<i32>} : memref<128x128xf32, #tpu.memory_space<vmem>>, vector<128x128xf32>,
    return
  }
}

</mosaic_0001>

<llo_original>
// kernel: tpu_custom_call.1
$region0: #{tpu_custom_call.1}
  #allocation0 [shape = 'u32[]', space=smem, size = 0x4, offset = 0x4, fixed_abs, tag = 'smem constant byte address 0x4 - core index']
  #allocation1 [shape = 'u32[72,128]{1,0:T(1,128)}', space=vmem, size = 0x9000, scoped, tag = 'internal scratch']
  #allocation2 [shape = 'bf16[256,128]{1,0:T(8,128)(2,1)}', space=vmem, size = 0x10000, scoped, tag = 'scratch operand']
  %s0 = inlined_call_operand.vmem [shape: f32[128,128], index: 0, kind: input, shape index: {}]
  %s1 = inlined_call_operand.hbm [shape: bf16[128,128], index: 1, kind: input, shape index: {}]
  %s2 = inlined_call_operand.vmem [shape: f32[128,1], index: 2, kind: input, shape index: {}]
  %s3 = inlined_call_operand.hbm [shape: bf16[128,256], index: 3, kind: input, shape index: {}]
  %s4 = inlined_call_operand.hbm [shape: bf16[1408,256], index: 4, kind: input, shape index: {}]
  %s5 = inlined_call_operand.hbm [shape: f32[16,256], index: 5, kind: input, shape index: {}]
  %s6 = inlined_call_operand.hbm [shape: f32[128,128], index: 6, kind: output, shape index: {0}]
  %s7 = inlined_call_operand.hbm [shape: f32[128,128], index: 7, kind: output, shape index: {1}]
  %s8 = inlined_call_operand.hbm [shape: f32[128,128], index: 8, kind: output, shape index: {2}]
  %9 = xla_tuple %s6, %s7, %s8
  %s10 = sld [smem:[#allocation0]]
  $region66: #{tpu_custom_call.1} parent=0
    _
  %s12 = ssub.s32 1, %s10
  %s13 = scalar_select 0, %s12, %s10
  $region1: #{tpu_custom_call.1} parent=0
    #allocation3 [shape = 'u8[32768]{0}', space=vmem, size = 0x8000, scoped, tag = 'input window, operand 1, single buffered']
    #allocation4 [shape = 's32[1]{0}', space=sflag, size = 0x4, scoped, tag = 'scoped memory for tpu_custom_call.1']
    #allocation5 [shape = 's32[1]{0}', space=sflag, size = 0x4, scoped, tag = 'scoped memory for tpu_custom_call.1']
    #allocation6 [shape = 'u8[65536]{0}', space=vmem, size = 0x10000, scoped, tag = 'input window, operand 3, single buffered']
    #allocation7 [shape = 's32[1]{0}', space=sflag, size = 0x4, scoped, tag = 'scoped memory for tpu_custom_call.1']
    #allocation8 [shape = 'u8[720896]{0}', space=vmem, size = 0xb0000, scoped, tag = 'input window, operand 4, single buffered']
    #allocation9 [shape = 'u8[16384]{0}', space=vmem, size = 0x4000, scoped, tag = 'input window, operand 5, single buffered']
    #allocation10 [shape = 's32[1]{0}', space=sflag, size = 0x4, scoped, tag = 'scoped memory for tpu_custom_call.1']
    #allocation11 [shape = 'u8[65536]{0}', space=vmem, size = 0x10000, scoped, tag = 'output window, operand 0, single buffered']
    #allocation12 [shape = 'u8[65536]{0}', space=vmem, size = 0x10000, scoped, tag = 'output window, operand 1, single buffered']
    #allocation13 [shape = 's32[1]{0}', space=sflag, size = 0x4, scoped, tag = 'scoped memory for tpu_custom_call.1']
    #allocation14 [shape = 'u8[65536]{0}', space=vmem, size = 0x10000, scoped, tag = 'output window, operand 2, single buffered']
    %14 = vsyncpa [#allocation4], 0
    %15 = vsyncpa [#allocation7], 0
    %16 = vsyncpa [#allocation10], 0
    %17 = vsyncpa [#allocation5], 0
    %18 = vsyncpa [#allocation13], 0
    // Predicated region
    $region2: #{tpu_custom_call.1} parent=1 // pred_check
      _
    $region3: #{tpu_custom_call.1} parent=1 // pred_check_branch
      %20 = sbr.rel (0) target = $region5
    $region4: #{tpu_custom_call.1} parent=1 // pred_region
      _
    $region5: #{tpu_custom_call.1} parent=1 // pred_fallthru
      _
    // Predicated region
    $region6: #{tpu_custom_call.1} parent=1 // pred_check
      _
    $region7: #{tpu_custom_call.1} parent=1 // pred_check_branch
      %22 = sbr.rel (0) target = $region9
    $region8: #{tpu_custom_call.1} parent=1 // pred_region
      %24 = vsyncadd [#allocation4], 0
      %s25 = sshll.u32 %s1, 4
      %s26 = int_to_ptr.hbm [resolvable:$true] %s25
      %s27 = sshll.u32 [#allocation3], 4
      %s28 = int_to_ptr.vmem [resolvable:$true] %s27
      %33 = dma.hbm_to_vmem [thread:$0]  %s26, 1024, %s28, [#allocation4], 64, 64, 4
    $region9: #{tpu_custom_call.1} parent=1 // pred_fallthru
      _
    // Predicated region
    $region10: #{tpu_custom_call.1} parent=1 // pred_check
      _
    $region11: #{tpu_custom_call.1} parent=1 // pred_check_branch
      %35 = sbr.rel (0) target = $region13
    $region12: #{tpu_custom_call.1} parent=1 // pred_region
      _
    $region13: #{tpu_custom_call.1} parent=1 // pred_fallthru
      _
    // Predicated region
    $region14: #{tpu_custom_call.1} parent=1 // pred_check
      _
    $region15: #{tpu_custom_call.1} parent=1 // pred_check_branch
      %37 = sbr.rel (0) target = $region17
    $region16: #{tpu_custom_call.1} parent=1 // pred_region
      %39 = vsyncadd [#allocation7], 0
      %s40 = sshll.u32 %s3, 4
      %s41 = int_to_ptr.hbm [resolvable:$true] %s40
      %s42 = sshll.u32 [#allocation6], 4
      %s43 = int_to_ptr.vmem [resolvable:$true] %s42
      %48 = dma.hbm_to_vmem [thread:$0]  %s41, 2048, %s43, [#allocation7], 128, 128, 8
    $region17: #{tpu_custom_call.1} parent=1 // pred_fallthru
      _
    // Predicated region
    $region18: #{tpu_custom_call.1} parent=1 // pred_check
      _
    $region19: #{tpu_custom_call.1} parent=1 // pred_check_branch
      %50 = sbr.rel (0) target = $region21
    $region20: #{tpu_custom_call.1} parent=1 // pred_region
      %52 = vsyncadd [#allocation7], 0
      %s53 = sshll.u32 %s4, 4
      %s54 = int_to_ptr.hbm [resolvable:$true] %s53
      %s55 = sshll.u32 [#allocation8], 4
      %s56 = int_to_ptr.vmem [resolvable:$true] %s55
      %61 = dma.hbm_to_vmem [thread:$0]  %s54, 22528, %s56, [#allocation7], 128, 128, 8
    $region21: #{tpu_custom_call.1} parent=1 // pred_fallthru
      _
    // Predicated region
    $region22: #{tpu_custom_call.1} parent=1 // pred_check
      _
    $region23: #{tpu_custom_call.1} parent=1 // pred_check_branch
      %63 = sbr.rel (0) target = $region25
    $region24: #{tpu_custom_call.1} parent=1 // pred_region
      %65 = vsyncadd [#allocation10], 0
      %s66 = sshll.u32 %s5, 4
      %s67 = int_to_ptr.hbm [resolvable:$true] %s66
      %s68 = sshll.u32 [#allocation9], 4
      %s69 = int_to_ptr.vmem [resolvable:$true] %s68
      %74 = dma.hbm_to_vmem [thread:$0]  %s67, 512, %s69, [#allocation10], 256, 256, 16
    $region25: #{tpu_custom_call.1} parent=1 // pred_fallthru
      _
    // Predicated region
    $region26: #{tpu_custom_call.1} parent=1 // pred_check
      _
    $region27: #{tpu_custom_call.1} parent=1 // pred_check_branch
      %76 = sbr.rel (0) target = $region29
    $region28: #{tpu_custom_call.1} parent=1 // pred_region
      %78 = dma.done [#allocation4], 1024
    $region29: #{tpu_custom_call.1} parent=1 // pred_fallthru
      _
    // Predicated region
    $region30: #{tpu_custom_call.1} parent=1 // pred_check
      _
    $region31: #{tpu_custom_call.1} parent=1 // pred_check_branch
      %80 = sbr.rel (0) target = $region33
    $region32: #{tpu_custom_call.1} parent=1 // pred_region
      %82 = dma.done [#allocation7], 2048
    $region33: #{tpu_custom_call.1} parent=1 // pred_fallthru
      _
    // Predicated region
    $region34: #{tpu_custom_call.1} parent=1 // pred_check
      _
    $region35: #{tpu_custom_call.1} parent=1 // pred_check_branch
      %84 = sbr.rel (0) target = $region37
    $region36: #{tpu_custom_call.1} parent=1 // pred_region
      %86 = dma.done [#allocation7], 22528
    $region37: #{tpu_custom_call.1} parent=1 // pred_fallthru
      _
    // Predicated region
    $region38: #{tpu_custom_call.1} parent=1 // pred_check
      _
    $region39: #{tpu_custom_call.1} parent=1 // pred_check_branch
      %88 = sbr.rel (0) target = $region41
    $region40: #{tpu_custom_call.1} parent=1 // pred_region
      %90 = dma.done [#allocation10], 512
    $region41: #{tpu_custom_call.1} parent=1 // pred_fallthru
      _
    %v91 = vld [vmem:[%s2] sm:$0xff]
    %v92 = vld [vmem:[%s2 + $0x8] sm:$0xff]
    %v93 = vld [vmem:[%s2 + $0x10] sm:$0xff]
    %v94 = vld [vmem:[%s2 + $0x18] sm:$0xff]
    %v95 = vld [vmem:[%s2 + $0x20] sm:$0xff]
    %v96 = vld [vmem:[%s2 + $0x28] sm:$0xff]
    %v97 = vld [vmem:[%s2 + $0x30] sm:$0xff]
    %v98 = vld [vmem:[%s2 + $0x38] sm:$0xff]
    %v99 = vld [vmem:[%s2 + $0x40] sm:$0xff]
    %v100 = vld [vmem:[%s2 + $0x48] sm:$0xff]
    %v101 = vld [vmem:[%s2 + $0x50] sm:$0xff]
    %v102 = vld [vmem:[%s2 + $0x58] sm:$0xff]
    %v103 = vld [vmem:[%s2 + $0x60] sm:$0xff]
    %v104 = vld [vmem:[%s2 + $0x68] sm:$0xff]
    %v105 = vld [vmem:[%s2 + $0x70] sm:$0xff]
    %v106 = vld [vmem:[%s2 + $0x78] sm:$0xff]
    %vm107 = vcmask 7168
    %v108 = vsel %vm107, %v91, 0.0
    %v109 = vsel %vm107, %v92, 0.0
    %v110 = vadd.f32 %v108, %v109
    %v111 = vsel %vm107, %v93, 0.0
    %v112 = vadd.f32 %v110, %v111
    %v113 = vsel %vm107, %v94, 0.0
    %v114 = vadd.f32 %v112, %v113
    %v115 = vsel %vm107, %v95, 0.0
    %v116 = vadd.f32 %v114, %v115
    %v117 = vsel %vm107, %v96, 0.0
    %v118 = vadd.f32 %v116, %v117
    %v119 = vsel %vm107, %v97, 0.0
    %v120 = vadd.f32 %v118, %v119
    %v121 = vsel %vm107, %v98, 0.0
    %v122 = vadd.f32 %v120, %v121
    %v123 = vsel %vm107, %v99, 0.0
    %v124 = vadd.f32 %v122, %v123
    %v125 = vsel %vm107, %v100, 0.0
    %v126 = vadd.f32 %v124, %v125
    %v127 = vsel %vm107, %v101, 0.0
    %v128 = vadd.f32 %v126, %v127
    %v129 = vsel %vm107, %v102, 0.0
    %v130 = vadd.f32 %v128, %v129
    %v131 = vsel %vm107, %v103, 0.0
    %v132 = vadd.f32 %v130, %v131
    %v133 = vsel %vm107, %v104, 0.0
    %v134 = vadd.f32 %v132, %v133
    %v135 = vsel %vm107, %v105, 0.0
    %v136 = vadd.f32 %v134, %v135
    %v137 = vsel %vm107, %v106, 0.0
    %v138 = vadd.f32 %v136, %v137
    %139 = vadd.xlane.f32.xlu0 %v138
    %v140 = vpop.xlane.xlu0 %139
    %v141 = vrot.slane %v140, 4
    %v142 = vadd.f32 %v140, %v141
    %v143 = vrot.slane %v142, 2
    %v144 = vadd.f32 %v142, %v143
    %v145 = vrot.slane %v144, 1
    %v146 = vadd.f32 %v144, %v145
    %s147 = vtos %v146
    %s148 = smax.f32 %s147, 1.0
    %v149 = vstv %s148
    %v150 = vrcp.pop %v149
    %v151 = vmul.f32 %v149, %v150
    %v152 = vsub.f32 1.0, %v151
    %v153 = vmul.f32 %v150, %v152
    %v154 = vadd.f32 %v150, %v153
    %vm155 = vweird.f32 %v149
    %vm156 = vweird.f32 %v150
    %vm157 = vmor %vm155, %vm156
    %v158 = vsel %vm157, %v150, %v154
    %v159 = vand.u32 2147483647, %v149
    %vm160 = vcmp.eq.f32.partialorder %v159, 8.507059e+37
    %v161 = vand.u32 %v149, 2147483648
    %v162 = vor.u32 1.1754944e-38, %v161
    %v163 = vsel %vm160, %v162, %v158
    %s164 = vtos %v163
    %v165 = vlaneseq
    %v166 = vshrl.u32 %v165, 7
    %v167 = vadd.s32 %v166, 8
    %v168 = vadd.s32 %v166, 16
    %v169 = vadd.s32 %v166, 24
    %v170 = vadd.s32 %v166, 32
    %v171 = vadd.s32 %v166, 40
    %v172 = vadd.s32 %v166, 48
    %v173 = vadd.s32 %v166, 56
    %v174 = vadd.s32 %v166, 64
    %v175 = vadd.s32 %v166, 72
    %v176 = vadd.s32 %v166, 80
    %v177 = vadd.s32 %v166, 88
    %v178 = vadd.s32 %v166, 96
    %v179 = vadd.s32 %v166, 104
    %v180 = vadd.s32 %v166, 112
    %v181 = vadd.s32 %v166, 120
    %vm182 = vcmp.lt.s32.totalorder %v166, 50
    %vm183 = vcmp.lt.s32.totalorder %v167, 50
    %vm184 = vcmp.lt.s32.totalorder %v168, 50
    %vm185 = vcmp.lt.s32.totalorder %v169, 50
    %vm186 = vcmp.lt.s32.totalorder %v170, 50
    %vm187 = vcmp.lt.s32.totalorder %v171, 50
    %vm188 = vcmp.lt.s32.totalorder %v172, 50
    %vm189 = vcmp.lt.s32.totalorder %v173, 50
    %vm190 = vcmp.lt.s32.totalorder %v174, 50
    %vm191 = vcmp.lt.s32.totalorder %v175, 50
    %vm192 = vcmp.lt.s32.totalorder %v176, 50
    %vm193 = vcmp.lt.s32.totalorder %v177, 50
    %vm194 = vcmp.lt.s32.totalorder %v178, 50
    %vm195 = vcmp.lt.s32.totalorder %v179, 50
    %vm196 = vcmp.lt.s32.totalorder %v180, 50
    %vm197 = vcmp.lt.s32.totalorder %v181, 50
    %v198 = vsel %vm182, 1, 0
    %v199 = vsel %vm183, 1, 0
    %v200 = vsel %vm184, 1, 0
    %v201 = vsel %vm185, 1, 0
    %v202 = vsel %vm186, 1, 0
    %v203 = vsel %vm187, 1, 0
    %v204 = vsel %vm188, 1, 0
    %v205 = vsel %vm189, 1, 0
    %v206 = vsel %vm190, 1, 0
    %v207 = vsel %vm191, 1, 0
    %v208 = vsel %vm192, 1, 0
    %v209 = vsel %vm193, 1, 0
    %v210 = vsel %vm194, 1, 0
    %v211 = vsel %vm195, 1, 0
    %v212 = vsel %vm196, 1, 0
    %v213 = vsel %vm197, 1, 0
    %v214 = vcvt.s32.f32 %v198
    %v215 = vcvt.s32.f32 %v199
    %v216 = vcvt.s32.f32 %v200
    %v217 = vcvt.s32.f32 %v201
    %v218 = vcvt.s32.f32 %v202
    %v219 = vcvt.s32.f32 %v203
    %v220 = vcvt.s32.f32 %v204
    %v221 = vcvt.s32.f32 %v205
    %v222 = vcvt.s32.f32 %v206
    %v223 = vcvt.s32.f32 %v207
    %v224 = vcvt.s32.f32 %v208
    %v225 = vcvt.s32.f32 %v209
    %v226 = vcvt.s32.f32 %v210
    %v227 = vcvt.s32.f32 %v211
    %v228 = vcvt.s32.f32 %v212
    %v229 = vcvt.s32.f32 %v213
    %v230 = vld [vmem:[#allocation3] sm:$0xf]
    %v231 = vld [vmem:[#allocation3 + $0x4] sm:$0xf]
    %v232 = vld [vmem:[#allocation3 + $0x8] sm:$0xf]
    %v233 = vld [vmem:[#allocation3 + $0xc] sm:$0xf]
    %v234 = vld [vmem:[#allocation3 + $0x10] sm:$0xf]
    %v235 = vld [vmem:[#allocation3 + $0x14] sm:$0xf]
    %v236 = vld [vmem:[#allocation3 + $0x18] sm:$0xf]
    %v237 = vld [vmem:[#allocation3 + $0x1c] sm:$0xf]
    %v238 = vld [vmem:[#allocation3 + $0x20] sm:$0xf]
    %v239 = vld [vmem:[#allocation3 + $0x24] sm:$0xf]
    %v240 = vld [vmem:[#allocation3 + $0x28] sm:$0xf]
    %v241 = vld [vmem:[#allocation3 + $0x2c] sm:$0xf]
    %v242 = vld [vmem:[#allocation3 + $0x30] sm:$0xf]
    %v243 = vld [vmem:[#allocation3 + $0x34] sm:$0xf]
    %v244 = vld [vmem:[#allocation3 + $0x38] sm:$0xf]
    %v245 = vld [vmem:[#allocation3 + $0x3c] sm:$0xf]
    %246 = vst [vmem:[#allocation2] sm:$0xf] %v230
    %247 = vst [vmem:[#allocation2 + $0x4] sm:$0xf] %v231
    %248 = vst [vmem:[#allocation2 + $0x8] sm:$0xf] %v232
    %249 = vst [vmem:[#allocation2 + $0xc] sm:$0xf] %v233
    %250 = vst [vmem:[#allocation2 + $0x10] sm:$0xf] %v234
    %251 = vst [vmem:[#allocation2 + $0x14] sm:$0xf] %v235
    %252 = vst [vmem:[#allocation2 + $0x18] sm:$0xf] %v236
    %253 = vst [vmem:[#allocation2 + $0x1c] sm:$0xf] %v237
    %254 = vst [vmem:[#allocation2 + $0x20] sm:$0xf] %v238
    %255 = vst [vmem:[#allocation2 + $0x24] sm:$0xf] %v239
    %256 = vst [vmem:[#allocation2 + $0x28] sm:$0xf] %v240
    %257 = vst [vmem:[#allocation2 + $0x2c] sm:$0xf] %v241
    %258 = vst [vmem:[#allocation2 + $0x30] sm:$0xf] %v242
    %259 = vst [vmem:[#allocation2 + $0x34] sm:$0xf] %v243
    %260 = vst [vmem:[#allocation2 + $0x38] sm:$0xf] %v244
    %261 = vst [vmem:[#allocation2 + $0x3c] sm:$0xf] %v245
    %v262 = vld [vmem:[%s0] sm:$0xff]
    %v263 = vld [vmem:[%s0 + $0x8] sm:$0xff]
    %v264 = vld [vmem:[%s0 + $0x10] sm:$0xff]
    %v265 = vld [vmem:[%s0 + $0x18] sm:$0xff]
    %v266 = vld [vmem:[%s0 + $0x20] sm:$0xff]
    %v267 = vld [vmem:[%s0 + $0x28] sm:$0xff]
    %v268 = vld [vmem:[%s0 + $0x30] sm:$0xff]
    %v269 = vld [vmem:[%s0 + $0x38] sm:$0xff]
    %v270 = vld [vmem:[%s0 + $0x40] sm:$0xff]
    %v271 = vld [vmem:[%s0 + $0x48] sm:$0xff]
    %v272 = vld [vmem:[%s0 + $0x50] sm:$0xff]
    %v273 = vld [vmem:[%s0 + $0x58] sm:$0xff]
    %v274 = vld [vmem:[%s0 + $0x60] sm:$0xff]
    %v275 = vld [vmem:[%s0 + $0x68] sm:$0xff]
    %v276 = vld [vmem:[%s0 + $0x70] sm:$0xff]
    %v277 = vld [vmem:[%s0 + $0x78] sm:$0xff]
    %279 = vset.pattern.permute.xlu0 0
    %280 = vperm.xlu0 %279, %v91
    %v281 = vpop.permute.xlu0 %280
    %284 = vset.pattern.permute.xlu0 0
    %285 = vperm.xlu0 %284, %v92
    %v286 = vpop.permute.xlu0 %285
    %289 = vset.pattern.permute.xlu0 0
    %290 = vperm.xlu0 %289, %v93
    %v291 = vpop.permute.xlu0 %290
    %294 = vset.pattern.permute.xlu0 0
    %295 = vperm.xlu0 %294, %v94
    %v296 = vpop.permute.xlu0 %295
    %299 = vset.pattern.permute.xlu0 0
    %300 = vperm.xlu0 %299, %v95
    %v301 = vpop.permute.xlu0 %300
    %304 = vset.pattern.permute.xlu0 0
    %305 = vperm.xlu0 %304, %v96
    %v306 = vpop.permute.xlu0 %305
    %309 = vset.pattern.permute.xlu0 0
    %310 = vperm.xlu0 %309, %v97
    %v311 = vpop.permute.xlu0 %310
    %314 = vset.pattern.permute.xlu0 0
    %315 = vperm.xlu0 %314, %v98
    %v316 = vpop.permute.xlu0 %315
    %319 = vset.pattern.permute.xlu0 0
    %320 = vperm.xlu0 %319, %v99
    %v321 = vpop.permute.xlu0 %320
    %324 = vset.pattern.permute.xlu0 0
    %325 = vperm.xlu0 %324, %v100
    %v326 = vpop.permute.xlu0 %325
    %329 = vset.pattern.permute.xlu0 0
    %330 = vperm.xlu0 %329, %v101
    %v331 = vpop.permute.xlu0 %330
    %334 = vset.pattern.permute.xlu0 0
    %335 = vperm.xlu0 %334, %v102
    %v336 = vpop.permute.xlu0 %335
    %339 = vset.pattern.permute.xlu0 0
    %340 = vperm.xlu0 %339, %v103
    %v341 = vpop.permute.xlu0 %340
    %344 = vset.pattern.permute.xlu0 0
    %345 = vperm.xlu0 %344, %v104
    %v346 = vpop.permute.xlu0 %345
    %349 = vset.pattern.permute.xlu0 0
    %350 = vperm.xlu0 %349, %v105
    %v351 = vpop.permute.xlu0 %350
    %354 = vset.pattern.permute.xlu0 0
    %355 = vperm.xlu0 %354, %v106
    %v356 = vpop.permute.xlu0 %355
    %v358 = vmul.f32 %v281, %v262
    %v359 = vmul.f32 %v286, %v263
    %v360 = vmul.f32 %v291, %v264
    %v361 = vmul.f32 %v296, %v265
    %v362 = vmul.f32 %v301, %v266
    %v363 = vmul.f32 %v306, %v267
    %v364 = vmul.f32 %v311, %v268
    %v365 = vmul.f32 %v316, %v269
    %v366 = vmul.f32 %v321, %v270
    %v367 = vmul.f32 %v326, %v271
    %v368 = vmul.f32 %v331, %v272
    %v369 = vmul.f32 %v336, %v273
    %v370 = vmul.f32 %v341, %v274
    %v371 = vmul.f32 %v346, %v275
    %v372 = vmul.f32 %v351, %v276
    %v373 = vmul.f32 %v356, %v277
    %v374 = vld [vmem:[#allocation6] sm:$0xff]
    %v375 = vld [vmem:[#allocation6 + $0x8] sm:$0xff]
    %v376 = vld [vmem:[#allocation6 + $0x10] sm:$0xff]
    %v377 = vld [vmem:[#allocation6 + $0x18] sm:$0xff]
    %v378 = vld [vmem:[#allocation6 + $0x20] sm:$0xff]
    %v379 = vld [vmem:[#allocation6 + $0x28] sm:$0xff]
    %v380 = vld [vmem:[#allocation6 + $0x30] sm:$0xff]
    %v381 = vld [vmem:[#allocation6 + $0x38] sm:$0xff]
    %v382 = vld [vmem:[#allocation6 + $0x40] sm:$0xff]
    %v383 = vld [vmem:[#allocation6 + $0x48] sm:$0xff]
    %v384 = vld [vmem:[#allocation6 + $0x50] sm:$0xff]
    %v385 = vld [vmem:[#allocation6 + $0x58] sm:$0xff]
    %v386 = vld [vmem:[#allocation6 + $0x60] sm:$0xff]
    %v387 = vld [vmem:[#allocation6 + $0x68] sm:$0xff]
    %v388 = vld [vmem:[#allocation6 + $0x70] sm:$0xff]
    %v389 = vld [vmem:[#allocation6 + $0x78] sm:$0xff]
    %v390 = vpack.c.bf16 %v359, %v358
    %v391 = vpack.c.bf16 %v361, %v360
    %v392 = vpack.c.bf16 %v363, %v362
    %v393 = vpack.c.bf16 %v365, %v364
    %v394 = vpack.c.bf16 %v367, %v366
    %v395 = vpack.c.bf16 %v369, %v368
    %v396 = vpack.c.bf16 %v371, %v370
    %v397 = vpack.c.bf16 %v373, %v372
    %v398 = vld [vmem:[#allocation9] ss:$8 sm:$0x3]
    %v400 = vperm.slane %v398, 0
    %v401 = vperm.slane %v398, 1
    %v420 = vunpack.c.l.b16 %v374
    %v421 = vunpack.c.h.b16 %v374
    %v422 = vunpack.c.l.b16 %v375
    %v423 = vunpack.c.h.b16 %v375
    %v424 = vunpack.c.l.b16 %v376
    %v425 = vunpack.c.h.b16 %v376
    %v426 = vunpack.c.l.b16 %v377
    %v427 = vunpack.c.h.b16 %v377
    %v428 = vunpack.c.l.b16 %v378
    %v429 = vunpack.c.h.b16 %v378
    %v430 = vunpack.c.l.b16 %v379
    %v431 = vunpack.c.h.b16 %v379
    %v432 = vunpack.c.l.b16 %v380
    %v433 = vunpack.c.h.b16 %v380
    %v434 = vunpack.c.l.b16 %v381
    %v435 = vunpack.c.h.b16 %v381
    %v436 = vunpack.c.l.b16 %v382
    %v437 = vunpack.c.h.b16 %v382
    %v438 = vunpack.c.l.b16 %v383
    %v439 = vunpack.c.h.b16 %v383
    %v440 = vunpack.c.l.b16 %v384
    %v441 = vunpack.c.h.b16 %v384
    %v442 = vunpack.c.l.b16 %v385
    %v443 = vunpack.c.h.b16 %v385
    %v444 = vunpack.c.l.b16 %v386
    %v445 = vunpack.c.h.b16 %v386
    %v446 = vunpack.c.l.b16 %v387
    %v447 = vunpack.c.h.b16 %v387
    %v448 = vunpack.c.l.b16 %v388
    %v449 = vunpack.c.h.b16 %v388
    %v450 = vunpack.c.l.b16 %v389
    %v451 = vunpack.c.h.b16 %v389
    %v452 = vpack.c.b16 %v422, %v420
    %v453 = vpack.c.b16 %v423, %v421
    %v454 = vpack.c.b16 %v426, %v424
    %v455 = vpack.c.b16 %v427, %v425
    %v456 = vpack.c.b16 %v430, %v428
    %v457 = vpack.c.b16 %v431, %v429
    %v458 = vpack.c.b16 %v434, %v432
    %v459 = vpack.c.b16 %v435, %v433
    %v460 = vpack.c.b16 %v438, %v436
    %v461 = vpack.c.b16 %v439, %v437
    %v462 = vpack.c.b16 %v442, %v440
    %v463 = vpack.c.b16 %v443, %v441
    %v464 = vpack.c.b16 %v446, %v444
    %v465 = vpack.c.b16 %v447, %v445
    %v466 = vpack.c.b16 %v450, %v448
    %v467 = vpack.c.b16 %v451, %v449
    %484 = vmatpush.bf16.msra.mxu0 %v466
    %485 = vmatpush.bf16.msra.mxu0 %v464
    %486 = vmatpush.bf16.msra.mxu0 %v462
    %487 = vmatpush.bf16.msra.mxu0 %v460
    %488 = vmatpush.bf16.msra.mxu0 %v458
    %489 = vmatpush.bf16.msra.mxu0 %v456
    %490 = vmatpush.bf16.msra.mxu0 %v454
    %491 = vmatpush.bf16.msra.mxu0 %v452
    %492 = vmatmul.bf16.gmra.mxu0 %v390
    %v493 = vpop.f32.mrf.mxu0
    %v494 = vadd.f32 %v400, %v493
    %v495 = vpop.f32.mrf.mxu0
    %v496 = vadd.f32 %v400, %v495
    %497 = vmatmul.bf16.gmra.mxu0 %v391
    %v498 = vpop.f32.mrf.mxu0
    %v499 = vadd.f32 %v400, %v498
    %v500 = vpop.f32.mrf.mxu0
    %v501 = vadd.f32 %v400, %v500
    %502 = vmatmul.bf16.gmra.mxu0 %v392
    %v503 = vpop.f32.mrf.mxu0
    %v504 = vadd.f32 %v400, %v503
    %v505 = vpop.f32.mrf.mxu0
    %v506 = vadd.f32 %v400, %v505
    %507 = vmatmul.bf16.gmra.mxu0 %v393
    %v508 = vpop.f32.mrf.mxu0
    %v509 = vadd.f32 %v400, %v508
    %v510 = vpop.f32.mrf.mxu0
    %v511 = vadd.f32 %v400, %v510
    %512 = vmatmul.bf16.gmra.mxu0 %v394
    %v513 = vpop.f32.mrf.mxu0
    %v514 = vadd.f32 %v400, %v513
    %v515 = vpop.f32.mrf.mxu0
    %v516 = vadd.f32 %v400, %v515
    %517 = vmatmul.bf16.gmra.mxu0 %v395
    %v518 = vpop.f32.mrf.mxu0
    %v519 = vadd.f32 %v400, %v518
    %v520 = vpop.f32.mrf.mxu0
    %v521 = vadd.f32 %v400, %v520
    %522 = vmatmul.bf16.gmra.mxu0 %v396
    %v523 = vpop.f32.mrf.mxu0
    %v524 = vadd.f32 %v400, %v523
    %v525 = vpop.f32.mrf.mxu0
    %v526 = vadd.f32 %v400, %v525
    %527 = vmatmul.bf16.gmra.mxu0 %v397
    %v528 = vpop.f32.mrf.mxu0
    %v529 = vadd.f32 %v400, %v528
    %v530 = vpop.f32.mrf.mxu0
    %v531 = vadd.f32 %v400, %v530
    %532 = vdwg.mxu0
    %533 = vmatpush.bf16.msra.mxu0 %v467
    %534 = vmatpush.bf16.msra.mxu0 %v465
    %535 = vmatpush.bf16.msra.mxu0 %v463
    %536 = vmatpush.bf16.msra.mxu0 %v461
    %537 = vmatpush.bf16.msra.mxu0 %v459
    %538 = vmatpush.bf16.msra.mxu0 %v457
    %539 = vmatpush.bf16.msra.mxu0 %v455
    %540 = vmatpush.bf16.msra.mxu0 %v453
    %541 = vmatmul.bf16.gmra.mxu0 %v390
    %v542 = vpop.f32.mrf.mxu0
    %v543 = vadd.f32 %v401, %v542
    %v544 = vpop.f32.mrf.mxu0
    %v545 = vadd.f32 %v401, %v544
    %546 = vmatmul.bf16.gmra.mxu0 %v391
    %v547 = vpop.f32.mrf.mxu0
    %v548 = vadd.f32 %v401, %v547
    %v549 = vpop.f32.mrf.mxu0
    %v550 = vadd.f32 %v401, %v549
    %551 = vmatmul.bf16.gmra.mxu0 %v392
    %v552 = vpop.f32.mrf.mxu0
    %v553 = vadd.f32 %v401, %v552
    %v554 = vpop.f32.mrf.mxu0
    %v555 = vadd.f32 %v401, %v554
    %556 = vmatmul.bf16.gmra.mxu0 %v393
    %v557 = vpop.f32.mrf.mxu0
    %v558 = vadd.f32 %v401, %v557
    %v559 = vpop.f32.mrf.mxu0
    %v560 = vadd.f32 %v401, %v559
    %561 = vmatmul.bf16.gmra.mxu0 %v394
    %v562 = vpop.f32.mrf.mxu0
    %v563 = vadd.f32 %v401, %v562
    %v564 = vpop.f32.mrf.mxu0
    %v565 = vadd.f32 %v401, %v564
    %566 = vmatmul.bf16.gmra.mxu0 %v395
    %v567 = vpop.f32.mrf.mxu0
    %v568 = vadd.f32 %v401, %v567
    %v569 = vpop.f32.mrf.mxu0
    %v570 = vadd.f32 %v401, %v569
    %571 = vmatmul.bf16.gmra.mxu0 %v396
    %v572 = vpop.f32.mrf.mxu0
    %v573 = vadd.f32 %v401, %v572
    %v574 = vpop.f32.mrf.mxu0
    %v575 = vadd.f32 %v401, %v574
    %576 = vmatmul.bf16.gmra.mxu0 %v397
    %v577 = vpop.f32.mrf.mxu0
    %v578 = vadd.f32 %v401, %v577
    %v579 = vpop.f32.mrf.mxu0
    %v580 = vadd.f32 %v401, %v579
    %581 = vdwg.mxu0
    %v582 = vmul.f32 %v494, %v214
    %v583 = vmul.f32 %v543, %v214
    %v584 = vmul.f32 %v496, %v215
    %v585 = vmul.f32 %v545, %v215
    %v586 = vmul.f32 %v499, %v216
    %v587 = vmul.f32 %v548, %v216
    %v588 = vmul.f32 %v501, %v217
    %v589 = vmul.f32 %v550, %v217
    %v590 = vmul.f32 %v504, %v218
    %v591 = vmul.f32 %v553, %v218
    %v592 = vmul.f32 %v506, %v219
    %v593 = vmul.f32 %v555, %v219
    %v594 = vmul.f32 %v509, %v220
    %v595 = vmul.f32 %v558, %v220
    %v596 = vmul.f32 %v511, %v221
    %v597 = vmul.f32 %v560, %v221
    %v598 = vmul.f32 %v514, %v222
    %v599 = vmul.f32 %v563, %v222
    %v600 = vmul.f32 %v516, %v223
    %v601 = vmul.f32 %v565, %v223
    %v602 = vmul.f32 %v519, %v224
    %v603 = vmul.f32 %v568, %v224
    %v604 = vmul.f32 %v521, %v225
    %v605 = vmul.f32 %v570, %v225
    %v606 = vmul.f32 %v524, %v226
    %v607 = vmul.f32 %v573, %v226
    %v608 = vmul.f32 %v526, %v227
    %v609 = vmul.f32 %v575, %v227
    %v610 = vmul.f32 %v529, %v228
    %v611 = vmul.f32 %v578, %v228
    %v612 = vmul.f32 %v531, %v229
    %v613 = vmul.f32 %v580, %v229
    %v614 = vmul.f32 %v582, %v582
    %v615 = vmul.f32 %v583, %v583
    %v616 = vmul.f32 %v584, %v584
    %v617 = vmul.f32 %v585, %v585
    %v618 = vmul.f32 %v586, %v586
    %v619 = vmul.f32 %v587, %v587
    %v620 = vmul.f32 %v588, %v588
    %v621 = vmul.f32 %v589, %v589
    %v622 = vmul.f32 %v590, %v590
    %v623 = vmul.f32 %v591, %v591
    %v624 = vmul.f32 %v592, %v592
    %v625 = vmul.f32 %v593, %v593
    %v626 = vmul.f32 %v594, %v594
    %v627 = vmul.f32 %v595, %v595
    %v628 = vmul.f32 %v596, %v596
    %v629 = vmul.f32 %v597, %v597
    %v630 = vmul.f32 %v598, %v598
    %v631 = vmul.f32 %v599, %v599
    %v632 = vmul.f32 %v600, %v600
    %v633 = vmul.f32 %v601, %v601
    %v634 = vmul.f32 %v602, %v602
    %v635 = vmul.f32 %v603, %v603
    %v636 = vmul.f32 %v604, %v604
    %v637 = vmul.f32 %v605, %v605
    %v638 = vmul.f32 %v606, %v606
    %v639 = vmul.f32 %v607, %v607
    %v640 = vmul.f32 %v608, %v608
    %v641 = vmul.f32 %v609, %v609
    %v642 = vmul.f32 %v610, %v610
    %v643 = vmul.f32 %v611, %v611
    %v644 = vmul.f32 %v612, %v612
    %v645 = vmul.f32 %v613, %v613
    %v646 = vadd.f32 %v614, %v615
    %647 = vadd.xlane.f32.xlu0 %v646
    %v648 = vpop.xlane.xlu0 %647
    %v649 = vadd.f32 %v616, %v617
    %650 = vadd.xlane.f32.xlu0 %v649
    %v651 = vpop.xlane.xlu0 %650
    %v652 = vadd.f32 %v618, %v619
    %653 = vadd.xlane.f32.xlu0 %v652
    %v654 = vpop.xlane.xlu0 %653
    %v655 = vadd.f32 %v620, %v621
    %656 = vadd.xlane.f32.xlu0 %v655
    %v657 = vpop.xlane.xlu0 %656
    %v658 = vadd.f32 %v622, %v623
    %659 = vadd.xlane.f32.xlu0 %v658
    %v660 = vpop.xlane.xlu0 %659
    %v661 = vadd.f32 %v624, %v625
    %662 = vadd.xlane.f32.xlu0 %v661
    %v663 = vpop.xlane.xlu0 %662
    %v664 = vadd.f32 %v626, %v627
    %665 = vadd.xlane.f32.xlu0 %v664
    %v666 = vpop.xlane.xlu0 %665
    %v667 = vadd.f32 %v628, %v629
    %668 = vadd.xlane.f32.xlu0 %v667
    %v669 = vpop.xlane.xlu0 %668
    %v670 = vadd.f32 %v630, %v631
    %671 = vadd.xlane.f32.xlu0 %v670
    %v672 = vpop.xlane.xlu0 %671
    %v673 = vadd.f32 %v632, %v633
    %674 = vadd.xlane.f32.xlu0 %v673
    %v675 = vpop.xlane.xlu0 %674
    %v676 = vadd.f32 %v634, %v635
    %677 = vadd.xlane.f32.xlu0 %v676
    %v678 = vpop.xlane.xlu0 %677
    %v679 = vadd.f32 %v636, %v637
    %680 = vadd.xlane.f32.xlu0 %v679
    %v681 = vpop.xlane.xlu0 %680
    %v682 = vadd.f32 %v638, %v639
    %683 = vadd.xlane.f32.xlu0 %v682
    %v684 = vpop.xlane.xlu0 %683
    %v685 = vadd.f32 %v640, %v641
    %686 = vadd.xlane.f32.xlu0 %v685
    %v687 = vpop.xlane.xlu0 %686
    %v688 = vadd.f32 %v642, %v643
    %689 = vadd.xlane.f32.xlu0 %v688
    %v690 = vpop.xlane.xlu0 %689
    %v691 = vadd.f32 %v644, %v645
    %692 = vadd.xlane.f32.xlu0 %v691
    %v693 = vpop.xlane.xlu0 %692
    %v694 = vmax.f32 %v648, 1e-16
    %v695 = vmax.f32 %v651, 1e-16
    %v696 = vmax.f32 %v654, 1e-16
    %v697 = vmax.f32 %v657, 1e-16
    %v698 = vmax.f32 %v660, 1e-16
    %v699 = vmax.f32 %v663, 1e-16
    %v700 = vmax.f32 %v666, 1e-16
    %v701 = vmax.f32 %v669, 1e-16
    %v702 = vmax.f32 %v672, 1e-16
    %v703 = vmax.f32 %v675, 1e-16
    %v704 = vmax.f32 %v678, 1e-16
    %v705 = vmax.f32 %v681, 1e-16
    %v706 = vmax.f32 %v684, 1e-16
    %v707 = vmax.f32 %v687, 1e-16
    %v708 = vmax.f32 %v690, 1e-16
    %v709 = vmax.f32 %v693, 1e-16
    %v710 = vrsqrt.pop %v694
    %v711 = vmul.f32 %v710, %v694
    %v712 = vmul.f32 %v711, %v710
    %v713 = vmul.f32 0.5, %v712
    %v714 = vsub.f32 1.5, %v713
    %v715 = vmul.f32 %v710, %v714
    %vm716 = vweird.f32 %v694
    %vm717 = vweird.f32 %v710
    %vm718 = vmor %vm716, %vm717
    %v719 = vsel %vm718, %v710, %v715
    %v720 = vrsqrt.pop %v695
    %v721 = vmul.f32 %v720, %v695
    %v722 = vmul.f32 %v721, %v720
    %v723 = vmul.f32 0.5, %v722
    %v724 = vsub.f32 1.5, %v723
    %v725 = vmul.f32 %v720, %v724
    %vm726 = vweird.f32 %v695
    %vm727 = vweird.f32 %v720
    %vm728 = vmor %vm726, %vm727
    %v729 = vsel %vm728, %v720, %v725
    %v730 = vrsqrt.pop %v696
    %v731 = vmul.f32 %v730, %v696
    %v732 = vmul.f32 %v731, %v730
    %v733 = vmul.f32 0.5, %v732
    %v734 = vsub.f32 1.5, %v733
    %v735 = vmul.f32 %v730, %v734
    %vm736 = vweird.f32 %v696
    %vm737 = vweird.f32 %v730
    %vm738 = vmor %vm736, %vm737
    %v739 = vsel %vm738, %v730, %v735
    %v740 = vrsqrt.pop %v697
    %v741 = vmul.f32 %v740, %v697
    %v742 = vmul.f32 %v741, %v740
    %v743 = vmul.f32 0.5, %v742
    %v744 = vsub.f32 1.5, %v743
    %v745 = vmul.f32 %v740, %v744
    %vm746 = vweird.f32 %v697
    %vm747 = vweird.f32 %v740
    %vm748 = vmor %vm746, %vm747
    %v749 = vsel %vm748, %v740, %v745
    %v750 = vrsqrt.pop %v698
    %v751 = vmul.f32 %v750, %v698
    %v752 = vmul.f32 %v751, %v750
    %v753 = vmul.f32 0.5, %v752
    %v754 = vsub.f32 1.5, %v753
    %v755 = vmul.f32 %v750, %v754
    %vm756 = vweird.f32 %v698
    %vm757 = vweird.f32 %v750
    %vm758 = vmor %vm756, %vm757
    %v759 = vsel %vm758, %v750, %v755
    %v760 = vrsqrt.pop %v699
    %v761 = vmul.f32 %v760, %v699
    %v762 = vmul.f32 %v761, %v760
    %v763 = vmul.f32 0.5, %v762
    %v764 = vsub.f32 1.5, %v763
    %v765 = vmul.f32 %v760, %v764
    %vm766 = vweird.f32 %v699
    %vm767 = vweird.f32 %v760
    %vm768 = vmor %vm766, %vm767
    %v769 = vsel %vm768, %v760, %v765
    %v770 = vrsqrt.pop %v700
    %v771 = vmul.f32 %v770, %v700
    %v772 = vmul.f32 %v771, %v770
    %v773 = vmul.f32 0.5, %v772
    %v774 = vsub.f32 1.5, %v773
    %v775 = vmul.f32 %v770, %v774
    %vm776 = vweird.f32 %v700
    %vm777 = vweird.f32 %v770
    %vm778 = vmor %vm776, %vm777
    %v779 = vsel %vm778, %v770, %v775
    %v780 = vrsqrt.pop %v701
    %v781 = vmul.f32 %v780, %v701
    %v782 = vmul.f32 %v781, %v780
    %v783 = vmul.f32 0.5, %v782
    %v784 = vsub.f32 1.5, %v783
    %v785 = vmul.f32 %v780, %v784
    %vm786 = vweird.f32 %v701
    %vm787 = vweird.f32 %v780
    %vm788 = vmor %vm786, %vm787
    %v789 = vsel %vm788, %v780, %v785
    %v790 = vrsqrt.pop %v702
    %v791 = vmul.f32 %v790, %v702
    %v792 = vmul.f32 %v791, %v790
    %v793 = vmul.f32 0.5, %v792
    %v794 = vsub.f32 1.5, %v793
    %v795 = vmul.f32 %v790, %v794
    %vm796 = vweird.f32 %v702
    %vm797 = vweird.f32 %v790
    %vm798 = vmor %vm796, %vm797
    %v799 = vsel %vm798, %v790, %v795
    %v800 = vrsqrt.pop %v703
    %v801 = vmul.f32 %v800, %v703
    %v802 = vmul.f32 %v801, %v800
    %v803 = vmul.f32 0.5, %v802
    %v804 = vsub.f32 1.5, %v803
    %v805 = vmul.f32 %v800, %v804
    %vm806 = vweird.f32 %v703
    %vm807 = vweird.f32 %v800
    %vm808 = vmor %vm806, %vm807
    %v809 = vsel %vm808, %v800, %v805
    %v810 = vrsqrt.pop %v704
    %v811 = vmul.f32 %v810, %v704
    %v812 = vmul.f32 %v811, %v810
    %v813 = vmul.f32 0.5, %v812
    %v814 = vsub.f32 1.5, %v813
    %v815 = vmul.f32 %v810, %v814
    %vm816 = vweird.f32 %v704
    %vm817 = vweird.f32 %v810
    %vm818 = vmor %vm816, %vm817
    %v819 = vsel %vm818, %v810, %v815
    %v820 = vrsqrt.pop %v705
    %v821 = vmul.f32 %v820, %v705
    %v822 = vmul.f32 %v821, %v820
    %v823 = vmul.f32 0.5, %v822
    %v824 = vsub.f32 1.5, %v823
    %v825 = vmul.f32 %v820, %v824
    %vm826 = vweird.f32 %v705
    %vm827 = vweird.f32 %v820
    %vm828 = vmor %vm826, %vm827
    %v829 = vsel %vm828, %v820, %v825
    %v830 = vrsqrt.pop %v706
    %v831 = vmul.f32 %v830, %v706
    %v832 = vmul.f32 %v831, %v830
    %v833 = vmul.f32 0.5, %v832
    %v834 = vsub.f32 1.5, %v833
    %v835 = vmul.f32 %v830, %v834
    %vm836 = vweird.f32 %v706
    %vm837 = vweird.f32 %v830
    %vm838 = vmor %vm836, %vm837
    %v839 = vsel %vm838, %v830, %v835
    %v840 = vrsqrt.pop %v707
    %v841 = vmul.f32 %v840, %v707
    %v842 = vmul.f32 %v841, %v840
    %v843 = vmul.f32 0.5, %v842
    %v844 = vsub.f32 1.5, %v843
    %v845 = vmul.f32 %v840, %v844
    %vm846 = vweird.f32 %v707
    %vm847 = vweird.f32 %v840
    %vm848 = vmor %vm846, %vm847
    %v849 = vsel %vm848, %v840, %v845
    %v850 = vrsqrt.pop %v708
    %v851 = vmul.f32 %v850, %v708
    %v852 = vmul.f32 %v851, %v850
    %v853 = vmul.f32 0.5, %v852
    %v854 = vsub.f32 1.5, %v853
    %v855 = vmul.f32 %v850, %v854
    %vm856 = vweird.f32 %v708
    %vm857 = vweird.f32 %v850
    %vm858 = vmor %vm856, %vm857
    %v859 = vsel %vm858, %v850, %v855
    %v860 = vrsqrt.pop %v709
    %v861 = vmul.f32 %v860, %v709
    %v862 = vmul.f32 %v861, %v860
    %v863 = vmul.f32 0.5, %v862
    %v864 = vsub.f32 1.5, %v863
    %v865 = vmul.f32 %v860, %v864
    %vm866 = vweird.f32 %v709
    %vm867 = vweird.f32 %v860
    %vm868 = vmor %vm866, %vm867
    %v869 = vsel %vm868, %v860, %v865
    %v870 = vmul.f32 %v582, %v719
    %v871 = vmul.f32 %v583, %v719
    %v872 = vmul.f32 %v584, %v729
    %v873 = vmul.f32 %v585, %v729
    %v874 = vmul.f32 %v586, %v739
    %v875 = vmul.f32 %v587, %v739
    %v876 = vmul.f32 %v588, %v749
    %v877 = vmul.f32 %v589, %v749
    %v878 = vmul.f32 %v590, %v759
    %v879 = vmul.f32 %v591, %v759
    %v880 = vmul.f32 %v592, %v769
    %v881 = vmul.f32 %v593, %v769
    %v882 = vmul.f32 %v594, %v779
    %v883 = vmul.f32 %v595, %v779
    %v884 = vmul.f32 %v596, %v789
    %v885 = vmul.f32 %v597, %v789
    %v886 = vmul.f32 %v598, %v799
    %v887 = vmul.f32 %v599, %v799
    %v888 = vmul.f32 %v600, %v809
    %v889 = vmul.f32 %v601, %v809
    %v890 = vmul.f32 %v602, %v819
    %v891 = vmul.f32 %v603, %v819
    %v892 = vmul.f32 %v604, %v829
    %v893 = vmul.f32 %v605, %v829
    %v894 = vmul.f32 %v606, %v839
    %v895 = vmul.f32 %v607, %v839
    %v896 = vmul.f32 %v608, %v849
    %v897 = vmul.f32 %v609, %v849
    %v898 = vmul.f32 %v610, %v859
    %v899 = vmul.f32 %v611, %v859
    %v900 = vmul.f32 %v612, %v869
    %v901 = vmul.f32 %v613, %v869
    %v902 = vpack.c.bf16 %v872, %v870
    %v903 = vpack.c.bf16 %v873, %v871
    %v904 = vpack.c.bf16 %v876, %v874
    %v905 = vpack.c.bf16 %v877, %v875
    %v906 = vpack.c.bf16 %v880, %v878
    %v907 = vpack.c.bf16 %v881, %v879
    %v908 = vpack.c.bf16 %v884, %v882
    %v909 = vpack.c.bf16 %v885, %v883
    %v910 = vpack.c.bf16 %v888, %v886
    %v911 = vpack.c.bf16 %v889, %v887
    %v912 = vpack.c.bf16 %v892, %v890
    %v913 = vpack.c.bf16 %v893, %v891
    %v914 = vpack.c.bf16 %v896, %v894
    %v915 = vpack.c.bf16 %v897, %v895
    %v916 = vpack.c.bf16 %v900, %v898
    %v917 = vpack.c.bf16 %v901, %v899
    %918 = vmatpush.bf16.xpose.msra.mxu0 %v916
    %919 = vmatpush.bf16.xpose.msra.mxu0 %v914
    %920 = vmatpush.bf16.xpose.msra.mxu0 %v912
    %921 = vmatpush.bf16.xpose.msra.mxu0 %v910
    %922 = vmatpush.bf16.xpose.msra.mxu0 %v908
    %923 = vmatpush.bf16.xpose.msra.mxu0 %v906
    %924 = vmatpush.bf16.xpose.msra.mxu0 %v904
    %925 = vmatpush.bf16.xpose.msra.mxu0 %v902
    %926 = vmatmul.bf16.gmra.mxu0 %v902
    %v927 = vpop.f32.mrf.mxu0
    %v928 = vadd.f32 0.0, %v927
    %v929 = vpop.f32.mrf.mxu0
    %v930 = vadd.f32 0.0, %v929
    %931 = vmatmul.bf16.gmra.mxu0 %v904
    %v932 = vpop.f32.mrf.mxu0
    %v933 = vadd.f32 0.0, %v932
    %v934 = vpop.f32.mrf.mxu0
    %v935 = vadd.f32 0.0, %v934
    %936 = vmatmul.bf16.gmra.mxu0 %v906
    %v937 = vpop.f32.mrf.mxu0
    %v938 = vadd.f32 0.0, %v937
    %v939 = vpop.f32.mrf.mxu0
    %v940 = vadd.f32 0.0, %v939
    %941 = vmatmul.bf16.gmra.mxu0 %v908
    %v942 = vpop.f32.mrf.mxu0
    %v943 = vadd.f32 0.0, %v942
    %v944 = vpop.f32.mrf.mxu0
    %v945 = vadd.f32 0.0, %v944
    %946 = vmatmul.bf16.gmra.mxu0 %v910
    %v947 = vpop.f32.mrf.mxu0
    %v948 = vadd.f32 0.0, %v947
    %v949 = vpop.f32.mrf.mxu0
    %v950 = vadd.f32 0.0, %v949
    %951 = vmatmul.bf16.gmra.mxu0 %v912
    %v952 = vpop.f32.mrf.mxu0
    %v953 = vadd.f32 0.0, %v952
    %v954 = vpop.f32.mrf.mxu0
    %v955 = vadd.f32 0.0, %v954
    %956 = vmatmul.bf16.gmra.mxu0 %v914
    %v957 = vpop.f32.mrf.mxu0
    %v958 = vadd.f32 0.0, %v957
    %v959 = vpop.f32.mrf.mxu0
    %v960 = vadd.f32 0.0, %v959
    %961 = vmatmul.bf16.gmra.mxu0 %v916
    %v962 = vpop.f32.mrf.mxu0
    %v963 = vadd.f32 0.0, %v962
    %v964 = vpop.f32.mrf.mxu0
    %v965 = vadd.f32 0.0, %v964
    %966 = vdwg.mxu0
    %967 = vmatpush.bf16.xpose.msra.mxu0 %v917
    %968 = vmatpush.bf16.xpose.msra.mxu0 %v915
    %969 = vmatpush.bf16.xpose.msra.mxu0 %v913
    %970 = vmatpush.bf16.xpose.msra.mxu0 %v911
    %971 = vmatpush.bf16.xpose.msra.mxu0 %v909
    %972 = vmatpush.bf16.xpose.msra.mxu0 %v907
    %973 = vmatpush.bf16.xpose.msra.mxu0 %v905
    %974 = vmatpush.bf16.xpose.msra.mxu0 %v903
    %975 = vmatmul.bf16.gmra.mxu0 %v903
    %v976 = vpop.f32.mrf.mxu0
    %v977 = vadd.f32 %v928, %v976
    %v978 = vpop.f32.mrf.mxu0
    %v979 = vadd.f32 %v930, %v978
    %980 = vmatmul.bf16.gmra.mxu0 %v905
    %v981 = vpop.f32.mrf.mxu0
    %v982 = vadd.f32 %v933, %v981
    %v983 = vpop.f32.mrf.mxu0
    %v984 = vadd.f32 %v935, %v983
    %985 = vmatmul.bf16.gmra.mxu0 %v907
    %v986 = vpop.f32.mrf.mxu0
    %v987 = vadd.f32 %v938, %v986
    %v988 = vpop.f32.mrf.mxu0
    %v989 = vadd.f32 %v940, %v988
    %990 = vmatmul.bf16.gmra.mxu0 %v909
    %v991 = vpop.f32.mrf.mxu0
    %v992 = vadd.f32 %v943, %v991
    %v993 = vpop.f32.mrf.mxu0
    %v994 = vadd.f32 %v945, %v993
    %995 = vmatmul.bf16.gmra.mxu0 %v911
    %v996 = vpop.f32.mrf.mxu0
    %v997 = vadd.f32 %v948, %v996
    %v998 = vpop.f32.mrf.mxu0
    %v999 = vadd.f32 %v950, %v998
    %1000 = vmatmul.bf16.gmra.mxu0 %v913
    %v1001 = vpop.f32.mrf.mxu0
    %v1002 = vadd.f32 %v953, %v1001
    %v1003 = vpop.f32.mrf.mxu0
    %v1004 = vadd.f32 %v955, %v1003
    %1005 = vmatmul.bf16.gmra.mxu0 %v915
    %v1006 = vpop.f32.mrf.mxu0
    %v1007 = vadd.f32 %v958, %v1006
    %v1008 = vpop.f32.mrf.mxu0
    %v1009 = vadd.f32 %v960, %v1008
    %1010 = vmatmul.bf16.gmra.mxu0 %v917
    %v1011 = vpop.f32.mrf.mxu0
    %v1012 = vadd.f32 %v963, %v1011
    %v1013 = vpop.f32.mrf.mxu0
    %v1014 = vadd.f32 %v965, %v1013
    %1015 = vdwg.mxu0
    %vm1016 = vcmp.gt.f32.partialorder %v977, 0.88
    %vm1017 = vcmp.gt.f32.partialorder %v979, 0.88
    %vm1018 = vcmp.gt.f32.partialorder %v982, 0.88
    %vm1019 = vcmp.gt.f32.partialorder %v984, 0.88
    %vm1020 = vcmp.gt.f32.partialorder %v987, 0.88
    %vm1021 = vcmp.gt.f32.partialorder %v989, 0.88
    %vm1022 = vcmp.gt.f32.partialorder %v992, 0.88
    %vm1023 = vcmp.gt.f32.partialorder %v994, 0.88
    %vm1024 = vcmp.gt.f32.partialorder %v997, 0.88
    %vm1025 = vcmp.gt.f32.partialorder %v999, 0.88
    %vm1026 = vcmp.gt.f32.partialorder %v1002, 0.88
    %vm1027 = vcmp.gt.f32.partialorder %v1004, 0.88
    %vm1028 = vcmp.gt.f32.partialorder %v1007, 0.88
    %vm1029 = vcmp.gt.f32.partialorder %v1009, 0.88
    %vm1030 = vcmp.gt.f32.partialorder %v1012, 0.88
    %vm1031 = vcmp.gt.f32.partialorder %v1014, 0.88
    %v1032 = vsel %vm1016, 1.0, 0.0
    %v1033 = vsel %vm1017, 1.0, 0.0
    %v1034 = vsel %vm1018, 1.0, 0.0
    %v1035 = vsel %vm1019, 1.0, 0.0
    %v1036 = vsel %vm1020, 1.0, 0.0
    %v1037 = vsel %vm1021, 1.0, 0.0
    %v1038 = vsel %vm1022, 1.0, 0.0
    %v1039 = vsel %vm1023, 1.0, 0.0
    %v1040 = vsel %vm1024, 1.0, 0.0
    %v1041 = vsel %vm1025, 1.0, 0.0
    %v1042 = vsel %vm1026, 1.0, 0.0
    %v1043 = vsel %vm1027, 1.0, 0.0
    %v1044 = vsel %vm1028, 1.0, 0.0
    %v1045 = vsel %vm1029, 1.0, 0.0
    %v1046 = vsel %vm1030, 1.0, 0.0
    %v1047 = vsel %vm1031, 1.0, 0.0
    %1048 = vst [vmem:[#allocation12] sm:$0xff] %v1032
    %1049 = vst [vmem:[#allocation12 + $0x8] sm:$0xff] %v1033
    %1050 = vst [vmem:[#allocation12 + $0x10] sm:$0xff] %v1034
    %1051 = vst [vmem:[#allocation12 + $0x18] sm:$0xff] %v1035
    %1052 = vst [vmem:[#allocation12 + $0x20] sm:$0xff] %v1036
    %1053 = vst [vmem:[#allocation12 + $0x28] sm:$0xff] %v1037
    %1054 = vst [vmem:[#allocation12 + $0x30] sm:$0xff] %v1038
    %1055 = vst [vmem:[#allocation12 + $0x38] sm:$0xff] %v1039
    %1056 = vst [vmem:[#allocation12 + $0x40] sm:$0xff] %v1040
    %1057 = vst [vmem:[#allocation12 + $0x48] sm:$0xff] %v1041
    %1058 = vst [vmem:[#allocation12 + $0x50] sm:$0xff] %v1042
    %1059 = vst [vmem:[#allocation12 + $0x58] sm:$0xff] %v1043
    %1060 = vst [vmem:[#allocation12 + $0x60] sm:$0xff] %v1044
    %1061 = vst [vmem:[#allocation12 + $0x68] sm:$0xff] %v1045
    %1062 = vst [vmem:[#allocation12 + $0x70] sm:$0xff] %v1046
    %1063 = vst [vmem:[#allocation12 + $0x78] sm:$0xff] %v1047
    %v1064 = vld [vmem:[#allocation8] sm:$0xff]
    %v1065 = vld [vmem:[#allocation8 + $0x8] sm:$0xff]
    %v1066 = vld [vmem:[#allocation8 + $0x10] sm:$0xff]
    %v1067 = vld [vmem:[#allocation8 + $0x18] sm:$0xff]
    %v1068 = vld [vmem:[#allocation8 + $0x20] sm:$0xff]
    %v1069 = vld [vmem:[#allocation8 + $0x28] sm:$0xff]
    %v1070 = vld [vmem:[#allocation8 + $0x30] sm:$0xff]
    %v1071 = vld [vmem:[#allocation8 + $0x38] sm:$0xff]
    %v1072 = vld [vmem:[#allocation8 + $0x40] sm:$0xff]
    %v1073 = vld [vmem:[#allocation8 + $0x48] sm:$0xff]
    %v1074 = vld [vmem:[#allocation8 + $0x50] sm:$0xff]
    %v1075 = vld [vmem:[#allocation8 + $0x58] sm:$0xff]
    %v1076 = vld [vmem:[#allocation8 + $0x60] sm:$0xff]
    %v1077 = vld [vmem:[#allocation8 + $0x68] sm:$0xff]
    %v1078 = vld [vmem:[#allocation8 + $0x70] sm:$0xff]
    %v1079 = vld [vmem:[#allocation8 + $0x78] sm:$0xff]
    %v1080 = vld [vmem:[#allocation8 + $0x80] sm:$0xff]
    %v1081 = vld [vmem:[#allocation8 + $0x88] sm:$0xff]
    %v1082 = vld [vmem:[#allocation8 + $0x90] sm:$0xff]
    %v1083 = vld [vmem:[#allocation8 + $0x98] sm:$0xff]
    %v1084 = vld [vmem:[#allocation8 + $0xa0] sm:$0xff]
    %v1085 = vld [vmem:[#allocation8 + $0xa8] sm:$0xff]
    %v1086 = vld [vmem:[#allocation8 + $0xb0] sm:$0xff]
    %v1087 = vld [vmem:[#allocation8 + $0xb8] sm:$0xff]
    %v1088 = vld [vmem:[#allocation8 + $0xc0] sm:$0xff]
    %v1089 = vld [vmem:[#allocation8 + $0xc8] sm:$0xff]
    %v1090 = vld [vmem:[#allocation8 + $0xd0] sm:$0xff]
    %v1091 = vld [vmem:[#allocation8 + $0xd8] sm:$0xff]
    %v1092 = vld [vmem:[#allocation8 + $0xe0] sm:$0xff]
    %v1093 = vld [vmem:[#allocation8 + $0xe8] sm:$0xff]
    %v1094 = vld [vmem:[#allocation8 + $0xf0] sm:$0xff]
    %v1095 = vld [vmem:[#allocation8 + $0xf8] sm:$0xff]
    %s1096 = scalar_lea.vmem [#allocation9], 1
    %v1097 = vld [vmem:[%s1096] ss:$8 sm:$0x3]
    %s1098 = scalar_lea.vmem [#allocation9], 2
    %v1099 = vld [vmem:[%s1098] ss:$8 sm:$0x3]
    %s1100 = scalar_lea.vmem [#allocation9], 3
    %v1101 = vld [vmem:[%s1100] ss:$8 sm:$0x3]
    %v1102 = vld [vmem:[#allocation8 + $0x100] sm:$0xff]
    %v1103 = vld [vmem:[#allocation8 + $0x108] sm:$0xff]
    %v1104 = vld [vmem:[#allocation8 + $0x110] sm:$0xff]
    %v1105 = vld [vmem:[#allocation8 + $0x118] sm:$0xff]
    %v1106 = vld [vmem:[#allocation8 + $0x120] sm:$0xff]
    %v1107 = vld [vmem:[#allocation8 + $0x128] sm:$0xff]
    %v1108 = vld [vmem:[#allocation8 + $0x130] sm:$0xff]
    %v1109 = vld [vmem:[#allocation8 + $0x138] sm:$0xff]
    %v1110 = vld [vmem:[#allocation8 + $0x140] sm:$0xff]
    %v1111 = vld [vmem:[#allocation8 + $0x148] sm:$0xff]
    %v1112 = vld [vmem:[#allocation8 + $0x150] sm:$0xff]
    %v1113 = vld [vmem:[#allocation8 + $0x158] sm:$0xff]
    %v1114 = vld [vmem:[#allocation8 + $0x160] sm:$0xff]
    %v1115 = vld [vmem:[#allocation8 + $0x168] sm:$0xff]
    %v1116 = vld [vmem:[#allocation8 + $0x170] sm:$0xff]
    %v1117 = vld [vmem:[#allocation8 + $0x178] sm:$0xff]
    %v1118 = vld [vmem:[#allocation8 + $0x180] sm:$0xff]
    %v1119 = vld [vmem:[#allocation8 + $0x188] sm:$0xff]
    %v1120 = vld [vmem:[#allocation8 + $0x190] sm:$0xff]
    %v1121 = vld [vmem:[#allocation8 + $0x198] sm:$0xff]
    %v1122 = vld [vmem:[#allocation8 + $0x1a0] sm:$0xff]
    %v1123 = vld [vmem:[#allocation8 + $0x1a8] sm:$0xff]
    %v1124 = vld [vmem:[#allocation8 + $0x1b0] sm:$0xff]
    %v1125 = vld [vmem:[#allocation8 + $0x1b8] sm:$0xff]
    %v1126 = vld [vmem:[#allocation8 + $0x1c0] sm:$0xff]
    %v1127 = vld [vmem:[#allocation8 + $0x1c8] sm:$0xff]
    %v1128 = vld [vmem:[#allocation8 + $0x1d0] sm:$0xff]
    %v1129 = vld [vmem:[#allocation8 + $0x1d8] sm:$0xff]
    %v1130 = vld [vmem:[#allocation8 + $0x1e0] sm:$0xff]
    %v1131 = vld [vmem:[#allocation8 + $0x1e8] sm:$0xff]
    %v1132 = vld [vmem:[#allocation8 + $0x1f0] sm:$0xff]
    %v1133 = vld [vmem:[#allocation8 + $0x1f8] sm:$0xff]
    %s1134 = scalar_lea.vmem [#allocation9], 4
    %v1135 = vld [vmem:[%s1134] ss:$8 sm:$0x3]
    %s1136 = scalar_lea.vmem [#allocation9], 5
    %v1137 = vld [vmem:[%s1136] ss:$8 sm:$0x3]
    %s1138 = scalar_lea.vmem [#allocation9], 6
    %v1139 = vld [vmem:[%s1138] ss:$8 sm:$0x3]
    %v1140 = vpack.c.bf16 %v1032, %v1032
    %v1141 = vpack.c.bf16 %v1033, %v1033
    %v1142 = vpack.c.bf16 %v1034, %v1034
    %v1143 = vpack.c.bf16 %v1035, %v1035
    %v1144 = vpack.c.bf16 %v1036, %v1036
    %v1145 = vpack.c.bf16 %v1037, %v1037
    %v1146 = vpack.c.bf16 %v1038, %v1038
    %v1147 = vpack.c.bf16 %v1039, %v1039
    %v1148 = vpack.c.bf16 %v1040, %v1040
    %v1149 = vpack.c.bf16 %v1041, %v1041
    %v1150 = vpack.c.bf16 %v1042, %v1042
    %v1151 = vpack.c.bf16 %v1043, %v1043
    %v1152 = vpack.c.bf16 %v1044, %v1044
    %v1153 = vpack.c.bf16 %v1045, %v1045
    %v1154 = vpack.c.bf16 %v1046, %v1046
    %v1155 = vpack.c.bf16 %v1047, %v1047
    %1156 = vst [vmem:[#allocation2 + $0x40] sm:$0xf] %v1140
    %1157 = vst [vmem:[#allocation2 + $0x44] sm:$0xf] %v1141
    %1158 = vst [vmem:[#allocation2 + $0x48] sm:$0xf] %v1142
    %1159 = vst [vmem:[#allocation2 + $0x4c] sm:$0xf] %v1143
    %1160 = vst [vmem:[#allocation2 + $0x50] sm:$0xf] %v1144
    %1161 = vst [vmem:[#allocation2 + $0x54] sm:$0xf] %v1145
    %1162 = vst [vmem:[#allocation2 + $0x58] sm:$0xf] %v1146
    %1163 = vst [vmem:[#allocation2 + $0x5c] sm:$0xf] %v1147
    %1164 = vst [vmem:[#allocation2 + $0x60] sm:$0xf] %v1148
    %1165 = vst [vmem:[#allocation2 + $0x64] sm:$0xf] %v1149
    %1166 = vst [vmem:[#allocation2 + $0x68] sm:$0xf] %v1150
    %1167 = vst [vmem:[#allocation2 + $0x6c] sm:$0xf] %v1151
    %1168 = vst [vmem:[#allocation2 + $0x70] sm:$0xf] %v1152
    %1169 = vst [vmem:[#allocation2 + $0x74] sm:$0xf] %v1153
    %1170 = vst [vmem:[#allocation2 + $0x78] sm:$0xf] %v1154
    %1171 = vst [vmem:[#allocation2 + $0x7c] sm:$0xf] %v1155
    %v1172 = vld [vmem:[#allocation2] sm:$0xf]
    %v1173 = vld [vmem:[#allocation2 + $0x4] sm:$0xf]
    %v1174 = vld [vmem:[#allocation2 + $0x8] sm:$0xf]
    %v1175 = vld [vmem:[#allocation2 + $0xc] sm:$0xf]
    %v1176 = vld [vmem:[#allocation2 + $0x10] sm:$0xf]
    %v1177 = vld [vmem:[#allocation2 + $0x14] sm:$0xf]
    %v1178 = vld [vmem:[#allocation2 + $0x18] sm:$0xf]
    %v1179 = vld [vmem:[#allocation2 + $0x1c] sm:$0xf]
    %v1180 = vld [vmem:[#allocation2 + $0x20] sm:$0xf]
    %v1181 = vld [vmem:[#allocation2 + $0x24] sm:$0xf]
    %v1182 = vld [vmem:[#allocation2 + $0x28] sm:$0xf]
    %v1183 = vld [vmem:[#allocation2 + $0x2c] sm:$0xf]
    %v1184 = vld [vmem:[#allocation2 + $0x30] sm:$0xf]
    %v1185 = vld [vmem:[#allocation2 + $0x34] sm:$0xf]
    %v1186 = vld [vmem:[#allocation2 + $0x38] sm:$0xf]
    %v1187 = vld [vmem:[#allocation2 + $0x3c] sm:$0xf]
    %v1188 = vld [vmem:[#allocation2 + $0x40] sm:$0xf]
    %v1189 = vld [vmem:[#allocation2 + $0x44] sm:$0xf]
    %v1190 = vld [vmem:[#allocation2 + $0x48] sm:$0xf]
    %v1191 = vld [vmem:[#allocation2 + $0x4c] sm:$0xf]
    %v1192 = vld [vmem:[#allocation2 + $0x50] sm:$0xf]
    %v1193 = vld [vmem:[#allocation2 + $0x54] sm:$0xf]
    %v1194 = vld [vmem:[#allocation2 + $0x58] sm:$0xf]
    %v1195 = vld [vmem:[#allocation2 + $0x5c] sm:$0xf]
    %v1196 = vld [vmem:[#allocation2 + $0x60] sm:$0xf]
    %v1197 = vld [vmem:[#allocation2 + $0x64] sm:$0xf]
    %v1198 = vld [vmem:[#allocation2 + $0x68] sm:$0xf]
    %v1199 = vld [vmem:[#allocation2 + $0x6c] sm:$0xf]
    %v1200 = vld [vmem:[#allocation2 + $0x70] sm:$0xf]
    %v1201 = vld [vmem:[#allocation2 + $0x74] sm:$0xf]
    %v1202 = vld [vmem:[#allocation2 + $0x78] sm:$0xf]
    %v1203 = vld [vmem:[#allocation2 + $0x7c] sm:$0xf]
    %v1204 = vpack.c.bf16 %v584, %v582
    %v1205 = vpack.c.bf16 %v585, %v583
    %v1206 = vpack.c.bf16 %v588, %v586
    %v1207 = vpack.c.bf16 %v589, %v587
    %v1208 = vpack.c.bf16 %v592, %v590
    %v1209 = vpack.c.bf16 %v593, %v591
    %v1210 = vpack.c.bf16 %v596, %v594
    %v1211 = vpack.c.bf16 %v597, %v595
    %v1212 = vpack.c.bf16 %v600, %v598
    %v1213 = vpack.c.bf16 %v601, %v599
    %v1214 = vpack.c.bf16 %v604, %v602
    %v1215 = vpack.c.bf16 %v605, %v603
    %v1216 = vpack.c.bf16 %v608, %v606
    %v1217 = vpack.c.bf16 %v609, %v607
    %v1218 = vpack.c.bf16 %v612, %v610
    %v1219 = vpack.c.bf16 %v613, %v611
    %v1252 = vunpack.c.l.b16 %v1172
    %v1253 = vunpack.c.l.b16 %v1173
    %v1254 = vunpack.c.l.b16 %v1174
    %v1255 = vunpack.c.l.b16 %v1175
    %v1256 = vunpack.c.l.b16 %v1176
    %v1257 = vunpack.c.l.b16 %v1177
    %v1258 = vunpack.c.l.b16 %v1178
    %v1259 = vunpack.c.l.b16 %v1179
    %v1260 = vunpack.c.l.b16 %v1180
    %v1261 = vunpack.c.l.b16 %v1181
    %v1262 = vunpack.c.l.b16 %v1182
    %v1263 = vunpack.c.l.b16 %v1183
    %v1264 = vunpack.c.l.b16 %v1184
    %v1265 = vunpack.c.l.b16 %v1185
    %v1266 = vunpack.c.l.b16 %v1186
    %v1267 = vunpack.c.l.b16 %v1187
    %v1268 = vunpack.c.l.b16 %v1188
    %v1269 = vunpack.c.l.b16 %v1189
    %v1270 = vunpack.c.l.b16 %v1190
    %v1271 = vunpack.c.l.b16 %v1191
    %v1272 = vunpack.c.l.b16 %v1192
    %v1273 = vunpack.c.l.b16 %v1193
    %v1274 = vunpack.c.l.b16 %v1194
    %v1275 = vunpack.c.l.b16 %v1195
    %v1276 = vunpack.c.l.b16 %v1196
    %v1277 = vunpack.c.l.b16 %v1197
    %v1278 = vunpack.c.l.b16 %v1198
    %v1279 = vunpack.c.l.b16 %v1199
    %v1280 = vunpack.c.l.b16 %v1200
    %v1281 = vunpack.c.l.b16 %v1201
    %v1282 = vunpack.c.l.b16 %v1202
    %v1283 = vunpack.c.l.b16 %v1203
    %v1284 = vpack.c.b16 %v1253, %v1252
    %v1285 = vpack.c.b16 %v1255, %v1254
    %v1286 = vpack.c.b16 %v1257, %v1256
    %v1287 = vpack.c.b16 %v1259, %v1258
    %v1288 = vpack.c.b16 %v1261, %v1260
    %v1289 = vpack.c.b16 %v1263, %v1262
    %v1290 = vpack.c.b16 %v1265, %v1264
    %v1291 = vpack.c.b16 %v1267, %v1266
    %v1292 = vpack.c.b16 %v1269, %v1268
    %v1293 = vpack.c.b16 %v1271, %v1270
    %v1294 = vpack.c.b16 %v1273, %v1272
    %v1295 = vpack.c.b16 %v1275, %v1274
    %v1296 = vpack.c.b16 %v1277, %v1276
    %v1297 = vpack.c.b16 %v1279, %v1278
    %v1298 = vpack.c.b16 %v1281, %v1280
    %v1299 = vpack.c.b16 %v1283, %v1282
    %1316 = vmatpush.bf16.msra.mxu0 %v1218
    %1317 = vmatpush.bf16.msra.mxu0 %v1216
    %1318 = vmatpush.bf16.msra.mxu0 %v1214
    %1319 = vmatpush.bf16.msra.mxu0 %v1212
    %1320 = vmatpush.bf16.msra.mxu0 %v1210
    %1321 = vmatpush.bf16.msra.mxu0 %v1208
    %1322 = vmatpush.bf16.msra.mxu0 %v1206
    %1323 = vmatpush.bf16.msra.mxu0 %v1204
    %1324 = vmatmul.bf16.gmra.mxu0 %v1284
    %v1325 = vpop.f32.mrf.mxu0
    %v1326 = vadd.f32 0.0, %v1325
    %v1327 = vpop.f32.mrf.mxu0
    %v1328 = vadd.f32 0.0, %v1327
    %1329 = vmatmul.bf16.gmra.mxu0 %v1285
    %v1330 = vpop.f32.mrf.mxu0
    %v1331 = vadd.f32 0.0, %v1330
    %v1332 = vpop.f32.mrf.mxu0
    %v1333 = vadd.f32 0.0, %v1332
    %1334 = vmatmul.bf16.gmra.mxu0 %v1286
    %v1335 = vpop.f32.mrf.mxu0
    %v1336 = vadd.f32 0.0, %v1335
    %v1337 = vpop.f32.mrf.mxu0
    %v1338 = vadd.f32 0.0, %v1337
    %1339 = vmatmul.bf16.gmra.mxu0 %v1287
    %v1340 = vpop.f32.mrf.mxu0
    %v1341 = vadd.f32 0.0, %v1340
    %v1342 = vpop.f32.mrf.mxu0
    %v1343 = vadd.f32 0.0, %v1342
    %1344 = vmatmul.bf16.gmra.mxu0 %v1288
    %v1345 = vpop.f32.mrf.mxu0
    %v1346 = vadd.f32 0.0, %v1345
    %v1347 = vpop.f32.mrf.mxu0
    %v1348 = vadd.f32 0.0, %v1347
    %1349 = vmatmul.bf16.gmra.mxu0 %v1289
    %v1350 = vpop.f32.mrf.mxu0
    %v1351 = vadd.f32 0.0, %v1350
    %v1352 = vpop.f32.mrf.mxu0
    %v1353 = vadd.f32 0.0, %v1352
    %1354 = vmatmul.bf16.gmra.mxu0 %v1290
    %v1355 = vpop.f32.mrf.mxu0
    %v1356 = vadd.f32 0.0, %v1355
    %v1357 = vpop.f32.mrf.mxu0
    %v1358 = vadd.f32 0.0, %v1357
    %1359 = vmatmul.bf16.gmra.mxu0 %v1291
    %v1360 = vpop.f32.mrf.mxu0
    %v1361 = vadd.f32 0.0, %v1360
    %v1362 = vpop.f32.mrf.mxu0
    %v1363 = vadd.f32 0.0, %v1362
    %1364 = vmatmul.bf16.gmra.mxu0 %v1292
    %v1365 = vpop.f32.mrf.mxu0
    %v1366 = vadd.f32 0.0, %v1365
    %v1367 = vpop.f32.mrf.mxu0
    %v1368 = vadd.f32 0.0, %v1367
    %1369 = vmatmul.bf16.gmra.mxu0 %v1293
    %v1370 = vpop.f32.mrf.mxu0
    %v1371 = vadd.f32 0.0, %v1370
    %v1372 = vpop.f32.mrf.mxu0
    %v1373 = vadd.f32 0.0, %v1372
    %1374 = vmatmul.bf16.gmra.mxu0 %v1294
    %v1375 = vpop.f32.mrf.mxu0
    %v1376 = vadd.f32 0.0, %v1375
    %v1377 = vpop.f32.mrf.mxu0
    %v1378 = vadd.f32 0.0, %v1377
    %1379 = vmatmul.bf16.gmra.mxu0 %v1295
    %v1380 = vpop.f32.mrf.mxu0
    %v1381 = vadd.f32 0.0, %v1380
    %v1382 = vpop.f32.mrf.mxu0
    %v1383 = vadd.f32 0.0, %v1382
    %1384 = vmatmul.bf16.gmra.mxu0 %v1296
    %v1385 = vpop.f32.mrf.mxu0
    %v1386 = vadd.f32 0.0, %v1385
    %v1387 = vpop.f32.mrf.mxu0
    %v1388 = vadd.f32 0.0, %v1387
    %1389 = vmatmul.bf16.gmra.mxu0 %v1297
    %v1390 = vpop.f32.mrf.mxu0
    %v1391 = vadd.f32 0.0, %v1390
    %v1392 = vpop.f32.mrf.mxu0
    %v1393 = vadd.f32 0.0, %v1392
    %1394 = vmatmul.bf16.gmra.mxu0 %v1298
    %v1395 = vpop.f32.mrf.mxu0
    %v1396 = vadd.f32 0.0, %v1395
    %v1397 = vpop.f32.mrf.mxu0
    %v1398 = vadd.f32 0.0, %v1397
    %1399 = vmatmul.bf16.gmra.mxu0 %v1299
    %v1400 = vpop.f32.mrf.mxu0
    %v1401 = vadd.f32 0.0, %v1400
    %v1402 = vpop.f32.mrf.mxu0
    %v1403 = vadd.f32 0.0, %v1402
    %1404 = vdwg.mxu0
    %1405 = vmatpush.bf16.msra.mxu0 %v1219
    %1406 = vmatpush.bf16.msra.mxu0 %v1217
    %1407 = vmatpush.bf16.msra.mxu0 %v1215
    %1408 = vmatpush.bf16.msra.mxu0 %v1213
    %1409 = vmatpush.bf16.msra.mxu0 %v1211
    %1410 = vmatpush.bf16.msra.mxu0 %v1209
    %1411 = vmatpush.bf16.msra.mxu0 %v1207
    %1412 = vmatpush.bf16.msra.mxu0 %v1205
    %1413 = vmatmul.bf16.gmra.mxu0 %v1284
    %v1414 = vpop.f32.mrf.mxu0
    %v1415 = vadd.f32 0.0, %v1414
    %v1416 = vpop.f32.mrf.mxu0
    %v1417 = vadd.f32 0.0, %v1416
    %1418 = vmatmul.bf16.gmra.mxu0 %v1285
    %v1419 = vpop.f32.mrf.mxu0
    %v1420 = vadd.f32 0.0, %v1419
    %v1421 = vpop.f32.mrf.mxu0
    %v1422 = vadd.f32 0.0, %v1421
    %1423 = vmatmul.bf16.gmra.mxu0 %v1286
    %v1424 = vpop.f32.mrf.mxu0
    %v1425 = vadd.f32 0.0, %v1424
    %v1426 = vpop.f32.mrf.mxu0
    %v1427 = vadd.f32 0.0, %v1426
    %1428 = vmatmul.bf16.gmra.mxu0 %v1287
    %v1429 = vpop.f32.mrf.mxu0
    %v1430 = vadd.f32 0.0, %v1429
    %v1431 = vpop.f32.mrf.mxu0
    %v1432 = vadd.f32 0.0, %v1431
    %1433 = vmatmul.bf16.gmra.mxu0 %v1288
    %v1434 = vpop.f32.mrf.mxu0
    %v1435 = vadd.f32 0.0, %v1434
    %v1436 = vpop.f32.mrf.mxu0
    %v1437 = vadd.f32 0.0, %v1436
    %1438 = vmatmul.bf16.gmra.mxu0 %v1289
    %v1439 = vpop.f32.mrf.mxu0
    %v1440 = vadd.f32 0.0, %v1439
    %v1441 = vpop.f32.mrf.mxu0
    %v1442 = vadd.f32 0.0, %v1441
    %1443 = vmatmul.bf16.gmra.mxu0 %v1290
    %v1444 = vpop.f32.mrf.mxu0
    %v1445 = vadd.f32 0.0, %v1444
    %v1446 = vpop.f32.mrf.mxu0
    %v1447 = vadd.f32 0.0, %v1446
    %1448 = vmatmul.bf16.gmra.mxu0 %v1291
    %v1449 = vpop.f32.mrf.mxu0
    %v1450 = vadd.f32 0.0, %v1449
    %v1451 = vpop.f32.mrf.mxu0
    %v1452 = vadd.f32 0.0, %v1451
    %1453 = vmatmul.bf16.gmra.mxu0 %v1292
    %v1454 = vpop.f32.mrf.mxu0
    %v1455 = vadd.f32 0.0, %v1454
    %v1456 = vpop.f32.mrf.mxu0
    %v1457 = vadd.f32 0.0, %v1456
    %1458 = vmatmul.bf16.gmra.mxu0 %v1293
    %v1459 = vpop.f32.mrf.mxu0
    %v1460 = vadd.f32 0.0, %v1459
    %v1461 = vpop.f32.mrf.mxu0
    %v1462 = vadd.f32 0.0, %v1461
    %1463 = vmatmul.bf16.gmra.mxu0 %v1294
    %v1464 = vpop.f32.mrf.mxu0
    %v1465 = vadd.f32 0.0, %v1464
    %v1466 = vpop.f32.mrf.mxu0
    %v1467 = vadd.f32 0.0, %v1466
    %1468 = vmatmul.bf16.gmra.mxu0 %v1295
    %v1469 = vpop.f32.mrf.mxu0
    %v1470 = vadd.f32 0.0, %v1469
    %v1471 = vpop.f32.mrf.mxu0
    %v1472 = vadd.f32 0.0, %v1471
    %1473 = vmatmul.bf16.gmra.mxu0 %v1296
    %v1474 = vpop.f32.mrf.mxu0
    %v1475 = vadd.f32 0.0, %v1474
    %v1476 = vpop.f32.mrf.mxu0
    %v1477 = vadd.f32 0.0, %v1476
    %1478 = vmatmul.bf16.gmra.mxu0 %v1297
    %v1479 = vpop.f32.mrf.mxu0
    %v1480 = vadd.f32 0.0, %v1479
    %v1481 = vpop.f32.mrf.mxu0
    %v1482 = vadd.f32 0.0, %v1481
    %1483 = vmatmul.bf16.gmra.mxu0 %v1298
    %v1484 = vpop.f32.mrf.mxu0
    %v1485 = vadd.f32 0.0, %v1484
    %v1486 = vpop.f32.mrf.mxu0
    %v1487 = vadd.f32 0.0, %v1486
    %1488 = vmatmul.bf16.gmra.mxu0 %v1299
    %v1489 = vpop.f32.mrf.mxu0
    %v1490 = vadd.f32 0.0, %v1489
    %v1491 = vpop.f32.mrf.mxu0
    %v1492 = vadd.f32 0.0, %v1491
    %1493 = vdwg.mxu0
    %v1494 = vadd.f32 %v1326, %v582
    %v1495 = vadd.f32 %v1415, %v583
    %v1496 = vadd.f32 %v1328, %v584
    %v1497 = vadd.f32 %v1417, %v585
    %v1498 = vadd.f32 %v1331, %v586
    %v1499 = vadd.f32 %v1420, %v587
    %v1500 = vadd.f32 %v1333, %v588
    %v1501 = vadd.f32 %v1422, %v589
    %v1502 = vadd.f32 %v1336, %v590
    %v1503 = vadd.f32 %v1425, %v591
    %v1504 = vadd.f32 %v1338, %v592
    %v1505 = vadd.f32 %v1427, %v593
    %v1506 = vadd.f32 %v1341, %v594
    %v1507 = vadd.f32 %v1430, %v595
    %v1508 = vadd.f32 %v1343, %v596
    %v1509 = vadd.f32 %v1432, %v597
    %v1510 = vadd.f32 %v1346, %v598
    %v1511 = vadd.f32 %v1435, %v599
    %v1512 = vadd.f32 %v1348, %v600
    %v1513 = vadd.f32 %v1437, %v601
    %v1514 = vadd.f32 %v1351, %v602
    %v1515 = vadd.f32 %v1440, %v603
    %v1516 = vadd.f32 %v1353, %v604
    %v1517 = vadd.f32 %v1442, %v605
    %v1518 = vadd.f32 %v1356, %v606
    %v1519 = vadd.f32 %v1445, %v607
    %v1520 = vadd.f32 %v1358, %v608
    %v1521 = vadd.f32 %v1447, %v609
    %v1522 = vadd.f32 %v1361, %v610
    %v1523 = vadd.f32 %v1450, %v611
    %v1524 = vadd.f32 %v1363, %v612
    %v1525 = vadd.f32 %v1452, %v613
    %v1526 = vpack.c.bf16 %v1496, %v1494
    %v1527 = vpack.c.bf16 %v1497, %v1495
    %v1528 = vpack.c.bf16 %v1500, %v1498
    %v1529 = vpack.c.bf16 %v1501, %v1499
    %v1530 = vpack.c.bf16 %v1504, %v1502
    %v1531 = vpack.c.bf16 %v1505, %v1503
    %v1532 = vpack.c.bf16 %v1508, %v1506
    %v1533 = vpack.c.bf16 %v1509, %v1507
    %v1534 = vpack.c.bf16 %v1512, %v1510
    %v1535 = vpack.c.bf16 %v1513, %v1511
    %v1536 = vpack.c.bf16 %v1516, %v1514
    %v1537 = vpack.c.bf16 %v1517, %v1515
    %v1538 = vpack.c.bf16 %v1520, %v1518
    %v1539 = vpack.c.bf16 %v1521, %v1519
    %v1540 = vpack.c.bf16 %v1524, %v1522
    %v1541 = vpack.c.bf16 %v1525, %v1523
    %v1543 = vperm.slane %v1097, 0
    %v1544 = vperm.slane %v1097, 1
    %v1579 = vunpack.c.l.b16 %v1064
    %v1580 = vunpack.c.h.b16 %v1064
    %v1581 = vunpack.c.l.b16 %v1065
    %v1582 = vunpack.c.h.b16 %v1065
    %v1583 = vunpack.c.l.b16 %v1066
    %v1584 = vunpack.c.h.b16 %v1066
    %v1585 = vunpack.c.l.b16 %v1067
    %v1586 = vunpack.c.h.b16 %v1067
    %v1587 = vunpack.c.l.b16 %v1068
    %v1588 = vunpack.c.h.b16 %v1068
    %v1589 = vunpack.c.l.b16 %v1069
    %v1590 = vunpack.c.h.b16 %v1069
    %v1591 = vunpack.c.l.b16 %v1070
    %v1592 = vunpack.c.h.b16 %v1070
    %v1593 = vunpack.c.l.b16 %v1071
    %v1594 = vunpack.c.h.b16 %v1071
    %v1595 = vunpack.c.l.b16 %v1072
    %v1596 = vunpack.c.h.b16 %v1072
    %v1597 = vunpack.c.l.b16 %v1073
    %v1598 = vunpack.c.h.b16 %v1073
    %v1599 = vunpack.c.l.b16 %v1074
    %v1600 = vunpack.c.h.b16 %v1074
    %v1601 = vunpack.c.l.b16 %v1075
    %v1602 = vunpack.c.h.b16 %v1075
    %v1603 = vunpack.c.l.b16 %v1076
    %v1604 = vunpack.c.h.b16 %v1076
    %v1605 = vunpack.c.l.b16 %v1077
    %v1606 = vunpack.c.h.b16 %v1077
    %v1607 = vunpack.c.l.b16 %v1078
    %v1608 = vunpack.c.h.b16 %v1078
    %v1609 = vunpack.c.l.b16 %v1079
    %v1610 = vunpack.c.h.b16 %v1079
    %v1611 = vunpack.c.l.b16 %v1080
    %v1612 = vunpack.c.h.b16 %v1080
    %v1613 = vunpack.c.l.b16 %v1081
    %v1614 = vunpack.c.h.b16 %v1081
    %v1615 = vunpack.c.l.b16 %v1082
    %v1616 = vunpack.c.h.b16 %v1082
    %v1617 = vunpack.c.l.b16 %v1083
    %v1618 = vunpack.c.h.b16 %v1083
    %v1619 = vunpack.c.l.b16 %v1084
    %v1620 = vunpack.c.h.b16 %v1084
    %v1621 = vunpack.c.l.b16 %v1085
    %v1622 = vunpack.c.h.b16 %v1085
    %v1623 = vunpack.c.l.b16 %v1086
    %v1624 = vunpack.c.h.b16 %v1086
    %v1625 = vunpack.c.l.b16 %v1087
    %v1626 = vunpack.c.h.b16 %v1087
    %v1627 = vunpack.c.l.b16 %v1088
    %v1628 = vunpack.c.h.b16 %v1088
    %v1629 = vunpack.c.l.b16 %v1089
    %v1630 = vunpack.c.h.b16 %v1089
    %v1631 = vunpack.c.l.b16 %v1090
    %v1632 = vunpack.c.h.b16 %v1090
    %v1633 = vunpack.c.l.b16 %v1091
    %v1634 = vunpack.c.h.b16 %v1091
    %v1635 = vunpack.c.l.b16 %v1092
    %v1636 = vunpack.c.h.b16 %v1092
    %v1637 = vunpack.c.l.b16 %v1093
    %v1638 = vunpack.c.h.b16 %v1093
    %v1639 = vunpack.c.l.b16 %v1094
    %v1640 = vunpack.c.h.b16 %v1094
    %v1641 = vunpack.c.l.b16 %v1095
    %v1642 = vunpack.c.h.b16 %v1095
    %v1643 = vpack.c.b16 %v1581, %v1579
    %v1644 = vpack.c.b16 %v1582, %v1580
    %v1645 = vpack.c.b16 %v1585, %v1583
    %v1646 = vpack.c.b16 %v1586, %v1584
    %v1647 = vpack.c.b16 %v1589, %v1587
    %v1648 = vpack.c.b16 %v1590, %v1588
    %v1649 = vpack.c.b16 %v1593, %v1591
    %v1650 = vpack.c.b16 %v1594, %v1592
    %v1651 = vpack.c.b16 %v1597, %v1595
    %v1652 = vpack.c.b16 %v1598, %v1596
    %v1653 = vpack.c.b16 %v1601, %v1599
    %v1654 = vpack.c.b16 %v1602, %v1600
    %v1655 = vpack.c.b16 %v1605, %v1603
    %v1656 = vpack.c.b16 %v1606, %v1604
    %v1657 = vpack.c.b16 %v1609, %v1607
    %v1658 = vpack.c.b16 %v1610, %v1608
    %v1659 = vpack.c.b16 %v1613, %v1611
    %v1660 = vpack.c.b16 %v1614, %v1612
    %v1661 = vpack.c.b16 %v1617, %v1615
    %v1662 = vpack.c.b16 %v1618, %v1616
    %v1663 = vpack.c.b16 %v1621, %v1619
    %v1664 = vpack.c.b16 %v1622, %v1620
    %v1665 = vpack.c.b16 %v1625, %v1623
    %v1666 = vpack.c.b16 %v1626, %v1624
    %v1667 = vpack.c.b16 %v1629, %v1627
    %v1668 = vpack.c.b16 %v1630, %v1628
    %v1669 = vpack.c.b16 %v1633, %v1631
    %v1670 = vpack.c.b16 %v1634, %v1632
    %v1671 = vpack.c.b16 %v1637, %v1635
    %v1672 = vpack.c.b16 %v1638, %v1636
    %v1673 = vpack.c.b16 %v1641, %v1639
    %v1674 = vpack.c.b16 %v1642, %v1640
    %1707 = vmatpush.bf16.msra.mxu0 %v1657
    %1708 = vmatpush.bf16.msra.mxu0 %v1655
    %1709 = vmatpush.bf16.msra.mxu0 %v1653
    %1710 = vmatpush.bf16.msra.mxu0 %v1651
    %1711 = vmatpush.bf16.msra.mxu0 %v1649
    %1712 = vmatpush.bf16.msra.mxu0 %v1647
    %1713 = vmatpush.bf16.msra.mxu0 %v1645
    %1714 = vmatpush.bf16.msra.mxu0 %v1643
    %1715 = vmatmul.bf16.gmra.mxu0 %v1526
    %v1716 = vpop.f32.mrf.mxu0
    %v1717 = vadd.f32 %v1543, %v1716
    %v1718 = vpop.f32.mrf.mxu0
    %v1719 = vadd.f32 %v1543, %v1718
    %1720 = vmatmul.bf16.gmra.mxu0 %v1528
    %v1721 = vpop.f32.mrf.mxu0
    %v1722 = vadd.f32 %v1543, %v1721
    %v1723 = vpop.f32.mrf.mxu0
    %v1724 = vadd.f32 %v1543, %v1723
    %1725 = vmatmul.bf16.gmra.mxu0 %v1530
    %v1726 = vpop.f32.mrf.mxu0
    %v1727 = vadd.f32 %v1543, %v1726
    %v1728 = vpop.f32.mrf.mxu0
    %v1729 = vadd.f32 %v1543, %v1728
    %1730 = vmatmul.bf16.gmra.mxu0 %v1532
    %v1731 = vpop.f32.mrf.mxu0
    %v1732 = vadd.f32 %v1543, %v1731
    %v1733 = vpop.f32.mrf.mxu0
    %v1734 = vadd.f32 %v1543, %v1733
    %1735 = vmatmul.bf16.gmra.mxu0 %v1534
    %v1736 = vpop.f32.mrf.mxu0
    %v1737 = vadd.f32 %v1543, %v1736
    %v1738 = vpop.f32.mrf.mxu0
    %v1739 = vadd.f32 %v1543, %v1738
    %1740 = vmatmul.bf16.gmra.mxu0 %v1536
    %v1741 = vpop.f32.mrf.mxu0
    %v1742 = vadd.f32 %v1543, %v1741
    %v1743 = vpop.f32.mrf.mxu0
    %v1744 = vadd.f32 %v1543, %v1743
    %1745 = vmatmul.bf16.gmra.mxu0 %v1538
    %v1746 = vpop.f32.mrf.mxu0
    %v1747 = vadd.f32 %v1543, %v1746
    %v1748 = vpop.f32.mrf.mxu0
    %v1749 = vadd.f32 %v1543, %v1748
    %1750 = vmatmul.bf16.gmra.mxu0 %v1540
    %v1751 = vpop.f32.mrf.mxu0
    %v1752 = vadd.f32 %v1543, %v1751
    %v1753 = vpop.f32.mrf.mxu0
    %v1754 = vadd.f32 %v1543, %v1753
    %1755 = vdwg.mxu0
    %1756 = vmatpush.bf16.msra.mxu0 %v1673
    %1757 = vmatpush.bf16.msra.mxu0 %v1671
    %1758 = vmatpush.bf16.msra.mxu0 %v1669
    %1759 = vmatpush.bf16.msra.mxu0 %v1667
    %1760 = vmatpush.bf16.msra.mxu0 %v1665
    %1761 = vmatpush.bf16.msra.mxu0 %v1663
    %1762 = vmatpush.bf16.msra.mxu0 %v1661
    %1763 = vmatpush.bf16.msra.mxu0 %v1659
    %1764 = vmatmul.bf16.gmra.mxu0 %v1527
    %v1765 = vpop.f32.mrf.mxu0
    %v1766 = vadd.f32 %v1717, %v1765
    %v1767 = vpop.f32.mrf.mxu0
    %v1768 = vadd.f32 %v1719, %v1767
    %1769 = vmatmul.bf16.gmra.mxu0 %v1529
    %v1770 = vpop.f32.mrf.mxu0
    %v1771 = vadd.f32 %v1722, %v1770
    %v1772 = vpop.f32.mrf.mxu0
    %v1773 = vadd.f32 %v1724, %v1772
    %1774 = vmatmul.bf16.gmra.mxu0 %v1531
    %v1775 = vpop.f32.mrf.mxu0
    %v1776 = vadd.f32 %v1727, %v1775
    %v1777 = vpop.f32.mrf.mxu0
    %v1778 = vadd.f32 %v1729, %v1777
    %1779 = vmatmul.bf16.gmra.mxu0 %v1533
    %v1780 = vpop.f32.mrf.mxu0
    %v1781 = vadd.f32 %v1732, %v1780
    %v1782 = vpop.f32.mrf.mxu0
    %v1783 = vadd.f32 %v1734, %v1782
    %1784 = vmatmul.bf16.gmra.mxu0 %v1535
    %v1785 = vpop.f32.mrf.mxu0
    %v1786 = vadd.f32 %v1737, %v1785
    %v1787 = vpop.f32.mrf.mxu0
    %v1788 = vadd.f32 %v1739, %v1787
    %1789 = vmatmul.bf16.gmra.mxu0 %v1537
    %v1790 = vpop.f32.mrf.mxu0
    %v1791 = vadd.f32 %v1742, %v1790
    %v1792 = vpop.f32.mrf.mxu0
    %v1793 = vadd.f32 %v1744, %v1792
    %1794 = vmatmul.bf16.gmra.mxu0 %v1539
    %v1795 = vpop.f32.mrf.mxu0
    %v1796 = vadd.f32 %v1747, %v1795
    %v1797 = vpop.f32.mrf.mxu0
    %v1798 = vadd.f32 %v1749, %v1797
    %1799 = vmatmul.bf16.gmra.mxu0 %v1541
    %v1800 = vpop.f32.mrf.mxu0
    %v1801 = vadd.f32 %v1752, %v1800
    %v1802 = vpop.f32.mrf.mxu0
    %v1803 = vadd.f32 %v1754, %v1802
    %1804 = vdwg.mxu0
    %1805 = vmatpush.bf16.msra.mxu0 %v1658
    %1806 = vmatpush.bf16.msra.mxu0 %v1656
    %1807 = vmatpush.bf16.msra.mxu0 %v1654
    %1808 = vmatpush.bf16.msra.mxu0 %v1652
    %1809 = vmatpush.bf16.msra.mxu0 %v1650
    %1810 = vmatpush.bf16.msra.mxu0 %v1648
    %1811 = vmatpush.bf16.msra.mxu0 %v1646
    %1812 = vmatpush.bf16.msra.mxu0 %v1644
    %1813 = vmatmul.bf16.gmra.mxu0 %v1526
    %v1814 = vpop.f32.mrf.mxu0
    %v1815 = vadd.f32 %v1544, %v1814
    %v1816 = vpop.f32.mrf.mxu0
    %v1817 = vadd.f32 %v1544, %v1816
    %1818 = vmatmul.bf16.gmra.mxu0 %v1528
    %v1819 = vpop.f32.mrf.mxu0
    %v1820 = vadd.f32 %v1544, %v1819
    %v1821 = vpop.f32.mrf.mxu0
    %v1822 = vadd.f32 %v1544, %v1821
    %1823 = vmatmul.bf16.gmra.mxu0 %v1530
    %v1824 = vpop.f32.mrf.mxu0
    %v1825 = vadd.f32 %v1544, %v1824
    %v1826 = vpop.f32.mrf.mxu0
    %v1827 = vadd.f32 %v1544, %v1826
    %1828 = vmatmul.bf16.gmra.mxu0 %v1532
    %v1829 = vpop.f32.mrf.mxu0
    %v1830 = vadd.f32 %v1544, %v1829
    %v1831 = vpop.f32.mrf.mxu0
    %v1832 = vadd.f32 %v1544, %v1831
    %1833 = vmatmul.bf16.gmra.mxu0 %v1534
    %v1834 = vpop.f32.mrf.mxu0
    %v1835 = vadd.f32 %v1544, %v1834
    %v1836 = vpop.f32.mrf.mxu0
    %v1837 = vadd.f32 %v1544, %v1836
    %1838 = vmatmul.bf16.gmra.mxu0 %v1536
    %v1839 = vpop.f32.mrf.mxu0
    %v1840 = vadd.f32 %v1544, %v1839
    %v1841 = vpop.f32.mrf.mxu0
    %v1842 = vadd.f32 %v1544, %v1841
    %1843 = vmatmul.bf16.gmra.mxu0 %v1538
    %v1844 = vpop.f32.mrf.mxu0
    %v1845 = vadd.f32 %v1544, %v1844
    %v1846 = vpop.f32.mrf.mxu0
    %v1847 = vadd.f32 %v1544, %v1846
    %1848 = vmatmul.bf16.gmra.mxu0 %v1540
    %v1849 = vpop.f32.mrf.mxu0
    %v1850 = vadd.f32 %v1544, %v1849
    %v1851 = vpop.f32.mrf.mxu0
    %v1852 = vadd.f32 %v1544, %v1851
    %1853 = vdwg.mxu0
    %1854 = vmatpush.bf16.msra.mxu0 %v1674
    %1855 = vmatpush.bf16.msra.mxu0 %v1672
    %1856 = vmatpush.bf16.msra.mxu0 %v1670
    %1857 = vmatpush.bf16.msra.mxu0 %v1668
    %1858 = vmatpush.bf16.msra.mxu0 %v1666
    %1859 = vmatpush.bf16.msra.mxu0 %v1664
    %1860 = vmatpush.bf16.msra.mxu0 %v1662
    %1861 = vmatpush.bf16.msra.mxu0 %v1660
    %1862 = vmatmul.bf16.gmra.mxu0 %v1527
    %v1863 = vpop.f32.mrf.mxu0
    %v1864 = vadd.f32 %v1815, %v1863
    %v1865 = vpop.f32.mrf.mxu0
    %v1866 = vadd.f32 %v1817, %v1865
    %1867 = vmatmul.bf16.gmra.mxu0 %v1529
    %v1868 = vpop.f32.mrf.mxu0
    %v1869 = vadd.f32 %v1820, %v1868
    %v1870 = vpop.f32.mrf.mxu0
    %v1871 = vadd.f32 %v1822, %v1870
    %1872 = vmatmul.bf16.gmra.mxu0 %v1531
    %v1873 = vpop.f32.mrf.mxu0
    %v1874 = vadd.f32 %v1825, %v1873
    %v1875 = vpop.f32.mrf.mxu0
    %v1876 = vadd.f32 %v1827, %v1875
    %1877 = vmatmul.bf16.gmra.mxu0 %v1533
    %v1878 = vpop.f32.mrf.mxu0
    %v1879 = vadd.f32 %v1830, %v1878
    %v1880 = vpop.f32.mrf.mxu0
    %v1881 = vadd.f32 %v1832, %v1880
    %1882 = vmatmul.bf16.gmra.mxu0 %v1535
    %v1883 = vpop.f32.mrf.mxu0
    %v1884 = vadd.f32 %v1835, %v1883
    %v1885 = vpop.f32.mrf.mxu0
    %v1886 = vadd.f32 %v1837, %v1885
    %1887 = vmatmul.bf16.gmra.mxu0 %v1537
    %v1888 = vpop.f32.mrf.mxu0
    %v1889 = vadd.f32 %v1840, %v1888
    %v1890 = vpop.f32.mrf.mxu0
    %v1891 = vadd.f32 %v1842, %v1890
    %1892 = vmatmul.bf16.gmra.mxu0 %v1539
    %v1893 = vpop.f32.mrf.mxu0
    %v1894 = vadd.f32 %v1845, %v1893
    %v1895 = vpop.f32.mrf.mxu0
    %v1896 = vadd.f32 %v1847, %v1895
    %1897 = vmatmul.bf16.gmra.mxu0 %v1541
    %v1898 = vpop.f32.mrf.mxu0
    %v1899 = vadd.f32 %v1850, %v1898
    %v1900 = vpop.f32.mrf.mxu0
    %v1901 = vadd.f32 %v1852, %v1900
    %1902 = vdwg.mxu0
    %v1903 = vmul.f32 %v1766, %v1766
    %v1904 = vmul.f32 %v1864, %v1864
    %v1905 = vmul.f32 %v1768, %v1768
    %v1906 = vmul.f32 %v1866, %v1866
    %v1907 = vmul.f32 %v1771, %v1771
    %v1908 = vmul.f32 %v1869, %v1869
    %v1909 = vmul.f32 %v1773, %v1773
    %v1910 = vmul.f32 %v1871, %v1871
    %v1911 = vmul.f32 %v1776, %v1776
    %v1912 = vmul.f32 %v1874, %v1874
    %v1913 = vmul.f32 %v1778, %v1778
    %v1914 = vmul.f32 %v1876, %v1876
    %v1915 = vmul.f32 %v1781, %v1781
    %v1916 = vmul.f32 %v1879, %v1879
    %v1917 = vmul.f32 %v1783, %v1783
    %v1918 = vmul.f32 %v1881, %v1881
    %v1919 = vmul.f32 %v1786, %v1786
    %v1920 = vmul.f32 %v1884, %v1884
    %v1921 = vmul.f32 %v1788, %v1788
    %v1922 = vmul.f32 %v1886, %v1886
    %v1923 = vmul.f32 %v1791, %v1791
    %v1924 = vmul.f32 %v1889, %v1889
    %v1925 = vmul.f32 %v1793, %v1793
    %v1926 = vmul.f32 %v1891, %v1891
    %v1927 = vmul.f32 %v1796, %v1796
    %v1928 = vmul.f32 %v1894, %v1894
    %v1929 = vmul.f32 %v1798, %v1798
    %v1930 = vmul.f32 %v1896, %v1896
    %v1931 = vmul.f32 %v1801, %v1801
    %v1932 = vmul.f32 %v1899, %v1899
    %v1933 = vmul.f32 %v1803, %v1803
    %v1934 = vmul.f32 %v1901, %v1901
    %v1935 = vadd.f32 %v1903, %v1904
    %1936 = vadd.xlane.f32.xlu0 %v1935
    %v1937 = vpop.xlane.xlu0 %1936
    %v1938 = vadd.f32 %v1905, %v1906
    %1939 = vadd.xlane.f32.xlu0 %v1938
    %v1940 = vpop.xlane.xlu0 %1939
    %v1941 = vadd.f32 %v1907, %v1908
    %1942 = vadd.xlane.f32.xlu0 %v1941
    %v1943 = vpop.xlane.xlu0 %1942
    %v1944 = vadd.f32 %v1909, %v1910
    %1945 = vadd.xlane.f32.xlu0 %v1944
    %v1946 = vpop.xlane.xlu0 %1945
    %v1947 = vadd.f32 %v1911, %v1912
    %1948 = vadd.xlane.f32.xlu0 %v1947
    %v1949 = vpop.xlane.xlu0 %1948
    %v1950 = vadd.f32 %v1913, %v1914
    %1951 = vadd.xlane.f32.xlu0 %v1950
    %v1952 = vpop.xlane.xlu0 %1951
    %v1953 = vadd.f32 %v1915, %v1916
    %1954 = vadd.xlane.f32.xlu0 %v1953
    %v1955 = vpop.xlane.xlu0 %1954
    %v1956 = vadd.f32 %v1917, %v1918
    %1957 = vadd.xlane.f32.xlu0 %v1956
    %v1958 = vpop.xlane.xlu0 %1957
    %v1959 = vadd.f32 %v1919, %v1920
    %1960 = vadd.xlane.f32.xlu0 %v1959
    %v1961 = vpop.xlane.xlu0 %1960
    %v1962 = vadd.f32 %v1921, %v1922
    %1963 = vadd.xlane.f32.xlu0 %v1962
    %v1964 = vpop.xlane.xlu0 %1963
    %v1965 = vadd.f32 %v1923, %v1924
    %1966 = vadd.xlane.f32.xlu0 %v1965
    %v1967 = vpop.xlane.xlu0 %1966
    %v1968 = vadd.f32 %v1925, %v1926
    %1969 = vadd.xlane.f32.xlu0 %v1968
    %v1970 = vpop.xlane.xlu0 %1969
    %v1971 = vadd.f32 %v1927, %v1928
    %1972 = vadd.xlane.f32.xlu0 %v1971
    %v1973 = vpop.xlane.xlu0 %1972
    %v1974 = vadd.f32 %v1929, %v1930
    %1975 = vadd.xlane.f32.xlu0 %v1974
    %v1976 = vpop.xlane.xlu0 %1975
    %v1977 = vadd.f32 %v1931, %v1932
    %1978 = vadd.xlane.f32.xlu0 %v1977
    %v1979 = vpop.xlane.xlu0 %1978
    %v1980 = vadd.f32 %v1933, %v1934
    %1981 = vadd.xlane.f32.xlu0 %v1980
    %v1982 = vpop.xlane.xlu0 %1981
    %v1983 = vmax.f32 %v1937, 1e-24
    %v1984 = vmax.f32 %v1940, 1e-24
    %v1985 = vmax.f32 %v1943, 1e-24
    %v1986 = vmax.f32 %v1946, 1e-24
    %v1987 = vmax.f32 %v1949, 1e-24
    %v1988 = vmax.f32 %v1952, 1e-24
    %v1989 = vmax.f32 %v1955, 1e-24
    %v1990 = vmax.f32 %v1958, 1e-24
    %v1991 = vmax.f32 %v1961, 1e-24
    %v1992 = vmax.f32 %v1964, 1e-24
    %v1993 = vmax.f32 %v1967, 1e-24
    %v1994 = vmax.f32 %v1970, 1e-24
    %v1995 = vmax.f32 %v1973, 1e-24
    %v1996 = vmax.f32 %v1976, 1e-24
    %v1997 = vmax.f32 %v1979, 1e-24
    %v1998 = vmax.f32 %v1982, 1e-24
    %v1999 = vrsqrt.pop %v1983
    %v2000 = vmul.f32 %v1999, %v1983
    %v2001 = vmul.f32 %v2000, %v1999
    %v2002 = vmul.f32 0.5, %v2001
    %v2003 = vsub.f32 1.5, %v2002
    %v2004 = vmul.f32 %v1999, %v2003
    %vm2005 = vweird.f32 %v1983
    %vm2006 = vweird.f32 %v1999
    %vm2007 = vmor %vm2005, %vm2006
    %v2008 = vsel %vm2007, %v1999, %v2004
    %v2009 = vrsqrt.pop %v1984
    %v2010 = vmul.f32 %v2009, %v1984
    %v2011 = vmul.f32 %v2010, %v2009
    %v2012 = vmul.f32 0.5, %v2011
    %v2013 = vsub.f32 1.5, %v2012
    %v2014 = vmul.f32 %v2009, %v2013
    %vm2015 = vweird.f32 %v1984
    %vm2016 = vweird.f32 %v2009
    %vm2017 = vmor %vm2015, %vm2016
    %v2018 = vsel %vm2017, %v2009, %v2014
    %v2019 = vrsqrt.pop %v1985
    %v2020 = vmul.f32 %v2019, %v1985
    %v2021 = vmul.f32 %v2020, %v2019
    %v2022 = vmul.f32 0.5, %v2021
    %v2023 = vsub.f32 1.5, %v2022
    %v2024 = vmul.f32 %v2019, %v2023
    %vm2025 = vweird.f32 %v1985
    %vm2026 = vweird.f32 %v2019
    %vm2027 = vmor %vm2025, %vm2026
    %v2028 = vsel %vm2027, %v2019, %v2024
    %v2029 = vrsqrt.pop %v1986
    %v2030 = vmul.f32 %v2029, %v1986
    %v2031 = vmul.f32 %v2030, %v2029
    %v2032 = vmul.f32 0.5, %v2031
    %v2033 = vsub.f32 1.5, %v2032
    %v2034 = vmul.f32 %v2029, %v2033
    %vm2035 = vweird.f32 %v1986
    %vm2036 = vweird.f32 %v2029
    %vm2037 = vmor %vm2035, %vm2036
    %v2038 = vsel %vm2037, %v2029, %v2034
    %v2039 = vrsqrt.pop %v1987
    %v2040 = vmul.f32 %v2039, %v1987
    %v2041 = vmul.f32 %v2040, %v2039
    %v2042 = vmul.f32 0.5, %v2041
    %v2043 = vsub.f32 1.5, %v2042
    %v2044 = vmul.f32 %v2039, %v2043
    %vm2045 = vweird.f32 %v1987
    %vm2046 = vweird.f32 %v2039
    %vm2047 = vmor %vm2045, %vm2046
    %v2048 = vsel %vm2047, %v2039, %v2044
    %v2049 = vrsqrt.pop %v1988
    %v2050 = vmul.f32 %v2049, %v1988
    %v2051 = vmul.f32 %v2050, %v2049
    %v2052 = vmul.f32 0.5, %v2051
    %v2053 = vsub.f32 1.5, %v2052
    %v2054 = vmul.f32 %v2049, %v2053
    %vm2055 = vweird.f32 %v1988
    %vm2056 = vweird.f32 %v2049
    %vm2057 = vmor %vm2055, %vm2056
    %v2058 = vsel %vm2057, %v2049, %v2054
    %v2059 = vrsqrt.pop %v1989
    %v2060 = vmul.f32 %v2059, %v1989
    %v2061 = vmul.f32 %v2060, %v2059
    %v2062 = vmul.f32 0.5, %v2061
    %v2063 = vsub.f32 1.5, %v2062
    %v2064 = vmul.f32 %v2059, %v2063
    %vm2065 = vweird.f32 %v1989
    %vm2066 = vweird.f32 %v2059
    %vm2067 = vmor %vm2065, %vm2066
    %v2068 = vsel %vm2067, %v2059, %v2064
    %v2069 = vrsqrt.pop %v1990
    %v2070 = vmul.f32 %v2069, %v1990
    %v2071 = vmul.f32 %v2070, %v2069
    %v2072 = vmul.f32 0.5, %v2071
    %v2073 = vsub.f32 1.5, %v2072
    %v2074 = vmul.f32 %v2069, %v2073
    %vm2075 = vweird.f32 %v1990
    %vm2076 = vweird.f32 %v2069
    %vm2077 = vmor %vm2075, %vm2076
    %v2078 = vsel %vm2077, %v2069, %v2074
    %v2079 = vrsqrt.pop %v1991
    %v2080 = vmul.f32 %v2079, %v1991
    %v2081 = vmul.f32 %v2080, %v2079
    %v2082 = vmul.f32 0.5, %v2081
    %v2083 = vsub.f32 1.5, %v2082
    %v2084 = vmul.f32 %v2079, %v2083
    %vm2085 = vweird.f32 %v1991
    %vm2086 = vweird.f32 %v2079
    %vm2087 = vmor %vm2085, %vm2086
    %v2088 = vsel %vm2087, %v2079, %v2084
    %v2089 = vrsqrt.pop %v1992
    %v2090 = vmul.f32 %v2089, %v1992
    %v2091 = vmul.f32 %v2090, %v2089
    %v2092 = vmul.f32 0.5, %v2091
    %v2093 = vsub.f32 1.5, %v2092
    %v2094 = vmul.f32 %v2089, %v2093
    %vm2095 = vweird.f32 %v1992
    %vm2096 = vweird.f32 %v2089
    %vm2097 = vmor %vm2095, %vm2096
    %v2098 = vsel %vm2097, %v2089, %v2094
    %v2099 = vrsqrt.pop %v1993
    %v2100 = vmul.f32 %v2099, %v1993
    %v2101 = vmul.f32 %v2100, %v2099
    %v2102 = vmul.f32 0.5, %v2101
    %v2103 = vsub.f32 1.5, %v2102
    %v2104 = vmul.f32 %v2099, %v2103
    %vm2105 = vweird.f32 %v1993
    %vm2106 = vweird.f32 %v2099
    %vm2107 = vmor %vm2105, %vm2106
    %v2108 = vsel %vm2107, %v2099, %v2104
    %v2109 = vrsqrt.pop %v1994
    %v2110 = vmul.f32 %v2109, %v1994
    %v2111 = vmul.f32 %v2110, %v2109
    %v2112 = vmul.f32 0.5, %v2111
    %v2113 = vsub.f32 1.5, %v2112
    %v2114 = vmul.f32 %v2109, %v2113
    %vm2115 = vweird.f32 %v1994
    %vm2116 = vweird.f32 %v2109
    %vm2117 = vmor %vm2115, %vm2116
    %v2118 = vsel %vm2117, %v2109, %v2114
    %v2119 = vrsqrt.pop %v1995
    %v2120 = vmul.f32 %v2119, %v1995
    %v2121 = vmul.f32 %v2120, %v2119
    %v2122 = vmul.f32 0.5, %v2121
    %v2123 = vsub.f32 1.5, %v2122
    %v2124 = vmul.f32 %v2119, %v2123
    %vm2125 = vweird.f32 %v1995
    %vm2126 = vweird.f32 %v2119
    %vm2127 = vmor %vm2125, %vm2126
    %v2128 = vsel %vm2127, %v2119, %v2124
    %v2129 = vrsqrt.pop %v1996
    %v2130 = vmul.f32 %v2129, %v1996
    %v2131 = vmul.f32 %v2130, %v2129
    %v2132 = vmul.f32 0.5, %v2131
    %v2133 = vsub.f32 1.5, %v2132
    %v2134 = vmul.f32 %v2129, %v2133
    %vm2135 = vweird.f32 %v1996
    %vm2136 = vweird.f32 %v2129
    %vm2137 = vmor %vm2135, %vm2136
    %v2138 = vsel %vm2137, %v2129, %v2134
    %v2139 = vrsqrt.pop %v1997
    %v2140 = vmul.f32 %v2139, %v1997
    %v2141 = vmul.f32 %v2140, %v2139
    %v2142 = vmul.f32 0.5, %v2141
    %v2143 = vsub.f32 1.5, %v2142
    %v2144 = vmul.f32 %v2139, %v2143
    %vm2145 = vweird.f32 %v1997
    %vm2146 = vweird.f32 %v2139
    %vm2147 = vmor %vm2145, %vm2146
    %v2148 = vsel %vm2147, %v2139, %v2144
    %v2149 = vrsqrt.pop %v1998
    %v2150 = vmul.f32 %v2149, %v1998
    %v2151 = vmul.f32 %v2150, %v2149
    %v2152 = vmul.f32 0.5, %v2151
    %v2153 = vsub.f32 1.5, %v2152
    %v2154 = vmul.f32 %v2149, %v2153
    %vm2155 = vweird.f32 %v1998
    %vm2156 = vweird.f32 %v2149
    %vm2157 = vmor %vm2155, %vm2156
    %v2158 = vsel %vm2157, %v2149, %v2154
    %v2159 = vmul.f32 %v1766, %v2008
    %v2160 = vmul.f32 %v1864, %v2008
    %v2161 = vmul.f32 %v1768, %v2018
    %v2162 = vmul.f32 %v1866, %v2018
    %v2163 = vmul.f32 %v1771, %v2028
    %v2164 = vmul.f32 %v1869, %v2028
    %v2165 = vmul.f32 %v1773, %v2038
    %v2166 = vmul.f32 %v1871, %v2038
    %v2167 = vmul.f32 %v1776, %v2048
    %v2168 = vmul.f32 %v1874, %v2048
    %v2169 = vmul.f32 %v1778, %v2058
    %v2170 = vmul.f32 %v1876, %v2058
    %v2171 = vmul.f32 %v1781, %v2068
    %v2172 = vmul.f32 %v1879, %v2068
    %v2173 = vmul.f32 %v1783, %v2078
    %v2174 = vmul.f32 %v1881, %v2078
    %v2175 = vmul.f32 %v1786, %v2088
    %v2176 = vmul.f32 %v1884, %v2088
    %v2177 = vmul.f32 %v1788, %v2098
    %v2178 = vmul.f32 %v1886, %v2098
    %v2179 = vmul.f32 %v1791, %v2108
    %v2180 = vmul.f32 %v1889, %v2108
    %v2181 = vmul.f32 %v1793, %v2118
    %v2182 = vmul.f32 %v1891, %v2118
    %v2183 = vmul.f32 %v1796, %v2128
    %v2184 = vmul.f32 %v1894, %v2128
    %v2185 = vmul.f32 %v1798, %v2138
    %v2186 = vmul.f32 %v1896, %v2138
    %v2187 = vmul.f32 %v1801, %v2148
    %v2188 = vmul.f32 %v1899, %v2148
    %v2189 = vmul.f32 %v1803, %v2158
    %v2190 = vmul.f32 %v1901, %v2158
    %v2191 = vmul.f32 %v2159, %v281
    %v2192 = vmul.f32 %v2160, %v281
    %v2193 = vmul.f32 %v2161, %v286
    %v2194 = vmul.f32 %v2162, %v286
    %v2195 = vmul.f32 %v2163, %v291
    %v2196 = vmul.f32 %v2164, %v291
    %v2197 = vmul.f32 %v2165, %v296
    %v2198 = vmul.f32 %v2166, %v296
    %v2199 = vmul.f32 %v2167, %v301
    %v2200 = vmul.f32 %v2168, %v301
    %v2201 = vmul.f32 %v2169, %v306
    %v2202 = vmul.f32 %v2170, %v306
    %v2203 = vmul.f32 %v2171, %v311
    %v2204 = vmul.f32 %v2172, %v311
    %v2205 = vmul.f32 %v2173, %v316
    %v2206 = vmul.f32 %v2174, %v316
    %v2207 = vmul.f32 %v2175, %v321
    %v2208 = vmul.f32 %v2176, %v321
    %v2209 = vmul.f32 %v2177, %v326
    %v2210 = vmul.f32 %v2178, %v326
    %v2211 = vmul.f32 %v2179, %v331
    %v2212 = vmul.f32 %v2180, %v331
    %v2213 = vmul.f32 %v2181, %v336
    %v2214 = vmul.f32 %v2182, %v336
    %v2215 = vmul.f32 %v2183, %v341
    %v2216 = vmul.f32 %v2184, %v341
    %v2217 = vmul.f32 %v2185, %v346
    %v2218 = vmul.f32 %v2186, %v346
    %v2219 = vmul.f32 %v2187, %v351
    %v2220 = vmul.f32 %v2188, %v351
    %v2221 = vmul.f32 %v2189, %v356
    %v2222 = vmul.f32 %v2190, %v356
    %v2223 = vadd.f32 %v2191, %v2193
    %v2224 = vadd.f32 %v2223, %v2195
    %v2225 = vadd.f32 %v2224, %v2197
    %v2226 = vadd.f32 %v2225, %v2199
    %v2227 = vadd.f32 %v2226, %v2201
    %v2228 = vadd.f32 %v2227, %v2203
    %v2229 = vadd.f32 %v2228, %v2205
    %v2230 = vadd.f32 %v2229, %v2207
    %v2231 = vadd.f32 %v2230, %v2209
    %v2232 = vadd.f32 %v2231, %v2211
    %v2233 = vadd.f32 %v2232, %v2213
    %v2234 = vadd.f32 %v2233, %v2215
    %v2235 = vadd.f32 %v2234, %v2217
    %v2236 = vadd.f32 %v2235, %v2219
    %v2237 = vadd.f32 %v2236, %v2221
    %v2238 = vrot.slane %v2237, 4
    %v2239 = vadd.f32 %v2237, %v2238
    %v2240 = vrot.slane %v2239, 2
    %v2241 = vadd.f32 %v2239, %v2240
    %v2242 = vrot.slane %v2241, 1
    %v2243 = vadd.f32 %v2241, %v2242
    %v2244 = vadd.f32 %v2192, %v2194
    %v2245 = vadd.f32 %v2244, %v2196
    %v2246 = vadd.f32 %v2245, %v2198
    %v2247 = vadd.f32 %v2246, %v2200
    %v2248 = vadd.f32 %v2247, %v2202
    %v2249 = vadd.f32 %v2248, %v2204
    %v2250 = vadd.f32 %v2249, %v2206
    %v2251 = vadd.f32 %v2250, %v2208
    %v2252 = vadd.f32 %v2251, %v2210
    %v2253 = vadd.f32 %v2252, %v2212
    %v2254 = vadd.f32 %v2253, %v2214
    %v2255 = vadd.f32 %v2254, %v2216
    %v2256 = vadd.f32 %v2255, %v2218
    %v2257 = vadd.f32 %v2256, %v2220
    %v2258 = vadd.f32 %v2257, %v2222
    %v2259 = vrot.slane %v2258, 4
    %v2260 = vadd.f32 %v2258, %v2259
    %v2261 = vrot.slane %v2260, 2
    %v2262 = vadd.f32 %v2260, %v2261
    %v2263 = vrot.slane %v2262, 1
    %v2264 = vadd.f32 %v2262, %v2263
    %v2265 = vstv %s164
    %v2266 = vmul.f32 %v2243, %v2265
    %v2267 = vmul.f32 %v2264, %v2265
    %v2268 = vmul.f32 %v2159, %v2159
    %v2269 = vmul.f32 %v2160, %v2160
    %v2270 = vmul.f32 %v2161, %v2161
    %v2271 = vmul.f32 %v2162, %v2162
    %v2272 = vmul.f32 %v2163, %v2163
    %v2273 = vmul.f32 %v2164, %v2164
    %v2274 = vmul.f32 %v2165, %v2165
    %v2275 = vmul.f32 %v2166, %v2166
    %v2276 = vmul.f32 %v2167, %v2167
    %v2277 = vmul.f32 %v2168, %v2168
    %v2278 = vmul.f32 %v2169, %v2169
    %v2279 = vmul.f32 %v2170, %v2170
    %v2280 = vmul.f32 %v2171, %v2171
    %v2281 = vmul.f32 %v2172, %v2172
    %v2282 = vmul.f32 %v2173, %v2173
    %v2283 = vmul.f32 %v2174, %v2174
    %v2284 = vmul.f32 %v2175, %v2175
    %v2285 = vmul.f32 %v2176, %v2176
    %v2286 = vmul.f32 %v2177, %v2177
    %v2287 = vmul.f32 %v2178, %v2178
    %v2288 = vmul.f32 %v2179, %v2179
    %v2289 = vmul.f32 %v2180, %v2180
    %v2290 = vmul.f32 %v2181, %v2181
    %v2291 = vmul.f32 %v2182, %v2182
    %v2292 = vmul.f32 %v2183, %v2183
    %v2293 = vmul.f32 %v2184, %v2184
    %v2294 = vmul.f32 %v2185, %v2185
    %v2295 = vmul.f32 %v2186, %v2186
    %v2296 = vmul.f32 %v2187, %v2187
    %v2297 = vmul.f32 %v2188, %v2188
    %v2298 = vmul.f32 %v2189, %v2189
    %v2299 = vmul.f32 %v2190, %v2190
    %v2300 = vmul.f32 %v2268, %v281
    %v2301 = vmul.f32 %v2269, %v281
    %v2302 = vmul.f32 %v2270, %v286
    %v2303 = vmul.f32 %v2271, %v286
    %v2304 = vmul.f32 %v2272, %v291
    %v2305 = vmul.f32 %v2273, %v291
    %v2306 = vmul.f32 %v2274, %v296
    %v2307 = vmul.f32 %v2275, %v296
    %v2308 = vmul.f32 %v2276, %v301
    %v2309 = vmul.f32 %v2277, %v301
    %v2310 = vmul.f32 %v2278, %v306
    %v2311 = vmul.f32 %v2279, %v306
    %v2312 = vmul.f32 %v2280, %v311
    %v2313 = vmul.f32 %v2281, %v311
    %v2314 = vmul.f32 %v2282, %v316
    %v2315 = vmul.f32 %v2283, %v316
    %v2316 = vmul.f32 %v2284, %v321
    %v2317 = vmul.f32 %v2285, %v321
    %v2318 = vmul.f32 %v2286, %v326
    %v2319 = vmul.f32 %v2287, %v326
    %v2320 = vmul.f32 %v2288, %v331
    %v2321 = vmul.f32 %v2289, %v331
    %v2322 = vmul.f32 %v2290, %v336
    %v2323 = vmul.f32 %v2291, %v336
    %v2324 = vmul.f32 %v2292, %v341
    %v2325 = vmul.f32 %v2293, %v341
    %v2326 = vmul.f32 %v2294, %v346
    %v2327 = vmul.f32 %v2295, %v346
    %v2328 = vmul.f32 %v2296, %v351
    %v2329 = vmul.f32 %v2297, %v351
    %v2330 = vmul.f32 %v2298, %v356
    %v2331 = vmul.f32 %v2299, %v356
    %v2332 = vadd.f32 %v2300, %v2302
    %v2333 = vadd.f32 %v2332, %v2304
    %v2334 = vadd.f32 %v2333, %v2306
    %v2335 = vadd.f32 %v2334, %v2308
    %v2336 = vadd.f32 %v2335, %v2310
    %v2337 = vadd.f32 %v2336, %v2312
    %v2338 = vadd.f32 %v2337, %v2314
    %v2339 = vadd.f32 %v2338, %v2316
    %v2340 = vadd.f32 %v2339, %v2318
    %v2341 = vadd.f32 %v2340, %v2320
    %v2342 = vadd.f32 %v2341, %v2322
    %v2343 = vadd.f32 %v2342, %v2324
    %v2344 = vadd.f32 %v2343, %v2326
    %v2345 = vadd.f32 %v2344, %v2328
    %v2346 = vadd.f32 %v2345, %v2330
    %v2347 = vrot.slane %v2346, 4
    %v2348 = vadd.f32 %v2346, %v2347
    %v2349 = vrot.slane %v2348, 2
    %v2350 = vadd.f32 %v2348, %v2349
    %v2351 = vrot.slane %v2350, 1
    %v2352 = vadd.f32 %v2350, %v2351
    %v2353 = vadd.f32 %v2301, %v2303
    %v2354 = vadd.f32 %v2353, %v2305
    %v2355 = vadd.f32 %v2354, %v2307
    %v2356 = vadd.f32 %v2355, %v2309
    %v2357 = vadd.f32 %v2356, %v2311
    %v2358 = vadd.f32 %v2357, %v2313
    %v2359 = vadd.f32 %v2358, %v2315
    %v2360 = vadd.f32 %v2359, %v2317
    %v2361 = vadd.f32 %v2360, %v2319
    %v2362 = vadd.f32 %v2361, %v2321
    %v2363 = vadd.f32 %v2362, %v2323
    %v2364 = vadd.f32 %v2363, %v2325
    %v2365 = vadd.f32 %v2364, %v2327
    %v2366 = vadd.f32 %v2365, %v2329
    %v2367 = vadd.f32 %v2366, %v2331
    %v2368 = vrot.slane %v2367, 4
    %v2369 = vadd.f32 %v2367, %v2368
    %v2370 = vrot.slane %v2369, 2
    %v2371 = vadd.f32 %v2369, %v2370
    %v2372 = vrot.slane %v2371, 1
    %v2373 = vadd.f32 %v2371, %v2372
    %v2374 = vmul.f32 %v2352, %v2265
    %v2375 = vmul.f32 %v2373, %v2265
    %v2376 = vmul.f32 %v2266, %v2266
    %v2377 = vmul.f32 %v2267, %v2267
    %v2378 = vsub.f32 %v2374, %v2376
    %v2379 = vsub.f32 %v2375, %v2377
    %v2380 = vmax.f32 %v2378, 0.0
    %v2381 = vmax.f32 %v2379, 0.0
    %v2382 = vadd.f32 %v2380, 1e-05
    %v2383 = vadd.f32 %v2381, 1e-05
    %v2384 = vrsqrt.pop %v2382
    %v2385 = vmul.f32 %v2384, %v2382
    %v2386 = vmul.f32 %v2385, %v2384
    %v2387 = vmul.f32 0.5, %v2386
    %v2388 = vsub.f32 1.5, %v2387
    %v2389 = vmul.f32 %v2384, %v2388
    %vm2390 = vweird.f32 %v2382
    %vm2391 = vweird.f32 %v2384
    %vm2392 = vmor %vm2390, %vm2391
    %v2393 = vsel %vm2392, %v2384, %v2389
    %v2394 = vrsqrt.pop %v2383
    %v2395 = vmul.f32 %v2394, %v2383
    %v2396 = vmul.f32 %v2395, %v2394
    %v2397 = vmul.f32 0.5, %v2396
    %v2398 = vsub.f32 1.5, %v2397
    %v2399 = vmul.f32 %v2394, %v2398
    %vm2400 = vweird.f32 %v2383
    %vm2401 = vweird.f32 %v2394
    %vm2402 = vmor %vm2400, %vm2401
    %v2403 = vsel %vm2402, %v2394, %v2399
    %v2406 = vrot.slane %v2403, 7
    %vm2407 = vcmask 1040384
    %v2408 = vsel %vm2407, %v2393, %v2406
    %v2410 = vmul.f32 %v1099, %v2408
    %v2412 = vperm.slane %v2410, 0
    %v2413 = vperm.slane %v2410, 1
    %v2416 = vmul.f32 %v2159, %v2412
    %v2417 = vmul.f32 %v2160, %v2413
    %v2418 = vmul.f32 %v2161, %v2412
    %v2419 = vmul.f32 %v2162, %v2413
    %v2420 = vmul.f32 %v2163, %v2412
    %v2421 = vmul.f32 %v2164, %v2413
    %v2422 = vmul.f32 %v2165, %v2412
    %v2423 = vmul.f32 %v2166, %v2413
    %v2424 = vmul.f32 %v2167, %v2412
    %v2425 = vmul.f32 %v2168, %v2413
    %v2426 = vmul.f32 %v2169, %v2412
    %v2427 = vmul.f32 %v2170, %v2413
    %v2428 = vmul.f32 %v2171, %v2412
    %v2429 = vmul.f32 %v2172, %v2413
    %v2430 = vmul.f32 %v2173, %v2412
    %v2431 = vmul.f32 %v2174, %v2413
    %v2432 = vmul.f32 %v2175, %v2412
    %v2433 = vmul.f32 %v2176, %v2413
    %v2434 = vmul.f32 %v2177, %v2412
    %v2435 = vmul.f32 %v2178, %v2413
    %v2436 = vmul.f32 %v2179, %v2412
    %v2437 = vmul.f32 %v2180, %v2413
    %v2438 = vmul.f32 %v2181, %v2412
    %v2439 = vmul.f32 %v2182, %v2413
    %v2440 = vmul.f32 %v2183, %v2412
    %v2441 = vmul.f32 %v2184, %v2413
    %v2442 = vmul.f32 %v2185, %v2412
    %v2443 = vmul.f32 %v2186, %v2413
    %v2444 = vmul.f32 %v2187, %v2412
    %v2445 = vmul.f32 %v2188, %v2413
    %v2446 = vmul.f32 %v2189, %v2412
    %v2447 = vmul.f32 %v2190, %v2413
    %v2448 = vmul.f32 %v2266, %v2412
    %v2449 = vmul.f32 %v2267, %v2413
    %v2452 = vrot.slane %v2449, 7
    %v2453 = vsel %vm2407, %v2448, %v2452
    %v2455 = vsub.f32 %v1101, %v2453
    %v2457 = vperm.slane %v2455, 0
    %v2458 = vperm.slane %v2455, 1
    %v2461 = vadd.f32 %v2416, %v2457
    %v2462 = vadd.f32 %v2417, %v2458
    %v2463 = vadd.f32 %v2418, %v2457
    %v2464 = vadd.f32 %v2419, %v2458
    %v2465 = vadd.f32 %v2420, %v2457
    %v2466 = vadd.f32 %v2421, %v2458
    %v2467 = vadd.f32 %v2422, %v2457
    %v2468 = vadd.f32 %v2423, %v2458
    %v2469 = vadd.f32 %v2424, %v2457
    %v2470 = vadd.f32 %v2425, %v2458
    %v2471 = vadd.f32 %v2426, %v2457
    %v2472 = vadd.f32 %v2427, %v2458
    %v2473 = vadd.f32 %v2428, %v2457
    %v2474 = vadd.f32 %v2429, %v2458
    %v2475 = vadd.f32 %v2430, %v2457
    %v2476 = vadd.f32 %v2431, %v2458
    %v2477 = vadd.f32 %v2432, %v2457
    %v2478 = vadd.f32 %v2433, %v2458
    %v2479 = vadd.f32 %v2434, %v2457
    %v2480 = vadd.f32 %v2435, %v2458
    %v2481 = vadd.f32 %v2436, %v2457
    %v2482 = vadd.f32 %v2437, %v2458
    %v2483 = vadd.f32 %v2438, %v2457
    %v2484 = vadd.f32 %v2439, %v2458
    %v2485 = vadd.f32 %v2440, %v2457
    %v2486 = vadd.f32 %v2441, %v2458
    %v2487 = vadd.f32 %v2442, %v2457
    %v2488 = vadd.f32 %v2443, %v2458
    %v2489 = vadd.f32 %v2444, %v2457
    %v2490 = vadd.f32 %v2445, %v2458
    %v2491 = vadd.f32 %v2446, %v2457
    %v2492 = vadd.f32 %v2447, %v2458
    %v2493 = vmul.f32 %v2461, %v281
    %v2494 = vmul.f32 %v2462, %v281
    %v2495 = vmul.f32 %v2463, %v286
    %v2496 = vmul.f32 %v2464, %v286
    %v2497 = vmul.f32 %v2465, %v291
    %v2498 = vmul.f32 %v2466, %v291
    %v2499 = vmul.f32 %v2467, %v296
    %v2500 = vmul.f32 %v2468, %v296
    %v2501 = vmul.f32 %v2469, %v301
    %v2502 = vmul.f32 %v2470, %v301
    %v2503 = vmul.f32 %v2471, %v306
    %v2504 = vmul.f32 %v2472, %v306
    %v2505 = vmul.f32 %v2473, %v311
    %v2506 = vmul.f32 %v2474, %v311
    %v2507 = vmul.f32 %v2475, %v316
    %v2508 = vmul.f32 %v2476, %v316
    %v2509 = vmul.f32 %v2477, %v321
    %v2510 = vmul.f32 %v2478, %v321
    %v2511 = vmul.f32 %v2479, %v326
    %v2512 = vmul.f32 %v2480, %v326
    %v2513 = vmul.f32 %v2481, %v331
    %v2514 = vmul.f32 %v2482, %v331
    %v2515 = vmul.f32 %v2483, %v336
    %v2516 = vmul.f32 %v2484, %v336
    %v2517 = vmul.f32 %v2485, %v341
    %v2518 = vmul.f32 %v2486, %v341
    %v2519 = vmul.f32 %v2487, %v346
    %v2520 = vmul.f32 %v2488, %v346
    %v2521 = vmul.f32 %v2489, %v351
    %v2522 = vmul.f32 %v2490, %v351
    %v2523 = vmul.f32 %v2491, %v356
    %v2524 = vmul.f32 %v2492, %v356
    %v2525 = vadd.f32 %v1366, %v582
    %v2526 = vadd.f32 %v1455, %v583
    %v2527 = vadd.f32 %v1368, %v584
    %v2528 = vadd.f32 %v1457, %v585
    %v2529 = vadd.f32 %v1371, %v586
    %v2530 = vadd.f32 %v1460, %v587
    %v2531 = vadd.f32 %v1373, %v588
    %v2532 = vadd.f32 %v1462, %v589
    %v2533 = vadd.f32 %v1376, %v590
    %v2534 = vadd.f32 %v1465, %v591
    %v2535 = vadd.f32 %v1378, %v592
    %v2536 = vadd.f32 %v1467, %v593
    %v2537 = vadd.f32 %v1381, %v594
    %v2538 = vadd.f32 %v1470, %v595
    %v2539 = vadd.f32 %v1383, %v596
    %v2540 = vadd.f32 %v1472, %v597
    %v2541 = vadd.f32 %v1386, %v598
    %v2542 = vadd.f32 %v1475, %v599
    %v2543 = vadd.f32 %v1388, %v600
    %v2544 = vadd.f32 %v1477, %v601
    %v2545 = vadd.f32 %v1391, %v602
    %v2546 = vadd.f32 %v1480, %v603
    %v2547 = vadd.f32 %v1393, %v604
    %v2548 = vadd.f32 %v1482, %v605
    %v2549 = vadd.f32 %v1396, %v606
    %v2550 = vadd.f32 %v1485, %v607
    %v2551 = vadd.f32 %v1398, %v608
    %v2552 = vadd.f32 %v1487, %v609
    %v2553 = vadd.f32 %v1401, %v610
    %v2554 = vadd.f32 %v1490, %v611
    %v2555 = vadd.f32 %v1403, %v612
    %v2556 = vadd.f32 %v1492, %v613
    %v2557 = vpack.c.bf16 %v2527, %v2525
    %v2558 = vpack.c.bf16 %v2528, %v2526
    %v2559 = vpack.c.bf16 %v2531, %v2529
    %v2560 = vpack.c.bf16 %v2532, %v2530
    %v2561 = vpack.c.bf16 %v2535, %v2533
    %v2562 = vpack.c.bf16 %v2536, %v2534
    %v2563 = vpack.c.bf16 %v2539, %v2537
    %v2564 = vpack.c.bf16 %v2540, %v2538
    %v2565 = vpack.c.bf16 %v2543, %v2541
    %v2566 = vpack.c.bf16 %v2544, %v2542
    %v2567 = vpack.c.bf16 %v2547, %v2545
    %v2568 = vpack.c.bf16 %v2548, %v2546
    %v2569 = vpack.c.bf16 %v2551, %v2549
    %v2570 = vpack.c.bf16 %v2552, %v2550
    %v2571 = vpack.c.bf16 %v2555, %v2553
    %v2572 = vpack.c.bf16 %v2556, %v2554
    %v2574 = vperm.slane %v1135, 0
    %v2575 = vperm.slane %v1135, 1
    %v2610 = vunpack.c.l.b16 %v1102
    %v2611 = vunpack.c.h.b16 %v1102
    %v2612 = vunpack.c.l.b16 %v1103
    %v2613 = vunpack.c.h.b16 %v1103
    %v2614 = vunpack.c.l.b16 %v1104
    %v2615 = vunpack.c.h.b16 %v1104
    %v2616 = vunpack.c.l.b16 %v1105
    %v2617 = vunpack.c.h.b16 %v1105
    %v2618 = vunpack.c.l.b16 %v1106
    %v2619 = vunpack.c.h.b16 %v1106
    %v2620 = vunpack.c.l.b16 %v1107
    %v2621 = vunpack.c.h.b16 %v1107
    %v2622 = vunpack.c.l.b16 %v1108
    %v2623 = vunpack.c.h.b16 %v1108
    %v2624 = vunpack.c.l.b16 %v1109
    %v2625 = vunpack.c.h.b16 %v1109
    %v2626 = vunpack.c.l.b16 %v1110
    %v2627 = vunpack.c.h.b16 %v1110
    %v2628 = vunpack.c.l.b16 %v1111
    %v2629 = vunpack.c.h.b16 %v1111
    %v2630 = vunpack.c.l.b16 %v1112
    %v2631 = vunpack.c.h.b16 %v1112
    %v2632 = vunpack.c.l.b16 %v1113
    %v2633 = vunpack.c.h.b16 %v1113
    %v2634 = vunpack.c.l.b16 %v1114
    %v2635 = vunpack.c.h.b16 %v1114
    %v2636 = vunpack.c.l.b16 %v1115
    %v2637 = vunpack.c.h.b16 %v1115
    %v2638 = vunpack.c.l.b16 %v1116
    %v2639 = vunpack.c.h.b16 %v1116
    %v2640 = vunpack.c.l.b16 %v1117
    %v2641 = vunpack.c.h.b16 %v1117
    %v2642 = vunpack.c.l.b16 %v1118
    %v2643 = vunpack.c.h.b16 %v1118
    %v2644 = vunpack.c.l.b16 %v1119
    %v2645 = vunpack.c.h.b16 %v1119
    %v2646 = vunpack.c.l.b16 %v1120
    %v2647 = vunpack.c.h.b16 %v1120
    %v2648 = vunpack.c.l.b16 %v1121
    %v2649 = vunpack.c.h.b16 %v1121
    %v2650 = vunpack.c.l.b16 %v1122
    %v2651 = vunpack.c.h.b16 %v1122
    %v2652 = vunpack.c.l.b16 %v1123
    %v2653 = vunpack.c.h.b16 %v1123
    %v2654 = vunpack.c.l.b16 %v1124
    %v2655 = vunpack.c.h.b16 %v1124
    %v2656 = vunpack.c.l.b16 %v1125
    %v2657 = vunpack.c.h.b16 %v1125
    %v2658 = vunpack.c.l.b16 %v1126
    %v2659 = vunpack.c.h.b16 %v1126
    %v2660 = vunpack.c.l.b16 %v1127
    %v2661 = vunpack.c.h.b16 %v1127
    %v2662 = vunpack.c.l.b16 %v1128
    %v2663 = vunpack.c.h.b16 %v1128
    %v2664 = vunpack.c.l.b16 %v1129
    %v2665 = vunpack.c.h.b16 %v1129
    %v2666 = vunpack.c.l.b16 %v1130
    %v2667 = vunpack.c.h.b16 %v1130
    %v2668 = vunpack.c.l.b16 %v1131
    %v2669 = vunpack.c.h.b16 %v1131
    %v2670 = vunpack.c.l.b16 %v1132
    %v2671 = vunpack.c.h.b16 %v1132
    %v2672 = vunpack.c.l.b16 %v1133
    %v2673 = vunpack.c.h.b16 %v1133
    %v2674 = vpack.c.b16 %v2612, %v2610
    %v2675 = vpack.c.b16 %v2613, %v2611
    %v2676 = vpack.c.b16 %v2616, %v2614
    %v2677 = vpack.c.b16 %v2617, %v2615
    %v2678 = vpack.c.b16 %v2620, %v2618
    %v2679 = vpack.c.b16 %v2621, %v2619
    %v2680 = vpack.c.b16 %v2624, %v2622
    %v2681 = vpack.c.b16 %v2625, %v2623
    %v2682 = vpack.c.b16 %v2628, %v2626
    %v2683 = vpack.c.b16 %v2629, %v2627
    %v2684 = vpack.c.b16 %v2632, %v2630
    %v2685 = vpack.c.b16 %v2633, %v2631
    %v2686 = vpack.c.b16 %v2636, %v2634
    %v2687 = vpack.c.b16 %v2637, %v2635
    %v2688 = vpack.c.b16 %v2640, %v2638
    %v2689 = vpack.c.b16 %v2641, %v2639
    %v2690 = vpack.c.b16 %v2644, %v2642
    %v2691 = vpack.c.b16 %v2645, %v2643
    %v2692 = vpack.c.b16 %v2648, %v2646
    %v2693 = vpack.c.b16 %v2649, %v2647
    %v2694 = vpack.c.b16 %v2652, %v2650
    %v2695 = vpack.c.b16 %v2653, %v2651
    %v2696 = vpack.c.b16 %v2656, %v2654
    %v2697 = vpack.c.b16 %v2657, %v2655
    %v2698 = vpack.c.b16 %v2660, %v2658
    %v2699 = vpack.c.b16 %v2661, %v2659
    %v2700 = vpack.c.b16 %v2664, %v2662
    %v2701 = vpack.c.b16 %v2665, %v2663
    %v2702 = vpack.c.b16 %v2668, %v2666
    %v2703 = vpack.c.b16 %v2669, %v2667
    %v2704 = vpack.c.b16 %v2672, %v2670
    %v2705 = vpack.c.b16 %v2673, %v2671
    %2738 = vmatpush.bf16.msra.mxu0 %v2688
    %2739 = vmatpush.bf16.msra.mxu0 %v2686
    %2740 = vmatpush.bf16.msra.mxu0 %v2684
    %2741 = vmatpush.bf16.msra.mxu0 %v2682
    %2742 = vmatpush.bf16.msra.mxu0 %v2680
    %2743 = vmatpush.bf16.msra.mxu0 %v2678
    %2744 = vmatpush.bf16.msra.mxu0 %v2676
    %2745 = vmatpush.bf16.msra.mxu0 %v2674
    %2746 = vmatmul.bf16.gmra.mxu0 %v2557
    %v2747 = vpop.f32.mrf.mxu0
    %v2748 = vadd.f32 %v2574, %v2747
    %v2749 = vpop.f32.mrf.mxu0
    %v2750 = vadd.f32 %v2574, %v2749
    %2751 = vmatmul.bf16.gmra.mxu0 %v2559
    %v2752 = vpop.f32.mrf.mxu0
    %v2753 = vadd.f32 %v2574, %v2752
    %v2754 = vpop.f32.mrf.mxu0
    %v2755 = vadd.f32 %v2574, %v2754
    %2756 = vmatmul.bf16.gmra.mxu0 %v2561
    %v2757 = vpop.f32.mrf.mxu0
    %v2758 = vadd.f32 %v2574, %v2757
    %v2759 = vpop.f32.mrf.mxu0
    %v2760 = vadd.f32 %v2574, %v2759
    %2761 = vmatmul.bf16.gmra.mxu0 %v2563
    %v2762 = vpop.f32.mrf.mxu0
    %v2763 = vadd.f32 %v2574, %v2762
    %v2764 = vpop.f32.mrf.mxu0
    %v2765 = vadd.f32 %v2574, %v2764
    %2766 = vmatmul.bf16.gmra.mxu0 %v2565
    %v2767 = vpop.f32.mrf.mxu0
    %v2768 = vadd.f32 %v2574, %v2767
    %v2769 = vpop.f32.mrf.mxu0
    %v2770 = vadd.f32 %v2574, %v2769
    %2771 = vmatmul.bf16.gmra.mxu0 %v2567
    %v2772 = vpop.f32.mrf.mxu0
    %v2773 = vadd.f32 %v2574, %v2772
    %v2774 = vpop.f32.mrf.mxu0
    %v2775 = vadd.f32 %v2574, %v2774
    %2776 = vmatmul.bf16.gmra.mxu0 %v2569
    %v2777 = vpop.f32.mrf.mxu0
    %v2778 = vadd.f32 %v2574, %v2777
    %v2779 = vpop.f32.mrf.mxu0
    %v2780 = vadd.f32 %v2574, %v2779
    %2781 = vmatmul.bf16.gmra.mxu0 %v2571
    %v2782 = vpop.f32.mrf.mxu0
    %v2783 = vadd.f32 %v2574, %v2782
    %v2784 = vpop.f32.mrf.mxu0
    %v2785 = vadd.f32 %v2574, %v2784
    %2786 = vdwg.mxu0
    %2787 = vmatpush.bf16.msra.mxu0 %v2704
    %2788 = vmatpush.bf16.msra.mxu0 %v2702
    %2789 = vmatpush.bf16.msra.mxu0 %v2700
    %2790 = vmatpush.bf16.msra.mxu0 %v2698
    %2791 = vmatpush.bf16.msra.mxu0 %v2696
    %2792 = vmatpush.bf16.msra.mxu0 %v2694
    %2793 = vmatpush.bf16.msra.mxu0 %v2692
    %2794 = vmatpush.bf16.msra.mxu0 %v2690
    %2795 = vmatmul.bf16.gmra.mxu0 %v2558
    %v2796 = vpop.f32.mrf.mxu0
    %v2797 = vadd.f32 %v2748, %v2796
    %v2798 = vpop.f32.mrf.mxu0
    %v2799 = vadd.f32 %v2750, %v2798
    %2800 = vmatmul.bf16.gmra.mxu0 %v2560
    %v2801 = vpop.f32.mrf.mxu0
    %v2802 = vadd.f32 %v2753, %v2801
    %v2803 = vpop.f32.mrf.mxu0
    %v2804 = vadd.f32 %v2755, %v2803
    %2805 = vmatmul.bf16.gmra.mxu0 %v2562
    %v2806 = vpop.f32.mrf.mxu0
    %v2807 = vadd.f32 %v2758, %v2806
    %v2808 = vpop.f32.mrf.mxu0
    %v2809 = vadd.f32 %v2760, %v2808
    %2810 = vmatmul.bf16.gmra.mxu0 %v2564
    %v2811 = vpop.f32.mrf.mxu0
    %v2812 = vadd.f32 %v2763, %v2811
    %v2813 = vpop.f32.mrf.mxu0
    %v2814 = vadd.f32 %v2765, %v2813
    %2815 = vmatmul.bf16.gmra.mxu0 %v2566
    %v2816 = vpop.f32.mrf.mxu0
    %v2817 = vadd.f32 %v2768, %v2816
    %v2818 = vpop.f32.mrf.mxu0
    %v2819 = vadd.f32 %v2770, %v2818
    %2820 = vmatmul.bf16.gmra.mxu0 %v2568
    %v2821 = vpop.f32.mrf.mxu0
    %v2822 = vadd.f32 %v2773, %v2821
    %v2823 = vpop.f32.mrf.mxu0
    %v2824 = vadd.f32 %v2775, %v2823
    %2825 = vmatmul.bf16.gmra.mxu0 %v2570
    %v2826 = vpop.f32.mrf.mxu0
    %v2827 = vadd.f32 %v2778, %v2826
    %v2828 = vpop.f32.mrf.mxu0
    %v2829 = vadd.f32 %v2780, %v2828
    %2830 = vmatmul.bf16.gmra.mxu0 %v2572
    %v2831 = vpop.f32.mrf.mxu0
    %v2832 = vadd.f32 %v2783, %v2831
    %v2833 = vpop.f32.mrf.mxu0
    %v2834 = vadd.f32 %v2785, %v2833
    %2835 = vdwg.mxu0
    %2836 = vmatpush.bf16.msra.mxu0 %v2689
    %2837 = vmatpush.bf16.msra.mxu0 %v2687
    %2838 = vmatpush.bf16.msra.mxu0 %v2685
    %2839 = vmatpush.bf16.msra.mxu0 %v2683
    %2840 = vmatpush.bf16.msra.mxu0 %v2681
    %2841 = vmatpush.bf16.msra.mxu0 %v2679
    %2842 = vmatpush.bf16.msra.mxu0 %v2677
    %2843 = vmatpush.bf16.msra.mxu0 %v2675
    %2844 = vmatmul.bf16.gmra.mxu0 %v2557
    %v2845 = vpop.f32.mrf.mxu0
    %v2846 = vadd.f32 %v2575, %v2845
    %v2847 = vpop.f32.mrf.mxu0
    %v2848 = vadd.f32 %v2575, %v2847
    %2849 = vmatmul.bf16.gmra.mxu0 %v2559
    %v2850 = vpop.f32.mrf.mxu0
    %v2851 = vadd.f32 %v2575, %v2850
    %v2852 = vpop.f32.mrf.mxu0
    %v2853 = vadd.f32 %v2575, %v2852
    %2854 = vmatmul.bf16.gmra.mxu0 %v2561
    %v2855 = vpop.f32.mrf.mxu0
    %v2856 = vadd.f32 %v2575, %v2855
    %v2857 = vpop.f32.mrf.mxu0
    %v2858 = vadd.f32 %v2575, %v2857
    %2859 = vmatmul.bf16.gmra.mxu0 %v2563
    %v2860 = vpop.f32.mrf.mxu0
    %v2861 = vadd.f32 %v2575, %v2860
    %v2862 = vpop.f32.mrf.mxu0
    %v2863 = vadd.f32 %v2575, %v2862
    %2864 = vmatmul.bf16.gmra.mxu0 %v2565
    %v2865 = vpop.f32.mrf.mxu0
    %v2866 = vadd.f32 %v2575, %v2865
    %v2867 = vpop.f32.mrf.mxu0
    %v2868 = vadd.f32 %v2575, %v2867
    %2869 = vmatmul.bf16.gmra.mxu0 %v2567
    %v2870 = vpop.f32.mrf.mxu0
    %v2871 = vadd.f32 %v2575, %v2870
    %v2872 = vpop.f32.mrf.mxu0
    %v2873 = vadd.f32 %v2575, %v2872
    %2874 = vmatmul.bf16.gmra.mxu0 %v2569
    %v2875 = vpop.f32.mrf.mxu0
    %v2876 = vadd.f32 %v2575, %v2875
    %v2877 = vpop.f32.mrf.mxu0
    %v2878 = vadd.f32 %v2575, %v2877
    %2879 = vmatmul.bf16.gmra.mxu0 %v2571
    %v2880 = vpop.f32.mrf.mxu0
    %v2881 = vadd.f32 %v2575, %v2880
    %v2882 = vpop.f32.mrf.mxu0
    %v2883 = vadd.f32 %v2575, %v2882
    %2884 = vdwg.mxu0
    %2885 = vmatpush.bf16.msra.mxu0 %v2705
    %2886 = vmatpush.bf16.msra.mxu0 %v2703
    %2887 = vmatpush.bf16.msra.mxu0 %v2701
    %2888 = vmatpush.bf16.msra.mxu0 %v2699
    %2889 = vmatpush.bf16.msra.mxu0 %v2697
    %2890 = vmatpush.bf16.msra.mxu0 %v2695
    %2891 = vmatpush.bf16.msra.mxu0 %v2693
    %2892 = vmatpush.bf16.msra.mxu0 %v2691
    %2893 = vmatmul.bf16.gmra.mxu0 %v2558
    %v2894 = vpop.f32.mrf.mxu0
    %v2895 = vadd.f32 %v2846, %v2894
    %v2896 = vpop.f32.mrf.mxu0
    %v2897 = vadd.f32 %v2848, %v2896
    %2898 = vmatmul.bf16.gmra.mxu0 %v2560
    %v2899 = vpop.f32.mrf.mxu0
    %v2900 = vadd.f32 %v2851, %v2899
    %v2901 = vpop.f32.mrf.mxu0
    %v2902 = vadd.f32 %v2853, %v2901
    %2903 = vmatmul.bf16.gmra.mxu0 %v2562
    %v2904 = vpop.f32.mrf.mxu0
    %v2905 = vadd.f32 %v2856, %v2904
    %v2906 = vpop.f32.mrf.mxu0
    %v2907 = vadd.f32 %v2858, %v2906
    %2908 = vmatmul.bf16.gmra.mxu0 %v2564
    %v2909 = vpop.f32.mrf.mxu0
    %v2910 = vadd.f32 %v2861, %v2909
    %v2911 = vpop.f32.mrf.mxu0
    %v2912 = vadd.f32 %v2863, %v2911
    %2913 = vmatmul.bf16.gmra.mxu0 %v2566
    %v2914 = vpop.f32.mrf.mxu0
    %v2915 = vadd.f32 %v2866, %v2914
    %v2916 = vpop.f32.mrf.mxu0
    %v2917 = vadd.f32 %v2868, %v2916
    %2918 = vmatmul.bf16.gmra.mxu0 %v2568
    %v2919 = vpop.f32.mrf.mxu0
    %v2920 = vadd.f32 %v2871, %v2919
    %v2921 = vpop.f32.mrf.mxu0
    %v2922 = vadd.f32 %v2873, %v2921
    %2923 = vmatmul.bf16.gmra.mxu0 %v2570
    %v2924 = vpop.f32.mrf.mxu0
    %v2925 = vadd.f32 %v2876, %v2924
    %v2926 = vpop.f32.mrf.mxu0
    %v2927 = vadd.f32 %v2878, %v2926
    %2928 = vmatmul.bf16.gmra.mxu0 %v2572
    %v2929 = vpop.f32.mrf.mxu0
    %v2930 = vadd.f32 %v2881, %v2929
    %v2931 = vpop.f32.mrf.mxu0
    %v2932 = vadd.f32 %v2883, %v2931
    %2933 = vdwg.mxu0
    %v2934 = vmul.f32 %v2797, %v2797
    %v2935 = vmul.f32 %v2895, %v2895
    %v2936 = vmul.f32 %v2799, %v2799
    %v2937 = vmul.f32 %v2897, %v2897
    %v2938 = vmul.f32 %v2802, %v2802
    %v2939 = vmul.f32 %v2900, %v2900
    %v2940 = vmul.f32 %v2804, %v2804
    %v2941 = vmul.f32 %v2902, %v2902
    %v2942 = vmul.f32 %v2807, %v2807
    %v2943 = vmul.f32 %v2905, %v2905
    %v2944 = vmul.f32 %v2809, %v2809
    %v2945 = vmul.f32 %v2907, %v2907
    %v2946 = vmul.f32 %v2812, %v2812
    %v2947 = vmul.f32 %v2910, %v2910
    %v2948 = vmul.f32 %v2814, %v2814
    %v2949 = vmul.f32 %v2912, %v2912
    %v2950 = vmul.f32 %v2817, %v2817
    %v2951 = vmul.f32 %v2915, %v2915
    %v2952 = vmul.f32 %v2819, %v2819
    %v2953 = vmul.f32 %v2917, %v2917
    %v2954 = vmul.f32 %v2822, %v2822
    %v2955 = vmul.f32 %v2920, %v2920
    %v2956 = vmul.f32 %v2824, %v2824
    %v2957 = vmul.f32 %v2922, %v2922
    %v2958 = vmul.f32 %v2827, %v2827
    %v2959 = vmul.f32 %v2925, %v2925
    %v2960 = vmul.f32 %v2829, %v2829
    %v2961 = vmul.f32 %v2927, %v2927
    %v2962 = vmul.f32 %v2832, %v2832
    %v2963 = vmul.f32 %v2930, %v2930
    %v2964 = vmul.f32 %v2834, %v2834
    %v2965 = vmul.f32 %v2932, %v2932
    %v2966 = vadd.f32 %v2934, %v2935
    %2967 = vadd.xlane.f32.xlu0 %v2966
    %v2968 = vpop.xlane.xlu0 %2967
    %v2969 = vadd.f32 %v2936, %v2937
    %2970 = vadd.xlane.f32.xlu0 %v2969
    %v2971 = vpop.xlane.xlu0 %2970
    %v2972 = vadd.f32 %v2938, %v2939
    %2973 = vadd.xlane.f32.xlu0 %v2972
    %v2974 = vpop.xlane.xlu0 %2973
    %v2975 = vadd.f32 %v2940, %v2941
    %2976 = vadd.xlane.f32.xlu0 %v2975
    %v2977 = vpop.xlane.xlu0 %2976
    %v2978 = vadd.f32 %v2942, %v2943
    %2979 = vadd.xlane.f32.xlu0 %v2978
    %v2980 = vpop.xlane.xlu0 %2979
    %v2981 = vadd.f32 %v2944, %v2945
    %2982 = vadd.xlane.f32.xlu0 %v2981
    %v2983 = vpop.xlane.xlu0 %2982
    %v2984 = vadd.f32 %v2946, %v2947
    %2985 = vadd.xlane.f32.xlu0 %v2984
    %v2986 = vpop.xlane.xlu0 %2985
    %v2987 = vadd.f32 %v2948, %v2949
    %2988 = vadd.xlane.f32.xlu0 %v2987
    %v2989 = vpop.xlane.xlu0 %2988
    %v2990 = vadd.f32 %v2950, %v2951
    %2991 = vadd.xlane.f32.xlu0 %v2990
    %v2992 = vpop.xlane.xlu0 %2991
    %v2993 = vadd.f32 %v2952, %v2953
    %2994 = vadd.xlane.f32.xlu0 %v2993
    %v2995 = vpop.xlane.xlu0 %2994
    %v2996 = vadd.f32 %v2954, %v2955
    %2997 = vadd.xlane.f32.xlu0 %v2996
    %v2998 = vpop.xlane.xlu0 %2997
    %v2999 = vadd.f32 %v2956, %v2957
    %3000 = vadd.xlane.f32.xlu0 %v2999
    %v3001 = vpop.xlane.xlu0 %3000
    %v3002 = vadd.f32 %v2958, %v2959
    %3003 = vadd.xlane.f32.xlu0 %v3002
    %v3004 = vpop.xlane.xlu0 %3003
    %v3005 = vadd.f32 %v2960, %v2961
    %3006 = vadd.xlane.f32.xlu0 %v3005
    %v3007 = vpop.xlane.xlu0 %3006
    %v3008 = vadd.f32 %v2962, %v2963
    %3009 = vadd.xlane.f32.xlu0 %v3008
    %v3010 = vpop.xlane.xlu0 %3009
    %v3011 = vadd.f32 %v2964, %v2965
    %3012 = vadd.xlane.f32.xlu0 %v3011
    %v3013 = vpop.xlane.xlu0 %3012
    %v3014 = vmax.f32 %v2968, 1e-24
    %v3015 = vmax.f32 %v2971, 1e-24
    %v3016 = vmax.f32 %v2974, 1e-24
    %v3017 = vmax.f32 %v2977, 1e-24
    %v3018 = vmax.f32 %v2980, 1e-24
    %v3019 = vmax.f32 %v2983, 1e-24
    %v3020 = vmax.f32 %v2986, 1e-24
    %v3021 = vmax.f32 %v2989, 1e-24
    %v3022 = vmax.f32 %v2992, 1e-24
    %v3023 = vmax.f32 %v2995, 1e-24
    %v3024 = vmax.f32 %v2998, 1e-24
    %v3025 = vmax.f32 %v3001, 1e-24
    %v3026 = vmax.f32 %v3004, 1e-24
    %v3027 = vmax.f32 %v3007, 1e-24
    %v3028 = vmax.f32 %v3010, 1e-24
    %v3029 = vmax.f32 %v3013, 1e-24
    %v3030 = vrsqrt.pop %v3014
    %v3031 = vmul.f32 %v3030, %v3014
    %v3032 = vmul.f32 %v3031, %v3030
    %v3033 = vmul.f32 0.5, %v3032
    %v3034 = vsub.f32 1.5, %v3033
    %v3035 = vmul.f32 %v3030, %v3034
    %vm3036 = vweird.f32 %v3014
    %vm3037 = vweird.f32 %v3030
    %vm3038 = vmor %vm3036, %vm3037
    %v3039 = vsel %vm3038, %v3030, %v3035
    %v3040 = vrsqrt.pop %v3015
    %v3041 = vmul.f32 %v3040, %v3015
    %v3042 = vmul.f32 %v3041, %v3040
    %v3043 = vmul.f32 0.5, %v3042
    %v3044 = vsub.f32 1.5, %v3043
    %v3045 = vmul.f32 %v3040, %v3044
    %vm3046 = vweird.f32 %v3015
    %vm3047 = vweird.f32 %v3040
    %vm3048 = vmor %vm3046, %vm3047
    %v3049 = vsel %vm3048, %v3040, %v3045
    %v3050 = vrsqrt.pop %v3016
    %v3051 = vmul.f32 %v3050, %v3016
    %v3052 = vmul.f32 %v3051, %v3050
    %v3053 = vmul.f32 0.5, %v3052
    %v3054 = vsub.f32 1.5, %v3053
    %v3055 = vmul.f32 %v3050, %v3054
    %vm3056 = vweird.f32 %v3016
    %vm3057 = vweird.f32 %v3050
    %vm3058 = vmor %vm3056, %vm3057
    %v3059 = vsel %vm3058, %v3050, %v3055
    %v3060 = vrsqrt.pop %v3017
    %v3061 = vmul.f32 %v3060, %v3017
    %v3062 = vmul.f32 %v3061, %v3060
    %v3063 = vmul.f32 0.5, %v3062
    %v3064 = vsub.f32 1.5, %v3063
    %v3065 = vmul.f32 %v3060, %v3064
    %vm3066 = vweird.f32 %v3017
    %vm3067 = vweird.f32 %v3060
    %vm3068 = vmor %vm3066, %vm3067
    %v3069 = vsel %vm3068, %v3060, %v3065
    %v3070 = vrsqrt.pop %v3018
    %v3071 = vmul.f32 %v3070, %v3018
    %v3072 = vmul.f32 %v3071, %v3070
    %v3073 = vmul.f32 0.5, %v3072
    %v3074 = vsub.f32 1.5, %v3073
    %v3075 = vmul.f32 %v3070, %v3074
    %vm3076 = vweird.f32 %v3018
    %vm3077 = vweird.f32 %v3070
    %vm3078 = vmor %vm3076, %vm3077
    %v3079 = vsel %vm3078, %v3070, %v3075
    %v3080 = vrsqrt.pop %v3019
    %v3081 = vmul.f32 %v3080, %v3019
    %v3082 = vmul.f32 %v3081, %v3080
    %v3083 = vmul.f32 0.5, %v3082
    %v3084 = vsub.f32 1.5, %v3083
    %v3085 = vmul.f32 %v3080, %v3084
    %vm3086 = vweird.f32 %v3019
    %vm3087 = vweird.f32 %v3080
    %vm3088 = vmor %vm3086, %vm3087
    %v3089 = vsel %vm3088, %v3080, %v3085
    %v3090 = vrsqrt.pop %v3020
    %v3091 = vmul.f32 %v3090, %v3020
    %v3092 = vmul.f32 %v3091, %v3090
    %v3093 = vmul.f32 0.5, %v3092
    %v3094 = vsub.f32 1.5, %v3093
    %v3095 = vmul.f32 %v3090, %v3094
    %vm3096 = vweird.f32 %v3020
    %vm3097 = vweird.f32 %v3090
    %vm3098 = vmor %vm3096, %vm3097
    %v3099 = vsel %vm3098, %v3090, %v3095
    %v3100 = vrsqrt.pop %v3021
    %v3101 = vmul.f32 %v3100, %v3021
    %v3102 = vmul.f32 %v3101, %v3100
    %v3103 = vmul.f32 0.5, %v3102
    %v3104 = vsub.f32 1.5, %v3103
    %v3105 = vmul.f32 %v3100, %v3104
    %vm3106 = vweird.f32 %v3021
    %vm3107 = vweird.f32 %v3100
    %vm3108 = vmor %vm3106, %vm3107
    %v3109 = vsel %vm3108, %v3100, %v3105
    %v3110 = vrsqrt.pop %v3022
    %v3111 = vmul.f32 %v3110, %v3022
    %v3112 = vmul.f32 %v3111, %v3110
    %v3113 = vmul.f32 0.5, %v3112
    %v3114 = vsub.f32 1.5, %v3113
    %v3115 = vmul.f32 %v3110, %v3114
    %vm3116 = vweird.f32 %v3022
    %vm3117 = vweird.f32 %v3110
    %vm3118 = vmor %vm3116, %vm3117
    %v3119 = vsel %vm3118, %v3110, %v3115
    %v3120 = vrsqrt.pop %v3023
    %v3121 = vmul.f32 %v3120, %v3023
    %v3122 = vmul.f32 %v3121, %v3120
    %v3123 = vmul.f32 0.5, %v3122
    %v3124 = vsub.f32 1.5, %v3123
    %v3125 = vmul.f32 %v3120, %v3124
    %vm3126 = vweird.f32 %v3023
    %vm3127 = vweird.f32 %v3120
    %vm3128 = vmor %vm3126, %vm3127
    %v3129 = vsel %vm3128, %v3120, %v3125
    %v3130 = vrsqrt.pop %v3024
    %v3131 = vmul.f32 %v3130, %v3024
    %v3132 = vmul.f32 %v3131, %v3130
    %v3133 = vmul.f32 0.5, %v3132
    %v3134 = vsub.f32 1.5, %v3133
    %v3135 = vmul.f32 %v3130, %v3134
    %vm3136 = vweird.f32 %v3024
    %vm3137 = vweird.f32 %v3130
    %vm3138 = vmor %vm3136, %vm3137
    %v3139 = vsel %vm3138, %v3130, %v3135
    %v3140 = vrsqrt.pop %v3025
    %v3141 = vmul.f32 %v3140, %v3025
    %v3142 = vmul.f32 %v3141, %v3140
    %v3143 = vmul.f32 0.5, %v3142
    %v3144 = vsub.f32 1.5, %v3143
    %v3145 = vmul.f32 %v3140, %v3144
    %vm3146 = vweird.f32 %v3025
    %vm3147 = vweird.f32 %v3140
    %vm3148 = vmor %vm3146, %vm3147
    %v3149 = vsel %vm3148, %v3140, %v3145
    %v3150 = vrsqrt.pop %v3026
    %v3151 = vmul.f32 %v3150, %v3026
    %v3152 = vmul.f32 %v3151, %v3150
    %v3153 = vmul.f32 0.5, %v3152
    %v3154 = vsub.f32 1.5, %v3153
    %v3155 = vmul.f32 %v3150, %v3154
    %vm3156 = vweird.f32 %v3026
    %vm3157 = vweird.f32 %v3150
    %vm3158 = vmor %vm3156, %vm3157
    %v3159 = vsel %vm3158, %v3150, %v3155
    %v3160 = vrsqrt.pop %v3027
    %v3161 = vmul.f32 %v3160, %v3027
    %v3162 = vmul.f32 %v3161, %v3160
    %v3163 = vmul.f32 0.5, %v3162
    %v3164 = vsub.f32 1.5, %v3163
    %v3165 = vmul.f32 %v3160, %v3164
    %vm3166 = vweird.f32 %v3027
    %vm3167 = vweird.f32 %v3160
    %vm3168 = vmor %vm3166, %vm3167
    %v3169 = vsel %vm3168, %v3160, %v3165
    %v3170 = vrsqrt.pop %v3028
    %v3171 = vmul.f32 %v3170, %v3028
    %v3172 = vmul.f32 %v3171, %v3170
    %v3173 = vmul.f32 0.5, %v3172
    %v3174 = vsub.f32 1.5, %v3173
    %v3175 = vmul.f32 %v3170, %v3174
    %vm3176 = vweird.f32 %v3028
    %vm3177 = vweird.f32 %v3170
    %vm3178 = vmor %vm3176, %vm3177
    %v3179 = vsel %vm3178, %v3170, %v3175
    %v3180 = vrsqrt.pop %v3029
    %v3181 = vmul.f32 %v3180, %v3029
    %v3182 = vmul.f32 %v3181, %v3180
    %v3183 = vmul.f32 0.5, %v3182
    %v3184 = vsub.f32 1.5, %v3183
    %v3185 = vmul.f32 %v3180, %v3184
    %vm3186 = vweird.f32 %v3029
    %vm3187 = vweird.f32 %v3180
    %vm3188 = vmor %vm3186, %vm3187
    %v3189 = vsel %vm3188, %v3180, %v3185
    %v3190 = vmul.f32 %v2797, %v3039
    %v3191 = vmul.f32 %v2895, %v3039
    %v3192 = vmul.f32 %v2799, %v3049
    %v3193 = vmul.f32 %v2897, %v3049
    %v3194 = vmul.f32 %v2802, %v3059
    %v3195 = vmul.f32 %v2900, %v3059
    %v3196 = vmul.f32 %v2804, %v3069
    %v3197 = vmul.f32 %v2902, %v3069
    %v3198 = vmul.f32 %v2807, %v3079
    %v3199 = vmul.f32 %v2905, %v3079
    %v3200 = vmul.f32 %v2809, %v3089
    %v3201 = vmul.f32 %v2907, %v3089
    %v3202 = vmul.f32 %v2812, %v3099
    %v3203 = vmul.f32 %v2910, %v3099
    %v3204 = vmul.f32 %v2814, %v3109
    %v3205 = vmul.f32 %v2912, %v3109
    %v3206 = vmul.f32 %v2817, %v3119
    %v3207 = vmul.f32 %v2915, %v3119
    %v3208 = vmul.f32 %v2819, %v3129
    %v3209 = vmul.f32 %v2917, %v3129
    %v3210 = vmul.f32 %v2822, %v3139
    %v3211 = vmul.f32 %v2920, %v3139
    %v3212 = vmul.f32 %v2824, %v3149
    %v3213 = vmul.f32 %v2922, %v3149
    %v3214 = vmul.f32 %v2827, %v3159
    %v3215 = vmul.f32 %v2925, %v3159
    %v3216 = vmul.f32 %v2829, %v3169
    %v3217 = vmul.f32 %v2927, %v3169
    %v3218 = vmul.f32 %v2832, %v3179
    %v3219 = vmul.f32 %v2930, %v3179
    %v3220 = vmul.f32 %v2834, %v3189
    %v3221 = vmul.f32 %v2932, %v3189
    %v3222 = vmul.f32 %v3190, %v281
    %v3223 = vmul.f32 %v3191, %v281
    %v3224 = vmul.f32 %v3192, %v286
    %v3225 = vmul.f32 %v3193, %v286
    %v3226 = vmul.f32 %v3194, %v291
    %v3227 = vmul.f32 %v3195, %v291
    %v3228 = vmul.f32 %v3196, %v296
    %v3229 = vmul.f32 %v3197, %v296
    %v3230 = vmul.f32 %v3198, %v301
    %v3231 = vmul.f32 %v3199, %v301
    %v3232 = vmul.f32 %v3200, %v306
    %v3233 = vmul.f32 %v3201, %v306
    %v3234 = vmul.f32 %v3202, %v311
    %v3235 = vmul.f32 %v3203, %v311
    %v3236 = vmul.f32 %v3204, %v316
    %v3237 = vmul.f32 %v3205, %v316
    %v3238 = vmul.f32 %v3206, %v321
    %v3239 = vmul.f32 %v3207, %v321
    %v3240 = vmul.f32 %v3208, %v326
    %v3241 = vmul.f32 %v3209, %v326
    %v3242 = vmul.f32 %v3210, %v331
    %v3243 = vmul.f32 %v3211, %v331
    %v3244 = vmul.f32 %v3212, %v336
    %v3245 = vmul.f32 %v3213, %v336
    %v3246 = vmul.f32 %v3214, %v341
    %v3247 = vmul.f32 %v3215, %v341
    %v3248 = vmul.f32 %v3216, %v346
    %v3249 = vmul.f32 %v3217, %v346
    %v3250 = vmul.f32 %v3218, %v351
    %v3251 = vmul.f32 %v3219, %v351
    %v3252 = vmul.f32 %v3220, %v356
    %v3253 = vmul.f32 %v3221, %v356
    %v3254 = vadd.f32 %v3222, %v3224
    %v3255 = vadd.f32 %v3254, %v3226
    %v3256 = vadd.f32 %v3255, %v3228
    %v3257 = vadd.f32 %v3256, %v3230
    %v3258 = vadd.f32 %v3257, %v3232
    %v3259 = vadd.f32 %v3258, %v3234
    %v3260 = vadd.f32 %v3259, %v3236
    %v3261 = vadd.f32 %v3260, %v3238
    %v3262 = vadd.f32 %v3261, %v3240
    %v3263 = vadd.f32 %v3262, %v3242
    %v3264 = vadd.f32 %v3263, %v3244
    %v3265 = vadd.f32 %v3264, %v3246
    %v3266 = vadd.f32 %v3265, %v3248
    %v3267 = vadd.f32 %v3266, %v3250
    %v3268 = vadd.f32 %v3267, %v3252
    %v3269 = vrot.slane %v3268, 4
    %v3270 = vadd.f32 %v3268, %v3269
    %v3271 = vrot.slane %v3270, 2
    %v3272 = vadd.f32 %v3270, %v3271
    %v3273 = vrot.slane %v3272, 1
    %v3274 = vadd.f32 %v3272, %v3273
    %v3275 = vadd.f32 %v3223, %v3225
    %v3276 = vadd.f32 %v3275, %v3227
    %v3277 = vadd.f32 %v3276, %v3229
    %v3278 = vadd.f32 %v3277, %v3231
    %v3279 = vadd.f32 %v3278, %v3233
    %v3280 = vadd.f32 %v3279, %v3235
    %v3281 = vadd.f32 %v3280, %v3237
    %v3282 = vadd.f32 %v3281, %v3239
    %v3283 = vadd.f32 %v3282, %v3241
    %v3284 = vadd.f32 %v3283, %v3243
    %v3285 = vadd.f32 %v3284, %v3245
    %v3286 = vadd.f32 %v3285, %v3247
    %v3287 = vadd.f32 %v3286, %v3249
    %v3288 = vadd.f32 %v3287, %v3251
    %v3289 = vadd.f32 %v3288, %v3253
    %v3290 = vrot.slane %v3289, 4
    %v3291 = vadd.f32 %v3289, %v3290
    %v3292 = vrot.slane %v3291, 2
    %v3293 = vadd.f32 %v3291, %v3292
    %v3294 = vrot.slane %v3293, 1
    %v3295 = vadd.f32 %v3293, %v3294
    %v3296 = vmul.f32 %v3274, %v2265
    %v3297 = vmul.f32 %v3295, %v2265
    %v3298 = vmul.f32 %v3190, %v3190
    %v3299 = vmul.f32 %v3191, %v3191
    %v3300 = vmul.f32 %v3192, %v3192
    %v3301 = vmul.f32 %v3193, %v3193
    %v3302 = vmul.f32 %v3194, %v3194
    %v3303 = vmul.f32 %v3195, %v3195
    %v3304 = vmul.f32 %v3196, %v3196
    %v3305 = vmul.f32 %v3197, %v3197
    %v3306 = vmul.f32 %v3198, %v3198
    %v3307 = vmul.f32 %v3199, %v3199
    %v3308 = vmul.f32 %v3200, %v3200
    %v3309 = vmul.f32 %v3201, %v3201
    %v3310 = vmul.f32 %v3202, %v3202
    %v3311 = vmul.f32 %v3203, %v3203
    %v3312 = vmul.f32 %v3204, %v3204
    %v3313 = vmul.f32 %v3205, %v3205
    %v3314 = vmul.f32 %v3206, %v3206
    %v3315 = vmul.f32 %v3207, %v3207
    %v3316 = vmul.f32 %v3208, %v3208
    %v3317 = vmul.f32 %v3209, %v3209
    %v3318 = vmul.f32 %v3210, %v3210
    %v3319 = vmul.f32 %v3211, %v3211
    %v3320 = vmul.f32 %v3212, %v3212
    %v3321 = vmul.f32 %v3213, %v3213
    %v3322 = vmul.f32 %v3214, %v3214
    %v3323 = vmul.f32 %v3215, %v3215
    %v3324 = vmul.f32 %v3216, %v3216
    %v3325 = vmul.f32 %v3217, %v3217
    %v3326 = vmul.f32 %v3218, %v3218
    %v3327 = vmul.f32 %v3219, %v3219
    %v3328 = vmul.f32 %v3220, %v3220
    %v3329 = vmul.f32 %v3221, %v3221
    %v3330 = vmul.f32 %v3298, %v281
    %v3331 = vmul.f32 %v3299, %v281
    %v3332 = vmul.f32 %v3300, %v286
    %v3333 = vmul.f32 %v3301, %v286
    %v3334 = vmul.f32 %v3302, %v291
    %v3335 = vmul.f32 %v3303, %v291
    %v3336 = vmul.f32 %v3304, %v296
    %v3337 = vmul.f32 %v3305, %v296
    %v3338 = vmul.f32 %v3306, %v301
    %v3339 = vmul.f32 %v3307, %v301
    %v3340 = vmul.f32 %v3308, %v306
    %v3341 = vmul.f32 %v3309, %v306
    %v3342 = vmul.f32 %v3310, %v311
    %v3343 = vmul.f32 %v3311, %v311
    %v3344 = vmul.f32 %v3312, %v316
    %v3345 = vmul.f32 %v3313, %v316
    %v3346 = vmul.f32 %v3314, %v321
    %v3347 = vmul.f32 %v3315, %v321
    %v3348 = vmul.f32 %v3316, %v326
    %v3349 = vmul.f32 %v3317, %v326
    %v3350 = vmul.f32 %v3318, %v331
    %v3351 = vmul.f32 %v3319, %v331
    %v3352 = vmul.f32 %v3320, %v336
    %v3353 = vmul.f32 %v3321, %v336
    %v3354 = vmul.f32 %v3322, %v341
    %v3355 = vmul.f32 %v3323, %v341
    %v3356 = vmul.f32 %v3324, %v346
    %v3357 = vmul.f32 %v3325, %v346
    %v3358 = vmul.f32 %v3326, %v351
    %v3359 = vmul.f32 %v3327, %v351
    %v3360 = vmul.f32 %v3328, %v356
    %v3361 = vmul.f32 %v3329, %v356
    %v3362 = vadd.f32 %v3330, %v3332
    %v3363 = vadd.f32 %v3362, %v3334
    %v3364 = vadd.f32 %v3363, %v3336
    %v3365 = vadd.f32 %v3364, %v3338
    %v3366 = vadd.f32 %v3365, %v3340
    %v3367 = vadd.f32 %v3366, %v3342
    %v3368 = vadd.f32 %v3367, %v3344
    %v3369 = vadd.f32 %v3368, %v3346
    %v3370 = vadd.f32 %v3369, %v3348
    %v3371 = vadd.f32 %v3370, %v3350
    %v3372 = vadd.f32 %v3371, %v3352
    %v3373 = vadd.f32 %v3372, %v3354
    %v3374 = vadd.f32 %v3373, %v3356
    %v3375 = vadd.f32 %v3374, %v3358
    %v3376 = vadd.f32 %v3375, %v3360
    %v3377 = vrot.slane %v3376, 4
    %v3378 = vadd.f32 %v3376, %v3377
    %v3379 = vrot.slane %v3378, 2
    %v3380 = vadd.f32 %v3378, %v3379
    %v3381 = vrot.slane %v3380, 1
    %v3382 = vadd.f32 %v3380, %v3381
    %v3383 = vadd.f32 %v3331, %v3333
    %v3384 = vadd.f32 %v3383, %v3335
    %v3385 = vadd.f32 %v3384, %v3337
    %v3386 = vadd.f32 %v3385, %v3339
    %v3387 = vadd.f32 %v3386, %v3341
    %v3388 = vadd.f32 %v3387, %v3343
    %v3389 = vadd.f32 %v3388, %v3345
    %v3390 = vadd.f32 %v3389, %v3347
    %v3391 = vadd.f32 %v3390, %v3349
    %v3392 = vadd.f32 %v3391, %v3351
    %v3393 = vadd.f32 %v3392, %v3353
    %v3394 = vadd.f32 %v3393, %v3355
    %v3395 = vadd.f32 %v3394, %v3357
    %v3396 = vadd.f32 %v3395, %v3359
    %v3397 = vadd.f32 %v3396, %v3361
    %v3398 = vrot.slane %v3397, 4
    %v3399 = vadd.f32 %v3397, %v3398
    %v3400 = vrot.slane %v3399, 2
    %v3401 = vadd.f32 %v3399, %v3400
    %v3402 = vrot.slane %v3401, 1
    %v3403 = vadd.f32 %v3401, %v3402
    %v3404 = vmul.f32 %v3382, %v2265
    %v3405 = vmul.f32 %v3403, %v2265
    %v3406 = vmul.f32 %v3296, %v3296
    %v3407 = vmul.f32 %v3297, %v3297
    %v3408 = vsub.f32 %v3404, %v3406
    %v3409 = vsub.f32 %v3405, %v3407
    %v3410 = vmax.f32 %v3408, 0.0
    %v3411 = vmax.f32 %v3409, 0.0
    %v3412 = vadd.f32 %v3410, 1e-05
    %v3413 = vadd.f32 %v3411, 1e-05
    %v3414 = vrsqrt.pop %v3412
    %v3415 = vmul.f32 %v3414, %v3412
    %v3416 = vmul.f32 %v3415, %v3414
    %v3417 = vmul.f32 0.5, %v3416
    %v3418 = vsub.f32 1.5, %v3417
    %v3419 = vmul.f32 %v3414, %v3418
    %vm3420 = vweird.f32 %v3412
    %vm3421 = vweird.f32 %v3414
    %vm3422 = vmor %vm3420, %vm3421
    %v3423 = vsel %vm3422, %v3414, %v3419
    %v3424 = vrsqrt.pop %v3413
    %v3425 = vmul.f32 %v3424, %v3413
    %v3426 = vmul.f32 %v3425, %v3424
    %v3427 = vmul.f32 0.5, %v3426
    %v3428 = vsub.f32 1.5, %v3427
    %v3429 = vmul.f32 %v3424, %v3428
    %vm3430 = vweird.f32 %v3413
    %vm3431 = vweird.f32 %v3424
    %vm3432 = vmor %vm3430, %vm3431
    %v3433 = vsel %vm3432, %v3424, %v3429
    %v3436 = vrot.slane %v3433, 7
    %v3437 = vsel %vm2407, %v3423, %v3436
    %v3439 = vmul.f32 %v1137, %v3437
    %v3441 = vperm.slane %v3439, 0
    %v3442 = vperm.slane %v3439, 1
    %v3445 = vmul.f32 %v3190, %v3441
    %v3446 = vmul.f32 %v3191, %v3442
    %v3447 = vmul.f32 %v3192, %v3441
    %v3448 = vmul.f32 %v3193, %v3442
    %v3449 = vmul.f32 %v3194, %v3441
    %v3450 = vmul.f32 %v3195, %v3442
    %v3451 = vmul.f32 %v3196, %v3441
    %v3452 = vmul.f32 %v3197, %v3442
    %v3453 = vmul.f32 %v3198, %v3441
    %v3454 = vmul.f32 %v3199, %v3442
    %v3455 = vmul.f32 %v3200, %v3441
    %v3456 = vmul.f32 %v3201, %v3442
    %v3457 = vmul.f32 %v3202, %v3441
    %v3458 = vmul.f32 %v3203, %v3442
    %v3459 = vmul.f32 %v3204, %v3441
    %v3460 = vmul.f32 %v3205, %v3442
    %v3461 = vmul.f32 %v3206, %v3441
    %v3462 = vmul.f32 %v3207, %v3442
    %v3463 = vmul.f32 %v3208, %v3441
    %v3464 = vmul.f32 %v3209, %v3442
    %v3465 = vmul.f32 %v3210, %v3441
    %v3466 = vmul.f32 %v3211, %v3442
    %v3467 = vmul.f32 %v3212, %v3441
    %v3468 = vmul.f32 %v3213, %v3442
    %v3469 = vmul.f32 %v3214, %v3441
    %v3470 = vmul.f32 %v3215, %v3442
    %v3471 = vmul.f32 %v3216, %v3441
    %v3472 = vmul.f32 %v3217, %v3442
    %v3473 = vmul.f32 %v3218, %v3441
    %v3474 = vmul.f32 %v3219, %v3442
    %v3475 = vmul.f32 %v3220, %v3441
    %v3476 = vmul.f32 %v3221, %v3442
    %v3477 = vmul.f32 %v3296, %v3441
    %v3478 = vmul.f32 %v3297, %v3442
    %v3481 = vrot.slane %v3478, 7
    %v3482 = vsel %vm2407, %v3477, %v3481
    %v3484 = vsub.f32 %v1139, %v3482
    %v3486 = vperm.slane %v3484, 0
    %v3487 = vperm.slane %v3484, 1
    %v3490 = vadd.f32 %v3445, %v3486
    %v3491 = vadd.f32 %v3446, %v3487
    %v3492 = vadd.f32 %v3447, %v3486
    %v3493 = vadd.f32 %v3448, %v3487
    %v3494 = vadd.f32 %v3449, %v3486
    %v3495 = vadd.f32 %v3450, %v3487
    %v3496 = vadd.f32 %v3451, %v3486
    %v3497 = vadd.f32 %v3452, %v3487
    %v3498 = vadd.f32 %v3453, %v3486
    %v3499 = vadd.f32 %v3454, %v3487
    %v3500 = vadd.f32 %v3455, %v3486
    %v3501 = vadd.f32 %v3456, %v3487
    %v3502 = vadd.f32 %v3457, %v3486
    %v3503 = vadd.f32 %v3458, %v3487
    %v3504 = vadd.f32 %v3459, %v3486
    %v3505 = vadd.f32 %v3460, %v3487
    %v3506 = vadd.f32 %v3461, %v3486
    %v3507 = vadd.f32 %v3462, %v3487
    %v3508 = vadd.f32 %v3463, %v3486
    %v3509 = vadd.f32 %v3464, %v3487
    %v3510 = vadd.f32 %v3465, %v3486
    %v3511 = vadd.f32 %v3466, %v3487
    %v3512 = vadd.f32 %v3467, %v3486
    %v3513 = vadd.f32 %v3468, %v3487
    %v3514 = vadd.f32 %v3469, %v3486
    %v3515 = vadd.f32 %v3470, %v3487
    %v3516 = vadd.f32 %v3471, %v3486
    %v3517 = vadd.f32 %v3472, %v3487
    %v3518 = vadd.f32 %v3473, %v3486
    %v3519 = vadd.f32 %v3474, %v3487
    %v3520 = vadd.f32 %v3475, %v3486
    %v3521 = vadd.f32 %v3476, %v3487
    %v3522 = vmul.f32 %v3490, %v281
    %v3523 = vmul.f32 %v3491, %v281
    %v3524 = vmul.f32 %v3492, %v286
    %v3525 = vmul.f32 %v3493, %v286
    %v3526 = vmul.f32 %v3494, %v291
    %v3527 = vmul.f32 %v3495, %v291
    %v3528 = vmul.f32 %v3496, %v296
    %v3529 = vmul.f32 %v3497, %v296
    %v3530 = vmul.f32 %v3498, %v301
    %v3531 = vmul.f32 %v3499, %v301
    %v3532 = vmul.f32 %v3500, %v306
    %v3533 = vmul.f32 %v3501, %v306
    %v3534 = vmul.f32 %v3502, %v311
    %v3535 = vmul.f32 %v3503, %v311
    %v3536 = vmul.f32 %v3504, %v316
    %v3537 = vmul.f32 %v3505, %v316
    %v3538 = vmul.f32 %v3506, %v321
    %v3539 = vmul.f32 %v3507, %v321
    %v3540 = vmul.f32 %v3508, %v326
    %v3541 = vmul.f32 %v3509, %v326
    %v3542 = vmul.f32 %v3510, %v331
    %v3543 = vmul.f32 %v3511, %v331
    %v3544 = vmul.f32 %v3512, %v336
    %v3545 = vmul.f32 %v3513, %v336
    %v3546 = vmul.f32 %v3514, %v341
    %v3547 = vmul.f32 %v3515, %v341
    %v3548 = vmul.f32 %v3516, %v346
    %v3549 = vmul.f32 %v3517, %v346
    %v3550 = vmul.f32 %v3518, %v351
    %v3551 = vmul.f32 %v3519, %v351
    %v3552 = vmul.f32 %v3520, %v356
    %v3553 = vmul.f32 %v3521, %v356
    %v3554 = vadd.f32 %v2493, %v3522
    %v3555 = vadd.f32 %v2494, %v3523
    %v3556 = vadd.f32 %v2495, %v3524
    %v3557 = vadd.f32 %v2496, %v3525
    %v3558 = vadd.f32 %v2497, %v3526
    %v3559 = vadd.f32 %v2498, %v3527
    %v3560 = vadd.f32 %v2499, %v3528
    %v3561 = vadd.f32 %v2500, %v3529
    %v3562 = vadd.f32 %v2501, %v3530
    %v3563 = vadd.f32 %v2502, %v3531
    %v3564 = vadd.f32 %v2503, %v3532
    %v3565 = vadd.f32 %v2504, %v3533
    %v3566 = vadd.f32 %v2505, %v3534
    %v3567 = vadd.f32 %v2506, %v3535
    %v3568 = vadd.f32 %v2507, %v3536
    %v3569 = vadd.f32 %v2508, %v3537
    %v3570 = vadd.f32 %v2509, %v3538
    %v3571 = vadd.f32 %v2510, %v3539
    %v3572 = vadd.f32 %v2511, %v3540
    %v3573 = vadd.f32 %v2512, %v3541
    %v3574 = vadd.f32 %v2513, %v3542
    %v3575 = vadd.f32 %v2514, %v3543
    %v3576 = vadd.f32 %v2515, %v3544
    %v3577 = vadd.f32 %v2516, %v3545
    %v3578 = vadd.f32 %v2517, %v3546
    %v3579 = vadd.f32 %v2518, %v3547
    %v3580 = vadd.f32 %v2519, %v3548
    %v3581 = vadd.f32 %v2520, %v3549
    %v3582 = vadd.f32 %v2521, %v3550
    %v3583 = vadd.f32 %v2522, %v3551
    %v3584 = vadd.f32 %v2523, %v3552
    %v3585 = vadd.f32 %v2524, %v3553
    %v3586 = vld [vmem:[#allocation8 + $0x200] sm:$0xff]
    %v3587 = vld [vmem:[#allocation8 + $0x208] sm:$0xff]
    %v3588 = vld [vmem:[#allocation8 + $0x210] sm:$0xff]
    %v3589 = vld [vmem:[#allocation8 + $0x218] sm:$0xff]
    %v3590 = vld [vmem:[#allocation8 + $0x220] sm:$0xff]
    %v3591 = vld [vmem:[#allocation8 + $0x228] sm:$0xff]
    %v3592 = vld [vmem:[#allocation8 + $0x230] sm:$0xff]
    %v3593 = vld [vmem:[#allocation8 + $0x238] sm:$0xff]
    %v3594 = vld [vmem:[#allocation8 + $0x240] sm:$0xff]
    %v3595 = vld [vmem:[#allocation8 + $0x248] sm:$0xff]
    %v3596 = vld [vmem:[#allocation8 + $0x250] sm:$0xff]
    %v3597 = vld [vmem:[#allocation8 + $0x258] sm:$0xff]
    %v3598 = vld [vmem:[#allocation8 + $0x260] sm:$0xff]
    %v3599 = vld [vmem:[#allocation8 + $0x268] sm:$0xff]
    %v3600 = vld [vmem:[#allocation8 + $0x270] sm:$0xff]
    %v3601 = vld [vmem:[#allocation8 + $0x278] sm:$0xff]
    %v3602 = vld [vmem:[#allocation8 + $0x280] sm:$0xff]
    %v3603 = vld [vmem:[#allocation8 + $0x288] sm:$0xff]
    %v3604 = vld [vmem:[#allocation8 + $0x290] sm:$0xff]
    %v3605 = vld [vmem:[#allocation8 + $0x298] sm:$0xff]
    %v3606 = vld [vmem:[#allocation8 + $0x2a0] sm:$0xff]
    %v3607 = vld [vmem:[#allocation8 + $0x2a8] sm:$0xff]
    %v3608 = vld [vmem:[#allocation8 + $0x2b0] sm:$0xff]
    %v3609 = vld [vmem:[#allocation8 + $0x2b8] sm:$0xff]
    %v3610 = vld [vmem:[#allocation8 + $0x2c0] sm:$0xff]
    %v3611 = vld [vmem:[#allocation8 + $0x2c8] sm:$0xff]
    %v3612 = vld [vmem:[#allocation8 + $0x2d0] sm:$0xff]
    %v3613 = vld [vmem:[#allocation8 + $0x2d8] sm:$0xff]
    %v3614 = vld [vmem:[#allocation8 + $0x2e0] sm:$0xff]
    %v3615 = vld [vmem:[#allocation8 + $0x2e8] sm:$0xff]
    %v3616 = vld [vmem:[#allocation8 + $0x2f0] sm:$0xff]
    %v3617 = vld [vmem:[#allocation8 + $0x2f8] sm:$0xff]
    %v3618 = vpack.c.bf16 %v3556, %v3554
    %v3619 = vpack.c.bf16 %v3557, %v3555
    %v3620 = vpack.c.bf16 %v3560, %v3558
    %v3621 = vpack.c.bf16 %v3561, %v3559
    %v3622 = vpack.c.bf16 %v3564, %v3562
    %v3623 = vpack.c.bf16 %v3565, %v3563
    %v3624 = vpack.c.bf16 %v3568, %v3566
    %v3625 = vpack.c.bf16 %v3569, %v3567
    %v3626 = vpack.c.bf16 %v3572, %v3570
    %v3627 = vpack.c.bf16 %v3573, %v3571
    %v3628 = vpack.c.bf16 %v3576, %v3574
    %v3629 = vpack.c.bf16 %v3577, %v3575
    %v3630 = vpack.c.bf16 %v3580, %v3578
    %v3631 = vpack.c.bf16 %v3581, %v3579
    %v3632 = vpack.c.bf16 %v3584, %v3582
    %v3633 = vpack.c.bf16 %v3585, %v3583
    %s3634 = scalar_lea.vmem [#allocation9], 7
    %v3635 = vld [vmem:[%s3634] ss:$8 sm:$0x3]
    %v3637 = vperm.slane %v3635, 0
    %v3638 = vperm.slane %v3635, 1
    %v3673 = vunpack.c.l.b16 %v3586
    %v3674 = vunpack.c.h.b16 %v3586
    %v3675 = vunpack.c.l.b16 %v3587
    %v3676 = vunpack.c.h.b16 %v3587
    %v3677 = vunpack.c.l.b16 %v3588
    %v3678 = vunpack.c.h.b16 %v3588
    %v3679 = vunpack.c.l.b16 %v3589
    %v3680 = vunpack.c.h.b16 %v3589
    %v3681 = vunpack.c.l.b16 %v3590
    %v3682 = vunpack.c.h.b16 %v3590
    %v3683 = vunpack.c.l.b16 %v3591
    %v3684 = vunpack.c.h.b16 %v3591
    %v3685 = vunpack.c.l.b16 %v3592
    %v3686 = vunpack.c.h.b16 %v3592
    %v3687 = vunpack.c.l.b16 %v3593
    %v3688 = vunpack.c.h.b16 %v3593
    %v3689 = vunpack.c.l.b16 %v3594
    %v3690 = vunpack.c.h.b16 %v3594
    %v3691 = vunpack.c.l.b16 %v3595
    %v3692 = vunpack.c.h.b16 %v3595
    %v3693 = vunpack.c.l.b16 %v3596
    %v3694 = vunpack.c.h.b16 %v3596
    %v3695 = vunpack.c.l.b16 %v3597
    %v3696 = vunpack.c.h.b16 %v3597
    %v3697 = vunpack.c.l.b16 %v3598
    %v3698 = vunpack.c.h.b16 %v3598
    %v3699 = vunpack.c.l.b16 %v3599
    %v3700 = vunpack.c.h.b16 %v3599
    %v3701 = vunpack.c.l.b16 %v3600
    %v3702 = vunpack.c.h.b16 %v3600
    %v3703 = vunpack.c.l.b16 %v3601
    %v3704 = vunpack.c.h.b16 %v3601
    %v3705 = vunpack.c.l.b16 %v3602
    %v3706 = vunpack.c.h.b16 %v3602
    %v3707 = vunpack.c.l.b16 %v3603
    %v3708 = vunpack.c.h.b16 %v3603
    %v3709 = vunpack.c.l.b16 %v3604
    %v3710 = vunpack.c.h.b16 %v3604
    %v3711 = vunpack.c.l.b16 %v3605
    %v3712 = vunpack.c.h.b16 %v3605
    %v3713 = vunpack.c.l.b16 %v3606
    %v3714 = vunpack.c.h.b16 %v3606
    %v3715 = vunpack.c.l.b16 %v3607
    %v3716 = vunpack.c.h.b16 %v3607
    %v3717 = vunpack.c.l.b16 %v3608
    %v3718 = vunpack.c.h.b16 %v3608
    %v3719 = vunpack.c.l.b16 %v3609
    %v3720 = vunpack.c.h.b16 %v3609
    %v3721 = vunpack.c.l.b16 %v3610
    %v3722 = vunpack.c.h.b16 %v3610
    %v3723 = vunpack.c.l.b16 %v3611
    %v3724 = vunpack.c.h.b16 %v3611
    %v3725 = vunpack.c.l.b16 %v3612
    %v3726 = vunpack.c.h.b16 %v3612
    %v3727 = vunpack.c.l.b16 %v3613
    %v3728 = vunpack.c.h.b16 %v3613
    %v3729 = vunpack.c.l.b16 %v3614
    %v3730 = vunpack.c.h.b16 %v3614
    %v3731 = vunpack.c.l.b16 %v3615
    %v3732 = vunpack.c.h.b16 %v3615
    %v3733 = vunpack.c.l.b16 %v3616
    %v3734 = vunpack.c.h.b16 %v3616
    %v3735 = vunpack.c.l.b16 %v3617
    %v3736 = vunpack.c.h.b16 %v3617
    %v3737 = vpack.c.b16 %v3675, %v3673
    %v3738 = vpack.c.b16 %v3676, %v3674
    %v3739 = vpack.c.b16 %v3679, %v3677
    %v3740 = vpack.c.b16 %v3680, %v3678
    %v3741 = vpack.c.b16 %v3683, %v3681
    %v3742 = vpack.c.b16 %v3684, %v3682
    %v3743 = vpack.c.b16 %v3687, %v3685
    %v3744 = vpack.c.b16 %v3688, %v3686
    %v3745 = vpack.c.b16 %v3691, %v3689
    %v3746 = vpack.c.b16 %v3692, %v3690
    %v3747 = vpack.c.b16 %v3695, %v3693
    %v3748 = vpack.c.b16 %v3696, %v3694
    %v3749 = vpack.c.b16 %v3699, %v3697
    %v3750 = vpack.c.b16 %v3700, %v3698
    %v3751 = vpack.c.b16 %v3703, %v3701
    %v3752 = vpack.c.b16 %v3704, %v3702
    %v3753 = vpack.c.b16 %v3707, %v3705
    %v3754 = vpack.c.b16 %v3708, %v3706
    %v3755 = vpack.c.b16 %v3711, %v3709
    %v3756 = vpack.c.b16 %v3712, %v3710
    %v3757 = vpack.c.b16 %v3715, %v3713
    %v3758 = vpack.c.b16 %v3716, %v3714
    %v3759 = vpack.c.b16 %v3719, %v3717
    %v3760 = vpack.c.b16 %v3720, %v3718
    %v3761 = vpack.c.b16 %v3723, %v3721
    %v3762 = vpack.c.b16 %v3724, %v3722
    %v3763 = vpack.c.b16 %v3727, %v3725
    %v3764 = vpack.c.b16 %v3728, %v3726
    %v3765 = vpack.c.b16 %v3731, %v3729
    %v3766 = vpack.c.b16 %v3732, %v3730
    %v3767 = vpack.c.b16 %v3735, %v3733
    %v3768 = vpack.c.b16 %v3736, %v3734
    %3801 = vmatpush.bf16.msra.mxu0 %v3751
    %3802 = vmatpush.bf16.msra.mxu0 %v3749
    %3803 = vmatpush.bf16.msra.mxu0 %v3747
    %3804 = vmatpush.bf16.msra.mxu0 %v3745
    %3805 = vmatpush.bf16.msra.mxu0 %v3743
    %3806 = vmatpush.bf16.msra.mxu0 %v3741
    %3807 = vmatpush.bf16.msra.mxu0 %v3739
    %3808 = vmatpush.bf16.msra.mxu0 %v3737
    %3809 = vmatmul.bf16.gmra.mxu0 %v3618
    %v3810 = vpop.f32.mrf.mxu0
    %v3811 = vadd.f32 %v3637, %v3810
    %v3812 = vpop.f32.mrf.mxu0
    %v3813 = vadd.f32 %v3637, %v3812
    %3814 = vmatmul.bf16.gmra.mxu0 %v3620
    %v3815 = vpop.f32.mrf.mxu0
    %v3816 = vadd.f32 %v3637, %v3815
    %v3817 = vpop.f32.mrf.mxu0
    %v3818 = vadd.f32 %v3637, %v3817
    %3819 = vmatmul.bf16.gmra.mxu0 %v3622
    %v3820 = vpop.f32.mrf.mxu0
    %v3821 = vadd.f32 %v3637, %v3820
    %v3822 = vpop.f32.mrf.mxu0
    %v3823 = vadd.f32 %v3637, %v3822
    %3824 = vmatmul.bf16.gmra.mxu0 %v3624
    %v3825 = vpop.f32.mrf.mxu0
    %v3826 = vadd.f32 %v3637, %v3825
    %v3827 = vpop.f32.mrf.mxu0
    %v3828 = vadd.f32 %v3637, %v3827
    %3829 = vmatmul.bf16.gmra.mxu0 %v3626
    %v3830 = vpop.f32.mrf.mxu0
    %v3831 = vadd.f32 %v3637, %v3830
    %v3832 = vpop.f32.mrf.mxu0
    %v3833 = vadd.f32 %v3637, %v3832
    %3834 = vmatmul.bf16.gmra.mxu0 %v3628
    %v3835 = vpop.f32.mrf.mxu0
    %v3836 = vadd.f32 %v3637, %v3835
    %v3837 = vpop.f32.mrf.mxu0
    %v3838 = vadd.f32 %v3637, %v3837
    %3839 = vmatmul.bf16.gmra.mxu0 %v3630
    %v3840 = vpop.f32.mrf.mxu0
    %v3841 = vadd.f32 %v3637, %v3840
    %v3842 = vpop.f32.mrf.mxu0
    %v3843 = vadd.f32 %v3637, %v3842
    %3844 = vmatmul.bf16.gmra.mxu0 %v3632
    %v3845 = vpop.f32.mrf.mxu0
    %v3846 = vadd.f32 %v3637, %v3845
    %v3847 = vpop.f32.mrf.mxu0
    %v3848 = vadd.f32 %v3637, %v3847
    %3849 = vdwg.mxu0
    %3850 = vmatpush.bf16.msra.mxu0 %v3767
    %3851 = vmatpush.bf16.msra.mxu0 %v3765
    %3852 = vmatpush.bf16.msra.mxu0 %v3763
    %3853 = vmatpush.bf16.msra.mxu0 %v3761
    %3854 = vmatpush.bf16.msra.mxu0 %v3759
    %3855 = vmatpush.bf16.msra.mxu0 %v3757
    %3856 = vmatpush.bf16.msra.mxu0 %v3755
    %3857 = vmatpush.bf16.msra.mxu0 %v3753
    %3858 = vmatmul.bf16.gmra.mxu0 %v3619
    %v3859 = vpop.f32.mrf.mxu0
    %v3860 = vadd.f32 %v3811, %v3859
    %v3861 = vpop.f32.mrf.mxu0
    %v3862 = vadd.f32 %v3813, %v3861
    %3863 = vmatmul.bf16.gmra.mxu0 %v3621
    %v3864 = vpop.f32.mrf.mxu0
    %v3865 = vadd.f32 %v3816, %v3864
    %v3866 = vpop.f32.mrf.mxu0
    %v3867 = vadd.f32 %v3818, %v3866
    %3868 = vmatmul.bf16.gmra.mxu0 %v3623
    %v3869 = vpop.f32.mrf.mxu0
    %v3870 = vadd.f32 %v3821, %v3869
    %v3871 = vpop.f32.mrf.mxu0
    %v3872 = vadd.f32 %v3823, %v3871
    %3873 = vmatmul.bf16.gmra.mxu0 %v3625
    %v3874 = vpop.f32.mrf.mxu0
    %v3875 = vadd.f32 %v3826, %v3874
    %v3876 = vpop.f32.mrf.mxu0
    %v3877 = vadd.f32 %v3828, %v3876
    %3878 = vmatmul.bf16.gmra.mxu0 %v3627
    %v3879 = vpop.f32.mrf.mxu0
    %v3880 = vadd.f32 %v3831, %v3879
    %v3881 = vpop.f32.mrf.mxu0
    %v3882 = vadd.f32 %v3833, %v3881
    %3883 = vmatmul.bf16.gmra.mxu0 %v3629
    %v3884 = vpop.f32.mrf.mxu0
    %v3885 = vadd.f32 %v3836, %v3884
    %v3886 = vpop.f32.mrf.mxu0
    %v3887 = vadd.f32 %v3838, %v3886
    %3888 = vmatmul.bf16.gmra.mxu0 %v3631
    %v3889 = vpop.f32.mrf.mxu0
    %v3890 = vadd.f32 %v3841, %v3889
    %v3891 = vpop.f32.mrf.mxu0
    %v3892 = vadd.f32 %v3843, %v3891
    %3893 = vmatmul.bf16.gmra.mxu0 %v3633
    %v3894 = vpop.f32.mrf.mxu0
    %v3895 = vadd.f32 %v3846, %v3894
    %v3896 = vpop.f32.mrf.mxu0
    %v3897 = vadd.f32 %v3848, %v3896
    %3898 = vdwg.mxu0
    %3899 = vmatpush.bf16.msra.mxu0 %v3752
    %3900 = vmatpush.bf16.msra.mxu0 %v3750
    %3901 = vmatpush.bf16.msra.mxu0 %v3748
    %3902 = vmatpush.bf16.msra.mxu0 %v3746
    %3903 = vmatpush.bf16.msra.mxu0 %v3744
    %3904 = vmatpush.bf16.msra.mxu0 %v3742
    %3905 = vmatpush.bf16.msra.mxu0 %v3740
    %3906 = vmatpush.bf16.msra.mxu0 %v3738
    %3907 = vmatmul.bf16.gmra.mxu0 %v3618
    %v3908 = vpop.f32.mrf.mxu0
    %v3909 = vadd.f32 %v3638, %v3908
    %v3910 = vpop.f32.mrf.mxu0
    %v3911 = vadd.f32 %v3638, %v3910
    %3912 = vmatmul.bf16.gmra.mxu0 %v3620
    %v3913 = vpop.f32.mrf.mxu0
    %v3914 = vadd.f32 %v3638, %v3913
    %v3915 = vpop.f32.mrf.mxu0
    %v3916 = vadd.f32 %v3638, %v3915
    %3917 = vmatmul.bf16.gmra.mxu0 %v3622
    %v3918 = vpop.f32.mrf.mxu0
    %v3919 = vadd.f32 %v3638, %v3918
    %v3920 = vpop.f32.mrf.mxu0
    %v3921 = vadd.f32 %v3638, %v3920
    %3922 = vmatmul.bf16.gmra.mxu0 %v3624
    %v3923 = vpop.f32.mrf.mxu0
    %v3924 = vadd.f32 %v3638, %v3923
    %v3925 = vpop.f32.mrf.mxu0
    %v3926 = vadd.f32 %v3638, %v3925
    %3927 = vmatmul.bf16.gmra.mxu0 %v3626
    %v3928 = vpop.f32.mrf.mxu0
    %v3929 = vadd.f32 %v3638, %v3928
    %v3930 = vpop.f32.mrf.mxu0
    %v3931 = vadd.f32 %v3638, %v3930
    %3932 = vmatmul.bf16.gmra.mxu0 %v3628
    %v3933 = vpop.f32.mrf.mxu0
    %v3934 = vadd.f32 %v3638, %v3933
    %v3935 = vpop.f32.mrf.mxu0
    %v3936 = vadd.f32 %v3638, %v3935
    %3937 = vmatmul.bf16.gmra.mxu0 %v3630
    %v3938 = vpop.f32.mrf.mxu0
    %v3939 = vadd.f32 %v3638, %v3938
    %v3940 = vpop.f32.mrf.mxu0
    %v3941 = vadd.f32 %v3638, %v3940
    %3942 = vmatmul.bf16.gmra.mxu0 %v3632
    %v3943 = vpop.f32.mrf.mxu0
    %v3944 = vadd.f32 %v3638, %v3943
    %v3945 = vpop.f32.mrf.mxu0
    %v3946 = vadd.f32 %v3638, %v3945
    %3947 = vdwg.mxu0
    %3948 = vmatpush.bf16.msra.mxu0 %v3768
    %3949 = vmatpush.bf16.msra.mxu0 %v3766
    %3950 = vmatpush.bf16.msra.mxu0 %v3764
    %3951 = vmatpush.bf16.msra.mxu0 %v3762
    %3952 = vmatpush.bf16.msra.mxu0 %v3760
    %3953 = vmatpush.bf16.msra.mxu0 %v3758
    %3954 = vmatpush.bf16.msra.mxu0 %v3756
    %3955 = vmatpush.bf16.msra.mxu0 %v3754
    %3956 = vmatmul.bf16.gmra.mxu0 %v3619
    %v3957 = vpop.f32.mrf.mxu0
    %v3958 = vadd.f32 %v3909, %v3957
    %v3959 = vpop.f32.mrf.mxu0
    %v3960 = vadd.f32 %v3911, %v3959
    %3961 = vmatmul.bf16.gmra.mxu0 %v3621
    %v3962 = vpop.f32.mrf.mxu0
    %v3963 = vadd.f32 %v3914, %v3962
    %v3964 = vpop.f32.mrf.mxu0
    %v3965 = vadd.f32 %v3916, %v3964
    %3966 = vmatmul.bf16.gmra.mxu0 %v3623
    %v3967 = vpop.f32.mrf.mxu0
    %v3968 = vadd.f32 %v3919, %v3967
    %v3969 = vpop.f32.mrf.mxu0
    %v3970 = vadd.f32 %v3921, %v3969
    %3971 = vmatmul.bf16.gmra.mxu0 %v3625
    %v3972 = vpop.f32.mrf.mxu0
    %v3973 = vadd.f32 %v3924, %v3972
    %v3974 = vpop.f32.mrf.mxu0
    %v3975 = vadd.f32 %v3926, %v3974
    %3976 = vmatmul.bf16.gmra.mxu0 %v3627
    %v3977 = vpop.f32.mrf.mxu0
    %v3978 = vadd.f32 %v3929, %v3977
    %v3979 = vpop.f32.mrf.mxu0
    %v3980 = vadd.f32 %v3931, %v3979
    %3981 = vmatmul.bf16.gmra.mxu0 %v3629
    %v3982 = vpop.f32.mrf.mxu0
    %v3983 = vadd.f32 %v3934, %v3982
    %v3984 = vpop.f32.mrf.mxu0
    %v3985 = vadd.f32 %v3936, %v3984
    %3986 = vmatmul.bf16.gmra.mxu0 %v3631
    %v3987 = vpop.f32.mrf.mxu0
    %v3988 = vadd.f32 %v3939, %v3987
    %v3989 = vpop.f32.mrf.mxu0
    %v3990 = vadd.f32 %v3941, %v3989
    %3991 = vmatmul.bf16.gmra.mxu0 %v3633
    %v3992 = vpop.f32.mrf.mxu0
    %v3993 = vadd.f32 %v3944, %v3992
    %v3994 = vpop.f32.mrf.mxu0
    %v3995 = vadd.f32 %v3946, %v3994
    %3996 = vdwg.mxu0
    %v3997 = vmul.f32 %v3860, %v214
    %v3998 = vmul.f32 %v3958, %v214
    %v3999 = vmul.f32 %v3862, %v215
    %v4000 = vmul.f32 %v3960, %v215
    %v4001 = vmul.f32 %v3865, %v216
    %v4002 = vmul.f32 %v3963, %v216
    %v4003 = vmul.f32 %v3867, %v217
    %v4004 = vmul.f32 %v3965, %v217
    %v4005 = vmul.f32 %v3870, %v218
    %v4006 = vmul.f32 %v3968, %v218
    %v4007 = vmul.f32 %v3872, %v219
    %v4008 = vmul.f32 %v3970, %v219
    %v4009 = vmul.f32 %v3875, %v220
    %v4010 = vmul.f32 %v3973, %v220
    %v4011 = vmul.f32 %v3877, %v221
    %v4012 = vmul.f32 %v3975, %v221
    %v4013 = vmul.f32 %v3880, %v222
    %v4014 = vmul.f32 %v3978, %v222
    %v4015 = vmul.f32 %v3882, %v223
    %v4016 = vmul.f32 %v3980, %v223
    %v4017 = vmul.f32 %v3885, %v224
    %v4018 = vmul.f32 %v3983, %v224
    %v4019 = vmul.f32 %v3887, %v225
    %v4020 = vmul.f32 %v3985, %v225
    %v4021 = vmul.f32 %v3890, %v226
    %v4022 = vmul.f32 %v3988, %v226
    %v4023 = vmul.f32 %v3892, %v227
    %v4024 = vmul.f32 %v3990, %v227
    %v4025 = vmul.f32 %v3895, %v228
    %v4026 = vmul.f32 %v3993, %v228
    %v4027 = vmul.f32 %v3897, %v229
    %v4028 = vmul.f32 %v3995, %v229
    %v4029 = vmul.f32 %v3997, %v3997
    %v4030 = vmul.f32 %v3998, %v3998
    %v4031 = vmul.f32 %v3999, %v3999
    %v4032 = vmul.f32 %v4000, %v4000
    %v4033 = vmul.f32 %v4001, %v4001
    %v4034 = vmul.f32 %v4002, %v4002
    %v4035 = vmul.f32 %v4003, %v4003
    %v4036 = vmul.f32 %v4004, %v4004
    %v4037 = vmul.f32 %v4005, %v4005
    %v4038 = vmul.f32 %v4006, %v4006
    %v4039 = vmul.f32 %v4007, %v4007
    %v4040 = vmul.f32 %v4008, %v4008
    %v4041 = vmul.f32 %v4009, %v4009
    %v4042 = vmul.f32 %v4010, %v4010
    %v4043 = vmul.f32 %v4011, %v4011
    %v4044 = vmul.f32 %v4012, %v4012
    %v4045 = vmul.f32 %v4013, %v4013
    %v4046 = vmul.f32 %v4014, %v4014
    %v4047 = vmul.f32 %v4015, %v4015
    %v4048 = vmul.f32 %v4016, %v4016
    %v4049 = vmul.f32 %v4017, %v4017
    %v4050 = vmul.f32 %v4018, %v4018
    %v4051 = vmul.f32 %v4019, %v4019
    %v4052 = vmul.f32 %v4020, %v4020
    %v4053 = vmul.f32 %v4021, %v4021
    %v4054 = vmul.f32 %v4022, %v4022
    %v4055 = vmul.f32 %v4023, %v4023
    %v4056 = vmul.f32 %v4024, %v4024
    %v4057 = vmul.f32 %v4025, %v4025
    %v4058 = vmul.f32 %v4026, %v4026
    %v4059 = vmul.f32 %v4027, %v4027
    %v4060 = vmul.f32 %v4028, %v4028
    %v4061 = vadd.f32 %v4029, %v4030
    %4062 = vadd.xlane.f32.xlu0 %v4061
    %v4063 = vpop.xlane.xlu0 %4062
    %v4064 = vadd.f32 %v4031, %v4032
    %4065 = vadd.xlane.f32.xlu0 %v4064
    %v4066 = vpop.xlane.xlu0 %4065
    %v4067 = vadd.f32 %v4033, %v4034
    %4068 = vadd.xlane.f32.xlu0 %v4067
    %v4069 = vpop.xlane.xlu0 %4068
    %v4070 = vadd.f32 %v4035, %v4036
    %4071 = vadd.xlane.f32.xlu0 %v4070
    %v4072 = vpop.xlane.xlu0 %4071
    %v4073 = vadd.f32 %v4037, %v4038
    %4074 = vadd.xlane.f32.xlu0 %v4073
    %v4075 = vpop.xlane.xlu0 %4074
    %v4076 = vadd.f32 %v4039, %v4040
    %4077 = vadd.xlane.f32.xlu0 %v4076
    %v4078 = vpop.xlane.xlu0 %4077
    %v4079 = vadd.f32 %v4041, %v4042
    %4080 = vadd.xlane.f32.xlu0 %v4079
    %v4081 = vpop.xlane.xlu0 %4080
    %v4082 = vadd.f32 %v4043, %v4044
    %4083 = vadd.xlane.f32.xlu0 %v4082
    %v4084 = vpop.xlane.xlu0 %4083
    %v4085 = vadd.f32 %v4045, %v4046
    %4086 = vadd.xlane.f32.xlu0 %v4085
    %v4087 = vpop.xlane.xlu0 %4086
    %v4088 = vadd.f32 %v4047, %v4048
    %4089 = vadd.xlane.f32.xlu0 %v4088
    %v4090 = vpop.xlane.xlu0 %4089
    %v4091 = vadd.f32 %v4049, %v4050
    %4092 = vadd.xlane.f32.xlu0 %v4091
    %v4093 = vpop.xlane.xlu0 %4092
    %v4094 = vadd.f32 %v4051, %v4052
    %4095 = vadd.xlane.f32.xlu0 %v4094
    %v4096 = vpop.xlane.xlu0 %4095
    %v4097 = vadd.f32 %v4053, %v4054
    %4098 = vadd.xlane.f32.xlu0 %v4097
    %v4099 = vpop.xlane.xlu0 %4098
    %v4100 = vadd.f32 %v4055, %v4056
    %4101 = vadd.xlane.f32.xlu0 %v4100
    %v4102 = vpop.xlane.xlu0 %4101
    %v4103 = vadd.f32 %v4057, %v4058
    %4104 = vadd.xlane.f32.xlu0 %v4103
    %v4105 = vpop.xlane.xlu0 %4104
    %v4106 = vadd.f32 %v4059, %v4060
    %4107 = vadd.xlane.f32.xlu0 %v4106
    %v4108 = vpop.xlane.xlu0 %4107
    %v4109 = vmax.f32 %v4063, 1e-16
    %v4110 = vmax.f32 %v4066, 1e-16
    %v4111 = vmax.f32 %v4069, 1e-16
    %v4112 = vmax.f32 %v4072, 1e-16
    %v4113 = vmax.f32 %v4075, 1e-16
    %v4114 = vmax.f32 %v4078, 1e-16
    %v4115 = vmax.f32 %v4081, 1e-16
    %v4116 = vmax.f32 %v4084, 1e-16
    %v4117 = vmax.f32 %v4087, 1e-16
    %v4118 = vmax.f32 %v4090, 1e-16
    %v4119 = vmax.f32 %v4093, 1e-16
    %v4120 = vmax.f32 %v4096, 1e-16
    %v4121 = vmax.f32 %v4099, 1e-16
    %v4122 = vmax.f32 %v4102, 1e-16
    %v4123 = vmax.f32 %v4105, 1e-16
    %v4124 = vmax.f32 %v4108, 1e-16
    %v4125 = vrsqrt.pop %v4109
    %v4126 = vmul.f32 %v4125, %v4109
    %v4127 = vmul.f32 %v4126, %v4125
    %v4128 = vmul.f32 0.5, %v4127
    %v4129 = vsub.f32 1.5, %v4128
    %v4130 = vmul.f32 %v4125, %v4129
    %vm4131 = vweird.f32 %v4109
    %vm4132 = vweird.f32 %v4125
    %vm4133 = vmor %vm4131, %vm4132
    %v4134 = vsel %vm4133, %v4125, %v4130
    %v4135 = vrsqrt.pop %v4110
    %v4136 = vmul.f32 %v4135, %v4110
    %v4137 = vmul.f32 %v4136, %v4135
    %v4138 = vmul.f32 0.5, %v4137
    %v4139 = vsub.f32 1.5, %v4138
    %v4140 = vmul.f32 %v4135, %v4139
    %vm4141 = vweird.f32 %v4110
    %vm4142 = vweird.f32 %v4135
    %vm4143 = vmor %vm4141, %vm4142
    %v4144 = vsel %vm4143, %v4135, %v4140
    %v4145 = vrsqrt.pop %v4111
    %v4146 = vmul.f32 %v4145, %v4111
    %v4147 = vmul.f32 %v4146, %v4145
    %v4148 = vmul.f32 0.5, %v4147
    %v4149 = vsub.f32 1.5, %v4148
    %v4150 = vmul.f32 %v4145, %v4149
    %vm4151 = vweird.f32 %v4111
    %vm4152 = vweird.f32 %v4145
    %vm4153 = vmor %vm4151, %vm4152
    %v4154 = vsel %vm4153, %v4145, %v4150
    %v4155 = vrsqrt.pop %v4112
    %v4156 = vmul.f32 %v4155, %v4112
    %v4157 = vmul.f32 %v4156, %v4155
    %v4158 = vmul.f32 0.5, %v4157
    %v4159 = vsub.f32 1.5, %v4158
    %v4160 = vmul.f32 %v4155, %v4159
    %vm4161 = vweird.f32 %v4112
    %vm4162 = vweird.f32 %v4155
    %vm4163 = vmor %vm4161, %vm4162
    %v4164 = vsel %vm4163, %v4155, %v4160
    %v4165 = vrsqrt.pop %v4113
    %v4166 = vmul.f32 %v4165, %v4113
    %v4167 = vmul.f32 %v4166, %v4165
    %v4168 = vmul.f32 0.5, %v4167
    %v4169 = vsub.f32 1.5, %v4168
    %v4170 = vmul.f32 %v4165, %v4169
    %vm4171 = vweird.f32 %v4113
    %vm4172 = vweird.f32 %v4165
    %vm4173 = vmor %vm4171, %vm4172
    %v4174 = vsel %vm4173, %v4165, %v4170
    %v4175 = vrsqrt.pop %v4114
    %v4176 = vmul.f32 %v4175, %v4114
    %v4177 = vmul.f32 %v4176, %v4175
    %v4178 = vmul.f32 0.5, %v4177
    %v4179 = vsub.f32 1.5, %v4178
    %v4180 = vmul.f32 %v4175, %v4179
    %vm4181 = vweird.f32 %v4114
    %vm4182 = vweird.f32 %v4175
    %vm4183 = vmor %vm4181, %vm4182
    %v4184 = vsel %vm4183, %v4175, %v4180
    %v4185 = vrsqrt.pop %v4115
    %v4186 = vmul.f32 %v4185, %v4115
    %v4187 = vmul.f32 %v4186, %v4185
    %v4188 = vmul.f32 0.5, %v4187
    %v4189 = vsub.f32 1.5, %v4188
    %v4190 = vmul.f32 %v4185, %v4189
    %vm4191 = vweird.f32 %v4115
    %vm4192 = vweird.f32 %v4185
    %vm4193 = vmor %vm4191, %vm4192
    %v4194 = vsel %vm4193, %v4185, %v4190
    %v4195 = vrsqrt.pop %v4116
    %v4196 = vmul.f32 %v4195, %v4116
    %v4197 = vmul.f32 %v4196, %v4195
    %v4198 = vmul.f32 0.5, %v4197
    %v4199 = vsub.f32 1.5, %v4198
    %v4200 = vmul.f32 %v4195, %v4199
    %vm4201 = vweird.f32 %v4116
    %vm4202 = vweird.f32 %v4195
    %vm4203 = vmor %vm4201, %vm4202
    %v4204 = vsel %vm4203, %v4195, %v4200
    %v4205 = vrsqrt.pop %v4117
    %v4206 = vmul.f32 %v4205, %v4117
    %v4207 = vmul.f32 %v4206, %v4205
    %v4208 = vmul.f32 0.5, %v4207
    %v4209 = vsub.f32 1.5, %v4208
    %v4210 = vmul.f32 %v4205, %v4209
    %vm4211 = vweird.f32 %v4117
    %vm4212 = vweird.f32 %v4205
    %vm4213 = vmor %vm4211, %vm4212
    %v4214 = vsel %vm4213, %v4205, %v4210
    %v4215 = vrsqrt.pop %v4118
    %v4216 = vmul.f32 %v4215, %v4118
    %v4217 = vmul.f32 %v4216, %v4215
    %v4218 = vmul.f32 0.5, %v4217
    %v4219 = vsub.f32 1.5, %v4218
    %v4220 = vmul.f32 %v4215, %v4219
    %vm4221 = vweird.f32 %v4118
    %vm4222 = vweird.f32 %v4215
    %vm4223 = vmor %vm4221, %vm4222
    %v4224 = vsel %vm4223, %v4215, %v4220
    %v4225 = vrsqrt.pop %v4119
    %v4226 = vmul.f32 %v4225, %v4119
    %v4227 = vmul.f32 %v4226, %v4225
    %v4228 = vmul.f32 0.5, %v4227
    %v4229 = vsub.f32 1.5, %v4228
    %v4230 = vmul.f32 %v4225, %v4229
    %vm4231 = vweird.f32 %v4119
    %vm4232 = vweird.f32 %v4225
    %vm4233 = vmor %vm4231, %vm4232
    %v4234 = vsel %vm4233, %v4225, %v4230
    %v4235 = vrsqrt.pop %v4120
    %v4236 = vmul.f32 %v4235, %v4120
    %v4237 = vmul.f32 %v4236, %v4235
    %v4238 = vmul.f32 0.5, %v4237
    %v4239 = vsub.f32 1.5, %v4238
    %v4240 = vmul.f32 %v4235, %v4239
    %vm4241 = vweird.f32 %v4120
    %vm4242 = vweird.f32 %v4235
    %vm4243 = vmor %vm4241, %vm4242
    %v4244 = vsel %vm4243, %v4235, %v4240
    %v4245 = vrsqrt.pop %v4121
    %v4246 = vmul.f32 %v4245, %v4121
    %v4247 = vmul.f32 %v4246, %v4245
    %v4248 = vmul.f32 0.5, %v4247
    %v4249 = vsub.f32 1.5, %v4248
    %v4250 = vmul.f32 %v4245, %v4249
    %vm4251 = vweird.f32 %v4121
    %vm4252 = vweird.f32 %v4245
    %vm4253 = vmor %vm4251, %vm4252
    %v4254 = vsel %vm4253, %v4245, %v4250
    %v4255 = vrsqrt.pop %v4122
    %v4256 = vmul.f32 %v4255, %v4122
    %v4257 = vmul.f32 %v4256, %v4255
    %v4258 = vmul.f32 0.5, %v4257
    %v4259 = vsub.f32 1.5, %v4258
    %v4260 = vmul.f32 %v4255, %v4259
    %vm4261 = vweird.f32 %v4122
    %vm4262 = vweird.f32 %v4255
    %vm4263 = vmor %vm4261, %vm4262
    %v4264 = vsel %vm4263, %v4255, %v4260
    %v4265 = vrsqrt.pop %v4123
    %v4266 = vmul.f32 %v4265, %v4123
    %v4267 = vmul.f32 %v4266, %v4265
    %v4268 = vmul.f32 0.5, %v4267
    %v4269 = vsub.f32 1.5, %v4268
    %v4270 = vmul.f32 %v4265, %v4269
    %vm4271 = vweird.f32 %v4123
    %vm4272 = vweird.f32 %v4265
    %vm4273 = vmor %vm4271, %vm4272
    %v4274 = vsel %vm4273, %v4265, %v4270
    %v4275 = vrsqrt.pop %v4124
    %v4276 = vmul.f32 %v4275, %v4124
    %v4277 = vmul.f32 %v4276, %v4275
    %v4278 = vmul.f32 0.5, %v4277
    %v4279 = vsub.f32 1.5, %v4278
    %v4280 = vmul.f32 %v4275, %v4279
    %vm4281 = vweird.f32 %v4124
    %vm4282 = vweird.f32 %v4275
    %vm4283 = vmor %vm4281, %vm4282
    %v4284 = vsel %vm4283, %v4275, %v4280
    %v4285 = vmul.f32 %v3997, %v4134
    %v4286 = vmul.f32 %v3998, %v4134
    %v4287 = vmul.f32 %v3999, %v4144
    %v4288 = vmul.f32 %v4000, %v4144
    %v4289 = vmul.f32 %v4001, %v4154
    %v4290 = vmul.f32 %v4002, %v4154
    %v4291 = vmul.f32 %v4003, %v4164
    %v4292 = vmul.f32 %v4004, %v4164
    %v4293 = vmul.f32 %v4005, %v4174
    %v4294 = vmul.f32 %v4006, %v4174
    %v4295 = vmul.f32 %v4007, %v4184
    %v4296 = vmul.f32 %v4008, %v4184
    %v4297 = vmul.f32 %v4009, %v4194
    %v4298 = vmul.f32 %v4010, %v4194
    %v4299 = vmul.f32 %v4011, %v4204
    %v4300 = vmul.f32 %v4012, %v4204
    %v4301 = vmul.f32 %v4013, %v4214
    %v4302 = vmul.f32 %v4014, %v4214
    %v4303 = vmul.f32 %v4015, %v4224
    %v4304 = vmul.f32 %v4016, %v4224
    %v4305 = vmul.f32 %v4017, %v4234
    %v4306 = vmul.f32 %v4018, %v4234
    %v4307 = vmul.f32 %v4019, %v4244
    %v4308 = vmul.f32 %v4020, %v4244
    %v4309 = vmul.f32 %v4021, %v4254
    %v4310 = vmul.f32 %v4022, %v4254
    %v4311 = vmul.f32 %v4023, %v4264
    %v4312 = vmul.f32 %v4024, %v4264
    %v4313 = vmul.f32 %v4025, %v4274
    %v4314 = vmul.f32 %v4026, %v4274
    %v4315 = vmul.f32 %v4027, %v4284
    %v4316 = vmul.f32 %v4028, %v4284
    %v4317 = vpack.c.bf16 %v4287, %v4285
    %v4318 = vpack.c.bf16 %v4288, %v4286
    %v4319 = vpack.c.bf16 %v4291, %v4289
    %v4320 = vpack.c.bf16 %v4292, %v4290
    %v4321 = vpack.c.bf16 %v4295, %v4293
    %v4322 = vpack.c.bf16 %v4296, %v4294
    %v4323 = vpack.c.bf16 %v4299, %v4297
    %v4324 = vpack.c.bf16 %v4300, %v4298
    %v4325 = vpack.c.bf16 %v4303, %v4301
    %v4326 = vpack.c.bf16 %v4304, %v4302
    %v4327 = vpack.c.bf16 %v4307, %v4305
    %v4328 = vpack.c.bf16 %v4308, %v4306
    %v4329 = vpack.c.bf16 %v4311, %v4309
    %v4330 = vpack.c.bf16 %v4312, %v4310
    %v4331 = vpack.c.bf16 %v4315, %v4313
    %v4332 = vpack.c.bf16 %v4316, %v4314
    %4333 = vmatpush.bf16.xpose.msra.mxu0 %v4331
    %4334 = vmatpush.bf16.xpose.msra.mxu0 %v4329
    %4335 = vmatpush.bf16.xpose.msra.mxu0 %v4327
    %4336 = vmatpush.bf16.xpose.msra.mxu0 %v4325
    %4337 = vmatpush.bf16.xpose.msra.mxu0 %v4323
    %4338 = vmatpush.bf16.xpose.msra.mxu0 %v4321
    %4339 = vmatpush.bf16.xpose.msra.mxu0 %v4319
    %4340 = vmatpush.bf16.xpose.msra.mxu0 %v4317
    %4341 = vmatmul.bf16.gmra.mxu0 %v4317
    %v4342 = vpop.f32.mrf.mxu0
    %v4343 = vadd.f32 0.0, %v4342
    %v4344 = vpop.f32.mrf.mxu0
    %v4345 = vadd.f32 0.0, %v4344
    %4346 = vmatmul.bf16.gmra.mxu0 %v4319
    %v4347 = vpop.f32.mrf.mxu0
    %v4348 = vadd.f32 0.0, %v4347
    %v4349 = vpop.f32.mrf.mxu0
    %v4350 = vadd.f32 0.0, %v4349
    %4351 = vmatmul.bf16.gmra.mxu0 %v4321
    %v4352 = vpop.f32.mrf.mxu0
    %v4353 = vadd.f32 0.0, %v4352
    %v4354 = vpop.f32.mrf.mxu0
    %v4355 = vadd.f32 0.0, %v4354
    %4356 = vmatmul.bf16.gmra.mxu0 %v4323
    %v4357 = vpop.f32.mrf.mxu0
    %v4358 = vadd.f32 0.0, %v4357
    %v4359 = vpop.f32.mrf.mxu0
    %v4360 = vadd.f32 0.0, %v4359
    %4361 = vmatmul.bf16.gmra.mxu0 %v4325
    %v4362 = vpop.f32.mrf.mxu0
    %v4363 = vadd.f32 0.0, %v4362
    %v4364 = vpop.f32.mrf.mxu0
    %v4365 = vadd.f32 0.0, %v4364
    %4366 = vmatmul.bf16.gmra.mxu0 %v4327
    %v4367 = vpop.f32.mrf.mxu0
    %v4368 = vadd.f32 0.0, %v4367
    %v4369 = vpop.f32.mrf.mxu0
    %v4370 = vadd.f32 0.0, %v4369
    %4371 = vmatmul.bf16.gmra.mxu0 %v4329
    %v4372 = vpop.f32.mrf.mxu0
    %v4373 = vadd.f32 0.0, %v4372
    %v4374 = vpop.f32.mrf.mxu0
    %v4375 = vadd.f32 0.0, %v4374
    %4376 = vmatmul.bf16.gmra.mxu0 %v4331
    %v4377 = vpop.f32.mrf.mxu0
    %v4378 = vadd.f32 0.0, %v4377
    %v4379 = vpop.f32.mrf.mxu0
    %v4380 = vadd.f32 0.0, %v4379
    %4381 = vdwg.mxu0
    %4382 = vmatpush.bf16.xpose.msra.mxu0 %v4332
    %4383 = vmatpush.bf16.xpose.msra.mxu0 %v4330
    %4384 = vmatpush.bf16.xpose.msra.mxu0 %v4328
    %4385 = vmatpush.bf16.xpose.msra.mxu0 %v4326
    %4386 = vmatpush.bf16.xpose.msra.mxu0 %v4324
    %4387 = vmatpush.bf16.xpose.msra.mxu0 %v4322
    %4388 = vmatpush.bf16.xpose.msra.mxu0 %v4320
    %4389 = vmatpush.bf16.xpose.msra.mxu0 %v4318
    %4390 = vmatmul.bf16.gmra.mxu0 %v4318
    %v4391 = vpop.f32.mrf.mxu0
    %v4392 = vadd.f32 %v4343, %v4391
    %v4393 = vpop.f32.mrf.mxu0
    %v4394 = vadd.f32 %v4345, %v4393
    %4395 = vmatmul.bf16.gmra.mxu0 %v4320
    %v4396 = vpop.f32.mrf.mxu0
    %v4397 = vadd.f32 %v4348, %v4396
    %v4398 = vpop.f32.mrf.mxu0
    %v4399 = vadd.f32 %v4350, %v4398
    %4400 = vmatmul.bf16.gmra.mxu0 %v4322
    %v4401 = vpop.f32.mrf.mxu0
    %v4402 = vadd.f32 %v4353, %v4401
    %v4403 = vpop.f32.mrf.mxu0
    %v4404 = vadd.f32 %v4355, %v4403
    %4405 = vmatmul.bf16.gmra.mxu0 %v4324
    %v4406 = vpop.f32.mrf.mxu0
    %v4407 = vadd.f32 %v4358, %v4406
    %v4408 = vpop.f32.mrf.mxu0
    %v4409 = vadd.f32 %v4360, %v4408
    %4410 = vmatmul.bf16.gmra.mxu0 %v4326
    %v4411 = vpop.f32.mrf.mxu0
    %v4412 = vadd.f32 %v4363, %v4411
    %v4413 = vpop.f32.mrf.mxu0
    %v4414 = vadd.f32 %v4365, %v4413
    %4415 = vmatmul.bf16.gmra.mxu0 %v4328
    %v4416 = vpop.f32.mrf.mxu0
    %v4417 = vadd.f32 %v4368, %v4416
    %v4418 = vpop.f32.mrf.mxu0
    %v4419 = vadd.f32 %v4370, %v4418
    %4420 = vmatmul.bf16.gmra.mxu0 %v4330
    %v4421 = vpop.f32.mrf.mxu0
    %v4422 = vadd.f32 %v4373, %v4421
    %v4423 = vpop.f32.mrf.mxu0
    %v4424 = vadd.f32 %v4375, %v4423
    %4425 = vmatmul.bf16.gmra.mxu0 %v4332
    %v4426 = vpop.f32.mrf.mxu0
    %v4427 = vadd.f32 %v4378, %v4426
    %v4428 = vpop.f32.mrf.mxu0
    %v4429 = vadd.f32 %v4380, %v4428
    %4430 = vdwg.mxu0
    %vm4431 = vcmp.gt.f32.partialorder %v4392, 0.88
    %vm4432 = vcmp.gt.f32.partialorder %v4394, 0.88
    %vm4433 = vcmp.gt.f32.partialorder %v4397, 0.88
    %vm4434 = vcmp.gt.f32.partialorder %v4399, 0.88
    %vm4435 = vcmp.gt.f32.partialorder %v4402, 0.88
    %vm4436 = vcmp.gt.f32.partialorder %v4404, 0.88
    %vm4437 = vcmp.gt.f32.partialorder %v4407, 0.88
    %vm4438 = vcmp.gt.f32.partialorder %v4409, 0.88
    %vm4439 = vcmp.gt.f32.partialorder %v4412, 0.88
    %vm4440 = vcmp.gt.f32.partialorder %v4414, 0.88
    %vm4441 = vcmp.gt.f32.partialorder %v4417, 0.88
    %vm4442 = vcmp.gt.f32.partialorder %v4419, 0.88
    %vm4443 = vcmp.gt.f32.partialorder %v4422, 0.88
    %vm4444 = vcmp.gt.f32.partialorder %v4424, 0.88
    %vm4445 = vcmp.gt.f32.partialorder %v4427, 0.88
    %vm4446 = vcmp.gt.f32.partialorder %v4429, 0.88
    %v4447 = vsel %vm4431, 1.0, 0.0
    %v4448 = vsel %vm4432, 1.0, 0.0
    %v4449 = vsel %vm4433, 1.0, 0.0
    %v4450 = vsel %vm4434, 1.0, 0.0
    %v4451 = vsel %vm4435, 1.0, 0.0
    %v4452 = vsel %vm4436, 1.0, 0.0
    %v4453 = vsel %vm4437, 1.0, 0.0
    %v4454 = vsel %vm4438, 1.0, 0.0
    %v4455 = vsel %vm4439, 1.0, 0.0
    %v4456 = vsel %vm4440, 1.0, 0.0
    %v4457 = vsel %vm4441, 1.0, 0.0
    %v4458 = vsel %vm4442, 1.0, 0.0
    %v4459 = vsel %vm4443, 1.0, 0.0
    %v4460 = vsel %vm4444, 1.0, 0.0
    %v4461 = vsel %vm4445, 1.0, 0.0
    %v4462 = vsel %vm4446, 1.0, 0.0
    %4463 = vst [vmem:[#allocation14] sm:$0xff] %v4447
    %4464 = vst [vmem:[#allocation14 + $0x8] sm:$0xff] %v4448
    %4465 = vst [vmem:[#allocation14 + $0x10] sm:$0xff] %v4449
    %4466 = vst [vmem:[#allocation14 + $0x18] sm:$0xff] %v4450
    %4467 = vst [vmem:[#allocation14 + $0x20] sm:$0xff] %v4451
    %4468 = vst [vmem:[#allocation14 + $0x28] sm:$0xff] %v4452
    %4469 = vst [vmem:[#allocation14 + $0x30] sm:$0xff] %v4453
    %4470 = vst [vmem:[#allocation14 + $0x38] sm:$0xff] %v4454
    %4471 = vst [vmem:[#allocation14 + $0x40] sm:$0xff] %v4455
    %4472 = vst [vmem:[#allocation14 + $0x48] sm:$0xff] %v4456
    %4473 = vst [vmem:[#allocation14 + $0x50] sm:$0xff] %v4457
    %4474 = vst [vmem:[#allocation14 + $0x58] sm:$0xff] %v4458
    %4475 = vst [vmem:[#allocation14 + $0x60] sm:$0xff] %v4459
    %4476 = vst [vmem:[#allocation14 + $0x68] sm:$0xff] %v4460
    %4477 = vst [vmem:[#allocation14 + $0x70] sm:$0xff] %v4461
    %4478 = vst [vmem:[#allocation14 + $0x78] sm:$0xff] %v4462
    %v4479 = vld [vmem:[#allocation8 + $0x300] sm:$0xf]
    %v4480 = vld [vmem:[#allocation8 + $0x308] sm:$0xf]
    %v4481 = vld [vmem:[#allocation8 + $0x310] sm:$0xf]
    %v4482 = vld [vmem:[#allocation8 + $0x318] sm:$0xf]
    %v4483 = vld [vmem:[#allocation8 + $0x320] sm:$0xf]
    %v4484 = vld [vmem:[#allocation8 + $0x328] sm:$0xf]
    %v4485 = vld [vmem:[#allocation8 + $0x330] sm:$0xf]
    %v4486 = vld [vmem:[#allocation8 + $0x338] sm:$0xf]
    %v4487 = vld [vmem:[#allocation8 + $0x340] sm:$0xf]
    %v4488 = vld [vmem:[#allocation8 + $0x348] sm:$0xf]
    %v4489 = vld [vmem:[#allocation8 + $0x350] sm:$0xf]
    %v4490 = vld [vmem:[#allocation8 + $0x358] sm:$0xf]
    %v4491 = vld [vmem:[#allocation8 + $0x360] sm:$0xf]
    %v4492 = vld [vmem:[#allocation8 + $0x368] sm:$0xf]
    %v4493 = vld [vmem:[#allocation8 + $0x370] sm:$0xf]
    %v4494 = vld [vmem:[#allocation8 + $0x378] sm:$0xf]
    %v4495 = vld [vmem:[#allocation8 + $0x380] sm:$0xf]
    %v4496 = vld [vmem:[#allocation8 + $0x388] sm:$0xf]
    %v4497 = vld [vmem:[#allocation8 + $0x390] sm:$0xf]
    %v4498 = vld [vmem:[#allocation8 + $0x398] sm:$0xf]
    %v4499 = vld [vmem:[#allocation8 + $0x3a0] sm:$0xf]
    %v4500 = vld [vmem:[#allocation8 + $0x3a8] sm:$0xf]
    %v4501 = vld [vmem:[#allocation8 + $0x3b0] sm:$0xf]
    %v4502 = vld [vmem:[#allocation8 + $0x3b8] sm:$0xf]
    %v4503 = vld [vmem:[#allocation8 + $0x3c0] sm:$0xf]
    %v4504 = vld [vmem:[#allocation8 + $0x3c8] sm:$0xf]
    %v4505 = vld [vmem:[#allocation8 + $0x3d0] sm:$0xf]
    %v4506 = vld [vmem:[#allocation8 + $0x3d8] sm:$0xf]
    %v4507 = vld [vmem:[#allocation8 + $0x3e0] sm:$0xf]
    %v4508 = vld [vmem:[#allocation8 + $0x3e8] sm:$0xf]
    %v4509 = vld [vmem:[#allocation8 + $0x3f0] sm:$0xf]
    %v4510 = vld [vmem:[#allocation8 + $0x3f8] sm:$0xf]
    %v4511 = vld [vmem:[#allocation9 + $0x10] ss:$0 sm:$0xff]
    %v4512 = vld [vmem:[#allocation9 + $0x11] ss:$0 sm:$0xff]
    %v4513 = vld [vmem:[#allocation9 + $0x12] ss:$0 sm:$0xff]
    %v4514 = vld [vmem:[#allocation8 + $0x400] sm:$0xf]
    %v4515 = vld [vmem:[#allocation8 + $0x408] sm:$0xf]
    %v4516 = vld [vmem:[#allocation8 + $0x410] sm:$0xf]
    %v4517 = vld [vmem:[#allocation8 + $0x418] sm:$0xf]
    %v4518 = vld [vmem:[#allocation8 + $0x420] sm:$0xf]
    %v4519 = vld [vmem:[#allocation8 + $0x428] sm:$0xf]
    %v4520 = vld [vmem:[#allocation8 + $0x430] sm:$0xf]
    %v4521 = vld [vmem:[#allocation8 + $0x438] sm:$0xf]
    %v4522 = vld [vmem:[#allocation8 + $0x440] sm:$0xf]
    %v4523 = vld [vmem:[#allocation8 + $0x448] sm:$0xf]
    %v4524 = vld [vmem:[#allocation8 + $0x450] sm:$0xf]
    %v4525 = vld [vmem:[#allocation8 + $0x458] sm:$0xf]
    %v4526 = vld [vmem:[#allocation8 + $0x460] sm:$0xf]
    %v4527 = vld [vmem:[#allocation8 + $0x468] sm:$0xf]
    %v4528 = vld [vmem:[#allocation8 + $0x470] sm:$0xf]
    %v4529 = vld [vmem:[#allocation8 + $0x478] sm:$0xf]
    %v4530 = vld [vmem:[#allocation8 + $0x480] sm:$0xf]
    %v4531 = vld [vmem:[#allocation8 + $0x488] sm:$0xf]
    %v4532 = vld [vmem:[#allocation8 + $0x490] sm:$0xf]
    %v4533 = vld [vmem:[#allocation8 + $0x498] sm:$0xf]
    %v4534 = vld [vmem:[#allocation8 + $0x4a0] sm:$0xf]
    %v4535 = vld [vmem:[#allocation8 + $0x4a8] sm:$0xf]
    %v4536 = vld [vmem:[#allocation8 + $0x4b0] sm:$0xf]
    %v4537 = vld [vmem:[#allocation8 + $0x4b8] sm:$0xf]
    %v4538 = vld [vmem:[#allocation8 + $0x4c0] sm:$0xf]
    %v4539 = vld [vmem:[#allocation8 + $0x4c8] sm:$0xf]
    %v4540 = vld [vmem:[#allocation8 + $0x4d0] sm:$0xf]
    %v4541 = vld [vmem:[#allocation8 + $0x4d8] sm:$0xf]
    %v4542 = vld [vmem:[#allocation8 + $0x4e0] sm:$0xf]
    %v4543 = vld [vmem:[#allocation8 + $0x4e8] sm:$0xf]
    %v4544 = vld [vmem:[#allocation8 + $0x4f0] sm:$0xf]
    %v4545 = vld [vmem:[#allocation8 + $0x4f8] sm:$0xf]
    %v4546 = vld [vmem:[#allocation9 + $0x13] ss:$0 sm:$0xff]
    %v4547 = vld [vmem:[#allocation9 + $0x14] ss:$0 sm:$0xff]
    %v4548 = vld [vmem:[#allocation9 + $0x15] ss:$0 sm:$0xff]
    %v4549 = vpack.c.bf16 %v4447, %v4447
    %v4550 = vpack.c.bf16 %v4448, %v4448
    %v4551 = vpack.c.bf16 %v4449, %v4449
    %v4552 = vpack.c.bf16 %v4450, %v4450
    %v4553 = vpack.c.bf16 %v4451, %v4451
    %v4554 = vpack.c.bf16 %v4452, %v4452
    %v4555 = vpack.c.bf16 %v4453, %v4453
    %v4556 = vpack.c.bf16 %v4454, %v4454
    %v4557 = vpack.c.bf16 %v4455, %v4455
    %v4558 = vpack.c.bf16 %v4456, %v4456
    %v4559 = vpack.c.bf16 %v4457, %v4457
    %v4560 = vpack.c.bf16 %v4458, %v4458
    %v4561 = vpack.c.bf16 %v4459, %v4459
    %v4562 = vpack.c.bf16 %v4460, %v4460
    %v4563 = vpack.c.bf16 %v4461, %v4461
    %v4564 = vpack.c.bf16 %v4462, %v4462
    %4565 = vst [vmem:[#allocation2 + $0x40] sm:$0xf] %v4549
    %4566 = vst [vmem:[#allocation2 + $0x44] sm:$0xf] %v4550
    %4567 = vst [vmem:[#allocation2 + $0x48] sm:$0xf] %v4551
    %4568 = vst [vmem:[#allocation2 + $0x4c] sm:$0xf] %v4552
    %4569 = vst [vmem:[#allocation2 + $0x50] sm:$0xf] %v4553
    %4570 = vst [vmem:[#allocation2 + $0x54] sm:$0xf] %v4554
    %4571 = vst [vmem:[#allocation2 + $0x58] sm:$0xf] %v4555
    %4572 = vst [vmem:[#allocation2 + $0x5c] sm:$0xf] %v4556
    %4573 = vst [vmem:[#allocation2 + $0x60] sm:$0xf] %v4557
    %4574 = vst [vmem:[#allocation2 + $0x64] sm:$0xf] %v4558
    %4575 = vst [vmem:[#allocation2 + $0x68] sm:$0xf] %v4559
    %4576 = vst [vmem:[#allocation2 + $0x6c] sm:$0xf] %v4560
    %4577 = vst [vmem:[#allocation2 + $0x70] sm:$0xf] %v4561
    %4578 = vst [vmem:[#allocation2 + $0x74] sm:$0xf] %v4562
    %4579 = vst [vmem:[#allocation2 + $0x78] sm:$0xf] %v4563
    %4580 = vst [vmem:[#allocation2 + $0x7c] sm:$0xf] %v4564
    %v4581 = vld [vmem:[#allocation2] sm:$0xf]
    %v4582 = vld [vmem:[#allocation2 + $0x4] sm:$0xf]
    %v4583 = vld [vmem:[#allocation2 + $0x8] sm:$0xf]
    %v4584 = vld [vmem:[#allocation2 + $0xc] sm:$0xf]
    %v4585 = vld [vmem:[#allocation2 + $0x10] sm:$0xf]
    %v4586 = vld [vmem:[#allocation2 + $0x14] sm:$0xf]
    %v4587 = vld [vmem:[#allocation2 + $0x18] sm:$0xf]
    %v4588 = vld [vmem:[#allocation2 + $0x1c] sm:$0xf]
    %v4589 = vld [vmem:[#allocation2 + $0x20] sm:$0xf]
    %v4590 = vld [vmem:[#allocation2 + $0x24] sm:$0xf]
    %v4591 = vld [vmem:[#allocation2 + $0x28] sm:$0xf]
    %v4592 = vld [vmem:[#allocation2 + $0x2c] sm:$0xf]
    %v4593 = vld [vmem:[#allocation2 + $0x30] sm:$0xf]
    %v4594 = vld [vmem:[#allocation2 + $0x34] sm:$0xf]
    %v4595 = vld [vmem:[#allocation2 + $0x38] sm:$0xf]
    %v4596 = vld [vmem:[#allocation2 + $0x3c] sm:$0xf]
    %v4597 = vld [vmem:[#allocation2 + $0x40] sm:$0xf]
    %v4598 = vld [vmem:[#allocation2 + $0x44] sm:$0xf]
    %v4599 = vld [vmem:[#allocation2 + $0x48] sm:$0xf]
    %v4600 = vld [vmem:[#allocation2 + $0x4c] sm:$0xf]
    %v4601 = vld [vmem:[#allocation2 + $0x50] sm:$0xf]
    %v4602 = vld [vmem:[#allocation2 + $0x54] sm:$0xf]
    %v4603 = vld [vmem:[#allocation2 + $0x58] sm:$0xf]
    %v4604 = vld [vmem:[#allocation2 + $0x5c] sm:$0xf]
    %v4605 = vld [vmem:[#allocation2 + $0x60] sm:$0xf]
    %v4606 = vld [vmem:[#allocation2 + $0x64] sm:$0xf]
    %v4607 = vld [vmem:[#allocation2 + $0x68] sm:$0xf]
    %v4608 = vld [vmem:[#allocation2 + $0x6c] sm:$0xf]
    %v4609 = vld [vmem:[#allocation2 + $0x70] sm:$0xf]
    %v4610 = vld [vmem:[#allocation2 + $0x74] sm:$0xf]
    %v4611 = vld [vmem:[#allocation2 + $0x78] sm:$0xf]
    %v4612 = vld [vmem:[#allocation2 + $0x7c] sm:$0xf]
    %v4613 = vpack.c.bf16 %v3999, %v3997
    %v4614 = vpack.c.bf16 %v4000, %v3998
    %v4615 = vpack.c.bf16 %v4003, %v4001
    %v4616 = vpack.c.bf16 %v4004, %v4002
    %v4617 = vpack.c.bf16 %v4007, %v4005
    %v4618 = vpack.c.bf16 %v4008, %v4006
    %v4619 = vpack.c.bf16 %v4011, %v4009
    %v4620 = vpack.c.bf16 %v4012, %v4010
    %v4621 = vpack.c.bf16 %v4015, %v4013
    %v4622 = vpack.c.bf16 %v4016, %v4014
    %v4623 = vpack.c.bf16 %v4019, %v4017
    %v4624 = vpack.c.bf16 %v4020, %v4018
    %v4625 = vpack.c.bf16 %v4023, %v4021
    %v4626 = vpack.c.bf16 %v4024, %v4022
    %v4627 = vpack.c.bf16 %v4027, %v4025
    %v4628 = vpack.c.bf16 %v4028, %v4026
    %v4661 = vunpack.c.l.b16 %v4581
    %v4662 = vunpack.c.l.b16 %v4582
    %v4663 = vunpack.c.l.b16 %v4583
    %v4664 = vunpack.c.l.b16 %v4584
    %v4665 = vunpack.c.l.b16 %v4585
    %v4666 = vunpack.c.l.b16 %v4586
    %v4667 = vunpack.c.l.b16 %v4587
    %v4668 = vunpack.c.l.b16 %v4588
    %v4669 = vunpack.c.l.b16 %v4589
    %v4670 = vunpack.c.l.b16 %v4590
    %v4671 = vunpack.c.l.b16 %v4591
    %v4672 = vunpack.c.l.b16 %v4592
    %v4673 = vunpack.c.l.b16 %v4593
    %v4674 = vunpack.c.l.b16 %v4594
    %v4675 = vunpack.c.l.b16 %v4595
    %v4676 = vunpack.c.l.b16 %v4596
    %v4677 = vunpack.c.l.b16 %v4597
    %v4678 = vunpack.c.l.b16 %v4598
    %v4679 = vunpack.c.l.b16 %v4599
    %v4680 = vunpack.c.l.b16 %v4600
    %v4681 = vunpack.c.l.b16 %v4601
    %v4682 = vunpack.c.l.b16 %v4602
    %v4683 = vunpack.c.l.b16 %v4603
    %v4684 = vunpack.c.l.b16 %v4604
    %v4685 = vunpack.c.l.b16 %v4605
    %v4686 = vunpack.c.l.b16 %v4606
    %v4687 = vunpack.c.l.b16 %v4607
    %v4688 = vunpack.c.l.b16 %v4608
    %v4689 = vunpack.c.l.b16 %v4609
    %v4690 = vunpack.c.l.b16 %v4610
    %v4691 = vunpack.c.l.b16 %v4611
    %v4692 = vunpack.c.l.b16 %v4612
    %v4693 = vpack.c.b16 %v4662, %v4661
    %v4694 = vpack.c.b16 %v4664, %v4663
    %v4695 = vpack.c.b16 %v4666, %v4665
    %v4696 = vpack.c.b16 %v4668, %v4667
    %v4697 = vpack.c.b16 %v4670, %v4669
    %v4698 = vpack.c.b16 %v4672, %v4671
    %v4699 = vpack.c.b16 %v4674, %v4673
    %v4700 = vpack.c.b16 %v4676, %v4675
    %v4701 = vpack.c.b16 %v4678, %v4677
    %v4702 = vpack.c.b16 %v4680, %v4679
    %v4703 = vpack.c.b16 %v4682, %v4681
    %v4704 = vpack.c.b16 %v4684, %v4683
    %v4705 = vpack.c.b16 %v4686, %v4685
    %v4706 = vpack.c.b16 %v4688, %v4687
    %v4707 = vpack.c.b16 %v4690, %v4689
    %v4708 = vpack.c.b16 %v4692, %v4691
    %4725 = vmatpush.bf16.msra.mxu0 %v4627
    %4726 = vmatpush.bf16.msra.mxu0 %v4625
    %4727 = vmatpush.bf16.msra.mxu0 %v4623
    %4728 = vmatpush.bf16.msra.mxu0 %v4621
    %4729 = vmatpush.bf16.msra.mxu0 %v4619
    %4730 = vmatpush.bf16.msra.mxu0 %v4617
    %4731 = vmatpush.bf16.msra.mxu0 %v4615
    %4732 = vmatpush.bf16.msra.mxu0 %v4613
    %4733 = vmatmul.bf16.gmra.mxu0 %v4693
    %v4734 = vpop.f32.mrf.mxu0
    %v4735 = vadd.f32 0.0, %v4734
    %v4736 = vpop.f32.mrf.mxu0
    %v4737 = vadd.f32 0.0, %v4736
    %4738 = vmatmul.bf16.gmra.mxu0 %v4694
    %v4739 = vpop.f32.mrf.mxu0
    %v4740 = vadd.f32 0.0, %v4739
    %v4741 = vpop.f32.mrf.mxu0
    %v4742 = vadd.f32 0.0, %v4741
    %4743 = vmatmul.bf16.gmra.mxu0 %v4695
    %v4744 = vpop.f32.mrf.mxu0
    %v4745 = vadd.f32 0.0, %v4744
    %v4746 = vpop.f32.mrf.mxu0
    %v4747 = vadd.f32 0.0, %v4746
    %4748 = vmatmul.bf16.gmra.mxu0 %v4696
    %v4749 = vpop.f32.mrf.mxu0
    %v4750 = vadd.f32 0.0, %v4749
    %v4751 = vpop.f32.mrf.mxu0
    %v4752 = vadd.f32 0.0, %v4751
    %4753 = vmatmul.bf16.gmra.mxu0 %v4697
    %v4754 = vpop.f32.mrf.mxu0
    %v4755 = vadd.f32 0.0, %v4754
    %v4756 = vpop.f32.mrf.mxu0
    %v4757 = vadd.f32 0.0, %v4756
    %4758 = vmatmul.bf16.gmra.mxu0 %v4698
    %v4759 = vpop.f32.mrf.mxu0
    %v4760 = vadd.f32 0.0, %v4759
    %v4761 = vpop.f32.mrf.mxu0
    %v4762 = vadd.f32 0.0, %v4761
    %4763 = vmatmul.bf16.gmra.mxu0 %v4699
    %v4764 = vpop.f32.mrf.mxu0
    %v4765 = vadd.f32 0.0, %v4764
    %v4766 = vpop.f32.mrf.mxu0
    %v4767 = vadd.f32 0.0, %v4766
    %4768 = vmatmul.bf16.gmra.mxu0 %v4700
    %v4769 = vpop.f32.mrf.mxu0
    %v4770 = vadd.f32 0.0, %v4769
    %v4771 = vpop.f32.mrf.mxu0
    %v4772 = vadd.f32 0.0, %v4771
    %4773 = vmatmul.bf16.gmra.mxu0 %v4701
    %v4774 = vpop.f32.mrf.mxu0
    %v4775 = vadd.f32 0.0, %v4774
    %v4776 = vpop.f32.mrf.mxu0
    %v4777 = vadd.f32 0.0, %v4776
    %4778 = vmatmul.bf16.gmra.mxu0 %v4702
    %v4779 = vpop.f32.mrf.mxu0
    %v4780 = vadd.f32 0.0, %v4779
    %v4781 = vpop.f32.mrf.mxu0
    %v4782 = vadd.f32 0.0, %v4781
    %4783 = vmatmul.bf16.gmra.mxu0 %v4703
    %v4784 = vpop.f32.mrf.mxu0
    %v4785 = vadd.f32 0.0, %v4784
    %v4786 = vpop.f32.mrf.mxu0
    %v4787 = vadd.f32 0.0, %v4786
    %4788 = vmatmul.bf16.gmra.mxu0 %v4704
    %v4789 = vpop.f32.mrf.mxu0
    %v4790 = vadd.f32 0.0, %v4789
    %v4791 = vpop.f32.mrf.mxu0
    %v4792 = vadd.f32 0.0, %v4791
    %4793 = vmatmul.bf16.gmra.mxu0 %v4705
    %v4794 = vpop.f32.mrf.mxu0
    %v4795 = vadd.f32 0.0, %v4794
    %v4796 = vpop.f32.mrf.mxu0
    %v4797 = vadd.f32 0.0, %v4796
    %4798 = vmatmul.bf16.gmra.mxu0 %v4706
    %v4799 = vpop.f32.mrf.mxu0
    %v4800 = vadd.f32 0.0, %v4799
    %v4801 = vpop.f32.mrf.mxu0
    %v4802 = vadd.f32 0.0, %v4801
    %4803 = vmatmul.bf16.gmra.mxu0 %v4707
    %v4804 = vpop.f32.mrf.mxu0
    %v4805 = vadd.f32 0.0, %v4804
    %v4806 = vpop.f32.mrf.mxu0
    %v4807 = vadd.f32 0.0, %v4806
    %4808 = vmatmul.bf16.gmra.mxu0 %v4708
    %v4809 = vpop.f32.mrf.mxu0
    %v4810 = vadd.f32 0.0, %v4809
    %v4811 = vpop.f32.mrf.mxu0
    %v4812 = vadd.f32 0.0, %v4811
    %4813 = vdwg.mxu0
    %4814 = vmatpush.bf16.msra.mxu0 %v4628
    %4815 = vmatpush.bf16.msra.mxu0 %v4626
    %4816 = vmatpush.bf16.msra.mxu0 %v4624
    %4817 = vmatpush.bf16.msra.mxu0 %v4622
    %4818 = vmatpush.bf16.msra.mxu0 %v4620
    %4819 = vmatpush.bf16.msra.mxu0 %v4618
    %4820 = vmatpush.bf16.msra.mxu0 %v4616
    %4821 = vmatpush.bf16.msra.mxu0 %v4614
    %4822 = vmatmul.bf16.gmra.mxu0 %v4693
    %v4823 = vpop.f32.mrf.mxu0
    %v4824 = vadd.f32 0.0, %v4823
    %v4825 = vpop.f32.mrf.mxu0
    %v4826 = vadd.f32 0.0, %v4825
    %4827 = vmatmul.bf16.gmra.mxu0 %v4694
    %v4828 = vpop.f32.mrf.mxu0
    %v4829 = vadd.f32 0.0, %v4828
    %v4830 = vpop.f32.mrf.mxu0
    %v4831 = vadd.f32 0.0, %v4830
    %4832 = vmatmul.bf16.gmra.mxu0 %v4695
    %v4833 = vpop.f32.mrf.mxu0
    %v4834 = vadd.f32 0.0, %v4833
    %v4835 = vpop.f32.mrf.mxu0
    %v4836 = vadd.f32 0.0, %v4835
    %4837 = vmatmul.bf16.gmra.mxu0 %v4696
    %v4838 = vpop.f32.mrf.mxu0
    %v4839 = vadd.f32 0.0, %v4838
    %v4840 = vpop.f32.mrf.mxu0
    %v4841 = vadd.f32 0.0, %v4840
    %4842 = vmatmul.bf16.gmra.mxu0 %v4697
    %v4843 = vpop.f32.mrf.mxu0
    %v4844 = vadd.f32 0.0, %v4843
    %v4845 = vpop.f32.mrf.mxu0
    %v4846 = vadd.f32 0.0, %v4845
    %4847 = vmatmul.bf16.gmra.mxu0 %v4698
    %v4848 = vpop.f32.mrf.mxu0
    %v4849 = vadd.f32 0.0, %v4848
    %v4850 = vpop.f32.mrf.mxu0
    %v4851 = vadd.f32 0.0, %v4850
    %4852 = vmatmul.bf16.gmra.mxu0 %v4699
    %v4853 = vpop.f32.mrf.mxu0
    %v4854 = vadd.f32 0.0, %v4853
    %v4855 = vpop.f32.mrf.mxu0
    %v4856 = vadd.f32 0.0, %v4855
    %4857 = vmatmul.bf16.gmra.mxu0 %v4700
    %v4858 = vpop.f32.mrf.mxu0
    %v4859 = vadd.f32 0.0, %v4858
    %v4860 = vpop.f32.mrf.mxu0
    %v4861 = vadd.f32 0.0, %v4860
    %4862 = vmatmul.bf16.gmra.mxu0 %v4701
    %v4863 = vpop.f32.mrf.mxu0
    %v4864 = vadd.f32 0.0, %v4863
    %v4865 = vpop.f32.mrf.mxu0
    %v4866 = vadd.f32 0.0, %v4865
    %4867 = vmatmul.bf16.gmra.mxu0 %v4702
    %v4868 = vpop.f32.mrf.mxu0
    %v4869 = vadd.f32 0.0, %v4868
    %v4870 = vpop.f32.mrf.mxu0
    %v4871 = vadd.f32 0.0, %v4870
    %4872 = vmatmul.bf16.gmra.mxu0 %v4703
    %v4873 = vpop.f32.mrf.mxu0
    %v4874 = vadd.f32 0.0, %v4873
    %v4875 = vpop.f32.mrf.mxu0
    %v4876 = vadd.f32 0.0, %v4875
    %4877 = vmatmul.bf16.gmra.mxu0 %v4704
    %v4878 = vpop.f32.mrf.mxu0
    %v4879 = vadd.f32 0.0, %v4878
    %v4880 = vpop.f32.mrf.mxu0
    %v4881 = vadd.f32 0.0, %v4880
    %4882 = vmatmul.bf16.gmra.mxu0 %v4705
    %v4883 = vpop.f32.mrf.mxu0
    %v4884 = vadd.f32 0.0, %v4883
    %v4885 = vpop.f32.mrf.mxu0
    %v4886 = vadd.f32 0.0, %v4885
    %4887 = vmatmul.bf16.gmra.mxu0 %v4706
    %v4888 = vpop.f32.mrf.mxu0
    %v4889 = vadd.f32 0.0, %v4888
    %v4890 = vpop.f32.mrf.mxu0
    %v4891 = vadd.f32 0.0, %v4890
    %4892 = vmatmul.bf16.gmra.mxu0 %v4707
    %v4893 = vpop.f32.mrf.mxu0
    %v4894 = vadd.f32 0.0, %v4893
    %v4895 = vpop.f32.mrf.mxu0
    %v4896 = vadd.f32 0.0, %v4895
    %4897 = vmatmul.bf16.gmra.mxu0 %v4708
    %v4898 = vpop.f32.mrf.mxu0
    %v4899 = vadd.f32 0.0, %v4898
    %v4900 = vpop.f32.mrf.mxu0
    %v4901 = vadd.f32 0.0, %v4900
    %4902 = vdwg.mxu0
    %v4903 = vadd.f32 %v4735, %v3997
    %v4904 = vadd.f32 %v4824, %v3998
    %v4905 = vadd.f32 %v4737, %v3999
    %v4906 = vadd.f32 %v4826, %v4000
    %v4907 = vadd.f32 %v4740, %v4001
    %v4908 = vadd.f32 %v4829, %v4002
    %v4909 = vadd.f32 %v4742, %v4003
    %v4910 = vadd.f32 %v4831, %v4004
    %v4911 = vadd.f32 %v4745, %v4005
    %v4912 = vadd.f32 %v4834, %v4006
    %v4913 = vadd.f32 %v4747, %v4007
    %v4914 = vadd.f32 %v4836, %v4008
    %v4915 = vadd.f32 %v4750, %v4009
    %v4916 = vadd.f32 %v4839, %v4010
    %v4917 = vadd.f32 %v4752, %v4011
    %v4918 = vadd.f32 %v4841, %v4012
    %v4919 = vadd.f32 %v4755, %v4013
    %v4920 = vadd.f32 %v4844, %v4014
    %v4921 = vadd.f32 %v4757, %v4015
    %v4922 = vadd.f32 %v4846, %v4016
    %v4923 = vadd.f32 %v4760, %v4017
    %v4924 = vadd.f32 %v4849, %v4018
    %v4925 = vadd.f32 %v4762, %v4019
    %v4926 = vadd.f32 %v4851, %v4020
    %v4927 = vadd.f32 %v4765, %v4021
    %v4928 = vadd.f32 %v4854, %v4022
    %v4929 = vadd.f32 %v4767, %v4023
    %v4930 = vadd.f32 %v4856, %v4024
    %v4931 = vadd.f32 %v4770, %v4025
    %v4932 = vadd.f32 %v4859, %v4026
    %v4933 = vadd.f32 %v4772, %v4027
    %v4934 = vadd.f32 %v4861, %v4028
    %v4935 = vpack.c.bf16 %v4905, %v4903
    %v4936 = vpack.c.bf16 %v4906, %v4904
    %v4937 = vpack.c.bf16 %v4909, %v4907
    %v4938 = vpack.c.bf16 %v4910, %v4908
    %v4939 = vpack.c.bf16 %v4913, %v4911
    %v4940 = vpack.c.bf16 %v4914, %v4912
    %v4941 = vpack.c.bf16 %v4917, %v4915
    %v4942 = vpack.c.bf16 %v4918, %v4916
    %v4943 = vpack.c.bf16 %v4921, %v4919
    %v4944 = vpack.c.bf16 %v4922, %v4920
    %v4945 = vpack.c.bf16 %v4925, %v4923
    %v4946 = vpack.c.bf16 %v4926, %v4924
    %v4947 = vpack.c.bf16 %v4929, %v4927
    %v4948 = vpack.c.bf16 %v4930, %v4928
    %v4949 = vpack.c.bf16 %v4933, %v4931
    %v4950 = vpack.c.bf16 %v4934, %v4932
    %v4983 = vunpack.c.l.b16 %v4479
    %v4984 = vunpack.c.l.b16 %v4480
    %v4985 = vunpack.c.l.b16 %v4481
    %v4986 = vunpack.c.l.b16 %v4482
    %v4987 = vunpack.c.l.b16 %v4483
    %v4988 = vunpack.c.l.b16 %v4484
    %v4989 = vunpack.c.l.b16 %v4485
    %v4990 = vunpack.c.l.b16 %v4486
    %v4991 = vunpack.c.l.b16 %v4487
    %v4992 = vunpack.c.l.b16 %v4488
    %v4993 = vunpack.c.l.b16 %v4489
    %v4994 = vunpack.c.l.b16 %v4490
    %v4995 = vunpack.c.l.b16 %v4491
    %v4996 = vunpack.c.l.b16 %v4492
    %v4997 = vunpack.c.l.b16 %v4493
    %v4998 = vunpack.c.l.b16 %v4494
    %v4999 = vunpack.c.l.b16 %v4495
    %v5000 = vunpack.c.l.b16 %v4496
    %v5001 = vunpack.c.l.b16 %v4497
    %v5002 = vunpack.c.l.b16 %v4498
    %v5003 = vunpack.c.l.b16 %v4499
    %v5004 = vunpack.c.l.b16 %v4500
    %v5005 = vunpack.c.l.b16 %v4501
    %v5006 = vunpack.c.l.b16 %v4502
    %v5007 = vunpack.c.l.b16 %v4503
    %v5008 = vunpack.c.l.b16 %v4504
    %v5009 = vunpack.c.l.b16 %v4505
    %v5010 = vunpack.c.l.b16 %v4506
    %v5011 = vunpack.c.l.b16 %v4507
    %v5012 = vunpack.c.l.b16 %v4508
    %v5013 = vunpack.c.l.b16 %v4509
    %v5014 = vunpack.c.l.b16 %v4510
    %v5015 = vpack.c.b16 %v4984, %v4983
    %v5016 = vpack.c.b16 %v4986, %v4985
    %v5017 = vpack.c.b16 %v4988, %v4987
    %v5018 = vpack.c.b16 %v4990, %v4989
    %v5019 = vpack.c.b16 %v4992, %v4991
    %v5020 = vpack.c.b16 %v4994, %v4993
    %v5021 = vpack.c.b16 %v4996, %v4995
    %v5022 = vpack.c.b16 %v4998, %v4997
    %v5023 = vpack.c.b16 %v5000, %v4999
    %v5024 = vpack.c.b16 %v5002, %v5001
    %v5025 = vpack.c.b16 %v5004, %v5003
    %v5026 = vpack.c.b16 %v5006, %v5005
    %v5027 = vpack.c.b16 %v5008, %v5007
    %v5028 = vpack.c.b16 %v5010, %v5009
    %v5029 = vpack.c.b16 %v5012, %v5011
    %v5030 = vpack.c.b16 %v5014, %v5013
    %5047 = vmatpush.bf16.msra.mxu0 %v5022
    %5048 = vmatpush.bf16.msra.mxu0 %v5021
    %5049 = vmatpush.bf16.msra.mxu0 %v5020
    %5050 = vmatpush.bf16.msra.mxu0 %v5019
    %5051 = vmatpush.bf16.msra.mxu0 %v5018
    %5052 = vmatpush.bf16.msra.mxu0 %v5017
    %5053 = vmatpush.bf16.msra.mxu0 %v5016
    %5054 = vmatpush.bf16.msra.mxu0 %v5015
    %5055 = vmatmul.bf16.gmra.mxu0 %v4935
    %v5056 = vpop.f32.mrf.mxu0
    %v5057 = vadd.f32 %v4511, %v5056
    %v5058 = vpop.f32.mrf.mxu0
    %v5059 = vadd.f32 %v4511, %v5058
    %5060 = vmatmul.bf16.gmra.mxu0 %v4937
    %v5061 = vpop.f32.mrf.mxu0
    %v5062 = vadd.f32 %v4511, %v5061
    %v5063 = vpop.f32.mrf.mxu0
    %v5064 = vadd.f32 %v4511, %v5063
    %5065 = vmatmul.bf16.gmra.mxu0 %v4939
    %v5066 = vpop.f32.mrf.mxu0
    %v5067 = vadd.f32 %v4511, %v5066
    %v5068 = vpop.f32.mrf.mxu0
    %v5069 = vadd.f32 %v4511, %v5068
    %5070 = vmatmul.bf16.gmra.mxu0 %v4941
    %v5071 = vpop.f32.mrf.mxu0
    %v5072 = vadd.f32 %v4511, %v5071
    %v5073 = vpop.f32.mrf.mxu0
    %v5074 = vadd.f32 %v4511, %v5073
    %5075 = vmatmul.bf16.gmra.mxu0 %v4943
    %v5076 = vpop.f32.mrf.mxu0
    %v5077 = vadd.f32 %v4511, %v5076
    %v5078 = vpop.f32.mrf.mxu0
    %v5079 = vadd.f32 %v4511, %v5078
    %5080 = vmatmul.bf16.gmra.mxu0 %v4945
    %v5081 = vpop.f32.mrf.mxu0
    %v5082 = vadd.f32 %v4511, %v5081
    %v5083 = vpop.f32.mrf.mxu0
    %v5084 = vadd.f32 %v4511, %v5083
    %5085 = vmatmul.bf16.gmra.mxu0 %v4947
    %v5086 = vpop.f32.mrf.mxu0
    %v5087 = vadd.f32 %v4511, %v5086
    %v5088 = vpop.f32.mrf.mxu0
    %v5089 = vadd.f32 %v4511, %v5088
    %5090 = vmatmul.bf16.gmra.mxu0 %v4949
    %v5091 = vpop.f32.mrf.mxu0
    %v5092 = vadd.f32 %v4511, %v5091
    %v5093 = vpop.f32.mrf.mxu0
    %v5094 = vadd.f32 %v4511, %v5093
    %5095 = vdwg.mxu0
    %5096 = vmatpush.bf16.msra.mxu0 %v5030
    %5097 = vmatpush.bf16.msra.mxu0 %v5029
    %5098 = vmatpush.bf16.msra.mxu0 %v5028
    %5099 = vmatpush.bf16.msra.mxu0 %v5027
    %5100 = vmatpush.bf16.msra.mxu0 %v5026
    %5101 = vmatpush.bf16.msra.mxu0 %v5025
    %5102 = vmatpush.bf16.msra.mxu0 %v5024
    %5103 = vmatpush.bf16.msra.mxu0 %v5023
    %5104 = vmatmul.bf16.gmra.mxu0 %v4936
    %v5105 = vpop.f32.mrf.mxu0
    %v5106 = vadd.f32 %v5057, %v5105
    %v5107 = vpop.f32.mrf.mxu0
    %v5108 = vadd.f32 %v5059, %v5107
    %5109 = vmatmul.bf16.gmra.mxu0 %v4938
    %v5110 = vpop.f32.mrf.mxu0
    %v5111 = vadd.f32 %v5062, %v5110
    %v5112 = vpop.f32.mrf.mxu0
    %v5113 = vadd.f32 %v5064, %v5112
    %5114 = vmatmul.bf16.gmra.mxu0 %v4940
    %v5115 = vpop.f32.mrf.mxu0
    %v5116 = vadd.f32 %v5067, %v5115
    %v5117 = vpop.f32.mrf.mxu0
    %v5118 = vadd.f32 %v5069, %v5117
    %5119 = vmatmul.bf16.gmra.mxu0 %v4942
    %v5120 = vpop.f32.mrf.mxu0
    %v5121 = vadd.f32 %v5072, %v5120
    %v5122 = vpop.f32.mrf.mxu0
    %v5123 = vadd.f32 %v5074, %v5122
    %5124 = vmatmul.bf16.gmra.mxu0 %v4944
    %v5125 = vpop.f32.mrf.mxu0
    %v5126 = vadd.f32 %v5077, %v5125
    %v5127 = vpop.f32.mrf.mxu0
    %v5128 = vadd.f32 %v5079, %v5127
    %5129 = vmatmul.bf16.gmra.mxu0 %v4946
    %v5130 = vpop.f32.mrf.mxu0
    %v5131 = vadd.f32 %v5082, %v5130
    %v5132 = vpop.f32.mrf.mxu0
    %v5133 = vadd.f32 %v5084, %v5132
    %5134 = vmatmul.bf16.gmra.mxu0 %v4948
    %v5135 = vpop.f32.mrf.mxu0
    %v5136 = vadd.f32 %v5087, %v5135
    %v5137 = vpop.f32.mrf.mxu0
    %v5138 = vadd.f32 %v5089, %v5137
    %5139 = vmatmul.bf16.gmra.mxu0 %v4950
    %v5140 = vpop.f32.mrf.mxu0
    %v5141 = vadd.f32 %v5092, %v5140
    %v5142 = vpop.f32.mrf.mxu0
    %v5143 = vadd.f32 %v5094, %v5142
    %5144 = vdwg.mxu0
    %v5145 = vmul.f32 %v5106, %v5106
    %v5146 = vmul.f32 %v5108, %v5108
    %v5147 = vmul.f32 %v5111, %v5111
    %v5148 = vmul.f32 %v5113, %v5113
    %v5149 = vmul.f32 %v5116, %v5116
    %v5150 = vmul.f32 %v5118, %v5118
    %v5151 = vmul.f32 %v5121, %v5121
    %v5152 = vmul.f32 %v5123, %v5123
    %v5153 = vmul.f32 %v5126, %v5126
    %v5154 = vmul.f32 %v5128, %v5128
    %v5155 = vmul.f32 %v5131, %v5131
    %v5156 = vmul.f32 %v5133, %v5133
    %v5157 = vmul.f32 %v5136, %v5136
    %v5158 = vmul.f32 %v5138, %v5138
    %v5159 = vmul.f32 %v5141, %v5141
    %v5160 = vmul.f32 %v5143, %v5143
    %5161 = vadd.xlane.f32.xlu0 %v5145
    %v5162 = vpop.xlane.xlu0 %5161
    %5163 = vadd.xlane.f32.xlu0 %v5146
    %v5164 = vpop.xlane.xlu0 %5163
    %5165 = vadd.xlane.f32.xlu0 %v5147
    %v5166 = vpop.xlane.xlu0 %5165
    %5167 = vadd.xlane.f32.xlu0 %v5148
    %v5168 = vpop.xlane.xlu0 %5167
    %5169 = vadd.xlane.f32.xlu0 %v5149
    %v5170 = vpop.xlane.xlu0 %5169
    %5171 = vadd.xlane.f32.xlu0 %v5150
    %v5172 = vpop.xlane.xlu0 %5171
    %5173 = vadd.xlane.f32.xlu0 %v5151
    %v5174 = vpop.xlane.xlu0 %5173
    %5175 = vadd.xlane.f32.xlu0 %v5152
    %v5176 = vpop.xlane.xlu0 %5175
    %5177 = vadd.xlane.f32.xlu0 %v5153
    %v5178 = vpop.xlane.xlu0 %5177
    %5179 = vadd.xlane.f32.xlu0 %v5154
    %v5180 = vpop.xlane.xlu0 %5179
    %5181 = vadd.xlane.f32.xlu0 %v5155
    %v5182 = vpop.xlane.xlu0 %5181
    %5183 = vadd.xlane.f32.xlu0 %v5156
    %v5184 = vpop.xlane.xlu0 %5183
    %5185 = vadd.xlane.f32.xlu0 %v5157
    %v5186 = vpop.xlane.xlu0 %5185
    %5187 = vadd.xlane.f32.xlu0 %v5158
    %v5188 = vpop.xlane.xlu0 %5187
    %5189 = vadd.xlane.f32.xlu0 %v5159
    %v5190 = vpop.xlane.xlu0 %5189
    %5191 = vadd.xlane.f32.xlu0 %v5160
    %v5192 = vpop.xlane.xlu0 %5191
    %v5193 = vmax.f32 %v5162, 1e-24
    %v5194 = vmax.f32 %v5164, 1e-24
    %v5195 = vmax.f32 %v5166, 1e-24
    %v5196 = vmax.f32 %v5168, 1e-24
    %v5197 = vmax.f32 %v5170, 1e-24
    %v5198 = vmax.f32 %v5172, 1e-24
    %v5199 = vmax.f32 %v5174, 1e-24
    %v5200 = vmax.f32 %v5176, 1e-24
    %v5201 = vmax.f32 %v5178, 1e-24
    %v5202 = vmax.f32 %v5180, 1e-24
    %v5203 = vmax.f32 %v5182, 1e-24
    %v5204 = vmax.f32 %v5184, 1e-24
    %v5205 = vmax.f32 %v5186, 1e-24
    %v5206 = vmax.f32 %v5188, 1e-24
    %v5207 = vmax.f32 %v5190, 1e-24
    %v5208 = vmax.f32 %v5192, 1e-24
    %v5209 = vrsqrt.pop %v5193
    %v5210 = vmul.f32 %v5209, %v5193
    %v5211 = vmul.f32 %v5210, %v5209
    %v5212 = vmul.f32 0.5, %v5211
    %v5213 = vsub.f32 1.5, %v5212
    %v5214 = vmul.f32 %v5209, %v5213
    %vm5215 = vweird.f32 %v5193
    %vm5216 = vweird.f32 %v5209
    %vm5217 = vmor %vm5215, %vm5216
    %v5218 = vsel %vm5217, %v5209, %v5214
    %v5219 = vrsqrt.pop %v5194
    %v5220 = vmul.f32 %v5219, %v5194
    %v5221 = vmul.f32 %v5220, %v5219
    %v5222 = vmul.f32 0.5, %v5221
    %v5223 = vsub.f32 1.5, %v5222
    %v5224 = vmul.f32 %v5219, %v5223
    %vm5225 = vweird.f32 %v5194
    %vm5226 = vweird.f32 %v5219
    %vm5227 = vmor %vm5225, %vm5226
    %v5228 = vsel %vm5227, %v5219, %v5224
    %v5229 = vrsqrt.pop %v5195
    %v5230 = vmul.f32 %v5229, %v5195
    %v5231 = vmul.f32 %v5230, %v5229
    %v5232 = vmul.f32 0.5, %v5231
    %v5233 = vsub.f32 1.5, %v5232
    %v5234 = vmul.f32 %v5229, %v5233
    %vm5235 = vweird.f32 %v5195
    %vm5236 = vweird.f32 %v5229
    %vm5237 = vmor %vm5235, %vm5236
    %v5238 = vsel %vm5237, %v5229, %v5234
    %v5239 = vrsqrt.pop %v5196
    %v5240 = vmul.f32 %v5239, %v5196
    %v5241 = vmul.f32 %v5240, %v5239
    %v5242 = vmul.f32 0.5, %v5241
    %v5243 = vsub.f32 1.5, %v5242
    %v5244 = vmul.f32 %v5239, %v5243
    %vm5245 = vweird.f32 %v5196
    %vm5246 = vweird.f32 %v5239
    %vm5247 = vmor %vm5245, %vm5246
    %v5248 = vsel %vm5247, %v5239, %v5244
    %v5249 = vrsqrt.pop %v5197
    %v5250 = vmul.f32 %v5249, %v5197
    %v5251 = vmul.f32 %v5250, %v5249
    %v5252 = vmul.f32 0.5, %v5251
    %v5253 = vsub.f32 1.5, %v5252
    %v5254 = vmul.f32 %v5249, %v5253
    %vm5255 = vweird.f32 %v5197
    %vm5256 = vweird.f32 %v5249
    %vm5257 = vmor %vm5255, %vm5256
    %v5258 = vsel %vm5257, %v5249, %v5254
    %v5259 = vrsqrt.pop %v5198
    %v5260 = vmul.f32 %v5259, %v5198
    %v5261 = vmul.f32 %v5260, %v5259
    %v5262 = vmul.f32 0.5, %v5261
    %v5263 = vsub.f32 1.5, %v5262
    %v5264 = vmul.f32 %v5259, %v5263
    %vm5265 = vweird.f32 %v5198
    %vm5266 = vweird.f32 %v5259
    %vm5267 = vmor %vm5265, %vm5266
    %v5268 = vsel %vm5267, %v5259, %v5264
    %v5269 = vrsqrt.pop %v5199
    %v5270 = vmul.f32 %v5269, %v5199
    %v5271 = vmul.f32 %v5270, %v5269
    %v5272 = vmul.f32 0.5, %v5271
    %v5273 = vsub.f32 1.5, %v5272
    %v5274 = vmul.f32 %v5269, %v5273
    %vm5275 = vweird.f32 %v5199
    %vm5276 = vweird.f32 %v5269
    %vm5277 = vmor %vm5275, %vm5276
    %v5278 = vsel %vm5277, %v5269, %v5274
    %v5279 = vrsqrt.pop %v5200
    %v5280 = vmul.f32 %v5279, %v5200
    %v5281 = vmul.f32 %v5280, %v5279
    %v5282 = vmul.f32 0.5, %v5281
    %v5283 = vsub.f32 1.5, %v5282
    %v5284 = vmul.f32 %v5279, %v5283
    %vm5285 = vweird.f32 %v5200
    %vm5286 = vweird.f32 %v5279
    %vm5287 = vmor %vm5285, %vm5286
    %v5288 = vsel %vm5287, %v5279, %v5284
    %v5289 = vrsqrt.pop %v5201
    %v5290 = vmul.f32 %v5289, %v5201
    %v5291 = vmul.f32 %v5290, %v5289
    %v5292 = vmul.f32 0.5, %v5291
    %v5293 = vsub.f32 1.5, %v5292
    %v5294 = vmul.f32 %v5289, %v5293
    %vm5295 = vweird.f32 %v5201
    %vm5296 = vweird.f32 %v5289
    %vm5297 = vmor %vm5295, %vm5296
    %v5298 = vsel %vm5297, %v5289, %v5294
    %v5299 = vrsqrt.pop %v5202
    %v5300 = vmul.f32 %v5299, %v5202
    %v5301 = vmul.f32 %v5300, %v5299
    %v5302 = vmul.f32 0.5, %v5301
    %v5303 = vsub.f32 1.5, %v5302
    %v5304 = vmul.f32 %v5299, %v5303
    %vm5305 = vweird.f32 %v5202
    %vm5306 = vweird.f32 %v5299
    %vm5307 = vmor %vm5305, %vm5306
    %v5308 = vsel %vm5307, %v5299, %v5304
    %v5309 = vrsqrt.pop %v5203
    %v5310 = vmul.f32 %v5309, %v5203
    %v5311 = vmul.f32 %v5310, %v5309
    %v5312 = vmul.f32 0.5, %v5311
    %v5313 = vsub.f32 1.5, %v5312
    %v5314 = vmul.f32 %v5309, %v5313
    %vm5315 = vweird.f32 %v5203
    %vm5316 = vweird.f32 %v5309
    %vm5317 = vmor %vm5315, %vm5316
    %v5318 = vsel %vm5317, %v5309, %v5314
    %v5319 = vrsqrt.pop %v5204
    %v5320 = vmul.f32 %v5319, %v5204
    %v5321 = vmul.f32 %v5320, %v5319
    %v5322 = vmul.f32 0.5, %v5321
    %v5323 = vsub.f32 1.5, %v5322
    %v5324 = vmul.f32 %v5319, %v5323
    %vm5325 = vweird.f32 %v5204
    %vm5326 = vweird.f32 %v5319
    %vm5327 = vmor %vm5325, %vm5326
    %v5328 = vsel %vm5327, %v5319, %v5324
    %v5329 = vrsqrt.pop %v5205
    %v5330 = vmul.f32 %v5329, %v5205
    %v5331 = vmul.f32 %v5330, %v5329
    %v5332 = vmul.f32 0.5, %v5331
    %v5333 = vsub.f32 1.5, %v5332
    %v5334 = vmul.f32 %v5329, %v5333
    %vm5335 = vweird.f32 %v5205
    %vm5336 = vweird.f32 %v5329
    %vm5337 = vmor %vm5335, %vm5336
    %v5338 = vsel %vm5337, %v5329, %v5334
    %v5339 = vrsqrt.pop %v5206
    %v5340 = vmul.f32 %v5339, %v5206
    %v5341 = vmul.f32 %v5340, %v5339
    %v5342 = vmul.f32 0.5, %v5341
    %v5343 = vsub.f32 1.5, %v5342
    %v5344 = vmul.f32 %v5339, %v5343
    %vm5345 = vweird.f32 %v5206
    %vm5346 = vweird.f32 %v5339
    %vm5347 = vmor %vm5345, %vm5346
    %v5348 = vsel %vm5347, %v5339, %v5344
    %v5349 = vrsqrt.pop %v5207
    %v5350 = vmul.f32 %v5349, %v5207
    %v5351 = vmul.f32 %v5350, %v5349
    %v5352 = vmul.f32 0.5, %v5351
    %v5353 = vsub.f32 1.5, %v5352
    %v5354 = vmul.f32 %v5349, %v5353
    %vm5355 = vweird.f32 %v5207
    %vm5356 = vweird.f32 %v5349
    %vm5357 = vmor %vm5355, %vm5356
    %v5358 = vsel %vm5357, %v5349, %v5354
    %v5359 = vrsqrt.pop %v5208
    %v5360 = vmul.f32 %v5359, %v5208
    %v5361 = vmul.f32 %v5360, %v5359
    %v5362 = vmul.f32 0.5, %v5361
    %v5363 = vsub.f32 1.5, %v5362
    %v5364 = vmul.f32 %v5359, %v5363
    %vm5365 = vweird.f32 %v5208
    %vm5366 = vweird.f32 %v5359
    %vm5367 = vmor %vm5365, %vm5366
    %v5368 = vsel %vm5367, %v5359, %v5364
    %v5369 = vmul.f32 %v5106, %v5218
    %v5370 = vmul.f32 %v5108, %v5228
    %v5371 = vmul.f32 %v5111, %v5238
    %v5372 = vmul.f32 %v5113, %v5248
    %v5373 = vmul.f32 %v5116, %v5258
    %v5374 = vmul.f32 %v5118, %v5268
    %v5375 = vmul.f32 %v5121, %v5278
    %v5376 = vmul.f32 %v5123, %v5288
    %v5377 = vmul.f32 %v5126, %v5298
    %v5378 = vmul.f32 %v5128, %v5308
    %v5379 = vmul.f32 %v5131, %v5318
    %v5380 = vmul.f32 %v5133, %v5328
    %v5381 = vmul.f32 %v5136, %v5338
    %v5382 = vmul.f32 %v5138, %v5348
    %v5383 = vmul.f32 %v5141, %v5358
    %v5384 = vmul.f32 %v5143, %v5368
    %v5385 = vmul.f32 %v5369, %v281
    %v5386 = vmul.f32 %v5370, %v286
    %v5387 = vmul.f32 %v5371, %v291
    %v5388 = vmul.f32 %v5372, %v296
    %v5389 = vmul.f32 %v5373, %v301
    %v5390 = vmul.f32 %v5374, %v306
    %v5391 = vmul.f32 %v5375, %v311
    %v5392 = vmul.f32 %v5376, %v316
    %v5393 = vmul.f32 %v5377, %v321
    %v5394 = vmul.f32 %v5378, %v326
    %v5395 = vmul.f32 %v5379, %v331
    %v5396 = vmul.f32 %v5380, %v336
    %v5397 = vmul.f32 %v5381, %v341
    %v5398 = vmul.f32 %v5382, %v346
    %v5399 = vmul.f32 %v5383, %v351
    %v5400 = vmul.f32 %v5384, %v356
    %v5401 = vadd.f32 %v5385, %v5386
    %v5402 = vadd.f32 %v5401, %v5387
    %v5403 = vadd.f32 %v5402, %v5388
    %v5404 = vadd.f32 %v5403, %v5389
    %v5405 = vadd.f32 %v5404, %v5390
    %v5406 = vadd.f32 %v5405, %v5391
    %v5407 = vadd.f32 %v5406, %v5392
    %v5408 = vadd.f32 %v5407, %v5393
    %v5409 = vadd.f32 %v5408, %v5394
    %v5410 = vadd.f32 %v5409, %v5395
    %v5411 = vadd.f32 %v5410, %v5396
    %v5412 = vadd.f32 %v5411, %v5397
    %v5413 = vadd.f32 %v5412, %v5398
    %v5414 = vadd.f32 %v5413, %v5399
    %v5415 = vadd.f32 %v5414, %v5400
    %v5416 = vrot.slane %v5415, 4
    %v5417 = vadd.f32 %v5415, %v5416
    %v5418 = vrot.slane %v5417, 2
    %v5419 = vadd.f32 %v5417, %v5418
    %v5420 = vrot.slane %v5419, 1
    %v5421 = vadd.f32 %v5419, %v5420
    %v5422 = vmul.f32 %v5421, %v2265
    %v5423 = vmul.f32 %v5369, %v5369
    %v5424 = vmul.f32 %v5370, %v5370
    %v5425 = vmul.f32 %v5371, %v5371
    %v5426 = vmul.f32 %v5372, %v5372
    %v5427 = vmul.f32 %v5373, %v5373
    %v5428 = vmul.f32 %v5374, %v5374
    %v5429 = vmul.f32 %v5375, %v5375
    %v5430 = vmul.f32 %v5376, %v5376
    %v5431 = vmul.f32 %v5377, %v5377
    %v5432 = vmul.f32 %v5378, %v5378
    %v5433 = vmul.f32 %v5379, %v5379
    %v5434 = vmul.f32 %v5380, %v5380
    %v5435 = vmul.f32 %v5381, %v5381
    %v5436 = vmul.f32 %v5382, %v5382
    %v5437 = vmul.f32 %v5383, %v5383
    %v5438 = vmul.f32 %v5384, %v5384
    %v5439 = vmul.f32 %v5423, %v281
    %v5440 = vmul.f32 %v5424, %v286
    %v5441 = vmul.f32 %v5425, %v291
    %v5442 = vmul.f32 %v5426, %v296
    %v5443 = vmul.f32 %v5427, %v301
    %v5444 = vmul.f32 %v5428, %v306
    %v5445 = vmul.f32 %v5429, %v311
    %v5446 = vmul.f32 %v5430, %v316
    %v5447 = vmul.f32 %v5431, %v321
    %v5448 = vmul.f32 %v5432, %v326
    %v5449 = vmul.f32 %v5433, %v331
    %v5450 = vmul.f32 %v5434, %v336
    %v5451 = vmul.f32 %v5435, %v341
    %v5452 = vmul.f32 %v5436, %v346
    %v5453 = vmul.f32 %v5437, %v351
    %v5454 = vmul.f32 %v5438, %v356
    %v5455 = vadd.f32 %v5439, %v5440
    %v5456 = vadd.f32 %v5455, %v5441
    %v5457 = vadd.f32 %v5456, %v5442
    %v5458 = vadd.f32 %v5457, %v5443
    %v5459 = vadd.f32 %v5458, %v5444
    %v5460 = vadd.f32 %v5459, %v5445
    %v5461 = vadd.f32 %v5460, %v5446
    %v5462 = vadd.f32 %v5461, %v5447
    %v5463 = vadd.f32 %v5462, %v5448
    %v5464 = vadd.f32 %v5463, %v5449
    %v5465 = vadd.f32 %v5464, %v5450
    %v5466 = vadd.f32 %v5465, %v5451
    %v5467 = vadd.f32 %v5466, %v5452
    %v5468 = vadd.f32 %v5467, %v5453
    %v5469 = vadd.f32 %v5468, %v5454
    %v5470 = vrot.slane %v5469, 4
    %v5471 = vadd.f32 %v5469, %v5470
    %v5472 = vrot.slane %v5471, 2
    %v5473 = vadd.f32 %v5471, %v5472
    %v5474 = vrot.slane %v5473, 1
    %v5475 = vadd.f32 %v5473, %v5474
    %v5476 = vmul.f32 %v5475, %v2265
    %v5477 = vmul.f32 %v5422, %v5422
    %v5478 = vsub.f32 %v5476, %v5477
    %v5479 = vmax.f32 %v5478, 0.0
    %v5480 = vadd.f32 %v5479, 1e-05
    %v5481 = vrsqrt.pop %v5480
    %v5482 = vmul.f32 %v5481, %v5480
    %v5483 = vmul.f32 %v5482, %v5481
    %v5484 = vmul.f32 0.5, %v5483
    %v5485 = vsub.f32 1.5, %v5484
    %v5486 = vmul.f32 %v5481, %v5485
    %vm5487 = vweird.f32 %v5480
    %vm5488 = vweird.f32 %v5481
    %vm5489 = vmor %vm5487, %vm5488
    %v5490 = vsel %vm5489, %v5481, %v5486
    %v5491 = vmul.f32 %v4512, %v5490
    %v5492 = vmul.f32 %v5369, %v5491
    %v5493 = vmul.f32 %v5370, %v5491
    %v5494 = vmul.f32 %v5371, %v5491
    %v5495 = vmul.f32 %v5372, %v5491
    %v5496 = vmul.f32 %v5373, %v5491
    %v5497 = vmul.f32 %v5374, %v5491
    %v5498 = vmul.f32 %v5375, %v5491
    %v5499 = vmul.f32 %v5376, %v5491
    %v5500 = vmul.f32 %v5377, %v5491
    %v5501 = vmul.f32 %v5378, %v5491
    %v5502 = vmul.f32 %v5379, %v5491
    %v5503 = vmul.f32 %v5380, %v5491
    %v5504 = vmul.f32 %v5381, %v5491
    %v5505 = vmul.f32 %v5382, %v5491
    %v5506 = vmul.f32 %v5383, %v5491
    %v5507 = vmul.f32 %v5384, %v5491
    %v5508 = vmul.f32 %v5422, %v5491
    %v5509 = vsub.f32 %v4513, %v5508
    %v5510 = vadd.f32 %v5492, %v5509
    %v5511 = vadd.f32 %v5493, %v5509
    %v5512 = vadd.f32 %v5494, %v5509
    %v5513 = vadd.f32 %v5495, %v5509
    %v5514 = vadd.f32 %v5496, %v5509
    %v5515 = vadd.f32 %v5497, %v5509
    %v5516 = vadd.f32 %v5498, %v5509
    %v5517 = vadd.f32 %v5499, %v5509
    %v5518 = vadd.f32 %v5500, %v5509
    %v5519 = vadd.f32 %v5501, %v5509
    %v5520 = vadd.f32 %v5502, %v5509
    %v5521 = vadd.f32 %v5503, %v5509
    %v5522 = vadd.f32 %v5504, %v5509
    %v5523 = vadd.f32 %v5505, %v5509
    %v5524 = vadd.f32 %v5506, %v5509
    %v5525 = vadd.f32 %v5507, %v5509
    %v5526 = vmul.f32 %v5510, %v281
    %v5527 = vmul.f32 %v5511, %v286
    %v5528 = vmul.f32 %v5512, %v291
    %v5529 = vmul.f32 %v5513, %v296
    %v5530 = vmul.f32 %v5514, %v301
    %v5531 = vmul.f32 %v5515, %v306
    %v5532 = vmul.f32 %v5516, %v311
    %v5533 = vmul.f32 %v5517, %v316
    %v5534 = vmul.f32 %v5518, %v321
    %v5535 = vmul.f32 %v5519, %v326
    %v5536 = vmul.f32 %v5520, %v331
    %v5537 = vmul.f32 %v5521, %v336
    %v5538 = vmul.f32 %v5522, %v341
    %v5539 = vmul.f32 %v5523, %v346
    %v5540 = vmul.f32 %v5524, %v351
    %v5541 = vmul.f32 %v5525, %v356
    %v5542 = vadd.f32 %v4775, %v3997
    %v5543 = vadd.f32 %v4864, %v3998
    %v5544 = vadd.f32 %v4777, %v3999
    %v5545 = vadd.f32 %v4866, %v4000
    %v5546 = vadd.f32 %v4780, %v4001
    %v5547 = vadd.f32 %v4869, %v4002
    %v5548 = vadd.f32 %v4782, %v4003
    %v5549 = vadd.f32 %v4871, %v4004
    %v5550 = vadd.f32 %v4785, %v4005
    %v5551 = vadd.f32 %v4874, %v4006
    %v5552 = vadd.f32 %v4787, %v4007
    %v5553 = vadd.f32 %v4876, %v4008
    %v5554 = vadd.f32 %v4790, %v4009
    %v5555 = vadd.f32 %v4879, %v4010
    %v5556 = vadd.f32 %v4792, %v4011
    %v5557 = vadd.f32 %v4881, %v4012
    %v5558 = vadd.f32 %v4795, %v4013
    %v5559 = vadd.f32 %v4884, %v4014
    %v5560 = vadd.f32 %v4797, %v4015
    %v5561 = vadd.f32 %v4886, %v4016
    %v5562 = vadd.f32 %v4800, %v4017
    %v5563 = vadd.f32 %v4889, %v4018
    %v5564 = vadd.f32 %v4802, %v4019
    %v5565 = vadd.f32 %v4891, %v4020
    %v5566 = vadd.f32 %v4805, %v4021
    %v5567 = vadd.f32 %v4894, %v4022
    %v5568 = vadd.f32 %v4807, %v4023
    %v5569 = vadd.f32 %v4896, %v4024
    %v5570 = vadd.f32 %v4810, %v4025
    %v5571 = vadd.f32 %v4899, %v4026
    %v5572 = vadd.f32 %v4812, %v4027
    %v5573 = vadd.f32 %v4901, %v4028
    %v5574 = vpack.c.bf16 %v5544, %v5542
    %v5575 = vpack.c.bf16 %v5545, %v5543
    %v5576 = vpack.c.bf16 %v5548, %v5546
    %v5577 = vpack.c.bf16 %v5549, %v5547
    %v5578 = vpack.c.bf16 %v5552, %v5550
    %v5579 = vpack.c.bf16 %v5553, %v5551
    %v5580 = vpack.c.bf16 %v5556, %v5554
    %v5581 = vpack.c.bf16 %v5557, %v5555
    %v5582 = vpack.c.bf16 %v5560, %v5558
    %v5583 = vpack.c.bf16 %v5561, %v5559
    %v5584 = vpack.c.bf16 %v5564, %v5562
    %v5585 = vpack.c.bf16 %v5565, %v5563
    %v5586 = vpack.c.bf16 %v5568, %v5566
    %v5587 = vpack.c.bf16 %v5569, %v5567
    %v5588 = vpack.c.bf16 %v5572, %v5570
    %v5589 = vpack.c.bf16 %v5573, %v5571
    %v5622 = vunpack.c.l.b16 %v4514
    %v5623 = vunpack.c.l.b16 %v4515
    %v5624 = vunpack.c.l.b16 %v4516
    %v5625 = vunpack.c.l.b16 %v4517
    %v5626 = vunpack.c.l.b16 %v4518
    %v5627 = vunpack.c.l.b16 %v4519
    %v5628 = vunpack.c.l.b16 %v4520
    %v5629 = vunpack.c.l.b16 %v4521
    %v5630 = vunpack.c.l.b16 %v4522
    %v5631 = vunpack.c.l.b16 %v4523
    %v5632 = vunpack.c.l.b16 %v4524
    %v5633 = vunpack.c.l.b16 %v4525
    %v5634 = vunpack.c.l.b16 %v4526
    %v5635 = vunpack.c.l.b16 %v4527
    %v5636 = vunpack.c.l.b16 %v4528
    %v5637 = vunpack.c.l.b16 %v4529
    %v5638 = vunpack.c.l.b16 %v4530
    %v5639 = vunpack.c.l.b16 %v4531
    %v5640 = vunpack.c.l.b16 %v4532
    %v5641 = vunpack.c.l.b16 %v4533
    %v5642 = vunpack.c.l.b16 %v4534
    %v5643 = vunpack.c.l.b16 %v4535
    %v5644 = vunpack.c.l.b16 %v4536
    %v5645 = vunpack.c.l.b16 %v4537
    %v5646 = vunpack.c.l.b16 %v4538
    %v5647 = vunpack.c.l.b16 %v4539
    %v5648 = vunpack.c.l.b16 %v4540
    %v5649 = vunpack.c.l.b16 %v4541
    %v5650 = vunpack.c.l.b16 %v4542
    %v5651 = vunpack.c.l.b16 %v4543
    %v5652 = vunpack.c.l.b16 %v4544
    %v5653 = vunpack.c.l.b16 %v4545
    %v5654 = vpack.c.b16 %v5623, %v5622
    %v5655 = vpack.c.b16 %v5625, %v5624
    %v5656 = vpack.c.b16 %v5627, %v5626
    %v5657 = vpack.c.b16 %v5629, %v5628
    %v5658 = vpack.c.b16 %v5631, %v5630
    %v5659 = vpack.c.b16 %v5633, %v5632
    %v5660 = vpack.c.b16 %v5635, %v5634
    %v5661 = vpack.c.b16 %v5637, %v5636
    %v5662 = vpack.c.b16 %v5639, %v5638
    %v5663 = vpack.c.b16 %v5641, %v5640
    %v5664 = vpack.c.b16 %v5643, %v5642
    %v5665 = vpack.c.b16 %v5645, %v5644
    %v5666 = vpack.c.b16 %v5647, %v5646
    %v5667 = vpack.c.b16 %v5649, %v5648
    %v5668 = vpack.c.b16 %v5651, %v5650
    %v5669 = vpack.c.b16 %v5653, %v5652
    %5686 = vmatpush.bf16.msra.mxu0 %v5661
    %5687 = vmatpush.bf16.msra.mxu0 %v5660
    %5688 = vmatpush.bf16.msra.mxu0 %v5659
    %5689 = vmatpush.bf16.msra.mxu0 %v5658
    %5690 = vmatpush.bf16.msra.mxu0 %v5657
    %5691 = vmatpush.bf16.msra.mxu0 %v5656
    %5692 = vmatpush.bf16.msra.mxu0 %v5655
    %5693 = vmatpush.bf16.msra.mxu0 %v5654
    %5694 = vmatmul.bf16.gmra.mxu0 %v5574
    %v5695 = vpop.f32.mrf.mxu0
    %v5696 = vadd.f32 %v4546, %v5695
    %v5697 = vpop.f32.mrf.mxu0
    %v5698 = vadd.f32 %v4546, %v5697
    %5699 = vmatmul.bf16.gmra.mxu0 %v5576
    %v5700 = vpop.f32.mrf.mxu0
    %v5701 = vadd.f32 %v4546, %v5700
    %v5702 = vpop.f32.mrf.mxu0
    %v5703 = vadd.f32 %v4546, %v5702
    %5704 = vmatmul.bf16.gmra.mxu0 %v5578
    %v5705 = vpop.f32.mrf.mxu0
    %v5706 = vadd.f32 %v4546, %v5705
    %v5707 = vpop.f32.mrf.mxu0
    %v5708 = vadd.f32 %v4546, %v5707
    %5709 = vmatmul.bf16.gmra.mxu0 %v5580
    %v5710 = vpop.f32.mrf.mxu0
    %v5711 = vadd.f32 %v4546, %v5710
    %v5712 = vpop.f32.mrf.mxu0
    %v5713 = vadd.f32 %v4546, %v5712
    %5714 = vmatmul.bf16.gmra.mxu0 %v5582
    %v5715 = vpop.f32.mrf.mxu0
    %v5716 = vadd.f32 %v4546, %v5715
    %v5717 = vpop.f32.mrf.mxu0
    %v5718 = vadd.f32 %v4546, %v5717
    %5719 = vmatmul.bf16.gmra.mxu0 %v5584
    %v5720 = vpop.f32.mrf.mxu0
    %v5721 = vadd.f32 %v4546, %v5720
    %v5722 = vpop.f32.mrf.mxu0
    %v5723 = vadd.f32 %v4546, %v5722
    %5724 = vmatmul.bf16.gmra.mxu0 %v5586
    %v5725 = vpop.f32.mrf.mxu0
    %v5726 = vadd.f32 %v4546, %v5725
    %v5727 = vpop.f32.mrf.mxu0
    %v5728 = vadd.f32 %v4546, %v5727
    %5729 = vmatmul.bf16.gmra.mxu0 %v5588
    %v5730 = vpop.f32.mrf.mxu0
    %v5731 = vadd.f32 %v4546, %v5730
    %v5732 = vpop.f32.mrf.mxu0
    %v5733 = vadd.f32 %v4546, %v5732
    %5734 = vdwg.mxu0
    %5735 = vmatpush.bf16.msra.mxu0 %v5669
    %5736 = vmatpush.bf16.msra.mxu0 %v5668
    %5737 = vmatpush.bf16.msra.mxu0 %v5667
    %5738 = vmatpush.bf16.msra.mxu0 %v5666
    %5739 = vmatpush.bf16.msra.mxu0 %v5665
    %5740 = vmatpush.bf16.msra.mxu0 %v5664
    %5741 = vmatpush.bf16.msra.mxu0 %v5663
    %5742 = vmatpush.bf16.msra.mxu0 %v5662
    %5743 = vmatmul.bf16.gmra.mxu0 %v5575
    %v5744 = vpop.f32.mrf.mxu0
    %v5745 = vadd.f32 %v5696, %v5744
    %v5746 = vpop.f32.mrf.mxu0
    %v5747 = vadd.f32 %v5698, %v5746
    %5748 = vmatmul.bf16.gmra.mxu0 %v5577
    %v5749 = vpop.f32.mrf.mxu0
    %v5750 = vadd.f32 %v5701, %v5749
    %v5751 = vpop.f32.mrf.mxu0
    %v5752 = vadd.f32 %v5703, %v5751
    %5753 = vmatmul.bf16.gmra.mxu0 %v5579
    %v5754 = vpop.f32.mrf.mxu0
    %v5755 = vadd.f32 %v5706, %v5754
    %v5756 = vpop.f32.mrf.mxu0
    %v5757 = vadd.f32 %v5708, %v5756
    %5758 = vmatmul.bf16.gmra.mxu0 %v5581
    %v5759 = vpop.f32.mrf.mxu0
    %v5760 = vadd.f32 %v5711, %v5759
    %v5761 = vpop.f32.mrf.mxu0
    %v5762 = vadd.f32 %v5713, %v5761
    %5763 = vmatmul.bf16.gmra.mxu0 %v5583
    %v5764 = vpop.f32.mrf.mxu0
    %v5765 = vadd.f32 %v5716, %v5764
    %v5766 = vpop.f32.mrf.mxu0
    %v5767 = vadd.f32 %v5718, %v5766
    %5768 = vmatmul.bf16.gmra.mxu0 %v5585
    %v5769 = vpop.f32.mrf.mxu0
    %v5770 = vadd.f32 %v5721, %v5769
    %v5771 = vpop.f32.mrf.mxu0
    %v5772 = vadd.f32 %v5723, %v5771
    %5773 = vmatmul.bf16.gmra.mxu0 %v5587
    %v5774 = vpop.f32.mrf.mxu0
    %v5775 = vadd.f32 %v5726, %v5774
    %v5776 = vpop.f32.mrf.mxu0
    %v5777 = vadd.f32 %v5728, %v5776
    %5778 = vmatmul.bf16.gmra.mxu0 %v5589
    %v5779 = vpop.f32.mrf.mxu0
    %v5780 = vadd.f32 %v5731, %v5779
    %v5781 = vpop.f32.mrf.mxu0
    %v5782 = vadd.f32 %v5733, %v5781
    %5783 = vdwg.mxu0
    %v5784 = vmul.f32 %v5745, %v5745
    %v5785 = vmul.f32 %v5747, %v5747
    %v5786 = vmul.f32 %v5750, %v5750
    %v5787 = vmul.f32 %v5752, %v5752
    %v5788 = vmul.f32 %v5755, %v5755
    %v5789 = vmul.f32 %v5757, %v5757
    %v5790 = vmul.f32 %v5760, %v5760
    %v5791 = vmul.f32 %v5762, %v5762
    %v5792 = vmul.f32 %v5765, %v5765
    %v5793 = vmul.f32 %v5767, %v5767
    %v5794 = vmul.f32 %v5770, %v5770
    %v5795 = vmul.f32 %v5772, %v5772
    %v5796 = vmul.f32 %v5775, %v5775
    %v5797 = vmul.f32 %v5777, %v5777
    %v5798 = vmul.f32 %v5780, %v5780
    %v5799 = vmul.f32 %v5782, %v5782
    %5800 = vadd.xlane.f32.xlu0 %v5784
    %v5801 = vpop.xlane.xlu0 %5800
    %5802 = vadd.xlane.f32.xlu0 %v5785
    %v5803 = vpop.xlane.xlu0 %5802
    %5804 = vadd.xlane.f32.xlu0 %v5786
    %v5805 = vpop.xlane.xlu0 %5804
    %5806 = vadd.xlane.f32.xlu0 %v5787
    %v5807 = vpop.xlane.xlu0 %5806
    %5808 = vadd.xlane.f32.xlu0 %v5788
    %v5809 = vpop.xlane.xlu0 %5808
    %5810 = vadd.xlane.f32.xlu0 %v5789
    %v5811 = vpop.xlane.xlu0 %5810
    %5812 = vadd.xlane.f32.xlu0 %v5790
    %v5813 = vpop.xlane.xlu0 %5812
    %5814 = vadd.xlane.f32.xlu0 %v5791
    %v5815 = vpop.xlane.xlu0 %5814
    %5816 = vadd.xlane.f32.xlu0 %v5792
    %v5817 = vpop.xlane.xlu0 %5816
    %5818 = vadd.xlane.f32.xlu0 %v5793
    %v5819 = vpop.xlane.xlu0 %5818
    %5820 = vadd.xlane.f32.xlu0 %v5794
    %v5821 = vpop.xlane.xlu0 %5820
    %5822 = vadd.xlane.f32.xlu0 %v5795
    %v5823 = vpop.xlane.xlu0 %5822
    %5824 = vadd.xlane.f32.xlu0 %v5796
    %v5825 = vpop.xlane.xlu0 %5824
    %5826 = vadd.xlane.f32.xlu0 %v5797
    %v5827 = vpop.xlane.xlu0 %5826
    %5828 = vadd.xlane.f32.xlu0 %v5798
    %v5829 = vpop.xlane.xlu0 %5828
    %5830 = vadd.xlane.f32.xlu0 %v5799
    %v5831 = vpop.xlane.xlu0 %5830
    %v5832 = vmax.f32 %v5801, 1e-24
    %v5833 = vmax.f32 %v5803, 1e-24
    %v5834 = vmax.f32 %v5805, 1e-24
    %v5835 = vmax.f32 %v5807, 1e-24
    %v5836 = vmax.f32 %v5809, 1e-24
    %v5837 = vmax.f32 %v5811, 1e-24
    %v5838 = vmax.f32 %v5813, 1e-24
    %v5839 = vmax.f32 %v5815, 1e-24
    %v5840 = vmax.f32 %v5817, 1e-24
    %v5841 = vmax.f32 %v5819, 1e-24
    %v5842 = vmax.f32 %v5821, 1e-24
    %v5843 = vmax.f32 %v5823, 1e-24
    %v5844 = vmax.f32 %v5825, 1e-24
    %v5845 = vmax.f32 %v5827, 1e-24
    %v5846 = vmax.f32 %v5829, 1e-24
    %v5847 = vmax.f32 %v5831, 1e-24
    %v5848 = vrsqrt.pop %v5832
    %v5849 = vmul.f32 %v5848, %v5832
    %v5850 = vmul.f32 %v5849, %v5848
    %v5851 = vmul.f32 0.5, %v5850
    %v5852 = vsub.f32 1.5, %v5851
    %v5853 = vmul.f32 %v5848, %v5852
    %vm5854 = vweird.f32 %v5832
    %vm5855 = vweird.f32 %v5848
    %vm5856 = vmor %vm5854, %vm5855
    %v5857 = vsel %vm5856, %v5848, %v5853
    %v5858 = vrsqrt.pop %v5833
    %v5859 = vmul.f32 %v5858, %v5833
    %v5860 = vmul.f32 %v5859, %v5858
    %v5861 = vmul.f32 0.5, %v5860
    %v5862 = vsub.f32 1.5, %v5861
    %v5863 = vmul.f32 %v5858, %v5862
    %vm5864 = vweird.f32 %v5833
    %vm5865 = vweird.f32 %v5858
    %vm5866 = vmor %vm5864, %vm5865
    %v5867 = vsel %vm5866, %v5858, %v5863
    %v5868 = vrsqrt.pop %v5834
    %v5869 = vmul.f32 %v5868, %v5834
    %v5870 = vmul.f32 %v5869, %v5868
    %v5871 = vmul.f32 0.5, %v5870
    %v5872 = vsub.f32 1.5, %v5871
    %v5873 = vmul.f32 %v5868, %v5872
    %vm5874 = vweird.f32 %v5834
    %vm5875 = vweird.f32 %v5868
    %vm5876 = vmor %vm5874, %vm5875
    %v5877 = vsel %vm5876, %v5868, %v5873
    %v5878 = vrsqrt.pop %v5835
    %v5879 = vmul.f32 %v5878, %v5835
    %v5880 = vmul.f32 %v5879, %v5878
    %v5881 = vmul.f32 0.5, %v5880
    %v5882 = vsub.f32 1.5, %v5881
    %v5883 = vmul.f32 %v5878, %v5882
    %vm5884 = vweird.f32 %v5835
    %vm5885 = vweird.f32 %v5878
    %vm5886 = vmor %vm5884, %vm5885
    %v5887 = vsel %vm5886, %v5878, %v5883
    %v5888 = vrsqrt.pop %v5836
    %v5889 = vmul.f32 %v5888, %v5836
    %v5890 = vmul.f32 %v5889, %v5888
    %v5891 = vmul.f32 0.5, %v5890
    %v5892 = vsub.f32 1.5, %v5891
    %v5893 = vmul.f32 %v5888, %v5892
    %vm5894 = vweird.f32 %v5836
    %vm5895 = vweird.f32 %v5888
    %vm5896 = vmor %vm5894, %vm5895
    %v5897 = vsel %vm5896, %v5888, %v5893
    %v5898 = vrsqrt.pop %v5837
    %v5899 = vmul.f32 %v5898, %v5837
    %v5900 = vmul.f32 %v5899, %v5898
    %v5901 = vmul.f32 0.5, %v5900
    %v5902 = vsub.f32 1.5, %v5901
    %v5903 = vmul.f32 %v5898, %v5902
    %vm5904 = vweird.f32 %v5837
    %vm5905 = vweird.f32 %v5898
    %vm5906 = vmor %vm5904, %vm5905
    %v5907 = vsel %vm5906, %v5898, %v5903
    %v5908 = vrsqrt.pop %v5838
    %v5909 = vmul.f32 %v5908, %v5838
    %v5910 = vmul.f32 %v5909, %v5908
    %v5911 = vmul.f32 0.5, %v5910
    %v5912 = vsub.f32 1.5, %v5911
    %v5913 = vmul.f32 %v5908, %v5912
    %vm5914 = vweird.f32 %v5838
    %vm5915 = vweird.f32 %v5908
    %vm5916 = vmor %vm5914, %vm5915
    %v5917 = vsel %vm5916, %v5908, %v5913
    %v5918 = vrsqrt.pop %v5839
    %v5919 = vmul.f32 %v5918, %v5839
    %v5920 = vmul.f32 %v5919, %v5918
    %v5921 = vmul.f32 0.5, %v5920
    %v5922 = vsub.f32 1.5, %v5921
    %v5923 = vmul.f32 %v5918, %v5922
    %vm5924 = vweird.f32 %v5839
    %vm5925 = vweird.f32 %v5918
    %vm5926 = vmor %vm5924, %vm5925
    %v5927 = vsel %vm5926, %v5918, %v5923
    %v5928 = vrsqrt.pop %v5840
    %v5929 = vmul.f32 %v5928, %v5840
    %v5930 = vmul.f32 %v5929, %v5928
    %v5931 = vmul.f32 0.5, %v5930
    %v5932 = vsub.f32 1.5, %v5931
    %v5933 = vmul.f32 %v5928, %v5932
    %vm5934 = vweird.f32 %v5840
    %vm5935 = vweird.f32 %v5928
    %vm5936 = vmor %vm5934, %vm5935
    %v5937 = vsel %vm5936, %v5928, %v5933
    %v5938 = vrsqrt.pop %v5841
    %v5939 = vmul.f32 %v5938, %v5841
    %v5940 = vmul.f32 %v5939, %v5938
    %v5941 = vmul.f32 0.5, %v5940
    %v5942 = vsub.f32 1.5, %v5941
    %v5943 = vmul.f32 %v5938, %v5942
    %vm5944 = vweird.f32 %v5841
    %vm5945 = vweird.f32 %v5938
    %vm5946 = vmor %vm5944, %vm5945
    %v5947 = vsel %vm5946, %v5938, %v5943
    %v5948 = vrsqrt.pop %v5842
    %v5949 = vmul.f32 %v5948, %v5842
    %v5950 = vmul.f32 %v5949, %v5948
    %v5951 = vmul.f32 0.5, %v5950
    %v5952 = vsub.f32 1.5, %v5951
    %v5953 = vmul.f32 %v5948, %v5952
    %vm5954 = vweird.f32 %v5842
    %vm5955 = vweird.f32 %v5948
    %vm5956 = vmor %vm5954, %vm5955
    %v5957 = vsel %vm5956, %v5948, %v5953
    %v5958 = vrsqrt.pop %v5843
    %v5959 = vmul.f32 %v5958, %v5843
    %v5960 = vmul.f32 %v5959, %v5958
    %v5961 = vmul.f32 0.5, %v5960
    %v5962 = vsub.f32 1.5, %v5961
    %v5963 = vmul.f32 %v5958, %v5962
    %vm5964 = vweird.f32 %v5843
    %vm5965 = vweird.f32 %v5958
    %vm5966 = vmor %vm5964, %vm5965
    %v5967 = vsel %vm5966, %v5958, %v5963
    %v5968 = vrsqrt.pop %v5844
    %v5969 = vmul.f32 %v5968, %v5844
    %v5970 = vmul.f32 %v5969, %v5968
    %v5971 = vmul.f32 0.5, %v5970
    %v5972 = vsub.f32 1.5, %v5971
    %v5973 = vmul.f32 %v5968, %v5972
    %vm5974 = vweird.f32 %v5844
    %vm5975 = vweird.f32 %v5968
    %vm5976 = vmor %vm5974, %vm5975
    %v5977 = vsel %vm5976, %v5968, %v5973
    %v5978 = vrsqrt.pop %v5845
    %v5979 = vmul.f32 %v5978, %v5845
    %v5980 = vmul.f32 %v5979, %v5978
    %v5981 = vmul.f32 0.5, %v5980
    %v5982 = vsub.f32 1.5, %v5981
    %v5983 = vmul.f32 %v5978, %v5982
    %vm5984 = vweird.f32 %v5845
    %vm5985 = vweird.f32 %v5978
    %vm5986 = vmor %vm5984, %vm5985
    %v5987 = vsel %vm5986, %v5978, %v5983
    %v5988 = vrsqrt.pop %v5846
    %v5989 = vmul.f32 %v5988, %v5846
    %v5990 = vmul.f32 %v5989, %v5988
    %v5991 = vmul.f32 0.5, %v5990
    %v5992 = vsub.f32 1.5, %v5991
    %v5993 = vmul.f32 %v5988, %v5992
    %vm5994 = vweird.f32 %v5846
    %vm5995 = vweird.f32 %v5988
    %vm5996 = vmor %vm5994, %vm5995
    %v5997 = vsel %vm5996, %v5988, %v5993
    %v5998 = vrsqrt.pop %v5847
    %v5999 = vmul.f32 %v5998, %v5847
    %v6000 = vmul.f32 %v5999, %v5998
    %v6001 = vmul.f32 0.5, %v6000
    %v6002 = vsub.f32 1.5, %v6001
    %v6003 = vmul.f32 %v5998, %v6002
    %vm6004 = vweird.f32 %v5847
    %vm6005 = vweird.f32 %v5998
    %vm6006 = vmor %vm6004, %vm6005
    %v6007 = vsel %vm6006, %v5998, %v6003
    %v6008 = vmul.f32 %v5745, %v5857
    %v6009 = vmul.f32 %v5747, %v5867
    %v6010 = vmul.f32 %v5750, %v5877
    %v6011 = vmul.f32 %v5752, %v5887
    %v6012 = vmul.f32 %v5755, %v5897
    %v6013 = vmul.f32 %v5757, %v5907
    %v6014 = vmul.f32 %v5760, %v5917
    %v6015 = vmul.f32 %v5762, %v5927
    %v6016 = vmul.f32 %v5765, %v5937
    %v6017 = vmul.f32 %v5767, %v5947
    %v6018 = vmul.f32 %v5770, %v5957
    %v6019 = vmul.f32 %v5772, %v5967
    %v6020 = vmul.f32 %v5775, %v5977
    %v6021 = vmul.f32 %v5777, %v5987
    %v6022 = vmul.f32 %v5780, %v5997
    %v6023 = vmul.f32 %v5782, %v6007
    %v6024 = vmul.f32 %v6008, %v281
    %v6025 = vmul.f32 %v6009, %v286
    %v6026 = vmul.f32 %v6010, %v291
    %v6027 = vmul.f32 %v6011, %v296
    %v6028 = vmul.f32 %v6012, %v301
    %v6029 = vmul.f32 %v6013, %v306
    %v6030 = vmul.f32 %v6014, %v311
    %v6031 = vmul.f32 %v6015, %v316
    %v6032 = vmul.f32 %v6016, %v321
    %v6033 = vmul.f32 %v6017, %v326
    %v6034 = vmul.f32 %v6018, %v331
    %v6035 = vmul.f32 %v6019, %v336
    %v6036 = vmul.f32 %v6020, %v341
    %v6037 = vmul.f32 %v6021, %v346
    %v6038 = vmul.f32 %v6022, %v351
    %v6039 = vmul.f32 %v6023, %v356
    %v6040 = vadd.f32 %v6024, %v6025
    %v6041 = vadd.f32 %v6040, %v6026
    %v6042 = vadd.f32 %v6041, %v6027
    %v6043 = vadd.f32 %v6042, %v6028
    %v6044 = vadd.f32 %v6043, %v6029
    %v6045 = vadd.f32 %v6044, %v6030
    %v6046 = vadd.f32 %v6045, %v6031
    %v6047 = vadd.f32 %v6046, %v6032
    %v6048 = vadd.f32 %v6047, %v6033
    %v6049 = vadd.f32 %v6048, %v6034
    %v6050 = vadd.f32 %v6049, %v6035
    %v6051 = vadd.f32 %v6050, %v6036
    %v6052 = vadd.f32 %v6051, %v6037
    %v6053 = vadd.f32 %v6052, %v6038
    %v6054 = vadd.f32 %v6053, %v6039
    %v6055 = vrot.slane %v6054, 4
    %v6056 = vadd.f32 %v6054, %v6055
    %v6057 = vrot.slane %v6056, 2
    %v6058 = vadd.f32 %v6056, %v6057
    %v6059 = vrot.slane %v6058, 1
    %v6060 = vadd.f32 %v6058, %v6059
    %v6061 = vmul.f32 %v6060, %v2265
    %v6062 = vmul.f32 %v6008, %v6008
    %v6063 = vmul.f32 %v6009, %v6009
    %v6064 = vmul.f32 %v6010, %v6010
    %v6065 = vmul.f32 %v6011, %v6011
    %v6066 = vmul.f32 %v6012, %v6012
    %v6067 = vmul.f32 %v6013, %v6013
    %v6068 = vmul.f32 %v6014, %v6014
    %v6069 = vmul.f32 %v6015, %v6015
    %v6070 = vmul.f32 %v6016, %v6016
    %v6071 = vmul.f32 %v6017, %v6017
    %v6072 = vmul.f32 %v6018, %v6018
    %v6073 = vmul.f32 %v6019, %v6019
    %v6074 = vmul.f32 %v6020, %v6020
    %v6075 = vmul.f32 %v6021, %v6021
    %v6076 = vmul.f32 %v6022, %v6022
    %v6077 = vmul.f32 %v6023, %v6023
    %v6078 = vmul.f32 %v6062, %v281
    %v6079 = vmul.f32 %v6063, %v286
    %v6080 = vmul.f32 %v6064, %v291
    %v6081 = vmul.f32 %v6065, %v296
    %v6082 = vmul.f32 %v6066, %v301
    %v6083 = vmul.f32 %v6067, %v306
    %v6084 = vmul.f32 %v6068, %v311
    %v6085 = vmul.f32 %v6069, %v316
    %v6086 = vmul.f32 %v6070, %v321
    %v6087 = vmul.f32 %v6071, %v326
    %v6088 = vmul.f32 %v6072, %v331
    %v6089 = vmul.f32 %v6073, %v336
    %v6090 = vmul.f32 %v6074, %v341
    %v6091 = vmul.f32 %v6075, %v346
    %v6092 = vmul.f32 %v6076, %v351
    %v6093 = vmul.f32 %v6077, %v356
    %v6094 = vadd.f32 %v6078, %v6079
    %v6095 = vadd.f32 %v6094, %v6080
    %v6096 = vadd.f32 %v6095, %v6081
    %v6097 = vadd.f32 %v6096, %v6082
    %v6098 = vadd.f32 %v6097, %v6083
    %v6099 = vadd.f32 %v6098, %v6084
    %v6100 = vadd.f32 %v6099, %v6085
    %v6101 = vadd.f32 %v6100, %v6086
    %v6102 = vadd.f32 %v6101, %v6087
    %v6103 = vadd.f32 %v6102, %v6088
    %v6104 = vadd.f32 %v6103, %v6089
    %v6105 = vadd.f32 %v6104, %v6090
    %v6106 = vadd.f32 %v6105, %v6091
    %v6107 = vadd.f32 %v6106, %v6092
    %v6108 = vadd.f32 %v6107, %v6093
    %v6109 = vrot.slane %v6108, 4
    %v6110 = vadd.f32 %v6108, %v6109
    %v6111 = vrot.slane %v6110, 2
    %v6112 = vadd.f32 %v6110, %v6111
    %v6113 = vrot.slane %v6112, 1
    %v6114 = vadd.f32 %v6112, %v6113
    %v6115 = vmul.f32 %v6114, %v2265
    %v6116 = vmul.f32 %v6061, %v6061
    %v6117 = vsub.f32 %v6115, %v6116
    %v6118 = vmax.f32 %v6117, 0.0
    %v6119 = vadd.f32 %v6118, 1e-05
    %v6120 = vrsqrt.pop %v6119
    %v6121 = vmul.f32 %v6120, %v6119
    %v6122 = vmul.f32 %v6121, %v6120
    %v6123 = vmul.f32 0.5, %v6122
    %v6124 = vsub.f32 1.5, %v6123
    %v6125 = vmul.f32 %v6120, %v6124
    %vm6126 = vweird.f32 %v6119
    %vm6127 = vweird.f32 %v6120
    %vm6128 = vmor %vm6126, %vm6127
    %v6129 = vsel %vm6128, %v6120, %v6125
    %v6130 = vmul.f32 %v4547, %v6129
    %v6131 = vmul.f32 %v6008, %v6130
    %v6132 = vmul.f32 %v6009, %v6130
    %v6133 = vmul.f32 %v6010, %v6130
    %v6134 = vmul.f32 %v6011, %v6130
    %v6135 = vmul.f32 %v6012, %v6130
    %v6136 = vmul.f32 %v6013, %v6130
    %v6137 = vmul.f32 %v6014, %v6130
    %v6138 = vmul.f32 %v6015, %v6130
    %v6139 = vmul.f32 %v6016, %v6130
    %v6140 = vmul.f32 %v6017, %v6130
    %v6141 = vmul.f32 %v6018, %v6130
    %v6142 = vmul.f32 %v6019, %v6130
    %v6143 = vmul.f32 %v6020, %v6130
    %v6144 = vmul.f32 %v6021, %v6130
    %v6145 = vmul.f32 %v6022, %v6130
    %v6146 = vmul.f32 %v6023, %v6130
    %v6147 = vmul.f32 %v6061, %v6130
    %v6148 = vsub.f32 %v4548, %v6147
    %v6149 = vadd.f32 %v6131, %v6148
    %v6150 = vadd.f32 %v6132, %v6148
    %v6151 = vadd.f32 %v6133, %v6148
    %v6152 = vadd.f32 %v6134, %v6148
    %v6153 = vadd.f32 %v6135, %v6148
    %v6154 = vadd.f32 %v6136, %v6148
    %v6155 = vadd.f32 %v6137, %v6148
    %v6156 = vadd.f32 %v6138, %v6148
    %v6157 = vadd.f32 %v6139, %v6148
    %v6158 = vadd.f32 %v6140, %v6148
    %v6159 = vadd.f32 %v6141, %v6148
    %v6160 = vadd.f32 %v6142, %v6148
    %v6161 = vadd.f32 %v6143, %v6148
    %v6162 = vadd.f32 %v6144, %v6148
    %v6163 = vadd.f32 %v6145, %v6148
    %v6164 = vadd.f32 %v6146, %v6148
    %v6165 = vmul.f32 %v6149, %v281
    %v6166 = vmul.f32 %v6150, %v286
    %v6167 = vmul.f32 %v6151, %v291
    %v6168 = vmul.f32 %v6152, %v296
    %v6169 = vmul.f32 %v6153, %v301
    %v6170 = vmul.f32 %v6154, %v306
    %v6171 = vmul.f32 %v6155, %v311
    %v6172 = vmul.f32 %v6156, %v316
    %v6173 = vmul.f32 %v6157, %v321
    %v6174 = vmul.f32 %v6158, %v326
    %v6175 = vmul.f32 %v6159, %v331
    %v6176 = vmul.f32 %v6160, %v336
    %v6177 = vmul.f32 %v6161, %v341
    %v6178 = vmul.f32 %v6162, %v346
    %v6179 = vmul.f32 %v6163, %v351
    %v6180 = vmul.f32 %v6164, %v356
    %v6181 = vadd.f32 %v5526, %v6165
    %v6182 = vadd.f32 %v5527, %v6166
    %v6183 = vadd.f32 %v5528, %v6167
    %v6184 = vadd.f32 %v5529, %v6168
    %v6185 = vadd.f32 %v5530, %v6169
    %v6186 = vadd.f32 %v5531, %v6170
    %v6187 = vadd.f32 %v5532, %v6171
    %v6188 = vadd.f32 %v5533, %v6172
    %v6189 = vadd.f32 %v5534, %v6173
    %v6190 = vadd.f32 %v5535, %v6174
    %v6191 = vadd.f32 %v5536, %v6175
    %v6192 = vadd.f32 %v5537, %v6176
    %v6193 = vadd.f32 %v5538, %v6177
    %v6194 = vadd.f32 %v5539, %v6178
    %v6195 = vadd.f32 %v5540, %v6179
    %v6196 = vadd.f32 %v5541, %v6180
    %v6197 = vld [vmem:[#allocation8 + $0x500] sm:$0xf]
    %v6198 = vld [vmem:[#allocation8 + $0x508] sm:$0xf]
    %v6199 = vld [vmem:[#allocation8 + $0x510] sm:$0xf]
    %v6200 = vld [vmem:[#allocation8 + $0x518] sm:$0xf]
    %v6201 = vld [vmem:[#allocation8 + $0x520] sm:$0xf]
    %v6202 = vld [vmem:[#allocation8 + $0x528] sm:$0xf]
    %v6203 = vld [vmem:[#allocation8 + $0x530] sm:$0xf]
    %v6204 = vld [vmem:[#allocation8 + $0x538] sm:$0xf]
    %v6205 = vld [vmem:[#allocation8 + $0x540] sm:$0xf]
    %v6206 = vld [vmem:[#allocation8 + $0x548] sm:$0xf]
    %v6207 = vld [vmem:[#allocation8 + $0x550] sm:$0xf]
    %v6208 = vld [vmem:[#allocation8 + $0x558] sm:$0xf]
    %v6209 = vld [vmem:[#allocation8 + $0x560] sm:$0xf]
    %v6210 = vld [vmem:[#allocation8 + $0x568] sm:$0xf]
    %v6211 = vld [vmem:[#allocation8 + $0x570] sm:$0xf]
    %v6212 = vld [vmem:[#allocation8 + $0x578] sm:$0xf]
    %v6213 = vpack.c.bf16 %v6182, %v6181
    %v6214 = vpack.c.bf16 %v6184, %v6183
    %v6215 = vpack.c.bf16 %v6186, %v6185
    %v6216 = vpack.c.bf16 %v6188, %v6187
    %v6217 = vpack.c.bf16 %v6190, %v6189
    %v6218 = vpack.c.bf16 %v6192, %v6191
    %v6219 = vpack.c.bf16 %v6194, %v6193
    %v6220 = vpack.c.bf16 %v6196, %v6195
    %v6221 = vld [vmem:[#allocation9 + $0x16] ss:$0 sm:$0xff]
    %v6238 = vunpack.c.l.b16 %v6197
    %v6239 = vunpack.c.l.b16 %v6198
    %v6240 = vunpack.c.l.b16 %v6199
    %v6241 = vunpack.c.l.b16 %v6200
    %v6242 = vunpack.c.l.b16 %v6201
    %v6243 = vunpack.c.l.b16 %v6202
    %v6244 = vunpack.c.l.b16 %v6203
    %v6245 = vunpack.c.l.b16 %v6204
    %v6246 = vunpack.c.l.b16 %v6205
    %v6247 = vunpack.c.l.b16 %v6206
    %v6248 = vunpack.c.l.b16 %v6207
    %v6249 = vunpack.c.l.b16 %v6208
    %v6250 = vunpack.c.l.b16 %v6209
    %v6251 = vunpack.c.l.b16 %v6210
    %v6252 = vunpack.c.l.b16 %v6211
    %v6253 = vunpack.c.l.b16 %v6212
    %v6254 = vpack.c.b16 %v6239, %v6238
    %v6255 = vpack.c.b16 %v6241, %v6240
    %v6256 = vpack.c.b16 %v6243, %v6242
    %v6257 = vpack.c.b16 %v6245, %v6244
    %v6258 = vpack.c.b16 %v6247, %v6246
    %v6259 = vpack.c.b16 %v6249, %v6248
    %v6260 = vpack.c.b16 %v6251, %v6250
    %v6261 = vpack.c.b16 %v6253, %v6252
    %6270 = vmatpush.bf16.msra.mxu0 %v6261
    %6271 = vmatpush.bf16.msra.mxu0 %v6260
    %6272 = vmatpush.bf16.msra.mxu0 %v6259
    %6273 = vmatpush.bf16.msra.mxu0 %v6258
    %6274 = vmatpush.bf16.msra.mxu0 %v6257
    %6275 = vmatpush.bf16.msra.mxu0 %v6256
    %6276 = vmatpush.bf16.msra.mxu0 %v6255
    %6277 = vmatpush.bf16.msra.mxu0 %v6254
    %6278 = vmatmul.bf16.gmra.mxu0 %v6213
    %v6279 = vpop.f32.mrf.mxu0
    %v6280 = vadd.f32 %v6221, %v6279
    %v6281 = vpop.f32.mrf.mxu0
    %v6282 = vadd.f32 %v6221, %v6281
    %6283 = vmatmul.bf16.gmra.mxu0 %v6214
    %v6284 = vpop.f32.mrf.mxu0
    %v6285 = vadd.f32 %v6221, %v6284
    %v6286 = vpop.f32.mrf.mxu0
    %v6287 = vadd.f32 %v6221, %v6286
    %6288 = vmatmul.bf16.gmra.mxu0 %v6215
    %v6289 = vpop.f32.mrf.mxu0
    %v6290 = vadd.f32 %v6221, %v6289
    %v6291 = vpop.f32.mrf.mxu0
    %v6292 = vadd.f32 %v6221, %v6291
    %6293 = vmatmul.bf16.gmra.mxu0 %v6216
    %v6294 = vpop.f32.mrf.mxu0
    %v6295 = vadd.f32 %v6221, %v6294
    %v6296 = vpop.f32.mrf.mxu0
    %v6297 = vadd.f32 %v6221, %v6296
    %6298 = vmatmul.bf16.gmra.mxu0 %v6217
    %v6299 = vpop.f32.mrf.mxu0
    %v6300 = vadd.f32 %v6221, %v6299
    %v6301 = vpop.f32.mrf.mxu0
    %v6302 = vadd.f32 %v6221, %v6301
    %6303 = vmatmul.bf16.gmra.mxu0 %v6218
    %v6304 = vpop.f32.mrf.mxu0
    %v6305 = vadd.f32 %v6221, %v6304
    %v6306 = vpop.f32.mrf.mxu0
    %v6307 = vadd.f32 %v6221, %v6306
    %6308 = vmatmul.bf16.gmra.mxu0 %v6219
    %v6309 = vpop.f32.mrf.mxu0
    %v6310 = vadd.f32 %v6221, %v6309
    %v6311 = vpop.f32.mrf.mxu0
    %v6312 = vadd.f32 %v6221, %v6311
    %6313 = vmatmul.bf16.gmra.mxu0 %v6220
    %v6314 = vpop.f32.mrf.mxu0
    %v6315 = vadd.f32 %v6221, %v6314
    %v6316 = vpop.f32.mrf.mxu0
    %v6317 = vadd.f32 %v6221, %v6316
    %6318 = vdwg.mxu0
    %v6319 = vmax.f32 %v6280, 0.0
    %v6320 = vmax.f32 %v6282, 0.0
    %v6321 = vmax.f32 %v6285, 0.0
    %v6322 = vmax.f32 %v6287, 0.0
    %v6323 = vmax.f32 %v6290, 0.0
    %v6324 = vmax.f32 %v6292, 0.0
    %v6325 = vmax.f32 %v6295, 0.0
    %v6326 = vmax.f32 %v6297, 0.0
    %v6327 = vmax.f32 %v6300, 0.0
    %v6328 = vmax.f32 %v6302, 0.0
    %v6329 = vmax.f32 %v6305, 0.0
    %v6330 = vmax.f32 %v6307, 0.0
    %v6331 = vmax.f32 %v6310, 0.0
    %v6332 = vmax.f32 %v6312, 0.0
    %v6333 = vmax.f32 %v6315, 0.0
    %v6334 = vmax.f32 %v6317, 0.0
    %6335 = vst [vmem:[#allocation11] sm:$0xff] %v6319
    %6336 = vst [vmem:[#allocation11 + $0x8] sm:$0xff] %v6320
    %6337 = vst [vmem:[#allocation11 + $0x10] sm:$0xff] %v6321
    %6338 = vst [vmem:[#allocation11 + $0x18] sm:$0xff] %v6322
    %6339 = vst [vmem:[#allocation11 + $0x20] sm:$0xff] %v6323
    %6340 = vst [vmem:[#allocation11 + $0x28] sm:$0xff] %v6324
    %6341 = vst [vmem:[#allocation11 + $0x30] sm:$0xff] %v6325
    %6342 = vst [vmem:[#allocation11 + $0x38] sm:$0xff] %v6326
    %6343 = vst [vmem:[#allocation11 + $0x40] sm:$0xff] %v6327
    %6344 = vst [vmem:[#allocation11 + $0x48] sm:$0xff] %v6328
    %6345 = vst [vmem:[#allocation11 + $0x50] sm:$0xff] %v6329
    %6346 = vst [vmem:[#allocation11 + $0x58] sm:$0xff] %v6330
    %6347 = vst [vmem:[#allocation11 + $0x60] sm:$0xff] %v6331
    %6348 = vst [vmem:[#allocation11 + $0x68] sm:$0xff] %v6332
    %6349 = vst [vmem:[#allocation11 + $0x70] sm:$0xff] %v6333
    %6350 = vst [vmem:[#allocation11 + $0x78] sm:$0xff] %v6334
    // Predicated region
    $region42: #{tpu_custom_call.1} parent=1 // pred_check
      _
    $region43: #{tpu_custom_call.1} parent=1 // pred_check_branch
      %6352 = sbr.rel (0) target = $region45
    $region44: #{tpu_custom_call.1} parent=1 // pred_region
      %6354 = vsyncadd [#allocation5], 0
      %s6355 = sshll.u32 [#allocation11], 4
      %s6356 = int_to_ptr.vmem [resolvable:$true] %s6355
      %s6357 = sshll.u32 %s6, 4
      %s6358 = int_to_ptr.hbm [resolvable:$true] %s6357
      %6363 = dma.vmem_to_hbm [thread:$0]  %s6356, 2048, %s6358, [#allocation5], 128, 128, 8
    $region45: #{tpu_custom_call.1} parent=1 // pred_fallthru
      _
    // Predicated region
    $region46: #{tpu_custom_call.1} parent=1 // pred_check
      _
    $region47: #{tpu_custom_call.1} parent=1 // pred_check_branch
      %6365 = sbr.rel (0) target = $region49
    $region48: #{tpu_custom_call.1} parent=1 // pred_region
      %6367 = vsyncadd [#allocation13], 0
      %s6368 = sshll.u32 [#allocation12], 4
      %s6369 = int_to_ptr.vmem [resolvable:$true] %s6368
      %s6370 = sshll.u32 %s7, 4
      %s6371 = int_to_ptr.hbm [resolvable:$true] %s6370
      %6376 = dma.vmem_to_hbm [thread:$0]  %s6369, 2048, %s6371, [#allocation13], 128, 128, 8
    $region49: #{tpu_custom_call.1} parent=1 // pred_fallthru
      _
    // Predicated region
    $region50: #{tpu_custom_call.1} parent=1 // pred_check
      _
    $region51: #{tpu_custom_call.1} parent=1 // pred_check_branch
      %6378 = sbr.rel (0) target = $region53
    $region52: #{tpu_custom_call.1} parent=1 // pred_region
      %6380 = vsyncadd [#allocation13], 0
      %s6381 = sshll.u32 [#allocation14], 4
      %s6382 = int_to_ptr.vmem [resolvable:$true] %s6381
      %s6383 = sshll.u32 %s8, 4
      %s6384 = int_to_ptr.hbm [resolvable:$true] %s6383
      %6389 = dma.vmem_to_hbm [thread:$0]  %s6382, 2048, %s6384, [#allocation13], 128, 128, 8
    $region53: #{tpu_custom_call.1} parent=1 // pred_fallthru
      _
    // Predicated region
    $region54: #{tpu_custom_call.1} parent=1 // pred_check
      _
    $region55: #{tpu_custom_call.1} parent=1 // pred_check_branch
      %6391 = sbr.rel (0) target = $region57
    $region56: #{tpu_custom_call.1} parent=1 // pred_region
      %6393 = dma.done [#allocation5], 2048
    $region57: #{tpu_custom_call.1} parent=1 // pred_fallthru
      _
    // Predicated region
    $region58: #{tpu_custom_call.1} parent=1 // pred_check
      _
    $region59: #{tpu_custom_call.1} parent=1 // pred_check_branch
      %6395 = sbr.rel (0) target = $region61
    $region60: #{tpu_custom_call.1} parent=1 // pred_region
      %6397 = dma.done [#allocation13], 2048
    $region61: #{tpu_custom_call.1} parent=1 // pred_fallthru
      _
    // Predicated region
    $region62: #{tpu_custom_call.1} parent=1 // pred_check
      _
    $region63: #{tpu_custom_call.1} parent=1 // pred_check_branch
      %6399 = sbr.rel (0) target = $region65
    $region64: #{tpu_custom_call.1} parent=1 // pred_region
      %6401 = dma.done [#allocation13], 2048
    $region65: #{tpu_custom_call.1} parent=1 // pred_fallthru
      _
    %6402 = vsyncpa [#allocation4], 1
    %6403 = vsyncpa [#allocation7], 1
    %6404 = vsyncpa [#allocation10], 1
    %6405 = vsyncpa [#allocation5], 1
    %6406 = vsyncpa [#allocation13], 1

</llo_original>
